<compile_context>
chip_gen: v7x
topology: tpu7x:2x2x1
jax: 0.10.0
libtpu: 0.0.40
codegen_flags: <defaults>
</compile_context>

<pallas_src>
import numpy as np
import jax
import jax.numpy as jnp
from jax.experimental import pallas as pl
from jax.experimental.pallas import tpu as pltpu

# Keep f32 matmuls exact (affects both the in-kernel dots and the pure-JAX reference).
jax.config.update("jax_default_matmul_precision", "float32")


# ---------------------------------------------------------------------------
# Parameter setup (deterministic, plain numpy) — mirrors the PyTorch __init__.
# ---------------------------------------------------------------------------
def _warp(omega, alpha, theta):
    x = omega - theta
    y = omega + theta
    return (omega
            + np.arctan2(alpha * np.sin(x), 1 - alpha * np.cos(x))
            + np.arctan2(alpha * np.sin(y), 1 - alpha * np.cos(y)))


def _warp_deriv(omega, alpha, theta):
    x = omega - theta
    y = omega + theta
    return (1.0
            + (alpha * np.cos(x) - alpha ** 2) / (1 - 2 * alpha * np.cos(x) + alpha ** 2)
            + (alpha * np.cos(y) - alpha ** 2) / (1 - 2 * alpha * np.cos(y) + alpha ** 2))


def coefficients_freq_transform_matrix(in_order, out_order, alpha, theta, n_fft):
    """Exactly CoefficientsFrequencyTransform.__init__; returns A of shape (in+1, out+1)."""
    theta = theta * np.pi
    delta = 2 * np.pi / n_fft
    omega = np.arange(n_fft) * delta
    ww = _warp(omega, alpha, theta)
    m2 = np.arange(out_order + 1)
    wwm2 = ww.reshape(-1, 1) * m2.reshape(1, -1)
    real = np.cos(wwm2)
    imag = -np.sin(wwm2)
    M1 = in_order + 1
    A = np.fft.ifft(real + 1j * imag, axis=0).real
    if 2 <= M1:
        A[1:M1] += np.flip(A[-(M1 - 1):], axis=0)
    A = A[:M1]
    return A


def soap_freqt_matrix(in_order, out_order, alpha, theta, n_fft):
    """SecondOrderAllPassFrequencyTransform matrix (analytic reconstruction)."""
    th = theta * np.pi
    omega = np.arange(n_fft) * (2 * np.pi / n_fft)
    ww = _warp(omega, alpha, th)
    dw = _warp_deriv(omega, alpha, th)
    n = np.arange(in_order + 1)
    m = np.arange(out_order + 1)
    cn = np.cos(omega[:, None] * n[None, :])     # (K, in+1)
    cm = np.cos(ww[:, None] * m[None, :])        # (K, out+1)
    return (2.0 / n_fft) * np.einsum("k,kn,km->nm", dw, cn, cm)


def soap_ifreqt_matrix(in_order, out_order, alpha, theta, n_fft):
    """SecondOrderAllPassInverseFrequencyTransform matrix (analytic reconstruction)."""
    th = theta * np.pi
    omega = np.arange(n_fft) * (2 * np.pi / n_fft)
    ww = _warp(omega, alpha, th)
    m = np.arange(in_order + 1)
    n = np.arange(out_order + 1)
    wm = np.where(m == 0, 1.0, 2.0)
    eps = np.ones(out_order + 1)
    eps[0] = 0.5
    cm = np.cos(ww[:, None] * m[None, :])        # (K, in+1)
    cn = np.cos(omega[:, None] * n[None, :])     # (K, out+1)
    return (1.0 / n_fft) * np.einsum("m,km,kn,n->mn", wm, cm, cn, eps)


def _round_up(v, m):
    return ((v + m - 1) // m) * m


def build_smcep_params(cep_order, fft_length, alpha=0.0, theta=0.0, accuracy_factor=4):
    M, L = cep_order, fft_length
    H = L // 2
    H1, M1, T = H + 1, M + 1, 2 * M + 1
    n_big = L * accuracy_factor

    k = np.arange(H1)
    n = np.arange(H1)
    cos_kn = np.cos(2 * np.pi * np.outer(k, n) / L)           # (H+1, H+1), symmetric
    w_k = np.where((k == 0) | (k == H), 1.0, 2.0)             # Hermitian-fold weights
    v_n = np.where((n == 0) | (n == H), 0.5, 1.0)             # the two *0.5 scalings

    C2 = (w_k[:, None] * v_n[None, :] / L) * cos_kn           # irfft(log_x)[:H+1] + 0.5 scaling
    IRn = (w_k[:, None] / L) * cos_kn                         # irfft(d)[:H+1] (no scaling)
    RF = cos_kn                                               # rfft(c, n=L).real

    A_freqt = soap_freqt_matrix(H, M, alpha, theta, n_big)                        # (H+1, M+1)
    A_ifreqt = soap_ifreqt_matrix(M, H, alpha, theta, n_big)                      # (M+1, H+1)
    A_rfreqt = coefficients_freq_transform_matrix(H, 2 * M, alpha, theta, n_big)  # (H+1, 2M+1)
    alpha_vec = coefficients_freq_transform_matrix(0, M, alpha, theta, n_big)[0]  # (M+1,)

    W0 = C2 @ A_freqt            # (H1, M1)
    Wd = A_ifreqt @ RF           # (M1, H1)
    Grt = IRn @ A_rfreqt         # (H1, T)

    # Lane-dense padding (128-wide output columns -> unmasked stores, MXU-friendly).
    Mpad = max(128, _round_up(M1 + 1, 128))   # needs >= M1 + 1 lanes (augmented column)
    Tpad = max(128, _round_up(T, 128))

    W0p = np.zeros((H1, Mpad), np.float32); W0p[:, :M1] = W0
    Wdp = np.zeros((Mpad, H1), np.float32); Wdp[:M1, :] = Wd
    Grtp = np.zeros((H1, Tpad), np.float32); Grtp[:, :T] = Grt

    # S[i] maps rt -> augmented Newton row i:  [ (R+Q)[i, :M1] | r[i] ]
    #   (R+Q)[i,j] = rt[|i-j|] + rt[i+j],  r[i] = rt[i]
    S = np.zeros((M1, Tpad, Mpad), np.float32)
    for i in range(M1):
        for j in range(M1):
            S[i, abs(i - j), j] += 1.0
            S[i, i + j, j] += 1.0
        S[i, i, M1] += 1.0

    return dict(
        W0=jnp.asarray(W0p), Wd=jnp.asarray(Wdp), Grt=jnp.asarray(Grtp),
        S=jnp.asarray(S), alpha_np=np.asarray(alpha_vec, np.float64),
        M1=M1, H1=H1, Mpad=Mpad, Tpad=Tpad)


# ---------------------------------------------------------------------------
# Fused Pallas kernel: log + init matmul + full Newton loop (incl. small solve)
# ---------------------------------------------------------------------------
def _make_smcep_kernel(M1, Mpad, n_iter, alpha_np):
    alpha_f = [float(a) for a in np.asarray(alpha_np).ravel()]

    def kernel(x_ref, w0_ref, wd_ref, grt_ref, s_ref, mc_ref):
        logx = jnp.log(x_ref[...])                                              # (bb, H1)
        mc = jnp.dot(logx, w0_ref[...], preferred_element_type=jnp.float32)     # (bb, Mpad)

        lane = jax.lax.broadcasted_iota(jnp.int32, (1, Mpad), 1)
        e_aug = (lane == M1).astype(jnp.float32)                                # (1, Mpad)

        # NOTE: n_iter and M1 are small (demo: 2 and 4); loops are statically unrolled.
        for _ in range(n_iter):
            d_lin = jnp.dot(mc, wd_ref[...], preferred_element_type=jnp.float32)   # (bb, H1)
            d = jnp.exp(logx - 2.0 * d_lin)                                         # (bb, H1)
            rt = jnp.dot(d, grt_ref[...], preferred_element_type=jnp.float32)       # (bb, Tpad)

            # Build augmented rows [ (R+Q)[i,:] | r[i] - alpha[i] ] with one matmul each.
            rows = []
            for i in range(M1):
                row = jnp.dot(rt, s_ref[i], preferred_element_type=jnp.float32)     # (bb, Mpad)
                rows.append(row - alpha_f[i] * e_aug)

            # Batched pivot-free Gauss-Jordan solve of (R+Q) grad = ra on the VPU.
            # TODO(synk): torch.linalg.solve uses partial-pivoting LU; R+Q here is the
            # SPD-like Newton system, so unpivoted elimination is numerically adequate.
            for kk in range(M1):
                piv = rows[kk][:, kk:kk + 1]                                         # (bb, 1)
                rows[kk] = rows[kk] * (1.0 / piv)
                for i in range(M1):
                    if i != kk:
                        rows[i] = rows[i] - rows[i][:, kk:kk + 1] * rows[kk]

            grad = jnp.zeros_like(mc)
            for i in range(M1):
                grad = grad + rows[i][:, M1:M1 + 1] * (lane == i).astype(jnp.float32)
            mc = mc + grad

        mc_ref[...] = mc

    return kernel


def _choose_block_b(B, requested=None):
    if requested is not None:
        return max(8, _round_up(int(requested), 8))
    if B >= 16:
        # Large tiles, but keep >= 2 grid steps so v7x's two TensorCores both work.
        return min(512, _round_up((B + 1) // 2, 8))
    return _round_up(max(B, 1), 8)


def smcep_forward(x, params, n_iter, block_b=None):
    """x: (..., L/2+1) power spectrum -> mc: (..., M+1) mel-cepstrum."""
    W0, Wd, Grt, S = params["W0"], params["Wd"], params["Grt"], params["S"]
    M1, H1, Mpad, Tpad = params["M1"], params["H1"], params["Mpad"], params["Tpad"]

    lead = x.shape[:-1]
    x2 = jnp.asarray(x, jnp.float32).reshape(-1, x.shape[-1])
    B = x2.shape[0]
    assert x2.shape[1] == H1, "dimension of spectrum must be L/2+1"

    bb = _choose_block_b(B, block_b)
    Bp = _round_up(B, bb)
    if Bp != B:
        # Pad with a flat unit spectrum (log = 0): keeps the Newton system non-singular.
        x2 = jnp.concatenate([x2, jnp.ones((Bp - B, H1), jnp.float32)], axis=0)
    grid = (Bp // bb,)

    kernel = _make_smcep_kernel(M1, Mpad, n_iter, params["alpha_np"])

    # Explicit VMEM budget: double-buffered x/out blocks + weights + live intermediates.
    est = 4 * (2 * (bb * H1 + bb * Mpad)
               + 2 * (H1 * Mpad + Mpad * H1 + H1 * Tpad + M1 * Tpad * Mpad)
               + bb * (2 * H1 + (M1 + 4) * Mpad + Tpad))
    vmem_limit = int(min(64 * 2 ** 20, max(32 * 2 ** 20, 2 * est)))

    out = pl.pallas_call(
        kernel,
        out_shape=jax.ShapeDtypeStruct((Bp, Mpad), jnp.float32),
        grid_spec=pltpu.PrefetchScalarGridSpec(
            num_scalar_prefetch=0,
            grid=grid,
            in_specs=[
                pl.BlockSpec((bb, H1), lambda i: (i, 0)),          # x tile
                pl.BlockSpec((H1, Mpad), lambda i: (0, 0)),        # W0 (padded)
                pl.BlockSpec((Mpad, H1), lambda i: (0, 0)),        # Wd (padded)
                pl.BlockSpec((H1, Tpad), lambda i: (0, 0)),        # Grt (padded)
                pl.BlockSpec((M1, Tpad, Mpad), lambda i: (0, 0, 0)),  # S stack
            ],
            out_specs=pl.BlockSpec((bb, Mpad), lambda i: (i, 0)),  # lane-dense output
        ),
        compiler_params=pltpu.CompilerParams(
            dimension_semantics=("parallel",),
            vmem_limit_bytes=vmem_limit),
    )(x2, W0, Wd, Grt, S)

    mc = out[:B, :M1]
    return mc.reshape(lead + (M1,))


# ---------------------------------------------------------------------------
# Pure-JAX reference (direct translation of the torch forward, real FFTs)
# ---------------------------------------------------------------------------
def smcep_ref(x, cep_order, fft_length, alpha, theta, n_iter, accuracy_factor=4):
    M, L = cep_order, fft_length
    H = L // 2
    n_big = L * accuracy_factor
    A_freqt = jnp.asarray(soap_freqt_matrix(H, M, alpha, theta, n_big), jnp.float32)
    A_ifreqt = jnp.asarray(soap_ifreqt_matrix(M, H, alpha, theta, n_big), jnp.float32)
    A_rfreqt = jnp.asarray(coefficients_freq_transform_matrix(H, 2 * M, alpha, theta, n_big),
                           jnp.float32)
    alpha_vec = jnp.asarray(coefficients_freq_transform_matrix(0, M, alpha, theta, n_big)[0],
                            jnp.float32)
    log_x = jnp.log(x)
    c = jnp.fft.irfft(log_x, axis=-1)
    c = c.at[..., 0].multiply(0.5).at[..., H].multiply(0.5)
    mc = c[..., :H + 1] @ A_freqt
    idx = jnp.arange(M + 1)
    for _ in range(n_iter):
        ci = mc @ A_ifreqt
        d = jnp.fft.rfft(ci, n=L, axis=-1).real
        d = jnp.exp(log_x - d - d)
        rd = jnp.fft.irfft(d, axis=-1)
        rt = rd[..., :H + 1] @ A_rfreqt
        r = rt[..., :M + 1]
        ra = r - alpha_vec
        R = r[..., jnp.abs(idx[:, None] - idx[None, :])]
        Q = rt[..., idx[:, None] + idx[None, :]]
        grad = jnp.linalg.solve(R + Q, ra[..., None])[..., 0]
        mc = mc + grad
    return mc


if __name__ == "__main__":
    cep_order = 3        # M
    fft_length = 16      # L  (H = 8, spectrum length 9)
    alpha = 0.1
    theta = 0.3
    n_iter = 2
    B = 16               # frames
    H1 = fft_length // 2 + 1

    params = build_smcep_params(cep_order, fft_length, alpha, theta)

    key = jax.random.PRNGKey(0)
    sig = jax.random.normal(key, (B, fft_length), dtype=jnp.float32)
    x = (jnp.abs(jnp.fft.rfft(sig, axis=-1)) ** 2 + 1e-2).astype(jnp.float32)  # (B, H1)

    mc = smcep_forward(x, params, n_iter)
    mc = jax.block_until_ready(mc)

    assert mc.shape == (B, cep_order + 1) and mc.dtype == jnp.float32
    assert bool(jnp.all(jnp.isfinite(mc)))

    mc_ref = smcep_ref(x, cep_order, fft_length, alpha, theta, n_iter)
    assert bool(jnp.allclose(mc, mc_ref, rtol=1e-2, atol=1e-2)), (
        f"max abs diff {float(jnp.max(jnp.abs(mc - mc_ref)))}")

    print("KERNEL_OK")
</pallas_src>

<mosaic_0001>
module attributes {stable_mosaic.version = 11 : i64} {
  func.func @kernel(%arg0: i32, %arg1: memref<8x9xf32, #tpu.memory_space<vmem>>, %arg2: memref<9x128xf32, #tpu.memory_space<vmem>>, %arg3: memref<128x9xf32, #tpu.memory_space<vmem>>, %arg4: memref<9x128xf32, #tpu.memory_space<vmem>>, %arg5: memref<4x128x128xf32, #tpu.memory_space<vmem>>, %arg6: memref<8x128xf32, #tpu.memory_space<vmem>>) attributes {dimension_semantics = [#tpu.dimension_semantics<parallel>], iteration_bounds = array<i64: 2>, scalar_prefetch = 0 : i64, scratch_operands = 0 : i64, tpu.core_type = #tpu.core_type<tc>, window_params = [{transform_indices = @transform_0, window_bounds = array<i64: 8, 9>}, {pipeline_mode = #tpu.pipeline_mode<synchronous>, transform_indices = @transform_1, window_bounds = array<i64: 9, 128>}, {pipeline_mode = #tpu.pipeline_mode<synchronous>, transform_indices = @transform_2, window_bounds = array<i64: 128, 9>}, {pipeline_mode = #tpu.pipeline_mode<synchronous>, transform_indices = @transform_3, window_bounds = array<i64: 9, 128>}, {pipeline_mode = #tpu.pipeline_mode<synchronous>, transform_indices = @transform_4, window_bounds = array<i64: 4, 128, 128>}, {transform_indices = @transform_5, window_bounds = array<i64: 8, 128>}]} {
    %c0 = arith.constant 0 : index
    %c0_0 = arith.constant 0 : index
    %0 = vector.load %arg1[%c0, %c0_0] : memref<8x9xf32, #tpu.memory_space<vmem>>, vector<8x9xf32>
    %1 = math.log %0 : vector<8x9xf32>
    %c0_1 = arith.constant 0 : index
    %c0_2 = arith.constant 0 : index
    %2 = vector.load %arg2[%c0_1, %c0_2] : memref<9x128xf32, #tpu.memory_space<vmem>>, vector<9x128xf32>
    %cst = arith.constant dense<0.000000e+00> : vector<8x128xf32>
    %3 = tpu.matmul %1, %2, %cst {dimension_numbers = #tpu.dot_dimension_numbers<[1], [0], [0], [1], [0, 0, 1, 1], [], []>, precision = #tpu.contract_precision<fp32>} : vector<8x9xf32>, vector<9x128xf32>, vector<8x128xf32> -> vector<8x128xf32>
    %4 = tpu.iota {dimensions = array<i32: 1>} : vector<1x128xi32>
    %c4_i32 = arith.constant 4 : i32
    %5 = vector.broadcast %c4_i32 : i32 to vector<1x128xi32>
    %6 = arith.cmpi eq, %4, %5 : vector<1x128xi32>
    %7 = arith.extui %6 : vector<1x128xi1> to vector<1x128xi32>
    %8 = arith.sitofp %7 : vector<1x128xi32> to vector<1x128xf32>
    %c0_3 = arith.constant 0 : index
    %c0_4 = arith.constant 0 : index
    %9 = vector.load %arg3[%c0_3, %c0_4] : memref<128x9xf32, #tpu.memory_space<vmem>>, vector<128x9xf32>
    %cst_5 = arith.constant dense<0.000000e+00> : vector<8x9xf32>
    %10 = tpu.matmul %3, %9, %cst_5 {dimension_numbers = #tpu.dot_dimension_numbers<[1], [0], [0], [1], [0, 0, 1, 1], [], []>, precision = #tpu.contract_precision<fp32>} : vector<8x128xf32>, vector<128x9xf32>, vector<8x9xf32> -> vector<8x9xf32>
    %cst_6 = arith.constant 2.000000e+00 : f32
    %11 = vector.broadcast %cst_6 : f32 to vector<8x9xf32>
    %12 = arith.mulf %11, %10 : vector<8x9xf32>
    %13 = arith.subf %1, %12 : vector<8x9xf32>
    %14 = math.exp %13 : vector<8x9xf32>
    %c0_7 = arith.constant 0 : index
    %c0_8 = arith.constant 0 : index
    %15 = vector.load %arg4[%c0_7, %c0_8] : memref<9x128xf32, #tpu.memory_space<vmem>>, vector<9x128xf32>
    %cst_9 = arith.constant dense<0.000000e+00> : vector<8x128xf32>
    %16 = tpu.matmul %14, %15, %cst_9 {dimension_numbers = #tpu.dot_dimension_numbers<[1], [0], [0], [1], [0, 0, 1, 1], [], []>, precision = #tpu.contract_precision<fp32>} : vector<8x9xf32>, vector<9x128xf32>, vector<8x128xf32> -> vector<8x128xf32>
    %c0_10 = arith.constant 0 : index
    %c0_11 = arith.constant 0 : index
    %c0_12 = arith.constant 0 : index
    %17 = vector.load %arg5[%c0_10, %c0_11, %c0_12] : memref<4x128x128xf32, #tpu.memory_space<vmem>>, vector<1x128x128xf32>
    %18 = vector.shape_cast %17 : vector<1x128x128xf32> to vector<128x128xf32>
    %cst_13 = arith.constant dense<0.000000e+00> : vector<8x128xf32>
    %19 = tpu.matmul %16, %18, %cst_13 {dimension_numbers = #tpu.dot_dimension_numbers<[1], [0], [0], [1], [0, 0, 1, 1], [], []>, precision = #tpu.contract_precision<fp32>} : vector<8x128xf32>, vector<128x128xf32>, vector<8x128xf32> -> vector<8x128xf32>
    %cst_14 = arith.constant 1.000000e+00 : f32
    %20 = vector.broadcast %cst_14 : f32 to vector<1x128xf32>
    %21 = arith.mulf %20, %8 : vector<1x128xf32>
    %22 = vector.broadcast %21 : vector<1x128xf32> to vector<8x128xf32>
    %23 = arith.subf %19, %22 : vector<8x128xf32>
    %c1 = arith.constant 1 : index
    %c0_15 = arith.constant 0 : index
    %c0_16 = arith.constant 0 : index
    %24 = vector.load %arg5[%c1, %c0_15, %c0_16] : memref<4x128x128xf32, #tpu.memory_space<vmem>>, vector<1x128x128xf32>
    %25 = vector.shape_cast %24 : vector<1x128x128xf32> to vector<128x128xf32>
    %cst_17 = arith.constant dense<0.000000e+00> : vector<8x128xf32>
    %26 = tpu.matmul %16, %25, %cst_17 {dimension_numbers = #tpu.dot_dimension_numbers<[1], [0], [0], [1], [0, 0, 1, 1], [], []>, precision = #tpu.contract_precision<fp32>} : vector<8x128xf32>, vector<128x128xf32>, vector<8x128xf32> -> vector<8x128xf32>
    %cst_18 = arith.constant -0.0585861355 : f32
    %27 = vector.broadcast %cst_18 : f32 to vector<1x128xf32>
    %28 = arith.mulf %27, %8 : vector<1x128xf32>
    %29 = vector.broadcast %28 : vector<1x128xf32> to vector<8x128xf32>
    %30 = arith.subf %26, %29 : vector<8x128xf32>
    %c2 = arith.constant 2 : index
    %c0_19 = arith.constant 0 : index
    %c0_20 = arith.constant 0 : index
    %31 = vector.load %arg5[%c2, %c0_19, %c0_20] : memref<4x128x128xf32, #tpu.memory_space<vmem>>, vector<1x128x128xf32>
    %32 = vector.shape_cast %31 : vector<1x128x128xf32> to vector<128x128xf32>
    %cst_21 = arith.constant dense<0.000000e+00> : vector<8x128xf32>
    %33 = tpu.matmul %16, %32, %cst_21 {dimension_numbers = #tpu.dot_dimension_numbers<[1], [0], [0], [1], [0, 0, 1, 1], [], []>, precision = #tpu.contract_precision<fp32>} : vector<8x128xf32>, vector<128x128xf32>, vector<8x128xf32> -> vector<8x128xf32>
    %cst_22 = arith.constant 0.00999999977 : f32
    %34 = vector.broadcast %cst_22 : f32 to vector<1x128xf32>
    %35 = arith.mulf %34, %8 : vector<1x128xf32>
    %36 = vector.broadcast %35 : vector<1x128xf32> to vector<8x128xf32>
    %37 = arith.subf %33, %36 : vector<8x128xf32>
    %c3 = arith.constant 3 : index
    %c0_23 = arith.constant 0 : index
    %c0_24 = arith.constant 0 : index
    %38 = vector.load %arg5[%c3, %c0_23, %c0_24] : memref<4x128x128xf32, #tpu.memory_space<vmem>>, vector<1x128x128xf32>
    %39 = vector.shape_cast %38 : vector<1x128x128xf32> to vector<128x128xf32>
    %cst_25 = arith.constant dense<0.000000e+00> : vector<8x128xf32>
    %40 = tpu.matmul %16, %39, %cst_25 {dimension_numbers = #tpu.dot_dimension_numbers<[1], [0], [0], [1], [0, 0, 1, 1], [], []>, precision = #tpu.contract_precision<fp32>} : vector<8x128xf32>, vector<128x128xf32>, vector<8x128xf32> -> vector<8x128xf32>
    %cst_26 = arith.constant -7.77297479E-4 : f32
    %41 = vector.broadcast %cst_26 : f32 to vector<1x128xf32>
    %42 = arith.mulf %41, %8 : vector<1x128xf32>
    %43 = vector.broadcast %42 : vector<1x128xf32> to vector<8x128xf32>
    %44 = arith.subf %40, %43 : vector<8x128xf32>
    %45 = vector.extract_strided_slice %23 {offsets = [0, 0], sizes = [8, 1], strides = [1, 1]} : vector<8x128xf32> to vector<8x1xf32>
    %cst_27 = arith.constant 1.000000e+00 : f32
    %46 = vector.broadcast %cst_27 : f32 to vector<8x1xf32>
    %47 = arith.divf %46, %45 : vector<8x1xf32>
    %48 = vector.broadcast %47 : vector<8x1xf32> to vector<8x128xf32>
    %49 = arith.mulf %23, %48 : vector<8x128xf32>
    %50 = vector.extract_strided_slice %30 {offsets = [0, 0], sizes = [8, 1], strides = [1, 1]} : vector<8x128xf32> to vector<8x1xf32>
    %51 = vector.broadcast %50 : vector<8x1xf32> to vector<8x128xf32>
    %52 = arith.mulf %51, %49 : vector<8x128xf32>
    %53 = arith.subf %30, %52 : vector<8x128xf32>
    %54 = vector.extract_strided_slice %37 {offsets = [0, 0], sizes = [8, 1], strides = [1, 1]} : vector<8x128xf32> to vector<8x1xf32>
    %55 = vector.broadcast %54 : vector<8x1xf32> to vector<8x128xf32>
    %56 = arith.mulf %55, %49 : vector<8x128xf32>
    %57 = arith.subf %37, %56 : vector<8x128xf32>
    %58 = vector.extract_strided_slice %44 {offsets = [0, 0], sizes = [8, 1], strides = [1, 1]} : vector<8x128xf32> to vector<8x1xf32>
    %59 = vector.broadcast %58 : vector<8x1xf32> to vector<8x128xf32>
    %60 = arith.mulf %59, %49 : vector<8x128xf32>
    %61 = arith.subf %44, %60 : vector<8x128xf32>
    %62 = vector.extract_strided_slice %53 {offsets = [0, 1], sizes = [8, 1], strides = [1, 1]} : vector<8x128xf32> to vector<8x1xf32>
    %cst_28 = arith.constant 1.000000e+00 : f32
    %63 = vector.broadcast %cst_28 : f32 to vector<8x1xf32>
    %64 = arith.divf %63, %62 : vector<8x1xf32>
    %65 = vector.broadcast %64 : vector<8x1xf32> to vector<8x128xf32>
    %66 = arith.mulf %53, %65 : vector<8x128xf32>
    %67 = vector.extract_strided_slice %49 {offsets = [0, 1], sizes = [8, 1], strides = [1, 1]} : vector<8x128xf32> to vector<8x1xf32>
    %68 = vector.broadcast %67 : vector<8x1xf32> to vector<8x128xf32>
    %69 = arith.mulf %68, %66 : vector<8x128xf32>
    %70 = arith.subf %49, %69 : vector<8x128xf32>
    %71 = vector.extract_strided_slice %57 {offsets = [0, 1], sizes = [8, 1], strides = [1, 1]} : vector<8x128xf32> to vector<8x1xf32>
    %72 = vector.broadcast %71 : vector<8x1xf32> to vector<8x128xf32>
    %73 = arith.mulf %72, %66 : vector<8x128xf32>
    %74 = arith.subf %57, %73 : vector<8x128xf32>
    %75 = vector.extract_strided_slice %61 {offsets = [0, 1], sizes = [8, 1], strides = [1, 1]} : vector<8x128xf32> to vector<8x1xf32>
    %76 = vector.broadcast %75 : vector<8x1xf32> to vector<8x128xf32>
    %77 = arith.mulf %76, %66 : vector<8x128xf32>
    %78 = arith.subf %61, %77 : vector<8x128xf32>
    %79 = vector.extract_strided_slice %74 {offsets = [0, 2], sizes = [8, 1], strides = [1, 1]} : vector<8x128xf32> to vector<8x1xf32>
    %cst_29 = arith.constant 1.000000e+00 : f32
    %80 = vector.broadcast %cst_29 : f32 to vector<8x1xf32>
    %81 = arith.divf %80, %79 : vector<8x1xf32>
    %82 = vector.broadcast %81 : vector<8x1xf32> to vector<8x128xf32>
    %83 = arith.mulf %74, %82 : vector<8x128xf32>
    %84 = vector.extract_strided_slice %70 {offsets = [0, 2], sizes = [8, 1], strides = [1, 1]} : vector<8x128xf32> to vector<8x1xf32>
    %85 = vector.broadcast %84 : vector<8x1xf32> to vector<8x128xf32>
    %86 = arith.mulf %85, %83 : vector<8x128xf32>
    %87 = arith.subf %70, %86 : vector<8x128xf32>
    %88 = vector.extract_strided_slice %66 {offsets = [0, 2], sizes = [8, 1], strides = [1, 1]} : vector<8x128xf32> to vector<8x1xf32>
    %89 = vector.broadcast %88 : vector<8x1xf32> to vector<8x128xf32>
    %90 = arith.mulf %89, %83 : vector<8x128xf32>
    %91 = arith.subf %66, %90 : vector<8x128xf32>
    %92 = vector.extract_strided_slice %78 {offsets = [0, 2], sizes = [8, 1], strides = [1, 1]} : vector<8x128xf32> to vector<8x1xf32>
    %93 = vector.broadcast %92 : vector<8x1xf32> to vector<8x128xf32>
    %94 = arith.mulf %93, %83 : vector<8x128xf32>
    %95 = arith.subf %78, %94 : vector<8x128xf32>
    %96 = vector.extract_strided_slice %95 {offsets = [0, 3], sizes = [8, 1], strides = [1, 1]} : vector<8x128xf32> to vector<8x1xf32>
    %cst_30 = arith.constant 1.000000e+00 : f32
    %97 = vector.broadcast %cst_30 : f32 to vector<8x1xf32>
    %98 = arith.divf %97, %96 : vector<8x1xf32>
    %99 = vector.broadcast %98 : vector<8x1xf32> to vector<8x128xf32>
    %100 = arith.mulf %95, %99 : vector<8x128xf32>
    %101 = vector.extract_strided_slice %87 {offsets = [0, 3], sizes = [8, 1], strides = [1, 1]} : vector<8x128xf32> to vector<8x1xf32>
    %102 = vector.broadcast %101 : vector<8x1xf32> to vector<8x128xf32>
    %103 = arith.mulf %102, %100 : vector<8x128xf32>
    %104 = arith.subf %87, %103 : vector<8x128xf32>
    %105 = vector.extract_strided_slice %91 {offsets = [0, 3], sizes = [8, 1], strides = [1, 1]} : vector<8x128xf32> to vector<8x1xf32>
    %106 = vector.broadcast %105 : vector<8x1xf32> to vector<8x128xf32>
    %107 = arith.mulf %106, %100 : vector<8x128xf32>
    %108 = arith.subf %91, %107 : vector<8x128xf32>
    %109 = vector.extract_strided_slice %83 {offsets = [0, 3], sizes = [8, 1], strides = [1, 1]} : vector<8x128xf32> to vector<8x1xf32>
    %110 = vector.broadcast %109 : vector<8x1xf32> to vector<8x128xf32>
    %111 = arith.mulf %110, %100 : vector<8x128xf32>
    %112 = arith.subf %83, %111 : vector<8x128xf32>
    %cst_31 = arith.constant 0.000000e+00 : f32
    %113 = vector.broadcast %cst_31 : f32 to vector<8x128xf32>
    %114 = vector.extract_strided_slice %104 {offsets = [0, 4], sizes = [8, 1], strides = [1, 1]} : vector<8x128xf32> to vector<8x1xf32>
    %c0_i32 = arith.constant 0 : i32
    %115 = vector.broadcast %c0_i32 : i32 to vector<1x128xi32>
    %116 = arith.cmpi eq, %4, %115 : vector<1x128xi32>
    %117 = arith.extui %116 : vector<1x128xi1> to vector<1x128xi32>
    %118 = arith.sitofp %117 : vector<1x128xi32> to vector<1x128xf32>
    %119 = vector.broadcast %114 : vector<8x1xf32> to vector<8x128xf32>
    %120 = vector.broadcast %118 : vector<1x128xf32> to vector<8x128xf32>
    %121 = arith.mulf %119, %120 : vector<8x128xf32>
    %122 = arith.addf %113, %121 : vector<8x128xf32>
    %123 = vector.extract_strided_slice %108 {offsets = [0, 4], sizes = [8, 1], strides = [1, 1]} : vector<8x128xf32> to vector<8x1xf32>
    %c1_i32 = arith.constant 1 : i32
    %124 = vector.broadcast %c1_i32 : i32 to vector<1x128xi32>
    %125 = arith.cmpi eq, %4, %124 : vector<1x128xi32>
    %126 = arith.extui %125 : vector<1x128xi1> to vector<1x128xi32>
    %127 = arith.sitofp %126 : vector<1x128xi32> to vector<1x128xf32>
    %128 = vector.broadcast %123 : vector<8x1xf32> to vector<8x128xf32>
    %129 = vector.broadcast %127 : vector<1x128xf32> to vector<8x128xf32>
    %130 = arith.mulf %128, %129 : vector<8x128xf32>
    %131 = arith.addf %122, %130 : vector<8x128xf32>
    %132 = vector.extract_strided_slice %112 {offsets = [0, 4], sizes = [8, 1], strides = [1, 1]} : vector<8x128xf32> to vector<8x1xf32>
    %c2_i32 = arith.constant 2 : i32
    %133 = vector.broadcast %c2_i32 : i32 to vector<1x128xi32>
    %134 = arith.cmpi eq, %4, %133 : vector<1x128xi32>
    %135 = arith.extui %134 : vector<1x128xi1> to vector<1x128xi32>
    %136 = arith.sitofp %135 : vector<1x128xi32> to vector<1x128xf32>
    %137 = vector.broadcast %132 : vector<8x1xf32> to vector<8x128xf32>
    %138 = vector.broadcast %136 : vector<1x128xf32> to vector<8x128xf32>
    %139 = arith.mulf %137, %138 : vector<8x128xf32>
    %140 = arith.addf %131, %139 : vector<8x128xf32>
    %141 = vector.extract_strided_slice %100 {offsets = [0, 4], sizes = [8, 1], strides = [1, 1]} : vector<8x128xf32> to vector<8x1xf32>
    %c3_i32 = arith.constant 3 : i32
    %142 = vector.broadcast %c3_i32 : i32 to vector<1x128xi32>
    %143 = arith.cmpi eq, %4, %142 : vector<1x128xi32>
    %144 = arith.extui %143 : vector<1x128xi1> to vector<1x128xi32>
    %145 = arith.sitofp %144 : vector<1x128xi32> to vector<1x128xf32>
    %146 = vector.broadcast %141 : vector<8x1xf32> to vector<8x128xf32>
    %147 = vector.broadcast %145 : vector<1x128xf32> to vector<8x128xf32>
    %148 = arith.mulf %146, %147 : vector<8x128xf32>
    %149 = arith.addf %140, %148 : vector<8x128xf32>
    %150 = arith.addf %3, %149 : vector<8x128xf32>
    %c0_32 = arith.constant 0 : index
    %c0_33 = arith.constant 0 : index
    %151 = vector.load %arg3[%c0_32, %c0_33] : memref<128x9xf32, #tpu.memory_space<vmem>>, vector<128x9xf32>
    %cst_34 = arith.constant dense<0.000000e+00> : vector<8x9xf32>
    %152 = tpu.matmul %150, %151, %cst_34 {dimension_numbers = #tpu.dot_dimension_numbers<[1], [0], [0], [1], [0, 0, 1, 1], [], []>, precision = #tpu.contract_precision<fp32>} : vector<8x128xf32>, vector<128x9xf32>, vector<8x9xf32> -> vector<8x9xf32>
    %cst_35 = arith.constant 2.000000e+00 : f32
    %153 = vector.broadcast %cst_35 : f32 to vector<8x9xf32>
    %154 = arith.mulf %153, %152 : vector<8x9xf32>
    %155 = arith.subf %1, %154 : vector<8x9xf32>
    %156 = math.exp %155 : vector<8x9xf32>
    %c0_36 = arith.constant 0 : index
    %c0_37 = arith.constant 0 : index
    %157 = vector.load %arg4[%c0_36, %c0_37] : memref<9x128xf32, #tpu.memory_space<vmem>>, vector<9x128xf32>
    %cst_38 = arith.constant dense<0.000000e+00> : vector<8x128xf32>
    %158 = tpu.matmul %156, %157, %cst_38 {dimension_numbers = #tpu.dot_dimension_numbers<[1], [0], [0], [1], [0, 0, 1, 1], [], []>, precision = #tpu.contract_precision<fp32>} : vector<8x9xf32>, vector<9x128xf32>, vector<8x128xf32> -> vector<8x128xf32>
    %c0_39 = arith.constant 0 : index
    %c0_40 = arith.constant 0 : index
    %c0_41 = arith.constant 0 : index
    %159 = vector.load %arg5[%c0_39, %c0_40, %c0_41] : memref<4x128x128xf32, #tpu.memory_space<vmem>>, vector<1x128x128xf32>
    %160 = vector.shape_cast %159 : vector<1x128x128xf32> to vector<128x128xf32>
    %cst_42 = arith.constant dense<0.000000e+00> : vector<8x128xf32>
    %161 = tpu.matmul %158, %160, %cst_42 {dimension_numbers = #tpu.dot_dimension_numbers<[1], [0], [0], [1], [0, 0, 1, 1], [], []>, precision = #tpu.contract_precision<fp32>} : vector<8x128xf32>, vector<128x128xf32>, vector<8x128xf32> -> vector<8x128xf32>
    %cst_43 = arith.constant 1.000000e+00 : f32
    %162 = vector.broadcast %cst_43 : f32 to vector<1x128xf32>
    %163 = arith.mulf %162, %8 : vector<1x128xf32>
    %164 = vector.broadcast %163 : vector<1x128xf32> to vector<8x128xf32>
    %165 = arith.subf %161, %164 : vector<8x128xf32>
    %c1_44 = arith.constant 1 : index
    %c0_45 = arith.constant 0 : index
    %c0_46 = arith.constant 0 : index
    %166 = vector.load %arg5[%c1_44, %c0_45, %c0_46] : memref<4x128x128xf32, #tpu.memory_space<vmem>>, vector<1x128x128xf32>
    %167 = vector.shape_cast %166 : vector<1x128x128xf32> to vector<128x128xf32>
    %cst_47 = arith.constant dense<0.000000e+00> : vector<8x128xf32>
    %168 = tpu.matmul %158, %167, %cst_47 {dimension_numbers = #tpu.dot_dimension_numbers<[1], [0], [0], [1], [0, 0, 1, 1], [], []>, precision = #tpu.contract_precision<fp32>} : vector<8x128xf32>, vector<128x128xf32>, vector<8x128xf32> -> vector<8x128xf32>
    %cst_48 = arith.constant -0.0585861355 : f32
    %169 = vector.broadcast %cst_48 : f32 to vector<1x128xf32>
    %170 = arith.mulf %169, %8 : vector<1x128xf32>
    %171 = vector.broadcast %170 : vector<1x128xf32> to vector<8x128xf32>
    %172 = arith.subf %168, %171 : vector<8x128xf32>
    %c2_49 = arith.constant 2 : index
    %c0_50 = arith.constant 0 : index
    %c0_51 = arith.constant 0 : index
    %173 = vector.load %arg5[%c2_49, %c0_50, %c0_51] : memref<4x128x128xf32, #tpu.memory_space<vmem>>, vector<1x128x128xf32>
    %174 = vector.shape_cast %173 : vector<1x128x128xf32> to vector<128x128xf32>
    %cst_52 = arith.constant dense<0.000000e+00> : vector<8x128xf32>
    %175 = tpu.matmul %158, %174, %cst_52 {dimension_numbers = #tpu.dot_dimension_numbers<[1], [0], [0], [1], [0, 0, 1, 1], [], []>, precision = #tpu.contract_precision<fp32>} : vector<8x128xf32>, vector<128x128xf32>, vector<8x128xf32> -> vector<8x128xf32>
    %cst_53 = arith.constant 0.00999999977 : f32
    %176 = vector.broadcast %cst_53 : f32 to vector<1x128xf32>
    %177 = arith.mulf %176, %8 : vector<1x128xf32>
    %178 = vector.broadcast %177 : vector<1x128xf32> to vector<8x128xf32>
    %179 = arith.subf %175, %178 : vector<8x128xf32>
    %c3_54 = arith.constant 3 : index
    %c0_55 = arith.constant 0 : index
    %c0_56 = arith.constant 0 : index
    %180 = vector.load %arg5[%c3_54, %c0_55, %c0_56] : memref<4x128x128xf32, #tpu.memory_space<vmem>>, vector<1x128x128xf32>
    %181 = vector.shape_cast %180 : vector<1x128x128xf32> to vector<128x128xf32>
    %cst_57 = arith.constant dense<0.000000e+00> : vector<8x128xf32>
    %182 = tpu.matmul %158, %181, %cst_57 {dimension_numbers = #tpu.dot_dimension_numbers<[1], [0], [0], [1], [0, 0, 1, 1], [], []>, precision = #tpu.contract_precision<fp32>} : vector<8x128xf32>, vector<128x128xf32>, vector<8x128xf32> -> vector<8x128xf32>
    %cst_58 = arith.constant -7.77297479E-4 : f32
    %183 = vector.broadcast %cst_58 : f32 to vector<1x128xf32>
    %184 = arith.mulf %183, %8 : vector<1x128xf32>
    %185 = vector.broadcast %184 : vector<1x128xf32> to vector<8x128xf32>
    %186 = arith.subf %182, %185 : vector<8x128xf32>
    %187 = vector.extract_strided_slice %165 {offsets = [0, 0], sizes = [8, 1], strides = [1, 1]} : vector<8x128xf32> to vector<8x1xf32>
    %cst_59 = arith.constant 1.000000e+00 : f32
    %188 = vector.broadcast %cst_59 : f32 to vector<8x1xf32>
    %189 = arith.divf %188, %187 : vector<8x1xf32>
    %190 = vector.broadcast %189 : vector<8x1xf32> to vector<8x128xf32>
    %191 = arith.mulf %165, %190 : vector<8x128xf32>
    %192 = vector.extract_strided_slice %172 {offsets = [0, 0], sizes = [8, 1], strides = [1, 1]} : vector<8x128xf32> to vector<8x1xf32>
    %193 = vector.broadcast %192 : vector<8x1xf32> to vector<8x128xf32>
    %194 = arith.mulf %193, %191 : vector<8x128xf32>
    %195 = arith.subf %172, %194 : vector<8x128xf32>
    %196 = vector.extract_strided_slice %179 {offsets = [0, 0], sizes = [8, 1], strides = [1, 1]} : vector<8x128xf32> to vector<8x1xf32>
    %197 = vector.broadcast %196 : vector<8x1xf32> to vector<8x128xf32>
    %198 = arith.mulf %197, %191 : vector<8x128xf32>
    %199 = arith.subf %179, %198 : vector<8x128xf32>
    %200 = vector.extract_strided_slice %186 {offsets = [0, 0], sizes = [8, 1], strides = [1, 1]} : vector<8x128xf32> to vector<8x1xf32>
    %201 = vector.broadcast %200 : vector<8x1xf32> to vector<8x128xf32>
    %202 = arith.mulf %201, %191 : vector<8x128xf32>
    %203 = arith.subf %186, %202 : vector<8x128xf32>
    %204 = vector.extract_strided_slice %195 {offsets = [0, 1], sizes = [8, 1], strides = [1, 1]} : vector<8x128xf32> to vector<8x1xf32>
    %cst_60 = arith.constant 1.000000e+00 : f32
    %205 = vector.broadcast %cst_60 : f32 to vector<8x1xf32>
    %206 = arith.divf %205, %204 : vector<8x1xf32>
    %207 = vector.broadcast %206 : vector<8x1xf32> to vector<8x128xf32>
    %208 = arith.mulf %195, %207 : vector<8x128xf32>
    %209 = vector.extract_strided_slice %191 {offsets = [0, 1], sizes = [8, 1], strides = [1, 1]} : vector<8x128xf32> to vector<8x1xf32>
    %210 = vector.broadcast %209 : vector<8x1xf32> to vector<8x128xf32>
    %211 = arith.mulf %210, %208 : vector<8x128xf32>
    %212 = arith.subf %191, %211 : vector<8x128xf32>
    %213 = vector.extract_strided_slice %199 {offsets = [0, 1], sizes = [8, 1], strides = [1, 1]} : vector<8x128xf32> to vector<8x1xf32>
    %214 = vector.broadcast %213 : vector<8x1xf32> to vector<8x128xf32>
    %215 = arith.mulf %214, %208 : vector<8x128xf32>
    %216 = arith.subf %199, %215 : vector<8x128xf32>
    %217 = vector.extract_strided_slice %203 {offsets = [0, 1], sizes = [8, 1], strides = [1, 1]} : vector<8x128xf32> to vector<8x1xf32>
    %218 = vector.broadcast %217 : vector<8x1xf32> to vector<8x128xf32>
    %219 = arith.mulf %218, %208 : vector<8x128xf32>
    %220 = arith.subf %203, %219 : vector<8x128xf32>
    %221 = vector.extract_strided_slice %216 {offsets = [0, 2], sizes = [8, 1], strides = [1, 1]} : vector<8x128xf32> to vector<8x1xf32>
    %cst_61 = arith.constant 1.000000e+00 : f32
    %222 = vector.broadcast %cst_61 : f32 to vector<8x1xf32>
    %223 = arith.divf %222, %221 : vector<8x1xf32>
    %224 = vector.broadcast %223 : vector<8x1xf32> to vector<8x128xf32>
    %225 = arith.mulf %216, %224 : vector<8x128xf32>
    %226 = vector.extract_strided_slice %212 {offsets = [0, 2], sizes = [8, 1], strides = [1, 1]} : vector<8x128xf32> to vector<8x1xf32>
    %227 = vector.broadcast %226 : vector<8x1xf32> to vector<8x128xf32>
    %228 = arith.mulf %227, %225 : vector<8x128xf32>
    %229 = arith.subf %212, %228 : vector<8x128xf32>
    %230 = vector.extract_strided_slice %208 {offsets = [0, 2], sizes = [8, 1], strides = [1, 1]} : vector<8x128xf32> to vector<8x1xf32>
    %231 = vector.broadcast %230 : vector<8x1xf32> to vector<8x128xf32>
    %232 = arith.mulf %231, %225 : vector<8x128xf32>
    %233 = arith.subf %208, %232 : vector<8x128xf32>
    %234 = vector.extract_strided_slice %220 {offsets = [0, 2], sizes = [8, 1], strides = [1, 1]} : vector<8x128xf32> to vector<8x1xf32>
    %235 = vector.broadcast %234 : vector<8x1xf32> to vector<8x128xf32>
    %236 = arith.mulf %235, %225 : vector<8x128xf32>
    %237 = arith.subf %220, %236 : vector<8x128xf32>
    %238 = vector.extract_strided_slice %237 {offsets = [0, 3], sizes = [8, 1], strides = [1, 1]} : vector<8x128xf32> to vector<8x1xf32>
    %cst_62 = arith.constant 1.000000e+00 : f32
    %239 = vector.broadcast %cst_62 : f32 to vector<8x1xf32>
    %240 = arith.divf %239, %238 : vector<8x1xf32>
    %241 = vector.broadcast %240 : vector<8x1xf32> to vector<8x128xf32>
    %242 = arith.mulf %237, %241 : vector<8x128xf32>
    %243 = vector.extract_strided_slice %229 {offsets = [0, 3], sizes = [8, 1], strides = [1, 1]} : vector<8x128xf32> to vector<8x1xf32>
    %244 = vector.broadcast %243 : vector<8x1xf32> to vector<8x128xf32>
    %245 = arith.mulf %244, %242 : vector<8x128xf32>
    %246 = arith.subf %229, %245 : vector<8x128xf32>
    %247 = vector.extract_strided_slice %233 {offsets = [0, 3], sizes = [8, 1], strides = [1, 1]} : vector<8x128xf32> to vector<8x1xf32>
    %248 = vector.broadcast %247 : vector<8x1xf32> to vector<8x128xf32>
    %249 = arith.mulf %248, %242 : vector<8x128xf32>
    %250 = arith.subf %233, %249 : vector<8x128xf32>
    %251 = vector.extract_strided_slice %225 {offsets = [0, 3], sizes = [8, 1], strides = [1, 1]} : vector<8x128xf32> to vector<8x1xf32>
    %252 = vector.broadcast %251 : vector<8x1xf32> to vector<8x128xf32>
    %253 = arith.mulf %252, %242 : vector<8x128xf32>
    %254 = arith.subf %225, %253 : vector<8x128xf32>
    %cst_63 = arith.constant 0.000000e+00 : f32
    %255 = vector.broadcast %cst_63 : f32 to vector<8x128xf32>
    %256 = vector.extract_strided_slice %246 {offsets = [0, 4], sizes = [8, 1], strides = [1, 1]} : vector<8x128xf32> to vector<8x1xf32>
    %c0_i32_64 = arith.constant 0 : i32
    %257 = vector.broadcast %c0_i32_64 : i32 to vector<1x128xi32>
    %258 = arith.cmpi eq, %4, %257 : vector<1x128xi32>
    %259 = arith.extui %258 : vector<1x128xi1> to vector<1x128xi32>
    %260 = arith.sitofp %259 : vector<1x128xi32> to vector<1x128xf32>
    %261 = vector.broadcast %256 : vector<8x1xf32> to vector<8x128xf32>
    %262 = vector.broadcast %260 : vector<1x128xf32> to vector<8x128xf32>
    %263 = arith.mulf %261, %262 : vector<8x128xf32>
    %264 = arith.addf %255, %263 : vector<8x128xf32>
    %265 = vector.extract_strided_slice %250 {offsets = [0, 4], sizes = [8, 1], strides = [1, 1]} : vector<8x128xf32> to vector<8x1xf32>
    %c1_i32_65 = arith.constant 1 : i32
    %266 = vector.broadcast %c1_i32_65 : i32 to vector<1x128xi32>
    %267 = arith.cmpi eq, %4, %266 : vector<1x128xi32>
    %268 = arith.extui %267 : vector<1x128xi1> to vector<1x128xi32>
    %269 = arith.sitofp %268 : vector<1x128xi32> to vector<1x128xf32>
    %270 = vector.broadcast %265 : vector<8x1xf32> to vector<8x128xf32>
    %271 = vector.broadcast %269 : vector<1x128xf32> to vector<8x128xf32>
    %272 = arith.mulf %270, %271 : vector<8x128xf32>
    %273 = arith.addf %264, %272 : vector<8x128xf32>
    %274 = vector.extract_strided_slice %254 {offsets = [0, 4], sizes = [8, 1], strides = [1, 1]} : vector<8x128xf32> to vector<8x1xf32>
    %c2_i32_66 = arith.constant 2 : i32
    %275 = vector.broadcast %c2_i32_66 : i32 to vector<1x128xi32>
    %276 = arith.cmpi eq, %4, %275 : vector<1x128xi32>
    %277 = arith.extui %276 : vector<1x128xi1> to vector<1x128xi32>
    %278 = arith.sitofp %277 : vector<1x128xi32> to vector<1x128xf32>
    %279 = vector.broadcast %274 : vector<8x1xf32> to vector<8x128xf32>
    %280 = vector.broadcast %278 : vector<1x128xf32> to vector<8x128xf32>
    %281 = arith.mulf %279, %280 : vector<8x128xf32>
    %282 = arith.addf %273, %281 : vector<8x128xf32>
    %283 = vector.extract_strided_slice %242 {offsets = [0, 4], sizes = [8, 1], strides = [1, 1]} : vector<8x128xf32> to vector<8x1xf32>
    %c3_i32_67 = arith.constant 3 : i32
    %284 = vector.broadcast %c3_i32_67 : i32 to vector<1x128xi32>
    %285 = arith.cmpi eq, %4, %284 : vector<1x128xi32>
    %286 = arith.extui %285 : vector<1x128xi1> to vector<1x128xi32>
    %287 = arith.sitofp %286 : vector<1x128xi32> to vector<1x128xf32>
    %288 = vector.broadcast %283 : vector<8x1xf32> to vector<8x128xf32>
    %289 = vector.broadcast %287 : vector<1x128xf32> to vector<8x128xf32>
    %290 = arith.mulf %288, %289 : vector<8x128xf32>
    %291 = arith.addf %282, %290 : vector<8x128xf32>
    %292 = arith.addf %150, %291 : vector<8x128xf32>
    %c0_68 = arith.constant 0 : index
    %c0_69 = arith.constant 0 : index
    %293 = vector.load %arg6[%c0_68, %c0_69] : memref<8x128xf32, #tpu.memory_space<vmem>>, vector<8x128xf32>
    tpu.vector_store %arg6[%c0_68, %c0_69], %292 {strides = array<i32>} : memref<8x128xf32, #tpu.memory_space<vmem>>, vector<8x128xf32>,
    return
  }
  func.func @transform_0(%arg0: i32) -> (i32, i32) {
    %c0_i32 = arith.constant 0 : i32
    %c0_i32_0 = arith.constant 0 : i32
    return %arg0, %c0_i32 : i32, i32
  }
  func.func @transform_1(%arg0: i32) -> (i32, i32) {
    %c0_i32 = arith.constant 0 : i32
    %c0_i32_0 = arith.constant 0 : i32
    %c0_i32_1 = arith.constant 0 : i32
    return %c0_i32, %c0_i32_0 : i32, i32
  }
  func.func @transform_2(%arg0: i32) -> (i32, i32) {
    %c0_i32 = arith.constant 0 : i32
    %c0_i32_0 = arith.constant 0 : i32
    %c0_i32_1 = arith.constant 0 : i32
    return %c0_i32, %c0_i32_0 : i32, i32
  }
  func.func @transform_3(%arg0: i32) -> (i32, i32) {
    %c0_i32 = arith.constant 0 : i32
    %c0_i32_0 = arith.constant 0 : i32
    %c0_i32_1 = arith.constant 0 : i32
    return %c0_i32, %c0_i32_0 : i32, i32
  }
  func.func @transform_4(%arg0: i32) -> (i32, i32, i32) {
    %c0_i32 = arith.constant 0 : i32
    %c0_i32_0 = arith.constant 0 : i32
    %c0_i32_1 = arith.constant 0 : i32
    %c0_i32_2 = arith.constant 0 : i32
    return %c0_i32, %c0_i32_0, %c0_i32_1 : i32, i32, i32
  }
  func.func @transform_5(%arg0: i32) -> (i32, i32) {
    %c0_i32 = arith.constant 0 : i32
    %c0_i32_0 = arith.constant 0 : i32
    return %arg0, %c0_i32 : i32, i32
  }
}

</mosaic_0001>

<llo_original>
// kernel: tpu_custom_call.1
$region0: #{tpu_custom_call.1}
  #allocation0 [shape = 'u32[]', space=smem, size = 0x4, offset = 0x4, fixed_abs, tag = 'smem constant byte address 0x4 - core index']
  #allocation1 [shape = 'u32[144,128]{1,0:T(1,128)}', space=vmem, size = 0x12000, scoped, tag = 'internal scratch']
  %s0 = inlined_call_operand.vmem [shape: f32[16,9], index: 0, kind: input, shape index: {}]
  %s1 = inlined_call_operand.vmem [shape: f32[9,128], index: 1, kind: input, shape index: {}]
  %s2 = inlined_call_operand.vmem [shape: f32[128,9], index: 2, kind: input, shape index: {}]
  %s3 = inlined_call_operand.vmem [shape: f32[9,128], index: 3, kind: input, shape index: {}]
  %s4 = inlined_call_operand.hbm [shape: f32[4,128,128], index: 4, kind: input, shape index: {}]
  %s5 = inlined_call_operand.hbm [shape: f32[16,128], index: 5, kind: output, shape index: {}]
  %s6 = sld [smem:[#allocation0]]
  $region57: #{tpu_custom_call.1} parent=0
    _
  %s8 = ssub.s32 1, %s6
  %s9 = scalar_select 0, %s8, %s6
  $region1: #{tpu_custom_call.1} parent=0
    #allocation2 [shape = 'u8[262144]{0}', space=vmem, size = 0x40000, scoped, tag = 'input window, operand 4, single buffered']
    #allocation3 [shape = 's32[2]{0}', space=sflag, size = 0x8, scoped, tag = 'scoped memory for tpu_custom_call.1']
    #allocation4 [shape = 's32[2]{0}', space=sflag, size = 0x8, scoped, tag = 'scoped memory for tpu_custom_call.1']
    #allocation5 [shape = 'u8[8192]{0}', space=vmem, size = 0x2000, scoped, tag = 'output window, operand 0']
    %10 = vsyncpa [#allocation3], 0
    %11 = vsyncpa [#allocation4], 0
    %s12 = scalar_lea.sflag [#allocation4], 1
    %13 = vsyncpa %s12, 0
    loop: start=0, step=1, limit=4
    $region2: #{tpu_custom_call.1} parent=1 // loop_pre_header
      _
    $region3: #{tpu_custom_call.1} parent=1 // loop_header
      %s15 = sphi 0, %s19
      %p16 = scmp.ge.s32.totalorder %s15, 4
      %s25 = sphi 0, %s27
      %s28 = sphi 0, %s25
      %s29 = sphi 0, %s28
      %s45 = sphi 0, %s29
      %s49 = sphi 0, %s49
      %s51 = sphi 0, %s49
      %s52 = sphi 0, %s51
      %s66 = sphi 0, %s52
      %s70 = sphi 0, %s70
      %s72 = sphi 0, %s70
      %s73 = sphi 0, %s72
      %s87 = sphi 0, %s73
      %s91 = sphi 0, %s91
      %s93 = sphi 0, %s91
      %s94 = sphi 0, %s93
      %s108 = sphi 0, %s94
      %s112 = sphi 0, %s112
      %s114 = sphi 0, %s112
      %s115 = sphi 0, %s114
      %s129 = sphi 0, %s115
      %s135 = sphi 0, %s137
      %s138 = sphi 0, %s135
      %s139 = sphi 0, %s138
      %s155 = sphi 0, %s139
    $region4: #{tpu_custom_call.1} parent=1 // loop_header_branch
      %18 = sbr.rel (%p16) target = $region8
    $region5: #{tpu_custom_call.1} parent=1 // loop_body
      %s20 = ssub.s32 %s15, 1
      %s21 = ssub.s32 %s15, 2
      %s22 = sadd.s32 %s15, 1
      %s23 = ssub.s32 %s15, %s22
      %p24 = scmp.eq.s32.totalorder %s23, 0
      %s26 = sadd.s32 %s25, 1
      %s27 = scalar_select %p24, %s25, %s26
      %p30 = pneg %p24
      %p31 = scmp.eq.s32.totalorder %s15, 1
      %p32 = por %p30, %p31
      %p33 = scmp.ne.s32.totalorder %s25, %s28
      %p34 = scmp.eq.s32.totalorder %s15, 0
      %p35 = por %p33, %p34
      %p36 = scmp.ne.s32.totalorder %s25, %s28
      %p37 = scmp.eq.s32.totalorder %s20, 1
      %p38 = por %p36, %p37
      %p39 = scmp.ne.s32.totalorder %s28, %s29
      %p40 = scmp.eq.s32.totalorder %s20, 0
      %p41 = por %p39, %p40
      %p42 = scmp.ne.s32.totalorder %s28, %s29
      %p43 = scmp.eq.s32.totalorder %s21, 1
      %p44 = por %p42, %p43
      %p46 = scmp.ne.s32.totalorder %s29, %s45
      %p47 = scmp.eq.s32.totalorder %s21, 0
      %p48 = por %p46, %p47
      %s50 = sadd.s32 %s49, 1
      %p53 = scmp.eq.s32.totalorder %s15, 1
      %p54 = scmp.ne.s32.totalorder %s49, %s51
      %p55 = scmp.eq.s32.totalorder %s15, 0
      %p56 = por %p54, %p55
      %p57 = scmp.ne.s32.totalorder %s49, %s51
      %p58 = scmp.eq.s32.totalorder %s20, 1
      %p59 = por %p57, %p58
      %p60 = scmp.ne.s32.totalorder %s51, %s52
      %p61 = scmp.eq.s32.totalorder %s20, 0
      %p62 = por %p60, %p61
      %p63 = scmp.ne.s32.totalorder %s51, %s52
      %p64 = scmp.eq.s32.totalorder %s21, 1
      %p65 = por %p63, %p64
      %p67 = scmp.ne.s32.totalorder %s52, %s66
      %p68 = scmp.eq.s32.totalorder %s21, 0
      %p69 = por %p67, %p68
      %s71 = sadd.s32 %s70, 1
      %p74 = scmp.eq.s32.totalorder %s15, 1
      %p75 = scmp.ne.s32.totalorder %s70, %s72
      %p76 = scmp.eq.s32.totalorder %s15, 0
      %p77 = por %p75, %p76
      %p78 = scmp.ne.s32.totalorder %s70, %s72
      %p79 = scmp.eq.s32.totalorder %s20, 1
      %p80 = por %p78, %p79
      %p81 = scmp.ne.s32.totalorder %s72, %s73
      %p82 = scmp.eq.s32.totalorder %s20, 0
      %p83 = por %p81, %p82
      %p84 = scmp.ne.s32.totalorder %s72, %s73
      %p85 = scmp.eq.s32.totalorder %s21, 1
      %p86 = por %p84, %p85
      %p88 = scmp.ne.s32.totalorder %s73, %s87
      %p89 = scmp.eq.s32.totalorder %s21, 0
      %p90 = por %p88, %p89
      %s92 = sadd.s32 %s91, 1
      %p95 = scmp.eq.s32.totalorder %s15, 1
      %p96 = scmp.ne.s32.totalorder %s91, %s93
      %p97 = scmp.eq.s32.totalorder %s15, 0
      %p98 = por %p96, %p97
      %p99 = scmp.ne.s32.totalorder %s91, %s93
      %p100 = scmp.eq.s32.totalorder %s20, 1
      %p101 = por %p99, %p100
      %p102 = scmp.ne.s32.totalorder %s93, %s94
      %p103 = scmp.eq.s32.totalorder %s20, 0
      %p104 = por %p102, %p103
      %p105 = scmp.ne.s32.totalorder %s93, %s94
      %p106 = scmp.eq.s32.totalorder %s21, 1
      %p107 = por %p105, %p106
      %p109 = scmp.ne.s32.totalorder %s94, %s108
      %p110 = scmp.eq.s32.totalorder %s21, 0
      %p111 = por %p109, %p110
      %s113 = sadd.s32 %s112, 1
      %p116 = scmp.eq.s32.totalorder %s15, 1
      %p117 = scmp.ne.s32.totalorder %s112, %s114
      %p118 = scmp.eq.s32.totalorder %s15, 0
      %p119 = por %p117, %p118
      %p120 = scmp.ne.s32.totalorder %s112, %s114
      %p121 = scmp.eq.s32.totalorder %s20, 1
      %p122 = por %p120, %p121
      %p123 = scmp.ne.s32.totalorder %s114, %s115
      %p124 = scmp.eq.s32.totalorder %s20, 0
      %p125 = por %p123, %p124
      %p126 = scmp.ne.s32.totalorder %s114, %s115
      %p127 = scmp.eq.s32.totalorder %s21, 1
      %p128 = por %p126, %p127
      %p130 = scmp.ne.s32.totalorder %s115, %s129
      %p131 = scmp.eq.s32.totalorder %s21, 0
      %p132 = por %p130, %p131
      %s133 = ssub.s32 %s15, %s22
      %p134 = scmp.eq.s32.totalorder %s133, 0
      %s136 = sadd.s32 %s135, 1
      %s137 = scalar_select %p134, %s135, %s136
      %p140 = pneg %p134
      %p141 = scmp.eq.s32.totalorder %s15, 1
      %p142 = por %p140, %p141
      %p143 = scmp.ne.s32.totalorder %s135, %s138
      %p144 = scmp.eq.s32.totalorder %s15, 0
      %p145 = por %p143, %p144
      %p146 = scmp.ne.s32.totalorder %s135, %s138
      %p147 = scmp.eq.s32.totalorder %s20, 1
      %p148 = por %p146, %p147
      %p149 = scmp.ne.s32.totalorder %s138, %s139
      %p150 = scmp.eq.s32.totalorder %s20, 0
      %p151 = por %p149, %p150
      %p152 = scmp.ne.s32.totalorder %s138, %s139
      %p153 = scmp.eq.s32.totalorder %s21, 1
      %p154 = por %p152, %p153
      %p156 = scmp.ne.s32.totalorder %s139, %s155
      %p157 = scmp.eq.s32.totalorder %s21, 0
      %p158 = por %p156, %p157
      %p159 = scmp.le.s32.totalorder 1, %s15
      %p160 = scmp.lt.s32.totalorder %s15, 3
      %p161 = pnand %p159, %p160
      %p162 = pneg %p161
      // Predicated region
      $region9: #{tpu_custom_call.1} parent=5 // pred_check
        _
      $region10: #{tpu_custom_call.1} parent=5 // pred_check_branch
        %164 = sbr.rel (%p161) target = $region12
      $region11: #{tpu_custom_call.1} parent=5 // pred_region
        %s165 = ssub.s32 %s15, 1
        // Predicated region
        $region13: #{tpu_custom_call.1} parent=11 // pred_check
          %p166 = pneg %p62
        $region14: #{tpu_custom_call.1} parent=11 // pred_check_branch
          %168 = sbr.rel (%p166) target = $region16
        $region15: #{tpu_custom_call.1} parent=11 // pred_region
          _
        $region16: #{tpu_custom_call.1} parent=11 // pred_fallthru
          _
        // Predicated region
        $region17: #{tpu_custom_call.1} parent=11 // pred_check
          %p169 = pneg %p83
        $region18: #{tpu_custom_call.1} parent=11 // pred_check_branch
          %171 = sbr.rel (%p169) target = $region20
        $region19: #{tpu_custom_call.1} parent=11 // pred_region
          _
        $region20: #{tpu_custom_call.1} parent=11 // pred_fallthru
          _
        // Predicated region
        $region21: #{tpu_custom_call.1} parent=11 // pred_check
          %p172 = pneg %p104
        $region22: #{tpu_custom_call.1} parent=11 // pred_check_branch
          %174 = sbr.rel (%p172) target = $region24
        $region23: #{tpu_custom_call.1} parent=11 // pred_region
          _
        $region24: #{tpu_custom_call.1} parent=11 // pred_fallthru
          _
        // Predicated region
        $region25: #{tpu_custom_call.1} parent=11 // pred_check
          %p175 = pneg %p125
        $region26: #{tpu_custom_call.1} parent=11 // pred_check_branch
          %177 = sbr.rel (%p175) target = $region28
        $region27: #{tpu_custom_call.1} parent=11 // pred_region
          %s179 = ssub.s32 8192, 8192
          %180 = vsyncadd [#allocation3], %s179
          %s181 = sshll.u32 [#allocation2], 4
          %s182 = int_to_ptr.vmem [resolvable:$true] %s181
          %187 = dma.hbm_to_vmem [thread:$0]  %s4, 8192, %s182, [#allocation3], 128, 128, 8
        $region28: #{tpu_custom_call.1} parent=11 // pred_fallthru
          _
      $region12: #{tpu_custom_call.1} parent=5 // pred_fallthru
        _
      %p188 = scmp.lt.s32.totalorder %s15, 2
      // Predicated region
      $region29: #{tpu_custom_call.1} parent=5 // pred_check
        %p189 = pneg %p188
      $region30: #{tpu_custom_call.1} parent=5 // pred_check_branch
        %191 = sbr.rel (%p189) target = $region32
      $region31: #{tpu_custom_call.1} parent=5 // pred_region
        // Predicated region
        $region33: #{tpu_custom_call.1} parent=31 // pred_check
          %p192 = pneg %p35
        $region34: #{tpu_custom_call.1} parent=31 // pred_check_branch
          %194 = sbr.rel (%p192) target = $region36
        $region35: #{tpu_custom_call.1} parent=31 // pred_region
          %p195 = scmp.lt.s32.totalorder %s15, 1
          %s196 = scalar_select %p195, %s15, 1
          %s197 = smul.addr %s196, 8
          %s198 = scalar_lea.vmem %s0, %s197
        $region36: #{tpu_custom_call.1} parent=31 // pred_fallthru
          _
      $region32: #{tpu_custom_call.1} parent=5 // pred_fallthru
        _
      %p199 = scmp.le.s32.totalorder 1, %s15
      %p200 = scmp.lt.s32.totalorder %s15, 3
      %p201 = pnand %p199, %p200
      %p202 = pneg %p201
      // Predicated region
      $region37: #{tpu_custom_call.1} parent=5 // pred_check
        _
      $region38: #{tpu_custom_call.1} parent=5 // pred_check_branch
        %204 = sbr.rel (%p201) target = $region40
      $region39: #{tpu_custom_call.1} parent=5 // pred_region
        %s205 = ssub.s32 %s15, 1
        // Predicated region
        $region41: #{tpu_custom_call.1} parent=39 // pred_check
          %p206 = pneg %p125
        $region42: #{tpu_custom_call.1} parent=39 // pred_check_branch
          %208 = sbr.rel (%p206) target = $region44
        $region43: #{tpu_custom_call.1} parent=39 // pred_region
          %209 = dma.done [#allocation3], 8192
        $region44: #{tpu_custom_call.1} parent=39 // pred_fallthru
          _
        %p210 = scmp.lt.s32.totalorder %s20, 1
        %s211 = scalar_select %p210, %s20, 1
        %s212 = smul.addr %s211, 8
        %s213 = scalar_lea.vmem %s0, %s212
        %p214 = pneg %p41
        %p215 = pneg %p38
        %p216 = pneg %p62
        %p217 = pneg %p59
        %p218 = pneg %p83
        %p219 = pneg %p80
        %p220 = pneg %p104
        %p221 = pneg %p101
        %p222 = pneg %p125
        %p223 = pneg %p122
        %p224 = pneg %p151
        %p225 = pneg %p148
        %s226 = sand.u32 %s138, 1
        %s227 = scalar_lea.sflag [#allocation4], %s226
        %s228 = sand.u32 %s138, 1
        %s229 = smul.addr %s228, 8
        %s230 = scalar_lea.vmem [#allocation5], %s229
        %p231 = scmp.lt.s32.totalorder %s20, 1
        %s232 = scalar_select %p231, %s20, 1
        %s233 = smul.addr %s232, 8
        %s234 = scalar_lea.vmem %s0, %s233
        %v235 = vld [vmem:[%s234] sm:$0xff]
        %v236 = vlog2.pop %v235
        %v237 = vmul.f32 %v236, 0.6931472
        %v238 = vld [vmem:[%s1] sm:$0xff]
        %v239 = vld [vmem:[%s1 + $0x8] sm:$0x1]
        %vm240 = vcmask 72704
        %v242 = vsel %vm240, %v237, 0
        %vm244 = vcmask 1040384
        %v246 = vsel %vm244, %v239, 0
        %248 = vmatprep.subr.mxu0 0.0
        %v249 = vand.u32 %v238, 4294901760
        %250 = vmatpush1.msra.mxu0 %v249
        %251 = vmatprep.subr.mxu0 0.0
        %v252 = vand.u32 %v246, 4294901760
        %253 = vmatpush1.msra.mxu0 %v252
        %254 = vmatprep.subr.mxu0 0.0
        %255 = vmatpush1.msra.mxu0 0.0
        %256 = vmatprep.subr.mxu0 0.0
        %257 = vmatpush1.msra.mxu0 0.0
        %258 = vmatprep.subr.mxu0 0.0
        %259 = vmatpush1.msra.mxu0 0.0
        %260 = vmatprep.subr.mxu0 0.0
        %261 = vmatpush1.msra.mxu0 0.0
        %262 = vmatprep.subr.mxu0 0.0
        %263 = vmatpush1.msra.mxu0 0.0
        %264 = vmatprep.subr.mxu0 0.0
        %265 = vmatpush1.msra.mxu0 0.0
        %266 = vmatprep.subr.mxu0 0.0
        %267 = vmatpush1.msra.mxu0 0.0
        %268 = vmatprep.subr.mxu0 0.0
        %269 = vmatpush1.msra.mxu0 0.0
        %270 = vmatprep.subr.mxu0 0.0
        %271 = vmatpush1.msra.mxu0 0.0
        %272 = vmatprep.subr.mxu0 0.0
        %273 = vmatpush1.msra.mxu0 0.0
        %274 = vmatprep.subr.mxu0 0.0
        %275 = vmatpush1.msra.mxu0 0.0
        %276 = vmatprep.subr.mxu0 0.0
        %277 = vmatpush1.msra.mxu0 0.0
        %278 = vmatprep.subr.mxu0 0.0
        %279 = vmatpush1.msra.mxu0 0.0
        %280 = vmatprep.subr.mxu0 0.0
        %281 = vmatpush1.msra.mxu0 0.0
        %282 = vmatprep.subr.mxu0 0.0
        %283 = vmatpush1.msra.mxu0 0.0
        %284 = vmatprep.subr.mxu0 0.0
        %285 = vmatpush1.msra.mxu0 0.0
        %286 = vmatprep.subr.mxu0 0.0
        %287 = vmatpush1.msra.mxu0 0.0
        %288 = vmatprep.subr.mxu0 0.0
        %289 = vmatpush1.msra.mxu0 0.0
        %290 = vmatprep.subr.mxu0 0.0
        %291 = vmatpush1.msra.mxu0 0.0
        %292 = vmatprep.subr.mxu0 0.0
        %293 = vmatpush1.msra.mxu0 0.0
        %294 = vmatprep.subr.mxu0 0.0
        %295 = vmatpush1.msra.mxu0 0.0
        %296 = vmatprep.subr.mxu0 0.0
        %297 = vmatpush1.msra.mxu0 0.0
        %298 = vmatprep.subr.mxu0 0.0
        %299 = vmatpush1.msra.mxu0 0.0
        %300 = vmatprep.subr.mxu0 0.0
        %301 = vmatpush1.msra.mxu0 0.0
        %302 = vmatprep.subr.mxu0 0.0
        %303 = vmatpush1.msra.mxu0 0.0
        %304 = vmatprep.subr.mxu0 0.0
        %305 = vmatpush1.msra.mxu0 0.0
        %306 = vmatprep.subr.mxu0 0.0
        %307 = vmatpush1.msra.mxu0 0.0
        %308 = vmatprep.subr.mxu0 0.0
        %309 = vmatpush1.msra.mxu0 0.0
        %310 = vmatprep.subr.mxu0 0.0
        %311 = vmatpush1.msra.mxu0 0.0
        %312 = vmatprep.subr.mxu0 0.0
        %313 = vmatpush1.msra.mxu0 0.0
        %314 = vmatprep.mubr.f32.mxu0 0.0
        %v315 = vand.u32 %v242, 4294901760
        %v316 = vsub.f32 %v242, %v315
        %v317 = vand.u32 %v316, 4294901760
        %v318 = vsub.f32 %v316, %v317
        %v319 = vand.u32 %v318, 4294901760
        %320 = vmatmul.mubr.f32.gmra.mrb[0].mxu0 %v319
        %v321 = vpop.f32.mrb[0].mxu0
        %v322 = vadd.f32 0.0, %v321
        %v323 = vpop.f32.mrb[0].mxu0
        %324 = vdwg.mxu0
        %325 = vmatprep.subr.mxu0 0.0
        %v326 = vand.u32 %v238, 4294901760
        %v327 = vsub.f32 %v238, %v326
        %v328 = vand.u32 %v327, 4294901760
        %v329 = vsub.f32 %v327, %v328
        %v330 = vand.u32 %v329, 4294901760
        %331 = vmatpush1.msra.mxu0 %v330
        %332 = vmatprep.subr.mxu0 0.0
        %v333 = vand.u32 %v246, 4294901760
        %v334 = vsub.f32 %v246, %v333
        %v335 = vand.u32 %v334, 4294901760
        %v336 = vsub.f32 %v334, %v335
        %v337 = vand.u32 %v336, 4294901760
        %338 = vmatpush1.msra.mxu0 %v337
        %339 = vmatprep.subr.mxu0 0.0
        %340 = vmatpush1.msra.mxu0 0.0
        %341 = vmatprep.subr.mxu0 0.0
        %342 = vmatpush1.msra.mxu0 0.0
        %343 = vmatprep.subr.mxu0 0.0
        %344 = vmatpush1.msra.mxu0 0.0
        %345 = vmatprep.subr.mxu0 0.0
        %346 = vmatpush1.msra.mxu0 0.0
        %347 = vmatprep.subr.mxu0 0.0
        %348 = vmatpush1.msra.mxu0 0.0
        %349 = vmatprep.subr.mxu0 0.0
        %350 = vmatpush1.msra.mxu0 0.0
        %351 = vmatprep.subr.mxu0 0.0
        %352 = vmatpush1.msra.mxu0 0.0
        %353 = vmatprep.subr.mxu0 0.0
        %354 = vmatpush1.msra.mxu0 0.0
        %355 = vmatprep.subr.mxu0 0.0
        %356 = vmatpush1.msra.mxu0 0.0
        %357 = vmatprep.subr.mxu0 0.0
        %358 = vmatpush1.msra.mxu0 0.0
        %359 = vmatprep.subr.mxu0 0.0
        %360 = vmatpush1.msra.mxu0 0.0
        %361 = vmatprep.subr.mxu0 0.0
        %362 = vmatpush1.msra.mxu0 0.0
        %363 = vmatprep.subr.mxu0 0.0
        %364 = vmatpush1.msra.mxu0 0.0
        %365 = vmatprep.subr.mxu0 0.0
        %366 = vmatpush1.msra.mxu0 0.0
        %367 = vmatprep.subr.mxu0 0.0
        %368 = vmatpush1.msra.mxu0 0.0
        %369 = vmatprep.subr.mxu0 0.0
        %370 = vmatpush1.msra.mxu0 0.0
        %371 = vmatprep.subr.mxu0 0.0
        %372 = vmatpush1.msra.mxu0 0.0
        %373 = vmatprep.subr.mxu0 0.0
        %374 = vmatpush1.msra.mxu0 0.0
        %375 = vmatprep.subr.mxu0 0.0
        %376 = vmatpush1.msra.mxu0 0.0
        %377 = vmatprep.subr.mxu0 0.0
        %378 = vmatpush1.msra.mxu0 0.0
        %379 = vmatprep.subr.mxu0 0.0
        %380 = vmatpush1.msra.mxu0 0.0
        %381 = vmatprep.subr.mxu0 0.0
        %382 = vmatpush1.msra.mxu0 0.0
        %383 = vmatprep.subr.mxu0 0.0
        %384 = vmatpush1.msra.mxu0 0.0
        %385 = vmatprep.subr.mxu0 0.0
        %386 = vmatpush1.msra.mxu0 0.0
        %387 = vmatprep.subr.mxu0 0.0
        %388 = vmatpush1.msra.mxu0 0.0
        %389 = vmatprep.subr.mxu0 0.0
        %390 = vmatpush1.msra.mxu0 0.0
        %391 = vmatprep.subr.mxu0 0.0
        %392 = vmatpush1.msra.mxu0 0.0
        %393 = vmatprep.subr.mxu0 0.0
        %394 = vmatpush1.msra.mxu0 0.0
        %395 = vmatprep.subr.mxu0 0.0
        %396 = vmatpush1.msra.mxu0 0.0
        %397 = vmatprep.subr.mxu0 0.0
        %398 = vmatpush1.msra.mxu0 0.0
        %399 = vmatprep.mubr.f32.mxu0 0.0
        %v400 = vand.u32 %v242, 4294901760
        %401 = vmatmul.mubr.f32.gmra.mrb[0].mxu0 %v400
        %v402 = vpop.f32.mrb[0].mxu0
        %v403 = vadd.f32 %v322, %v402
        %v404 = vpop.f32.mrb[0].mxu0
        %405 = vdwg.mxu0
        %406 = vmatprep.subr.mxu0 0.0
        %v407 = vand.u32 %v238, 4294901760
        %v408 = vsub.f32 %v238, %v407
        %409 = vmatpush1.msra.mxu0 %v408
        %410 = vmatprep.subr.mxu0 0.0
        %v411 = vand.u32 %v246, 4294901760
        %v412 = vsub.f32 %v246, %v411
        %413 = vmatpush1.msra.mxu0 %v412
        %414 = vmatprep.subr.mxu0 0.0
        %415 = vmatpush1.msra.mxu0 0.0
        %416 = vmatprep.subr.mxu0 0.0
        %417 = vmatpush1.msra.mxu0 0.0
        %418 = vmatprep.subr.mxu0 0.0
        %419 = vmatpush1.msra.mxu0 0.0
        %420 = vmatprep.subr.mxu0 0.0
        %421 = vmatpush1.msra.mxu0 0.0
        %422 = vmatprep.subr.mxu0 0.0
        %423 = vmatpush1.msra.mxu0 0.0
        %424 = vmatprep.subr.mxu0 0.0
        %425 = vmatpush1.msra.mxu0 0.0
        %426 = vmatprep.subr.mxu0 0.0
        %427 = vmatpush1.msra.mxu0 0.0
        %428 = vmatprep.subr.mxu0 0.0
        %429 = vmatpush1.msra.mxu0 0.0
        %430 = vmatprep.subr.mxu0 0.0
        %431 = vmatpush1.msra.mxu0 0.0
        %432 = vmatprep.subr.mxu0 0.0
        %433 = vmatpush1.msra.mxu0 0.0
        %434 = vmatprep.subr.mxu0 0.0
        %435 = vmatpush1.msra.mxu0 0.0
        %436 = vmatprep.subr.mxu0 0.0
        %437 = vmatpush1.msra.mxu0 0.0
        %438 = vmatprep.subr.mxu0 0.0
        %439 = vmatpush1.msra.mxu0 0.0
        %440 = vmatprep.subr.mxu0 0.0
        %441 = vmatpush1.msra.mxu0 0.0
        %442 = vmatprep.subr.mxu0 0.0
        %443 = vmatpush1.msra.mxu0 0.0
        %444 = vmatprep.subr.mxu0 0.0
        %445 = vmatpush1.msra.mxu0 0.0
        %446 = vmatprep.subr.mxu0 0.0
        %447 = vmatpush1.msra.mxu0 0.0
        %448 = vmatprep.subr.mxu0 0.0
        %449 = vmatpush1.msra.mxu0 0.0
        %450 = vmatprep.subr.mxu0 0.0
        %451 = vmatpush1.msra.mxu0 0.0
        %452 = vmatprep.subr.mxu0 0.0
        %453 = vmatpush1.msra.mxu0 0.0
        %454 = vmatprep.subr.mxu0 0.0
        %455 = vmatpush1.msra.mxu0 0.0
        %456 = vmatprep.subr.mxu0 0.0
        %457 = vmatpush1.msra.mxu0 0.0
        %458 = vmatprep.subr.mxu0 0.0
        %459 = vmatpush1.msra.mxu0 0.0
        %460 = vmatprep.subr.mxu0 0.0
        %461 = vmatpush1.msra.mxu0 0.0
        %462 = vmatprep.subr.mxu0 0.0
        %463 = vmatpush1.msra.mxu0 0.0
        %464 = vmatprep.subr.mxu0 0.0
        %465 = vmatpush1.msra.mxu0 0.0
        %466 = vmatprep.subr.mxu0 0.0
        %467 = vmatpush1.msra.mxu0 0.0
        %468 = vmatprep.subr.mxu0 0.0
        %469 = vmatpush1.msra.mxu0 0.0
        %470 = vmatprep.subr.mxu0 0.0
        %471 = vmatpush1.msra.mxu0 0.0
        %472 = vmatprep.subr.mxu0 0.0
        %473 = vmatpush1.msra.mxu0 0.0
        %474 = vmatprep.mubr.f32.mxu0 0.0
        %v475 = vand.u32 %v242, 4294901760
        %v476 = vsub.f32 %v242, %v475
        %477 = vmatmul.mubr.f32.gmra.mrb[0].mxu0 %v476
        %v478 = vpop.f32.mrb[0].mxu0
        %v479 = vadd.f32 %v403, %v478
        %v480 = vpop.f32.mrb[0].mxu0
        %481 = vdwg.mxu0
        %482 = vmatprep.subr.mxu0 0.0
        %v483 = vand.u32 %v238, 4294901760
        %484 = vmatpush1.msra.mxu0 %v483
        %485 = vmatprep.subr.mxu0 0.0
        %v486 = vand.u32 %v246, 4294901760
        %487 = vmatpush1.msra.mxu0 %v486
        %488 = vmatprep.subr.mxu0 0.0
        %489 = vmatpush1.msra.mxu0 0.0
        %490 = vmatprep.subr.mxu0 0.0
        %491 = vmatpush1.msra.mxu0 0.0
        %492 = vmatprep.subr.mxu0 0.0
        %493 = vmatpush1.msra.mxu0 0.0
        %494 = vmatprep.subr.mxu0 0.0
        %495 = vmatpush1.msra.mxu0 0.0
        %496 = vmatprep.subr.mxu0 0.0
        %497 = vmatpush1.msra.mxu0 0.0
        %498 = vmatprep.subr.mxu0 0.0
        %499 = vmatpush1.msra.mxu0 0.0
        %500 = vmatprep.subr.mxu0 0.0
        %501 = vmatpush1.msra.mxu0 0.0
        %502 = vmatprep.subr.mxu0 0.0
        %503 = vmatpush1.msra.mxu0 0.0
        %504 = vmatprep.subr.mxu0 0.0
        %505 = vmatpush1.msra.mxu0 0.0
        %506 = vmatprep.subr.mxu0 0.0
        %507 = vmatpush1.msra.mxu0 0.0
        %508 = vmatprep.subr.mxu0 0.0
        %509 = vmatpush1.msra.mxu0 0.0
        %510 = vmatprep.subr.mxu0 0.0
        %511 = vmatpush1.msra.mxu0 0.0
        %512 = vmatprep.subr.mxu0 0.0
        %513 = vmatpush1.msra.mxu0 0.0
        %514 = vmatprep.subr.mxu0 0.0
        %515 = vmatpush1.msra.mxu0 0.0
        %516 = vmatprep.subr.mxu0 0.0
        %517 = vmatpush1.msra.mxu0 0.0
        %518 = vmatprep.subr.mxu0 0.0
        %519 = vmatpush1.msra.mxu0 0.0
        %520 = vmatprep.subr.mxu0 0.0
        %521 = vmatpush1.msra.mxu0 0.0
        %522 = vmatprep.subr.mxu0 0.0
        %523 = vmatpush1.msra.mxu0 0.0
        %524 = vmatprep.subr.mxu0 0.0
        %525 = vmatpush1.msra.mxu0 0.0
        %526 = vmatprep.subr.mxu0 0.0
        %527 = vmatpush1.msra.mxu0 0.0
        %528 = vmatprep.subr.mxu0 0.0
        %529 = vmatpush1.msra.mxu0 0.0
        %530 = vmatprep.subr.mxu0 0.0
        %531 = vmatpush1.msra.mxu0 0.0
        %532 = vmatprep.subr.mxu0 0.0
        %533 = vmatpush1.msra.mxu0 0.0
        %534 = vmatprep.subr.mxu0 0.0
        %535 = vmatpush1.msra.mxu0 0.0
        %536 = vmatprep.subr.mxu0 0.0
        %537 = vmatpush1.msra.mxu0 0.0
        %538 = vmatprep.subr.mxu0 0.0
        %539 = vmatpush1.msra.mxu0 0.0
        %540 = vmatprep.subr.mxu0 0.0
        %541 = vmatpush1.msra.mxu0 0.0
        %542 = vmatprep.subr.mxu0 0.0
        %543 = vmatpush1.msra.mxu0 0.0
        %544 = vmatprep.subr.mxu0 0.0
        %545 = vmatpush1.msra.mxu0 0.0
        %546 = vmatprep.subr.mxu0 0.0
        %547 = vmatpush1.msra.mxu0 0.0
        %548 = vmatprep.mubr.f32.mxu0 0.0
        %v549 = vand.u32 %v242, 4294901760
        %v550 = vsub.f32 %v242, %v549
        %v551 = vand.u32 %v550, 4294901760
        %552 = vmatmul.mubr.f32.gmra.mrb[0].mxu0 %v551
        %v553 = vpop.f32.mrb[0].mxu0
        %v554 = vadd.f32 %v479, %v553
        %v555 = vpop.f32.mrb[0].mxu0
        %556 = vdwg.mxu0
        %557 = vmatprep.subr.mxu0 0.0
        %v558 = vand.u32 %v238, 4294901760
        %v559 = vsub.f32 %v238, %v558
        %v560 = vand.u32 %v559, 4294901760
        %561 = vmatpush1.msra.mxu0 %v560
        %562 = vmatprep.subr.mxu0 0.0
        %v563 = vand.u32 %v246, 4294901760
        %v564 = vsub.f32 %v246, %v563
        %v565 = vand.u32 %v564, 4294901760
        %566 = vmatpush1.msra.mxu0 %v565
        %567 = vmatprep.subr.mxu0 0.0
        %568 = vmatpush1.msra.mxu0 0.0
        %569 = vmatprep.subr.mxu0 0.0
        %570 = vmatpush1.msra.mxu0 0.0
        %571 = vmatprep.subr.mxu0 0.0
        %572 = vmatpush1.msra.mxu0 0.0
        %573 = vmatprep.subr.mxu0 0.0
        %574 = vmatpush1.msra.mxu0 0.0
        %575 = vmatprep.subr.mxu0 0.0
        %576 = vmatpush1.msra.mxu0 0.0
        %577 = vmatprep.subr.mxu0 0.0
        %578 = vmatpush1.msra.mxu0 0.0
        %579 = vmatprep.subr.mxu0 0.0
        %580 = vmatpush1.msra.mxu0 0.0
        %581 = vmatprep.subr.mxu0 0.0
        %582 = vmatpush1.msra.mxu0 0.0
        %583 = vmatprep.subr.mxu0 0.0
        %584 = vmatpush1.msra.mxu0 0.0
        %585 = vmatprep.subr.mxu0 0.0
        %586 = vmatpush1.msra.mxu0 0.0
        %587 = vmatprep.subr.mxu0 0.0
        %588 = vmatpush1.msra.mxu0 0.0
        %589 = vmatprep.subr.mxu0 0.0
        %590 = vmatpush1.msra.mxu0 0.0
        %591 = vmatprep.subr.mxu0 0.0
        %592 = vmatpush1.msra.mxu0 0.0
        %593 = vmatprep.subr.mxu0 0.0
        %594 = vmatpush1.msra.mxu0 0.0
        %595 = vmatprep.subr.mxu0 0.0
        %596 = vmatpush1.msra.mxu0 0.0
        %597 = vmatprep.subr.mxu0 0.0
        %598 = vmatpush1.msra.mxu0 0.0
        %599 = vmatprep.subr.mxu0 0.0
        %600 = vmatpush1.msra.mxu0 0.0
        %601 = vmatprep.subr.mxu0 0.0
        %602 = vmatpush1.msra.mxu0 0.0
        %603 = vmatprep.subr.mxu0 0.0
        %604 = vmatpush1.msra.mxu0 0.0
        %605 = vmatprep.subr.mxu0 0.0
        %606 = vmatpush1.msra.mxu0 0.0
        %607 = vmatprep.subr.mxu0 0.0
        %608 = vmatpush1.msra.mxu0 0.0
        %609 = vmatprep.subr.mxu0 0.0
        %610 = vmatpush1.msra.mxu0 0.0
        %611 = vmatprep.subr.mxu0 0.0
        %612 = vmatpush1.msra.mxu0 0.0
        %613 = vmatprep.subr.mxu0 0.0
        %614 = vmatpush1.msra.mxu0 0.0
        %615 = vmatprep.subr.mxu0 0.0
        %616 = vmatpush1.msra.mxu0 0.0
        %617 = vmatprep.subr.mxu0 0.0
        %618 = vmatpush1.msra.mxu0 0.0
        %619 = vmatprep.subr.mxu0 0.0
        %620 = vmatpush1.msra.mxu0 0.0
        %621 = vmatprep.subr.mxu0 0.0
        %622 = vmatpush1.msra.mxu0 0.0
        %623 = vmatprep.subr.mxu0 0.0
        %624 = vmatpush1.msra.mxu0 0.0
        %625 = vmatprep.subr.mxu0 0.0
        %626 = vmatpush1.msra.mxu0 0.0
        %627 = vmatprep.mubr.f32.mxu0 0.0
        %v628 = vand.u32 %v242, 4294901760
        %629 = vmatmul.mubr.f32.gmra.mrb[0].mxu0 %v628
        %v630 = vpop.f32.mrb[0].mxu0
        %v631 = vadd.f32 %v554, %v630
        %v632 = vpop.f32.mrb[0].mxu0
        %633 = vdwg.mxu0
        %634 = vmatprep.subr.mxu0 0.0
        %v635 = vand.u32 %v238, 4294901760
        %636 = vmatpush1.msra.mxu0 %v635
        %637 = vmatprep.subr.mxu0 0.0
        %v638 = vand.u32 %v246, 4294901760
        %639 = vmatpush1.msra.mxu0 %v638
        %640 = vmatprep.subr.mxu0 0.0
        %641 = vmatpush1.msra.mxu0 0.0
        %642 = vmatprep.subr.mxu0 0.0
        %643 = vmatpush1.msra.mxu0 0.0
        %644 = vmatprep.subr.mxu0 0.0
        %645 = vmatpush1.msra.mxu0 0.0
        %646 = vmatprep.subr.mxu0 0.0
        %647 = vmatpush1.msra.mxu0 0.0
        %648 = vmatprep.subr.mxu0 0.0
        %649 = vmatpush1.msra.mxu0 0.0
        %650 = vmatprep.subr.mxu0 0.0
        %651 = vmatpush1.msra.mxu0 0.0
        %652 = vmatprep.subr.mxu0 0.0
        %653 = vmatpush1.msra.mxu0 0.0
        %654 = vmatprep.subr.mxu0 0.0
        %655 = vmatpush1.msra.mxu0 0.0
        %656 = vmatprep.subr.mxu0 0.0
        %657 = vmatpush1.msra.mxu0 0.0
        %658 = vmatprep.subr.mxu0 0.0
        %659 = vmatpush1.msra.mxu0 0.0
        %660 = vmatprep.subr.mxu0 0.0
        %661 = vmatpush1.msra.mxu0 0.0
        %662 = vmatprep.subr.mxu0 0.0
        %663 = vmatpush1.msra.mxu0 0.0
        %664 = vmatprep.subr.mxu0 0.0
        %665 = vmatpush1.msra.mxu0 0.0
        %666 = vmatprep.subr.mxu0 0.0
        %667 = vmatpush1.msra.mxu0 0.0
        %668 = vmatprep.subr.mxu0 0.0
        %669 = vmatpush1.msra.mxu0 0.0
        %670 = vmatprep.subr.mxu0 0.0
        %671 = vmatpush1.msra.mxu0 0.0
        %672 = vmatprep.subr.mxu0 0.0
        %673 = vmatpush1.msra.mxu0 0.0
        %674 = vmatprep.subr.mxu0 0.0
        %675 = vmatpush1.msra.mxu0 0.0
        %676 = vmatprep.subr.mxu0 0.0
        %677 = vmatpush1.msra.mxu0 0.0
        %678 = vmatprep.subr.mxu0 0.0
        %679 = vmatpush1.msra.mxu0 0.0
        %680 = vmatprep.subr.mxu0 0.0
        %681 = vmatpush1.msra.mxu0 0.0
        %682 = vmatprep.subr.mxu0 0.0
        %683 = vmatpush1.msra.mxu0 0.0
        %684 = vmatprep.subr.mxu0 0.0
        %685 = vmatpush1.msra.mxu0 0.0
        %686 = vmatprep.subr.mxu0 0.0
        %687 = vmatpush1.msra.mxu0 0.0
        %688 = vmatprep.subr.mxu0 0.0
        %689 = vmatpush1.msra.mxu0 0.0
        %690 = vmatprep.subr.mxu0 0.0
        %691 = vmatpush1.msra.mxu0 0.0
        %692 = vmatprep.subr.mxu0 0.0
        %693 = vmatpush1.msra.mxu0 0.0
        %694 = vmatprep.subr.mxu0 0.0
        %695 = vmatpush1.msra.mxu0 0.0
        %696 = vmatprep.subr.mxu0 0.0
        %697 = vmatpush1.msra.mxu0 0.0
        %698 = vmatprep.subr.mxu0 0.0
        %699 = vmatpush1.msra.mxu0 0.0
        %700 = vmatprep.mubr.f32.mxu0 0.0
        %v701 = vand.u32 %v242, 4294901760
        %702 = vmatmul.mubr.f32.gmra.mrb[0].mxu0 %v701
        %v703 = vpop.f32.mrb[0].mxu0
        %v704 = vadd.f32 %v631, %v703
        %v705 = vpop.f32.mrb[0].mxu0
        %706 = vdwg.mxu0
        %v707 = vlaneseq
        %v708 = vand.u32 %v707, 127
        %vm709 = vcmp.eq.s32.totalorder %v708, 4
        %v710 = vsel %vm709, 1, 0
        %v711 = vcvt.s32.f32 %v710
        %v712 = vld [vmem:[%s2] sm:$0xff]
        %v713 = vld [vmem:[%s2 + $0x8] sm:$0xff]
        %v714 = vld [vmem:[%s2 + $0x10] sm:$0xff]
        %v715 = vld [vmem:[%s2 + $0x18] sm:$0xff]
        %v716 = vld [vmem:[%s2 + $0x20] sm:$0xff]
        %v717 = vld [vmem:[%s2 + $0x28] sm:$0xff]
        %v718 = vld [vmem:[%s2 + $0x30] sm:$0xff]
        %v719 = vld [vmem:[%s2 + $0x38] sm:$0xff]
        %v720 = vld [vmem:[%s2 + $0x40] sm:$0xff]
        %v721 = vld [vmem:[%s2 + $0x48] sm:$0xff]
        %v722 = vld [vmem:[%s2 + $0x50] sm:$0xff]
        %v723 = vld [vmem:[%s2 + $0x58] sm:$0xff]
        %v724 = vld [vmem:[%s2 + $0x60] sm:$0xff]
        %v725 = vld [vmem:[%s2 + $0x68] sm:$0xff]
        %v726 = vld [vmem:[%s2 + $0x70] sm:$0xff]
        %v727 = vld [vmem:[%s2 + $0x78] sm:$0xff]
        %728 = vmatprep.subr.mxu0 0.0
        %v729 = vand.u32 %v712, 4294901760
        %730 = vmatpush1.msra.mxu0 %v729
        %731 = vmatprep.subr.mxu0 0.0
        %v732 = vand.u32 %v713, 4294901760
        %733 = vmatpush1.msra.mxu0 %v732
        %734 = vmatprep.subr.mxu0 0.0
        %v735 = vand.u32 %v714, 4294901760
        %736 = vmatpush1.msra.mxu0 %v735
        %737 = vmatprep.subr.mxu0 0.0
        %v738 = vand.u32 %v715, 4294901760
        %739 = vmatpush1.msra.mxu0 %v738
        %740 = vmatprep.subr.mxu0 0.0
        %v741 = vand.u32 %v716, 4294901760
        %742 = vmatpush1.msra.mxu0 %v741
        %743 = vmatprep.subr.mxu0 0.0
        %v744 = vand.u32 %v717, 4294901760
        %745 = vmatpush1.msra.mxu0 %v744
        %746 = vmatprep.subr.mxu0 0.0
        %v747 = vand.u32 %v718, 4294901760
        %748 = vmatpush1.msra.mxu0 %v747
        %749 = vmatprep.subr.mxu0 0.0
        %v750 = vand.u32 %v719, 4294901760
        %751 = vmatpush1.msra.mxu0 %v750
        %752 = vmatprep.subr.mxu0 0.0
        %v753 = vand.u32 %v720, 4294901760
        %754 = vmatpush1.msra.mxu0 %v753
        %755 = vmatprep.subr.mxu0 0.0
        %v756 = vand.u32 %v721, 4294901760
        %757 = vmatpush1.msra.mxu0 %v756
        %758 = vmatprep.subr.mxu0 0.0
        %v759 = vand.u32 %v722, 4294901760
        %760 = vmatpush1.msra.mxu0 %v759
        %761 = vmatprep.subr.mxu0 0.0
        %v762 = vand.u32 %v723, 4294901760
        %763 = vmatpush1.msra.mxu0 %v762
        %764 = vmatprep.subr.mxu0 0.0
        %v765 = vand.u32 %v724, 4294901760
        %766 = vmatpush1.msra.mxu0 %v765
        %767 = vmatprep.subr.mxu0 0.0
        %v768 = vand.u32 %v725, 4294901760
        %769 = vmatpush1.msra.mxu0 %v768
        %770 = vmatprep.subr.mxu0 0.0
        %v771 = vand.u32 %v726, 4294901760
        %772 = vmatpush1.msra.mxu0 %v771
        %773 = vmatprep.subr.mxu0 0.0
        %v774 = vand.u32 %v727, 4294901760
        %775 = vmatpush1.msra.mxu0 %v774
        %776 = vmatprep.subr.mxu0 0.0
        %777 = vmatpush1.msra.mxu0 0.0
        %778 = vmatprep.subr.mxu0 0.0
        %779 = vmatpush1.msra.mxu0 0.0
        %780 = vmatprep.subr.mxu0 0.0
        %781 = vmatpush1.msra.mxu0 0.0
        %782 = vmatprep.subr.mxu0 0.0
        %783 = vmatpush1.msra.mxu0 0.0
        %784 = vmatprep.subr.mxu0 0.0
        %785 = vmatpush1.msra.mxu0 0.0
        %786 = vmatprep.subr.mxu0 0.0
        %787 = vmatpush1.msra.mxu0 0.0
        %788 = vmatprep.subr.mxu0 0.0
        %789 = vmatpush1.msra.mxu0 0.0
        %790 = vmatprep.subr.mxu0 0.0
        %791 = vmatpush1.msra.mxu0 0.0
        %792 = vmatprep.subr.mxu0 0.0
        %793 = vmatpush1.msra.mxu0 0.0
        %794 = vmatprep.subr.mxu0 0.0
        %795 = vmatpush1.msra.mxu0 0.0
        %796 = vmatprep.subr.mxu0 0.0
        %797 = vmatpush1.msra.mxu0 0.0
        %798 = vmatprep.subr.mxu0 0.0
        %799 = vmatpush1.msra.mxu0 0.0
        %800 = vmatprep.subr.mxu0 0.0
        %801 = vmatpush1.msra.mxu0 0.0
        %802 = vmatprep.subr.mxu0 0.0
        %803 = vmatpush1.msra.mxu0 0.0
        %804 = vmatprep.subr.mxu0 0.0
        %805 = vmatpush1.msra.mxu0 0.0
        %806 = vmatprep.subr.mxu0 0.0
        %807 = vmatpush1.msra.mxu0 0.0
        %808 = vmatprep.mubr.f32.mxu0 0.0
        %v809 = vand.u32 %v704, 4294901760
        %v810 = vsub.f32 %v704, %v809
        %v811 = vand.u32 %v810, 4294901760
        %v812 = vsub.f32 %v810, %v811
        %v813 = vand.u32 %v812, 4294901760
        %814 = vmatmul.mubr.f32.gmra.mrb[0].mxu0 %v813
        %v815 = vpop.f32.mrb[0].mxu0
        %v816 = vadd.f32 0.0, %v815
        %v817 = vpop.f32.mrb[0].mxu0
        %818 = vdwg.mxu0
        %819 = vmatprep.subr.mxu0 0.0
        %v820 = vand.u32 %v712, 4294901760
        %v821 = vsub.f32 %v712, %v820
        %v822 = vand.u32 %v821, 4294901760
        %v823 = vsub.f32 %v821, %v822
        %v824 = vand.u32 %v823, 4294901760
        %825 = vmatpush1.msra.mxu0 %v824
        %826 = vmatprep.subr.mxu0 0.0
        %v827 = vand.u32 %v713, 4294901760
        %v828 = vsub.f32 %v713, %v827
        %v829 = vand.u32 %v828, 4294901760
        %v830 = vsub.f32 %v828, %v829
        %v831 = vand.u32 %v830, 4294901760
        %832 = vmatpush1.msra.mxu0 %v831
        %833 = vmatprep.subr.mxu0 0.0
        %v834 = vand.u32 %v714, 4294901760
        %v835 = vsub.f32 %v714, %v834
        %v836 = vand.u32 %v835, 4294901760
        %v837 = vsub.f32 %v835, %v836
        %v838 = vand.u32 %v837, 4294901760
        %839 = vmatpush1.msra.mxu0 %v838
        %840 = vmatprep.subr.mxu0 0.0
        %v841 = vand.u32 %v715, 4294901760
        %v842 = vsub.f32 %v715, %v841
        %v843 = vand.u32 %v842, 4294901760
        %v844 = vsub.f32 %v842, %v843
        %v845 = vand.u32 %v844, 4294901760
        %846 = vmatpush1.msra.mxu0 %v845
        %847 = vmatprep.subr.mxu0 0.0
        %v848 = vand.u32 %v716, 4294901760
        %v849 = vsub.f32 %v716, %v848
        %v850 = vand.u32 %v849, 4294901760
        %v851 = vsub.f32 %v849, %v850
        %v852 = vand.u32 %v851, 4294901760
        %853 = vmatpush1.msra.mxu0 %v852
        %854 = vmatprep.subr.mxu0 0.0
        %v855 = vand.u32 %v717, 4294901760
        %v856 = vsub.f32 %v717, %v855
        %v857 = vand.u32 %v856, 4294901760
        %v858 = vsub.f32 %v856, %v857
        %v859 = vand.u32 %v858, 4294901760
        %860 = vmatpush1.msra.mxu0 %v859
        %861 = vmatprep.subr.mxu0 0.0
        %v862 = vand.u32 %v718, 4294901760
        %v863 = vsub.f32 %v718, %v862
        %v864 = vand.u32 %v863, 4294901760
        %v865 = vsub.f32 %v863, %v864
        %v866 = vand.u32 %v865, 4294901760
        %867 = vmatpush1.msra.mxu0 %v866
        %868 = vmatprep.subr.mxu0 0.0
        %v869 = vand.u32 %v719, 4294901760
        %v870 = vsub.f32 %v719, %v869
        %v871 = vand.u32 %v870, 4294901760
        %v872 = vsub.f32 %v870, %v871
        %v873 = vand.u32 %v872, 4294901760
        %874 = vmatpush1.msra.mxu0 %v873
        %875 = vmatprep.subr.mxu0 0.0
        %v876 = vand.u32 %v720, 4294901760
        %v877 = vsub.f32 %v720, %v876
        %v878 = vand.u32 %v877, 4294901760
        %v879 = vsub.f32 %v877, %v878
        %v880 = vand.u32 %v879, 4294901760
        %881 = vmatpush1.msra.mxu0 %v880
        %882 = vmatprep.subr.mxu0 0.0
        %v883 = vand.u32 %v721, 4294901760
        %v884 = vsub.f32 %v721, %v883
        %v885 = vand.u32 %v884, 4294901760
        %v886 = vsub.f32 %v884, %v885
        %v887 = vand.u32 %v886, 4294901760
        %888 = vmatpush1.msra.mxu0 %v887
        %889 = vmatprep.subr.mxu0 0.0
        %v890 = vand.u32 %v722, 4294901760
        %v891 = vsub.f32 %v722, %v890
        %v892 = vand.u32 %v891, 4294901760
        %v893 = vsub.f32 %v891, %v892
        %v894 = vand.u32 %v893, 4294901760
        %895 = vmatpush1.msra.mxu0 %v894
        %896 = vmatprep.subr.mxu0 0.0
        %v897 = vand.u32 %v723, 4294901760
        %v898 = vsub.f32 %v723, %v897
        %v899 = vand.u32 %v898, 4294901760
        %v900 = vsub.f32 %v898, %v899
        %v901 = vand.u32 %v900, 4294901760
        %902 = vmatpush1.msra.mxu0 %v901
        %903 = vmatprep.subr.mxu0 0.0
        %v904 = vand.u32 %v724, 4294901760
        %v905 = vsub.f32 %v724, %v904
        %v906 = vand.u32 %v905, 4294901760
        %v907 = vsub.f32 %v905, %v906
        %v908 = vand.u32 %v907, 4294901760
        %909 = vmatpush1.msra.mxu0 %v908
        %910 = vmatprep.subr.mxu0 0.0
        %v911 = vand.u32 %v725, 4294901760
        %v912 = vsub.f32 %v725, %v911
        %v913 = vand.u32 %v912, 4294901760
        %v914 = vsub.f32 %v912, %v913
        %v915 = vand.u32 %v914, 4294901760
        %916 = vmatpush1.msra.mxu0 %v915
        %917 = vmatprep.subr.mxu0 0.0
        %v918 = vand.u32 %v726, 4294901760
        %v919 = vsub.f32 %v726, %v918
        %v920 = vand.u32 %v919, 4294901760
        %v921 = vsub.f32 %v919, %v920
        %v922 = vand.u32 %v921, 4294901760
        %923 = vmatpush1.msra.mxu0 %v922
        %924 = vmatprep.subr.mxu0 0.0
        %v925 = vand.u32 %v727, 4294901760
        %v926 = vsub.f32 %v727, %v925
        %v927 = vand.u32 %v926, 4294901760
        %v928 = vsub.f32 %v926, %v927
        %v929 = vand.u32 %v928, 4294901760
        %930 = vmatpush1.msra.mxu0 %v929
        %931 = vmatprep.subr.mxu0 0.0
        %932 = vmatpush1.msra.mxu0 0.0
        %933 = vmatprep.subr.mxu0 0.0
        %934 = vmatpush1.msra.mxu0 0.0
        %935 = vmatprep.subr.mxu0 0.0
        %936 = vmatpush1.msra.mxu0 0.0
        %937 = vmatprep.subr.mxu0 0.0
        %938 = vmatpush1.msra.mxu0 0.0
        %939 = vmatprep.subr.mxu0 0.0
        %940 = vmatpush1.msra.mxu0 0.0
        %941 = vmatprep.subr.mxu0 0.0
        %942 = vmatpush1.msra.mxu0 0.0
        %943 = vmatprep.subr.mxu0 0.0
        %944 = vmatpush1.msra.mxu0 0.0
        %945 = vmatprep.subr.mxu0 0.0
        %946 = vmatpush1.msra.mxu0 0.0
        %947 = vmatprep.subr.mxu0 0.0
        %948 = vmatpush1.msra.mxu0 0.0
        %949 = vmatprep.subr.mxu0 0.0
        %950 = vmatpush1.msra.mxu0 0.0
        %951 = vmatprep.subr.mxu0 0.0
        %952 = vmatpush1.msra.mxu0 0.0
        %953 = vmatprep.subr.mxu0 0.0
        %954 = vmatpush1.msra.mxu0 0.0
        %955 = vmatprep.subr.mxu0 0.0
        %956 = vmatpush1.msra.mxu0 0.0
        %957 = vmatprep.subr.mxu0 0.0
        %958 = vmatpush1.msra.mxu0 0.0
        %959 = vmatprep.subr.mxu0 0.0
        %960 = vmatpush1.msra.mxu0 0.0
        %961 = vmatprep.subr.mxu0 0.0
        %962 = vmatpush1.msra.mxu0 0.0
        %963 = vmatprep.mubr.f32.mxu0 0.0
        %v964 = vand.u32 %v704, 4294901760
        %965 = vmatmul.mubr.f32.gmra.mrb[0].mxu0 %v964
        %v966 = vpop.f32.mrb[0].mxu0
        %v967 = vadd.f32 %v816, %v966
        %v968 = vpop.f32.mrb[0].mxu0
        %969 = vdwg.mxu0
        %970 = vmatprep.subr.mxu0 0.0
        %v971 = vand.u32 %v712, 4294901760
        %v972 = vsub.f32 %v712, %v971
        %973 = vmatpush1.msra.mxu0 %v972
        %974 = vmatprep.subr.mxu0 0.0
        %v975 = vand.u32 %v713, 4294901760
        %v976 = vsub.f32 %v713, %v975
        %977 = vmatpush1.msra.mxu0 %v976
        %978 = vmatprep.subr.mxu0 0.0
        %v979 = vand.u32 %v714, 4294901760
        %v980 = vsub.f32 %v714, %v979
        %981 = vmatpush1.msra.mxu0 %v980
        %982 = vmatprep.subr.mxu0 0.0
        %v983 = vand.u32 %v715, 4294901760
        %v984 = vsub.f32 %v715, %v983
        %985 = vmatpush1.msra.mxu0 %v984
        %986 = vmatprep.subr.mxu0 0.0
        %v987 = vand.u32 %v716, 4294901760
        %v988 = vsub.f32 %v716, %v987
        %989 = vmatpush1.msra.mxu0 %v988
        %990 = vmatprep.subr.mxu0 0.0
        %v991 = vand.u32 %v717, 4294901760
        %v992 = vsub.f32 %v717, %v991
        %993 = vmatpush1.msra.mxu0 %v992
        %994 = vmatprep.subr.mxu0 0.0
        %v995 = vand.u32 %v718, 4294901760
        %v996 = vsub.f32 %v718, %v995
        %997 = vmatpush1.msra.mxu0 %v996
        %998 = vmatprep.subr.mxu0 0.0
        %v999 = vand.u32 %v719, 4294901760
        %v1000 = vsub.f32 %v719, %v999
        %1001 = vmatpush1.msra.mxu0 %v1000
        %1002 = vmatprep.subr.mxu0 0.0
        %v1003 = vand.u32 %v720, 4294901760
        %v1004 = vsub.f32 %v720, %v1003
        %1005 = vmatpush1.msra.mxu0 %v1004
        %1006 = vmatprep.subr.mxu0 0.0
        %v1007 = vand.u32 %v721, 4294901760
        %v1008 = vsub.f32 %v721, %v1007
        %1009 = vmatpush1.msra.mxu0 %v1008
        %1010 = vmatprep.subr.mxu0 0.0
        %v1011 = vand.u32 %v722, 4294901760
        %v1012 = vsub.f32 %v722, %v1011
        %1013 = vmatpush1.msra.mxu0 %v1012
        %1014 = vmatprep.subr.mxu0 0.0
        %v1015 = vand.u32 %v723, 4294901760
        %v1016 = vsub.f32 %v723, %v1015
        %1017 = vmatpush1.msra.mxu0 %v1016
        %1018 = vmatprep.subr.mxu0 0.0
        %v1019 = vand.u32 %v724, 4294901760
        %v1020 = vsub.f32 %v724, %v1019
        %1021 = vmatpush1.msra.mxu0 %v1020
        %1022 = vmatprep.subr.mxu0 0.0
        %v1023 = vand.u32 %v725, 4294901760
        %v1024 = vsub.f32 %v725, %v1023
        %1025 = vmatpush1.msra.mxu0 %v1024
        %1026 = vmatprep.subr.mxu0 0.0
        %v1027 = vand.u32 %v726, 4294901760
        %v1028 = vsub.f32 %v726, %v1027
        %1029 = vmatpush1.msra.mxu0 %v1028
        %1030 = vmatprep.subr.mxu0 0.0
        %v1031 = vand.u32 %v727, 4294901760
        %v1032 = vsub.f32 %v727, %v1031
        %1033 = vmatpush1.msra.mxu0 %v1032
        %1034 = vmatprep.subr.mxu0 0.0
        %1035 = vmatpush1.msra.mxu0 0.0
        %1036 = vmatprep.subr.mxu0 0.0
        %1037 = vmatpush1.msra.mxu0 0.0
        %1038 = vmatprep.subr.mxu0 0.0
        %1039 = vmatpush1.msra.mxu0 0.0
        %1040 = vmatprep.subr.mxu0 0.0
        %1041 = vmatpush1.msra.mxu0 0.0
        %1042 = vmatprep.subr.mxu0 0.0
        %1043 = vmatpush1.msra.mxu0 0.0
        %1044 = vmatprep.subr.mxu0 0.0
        %1045 = vmatpush1.msra.mxu0 0.0
        %1046 = vmatprep.subr.mxu0 0.0
        %1047 = vmatpush1.msra.mxu0 0.0
        %1048 = vmatprep.subr.mxu0 0.0
        %1049 = vmatpush1.msra.mxu0 0.0
        %1050 = vmatprep.subr.mxu0 0.0
        %1051 = vmatpush1.msra.mxu0 0.0
        %1052 = vmatprep.subr.mxu0 0.0
        %1053 = vmatpush1.msra.mxu0 0.0
        %1054 = vmatprep.subr.mxu0 0.0
        %1055 = vmatpush1.msra.mxu0 0.0
        %1056 = vmatprep.subr.mxu0 0.0
        %1057 = vmatpush1.msra.mxu0 0.0
        %1058 = vmatprep.subr.mxu0 0.0
        %1059 = vmatpush1.msra.mxu0 0.0
        %1060 = vmatprep.subr.mxu0 0.0
        %1061 = vmatpush1.msra.mxu0 0.0
        %1062 = vmatprep.subr.mxu0 0.0
        %1063 = vmatpush1.msra.mxu0 0.0
        %1064 = vmatprep.subr.mxu0 0.0
        %1065 = vmatpush1.msra.mxu0 0.0
        %1066 = vmatprep.mubr.f32.mxu0 0.0
        %v1067 = vand.u32 %v704, 4294901760
        %v1068 = vsub.f32 %v704, %v1067
        %1069 = vmatmul.mubr.f32.gmra.mrb[0].mxu0 %v1068
        %v1070 = vpop.f32.mrb[0].mxu0
        %v1071 = vadd.f32 %v967, %v1070
        %v1072 = vpop.f32.mrb[0].mxu0
        %1073 = vdwg.mxu0
        %1074 = vmatprep.subr.mxu0 0.0
        %v1075 = vand.u32 %v712, 4294901760
        %1076 = vmatpush1.msra.mxu0 %v1075
        %1077 = vmatprep.subr.mxu0 0.0
        %v1078 = vand.u32 %v713, 4294901760
        %1079 = vmatpush1.msra.mxu0 %v1078
        %1080 = vmatprep.subr.mxu0 0.0
        %v1081 = vand.u32 %v714, 4294901760
        %1082 = vmatpush1.msra.mxu0 %v1081
        %1083 = vmatprep.subr.mxu0 0.0
        %v1084 = vand.u32 %v715, 4294901760
        %1085 = vmatpush1.msra.mxu0 %v1084
        %1086 = vmatprep.subr.mxu0 0.0
        %v1087 = vand.u32 %v716, 4294901760
        %1088 = vmatpush1.msra.mxu0 %v1087
        %1089 = vmatprep.subr.mxu0 0.0
        %v1090 = vand.u32 %v717, 4294901760
        %1091 = vmatpush1.msra.mxu0 %v1090
        %1092 = vmatprep.subr.mxu0 0.0
        %v1093 = vand.u32 %v718, 4294901760
        %1094 = vmatpush1.msra.mxu0 %v1093
        %1095 = vmatprep.subr.mxu0 0.0
        %v1096 = vand.u32 %v719, 4294901760
        %1097 = vmatpush1.msra.mxu0 %v1096
        %1098 = vmatprep.subr.mxu0 0.0
        %v1099 = vand.u32 %v720, 4294901760
        %1100 = vmatpush1.msra.mxu0 %v1099
        %1101 = vmatprep.subr.mxu0 0.0
        %v1102 = vand.u32 %v721, 4294901760
        %1103 = vmatpush1.msra.mxu0 %v1102
        %1104 = vmatprep.subr.mxu0 0.0
        %v1105 = vand.u32 %v722, 4294901760
        %1106 = vmatpush1.msra.mxu0 %v1105
        %1107 = vmatprep.subr.mxu0 0.0
        %v1108 = vand.u32 %v723, 4294901760
        %1109 = vmatpush1.msra.mxu0 %v1108
        %1110 = vmatprep.subr.mxu0 0.0
        %v1111 = vand.u32 %v724, 4294901760
        %1112 = vmatpush1.msra.mxu0 %v1111
        %1113 = vmatprep.subr.mxu0 0.0
        %v1114 = vand.u32 %v725, 4294901760
        %1115 = vmatpush1.msra.mxu0 %v1114
        %1116 = vmatprep.subr.mxu0 0.0
        %v1117 = vand.u32 %v726, 4294901760
        %1118 = vmatpush1.msra.mxu0 %v1117
        %1119 = vmatprep.subr.mxu0 0.0
        %v1120 = vand.u32 %v727, 4294901760
        %1121 = vmatpush1.msra.mxu0 %v1120
        %1122 = vmatprep.subr.mxu0 0.0
        %1123 = vmatpush1.msra.mxu0 0.0
        %1124 = vmatprep.subr.mxu0 0.0
        %1125 = vmatpush1.msra.mxu0 0.0
        %1126 = vmatprep.subr.mxu0 0.0
        %1127 = vmatpush1.msra.mxu0 0.0
        %1128 = vmatprep.subr.mxu0 0.0
        %1129 = vmatpush1.msra.mxu0 0.0
        %1130 = vmatprep.subr.mxu0 0.0
        %1131 = vmatpush1.msra.mxu0 0.0
        %1132 = vmatprep.subr.mxu0 0.0
        %1133 = vmatpush1.msra.mxu0 0.0
        %1134 = vmatprep.subr.mxu0 0.0
        %1135 = vmatpush1.msra.mxu0 0.0
        %1136 = vmatprep.subr.mxu0 0.0
        %1137 = vmatpush1.msra.mxu0 0.0
        %1138 = vmatprep.subr.mxu0 0.0
        %1139 = vmatpush1.msra.mxu0 0.0
        %1140 = vmatprep.subr.mxu0 0.0
        %1141 = vmatpush1.msra.mxu0 0.0
        %1142 = vmatprep.subr.mxu0 0.0
        %1143 = vmatpush1.msra.mxu0 0.0
        %1144 = vmatprep.subr.mxu0 0.0
        %1145 = vmatpush1.msra.mxu0 0.0
        %1146 = vmatprep.subr.mxu0 0.0
        %1147 = vmatpush1.msra.mxu0 0.0
        %1148 = vmatprep.subr.mxu0 0.0
        %1149 = vmatpush1.msra.mxu0 0.0
        %1150 = vmatprep.subr.mxu0 0.0
        %1151 = vmatpush1.msra.mxu0 0.0
        %1152 = vmatprep.subr.mxu0 0.0
        %1153 = vmatpush1.msra.mxu0 0.0
        %1154 = vmatprep.mubr.f32.mxu0 0.0
        %v1155 = vand.u32 %v704, 4294901760
        %v1156 = vsub.f32 %v704, %v1155
        %v1157 = vand.u32 %v1156, 4294901760
        %1158 = vmatmul.mubr.f32.gmra.mrb[0].mxu0 %v1157
        %v1159 = vpop.f32.mrb[0].mxu0
        %v1160 = vadd.f32 %v1071, %v1159
        %v1161 = vpop.f32.mrb[0].mxu0
        %1162 = vdwg.mxu0
        %1163 = vmatprep.subr.mxu0 0.0
        %v1164 = vand.u32 %v712, 4294901760
        %v1165 = vsub.f32 %v712, %v1164
        %v1166 = vand.u32 %v1165, 4294901760
        %1167 = vmatpush1.msra.mxu0 %v1166
        %1168 = vmatprep.subr.mxu0 0.0
        %v1169 = vand.u32 %v713, 4294901760
        %v1170 = vsub.f32 %v713, %v1169
        %v1171 = vand.u32 %v1170, 4294901760
        %1172 = vmatpush1.msra.mxu0 %v1171
        %1173 = vmatprep.subr.mxu0 0.0
        %v1174 = vand.u32 %v714, 4294901760
        %v1175 = vsub.f32 %v714, %v1174
        %v1176 = vand.u32 %v1175, 4294901760
        %1177 = vmatpush1.msra.mxu0 %v1176
        %1178 = vmatprep.subr.mxu0 0.0
        %v1179 = vand.u32 %v715, 4294901760
        %v1180 = vsub.f32 %v715, %v1179
        %v1181 = vand.u32 %v1180, 4294901760
        %1182 = vmatpush1.msra.mxu0 %v1181
        %1183 = vmatprep.subr.mxu0 0.0
        %v1184 = vand.u32 %v716, 4294901760
        %v1185 = vsub.f32 %v716, %v1184
        %v1186 = vand.u32 %v1185, 4294901760
        %1187 = vmatpush1.msra.mxu0 %v1186
        %1188 = vmatprep.subr.mxu0 0.0
        %v1189 = vand.u32 %v717, 4294901760
        %v1190 = vsub.f32 %v717, %v1189
        %v1191 = vand.u32 %v1190, 4294901760
        %1192 = vmatpush1.msra.mxu0 %v1191
        %1193 = vmatprep.subr.mxu0 0.0
        %v1194 = vand.u32 %v718, 4294901760
        %v1195 = vsub.f32 %v718, %v1194
        %v1196 = vand.u32 %v1195, 4294901760
        %1197 = vmatpush1.msra.mxu0 %v1196
        %1198 = vmatprep.subr.mxu0 0.0
        %v1199 = vand.u32 %v719, 4294901760
        %v1200 = vsub.f32 %v719, %v1199
        %v1201 = vand.u32 %v1200, 4294901760
        %1202 = vmatpush1.msra.mxu0 %v1201
        %1203 = vmatprep.subr.mxu0 0.0
        %v1204 = vand.u32 %v720, 4294901760
        %v1205 = vsub.f32 %v720, %v1204
        %v1206 = vand.u32 %v1205, 4294901760
        %1207 = vmatpush1.msra.mxu0 %v1206
        %1208 = vmatprep.subr.mxu0 0.0
        %v1209 = vand.u32 %v721, 4294901760
        %v1210 = vsub.f32 %v721, %v1209
        %v1211 = vand.u32 %v1210, 4294901760
        %1212 = vmatpush1.msra.mxu0 %v1211
        %1213 = vmatprep.subr.mxu0 0.0
        %v1214 = vand.u32 %v722, 4294901760
        %v1215 = vsub.f32 %v722, %v1214
        %v1216 = vand.u32 %v1215, 4294901760
        %1217 = vmatpush1.msra.mxu0 %v1216
        %1218 = vmatprep.subr.mxu0 0.0
        %v1219 = vand.u32 %v723, 4294901760
        %v1220 = vsub.f32 %v723, %v1219
        %v1221 = vand.u32 %v1220, 4294901760
        %1222 = vmatpush1.msra.mxu0 %v1221
        %1223 = vmatprep.subr.mxu0 0.0
        %v1224 = vand.u32 %v724, 4294901760
        %v1225 = vsub.f32 %v724, %v1224
        %v1226 = vand.u32 %v1225, 4294901760
        %1227 = vmatpush1.msra.mxu0 %v1226
        %1228 = vmatprep.subr.mxu0 0.0
        %v1229 = vand.u32 %v725, 4294901760
        %v1230 = vsub.f32 %v725, %v1229
        %v1231 = vand.u32 %v1230, 4294901760
        %1232 = vmatpush1.msra.mxu0 %v1231
        %1233 = vmatprep.subr.mxu0 0.0
        %v1234 = vand.u32 %v726, 4294901760
        %v1235 = vsub.f32 %v726, %v1234
        %v1236 = vand.u32 %v1235, 4294901760
        %1237 = vmatpush1.msra.mxu0 %v1236
        %1238 = vmatprep.subr.mxu0 0.0
        %v1239 = vand.u32 %v727, 4294901760
        %v1240 = vsub.f32 %v727, %v1239
        %v1241 = vand.u32 %v1240, 4294901760
        %1242 = vmatpush1.msra.mxu0 %v1241
        %1243 = vmatprep.subr.mxu0 0.0
        %1244 = vmatpush1.msra.mxu0 0.0
        %1245 = vmatprep.subr.mxu0 0.0
        %1246 = vmatpush1.msra.mxu0 0.0
        %1247 = vmatprep.subr.mxu0 0.0
        %1248 = vmatpush1.msra.mxu0 0.0
        %1249 = vmatprep.subr.mxu0 0.0
        %1250 = vmatpush1.msra.mxu0 0.0
        %1251 = vmatprep.subr.mxu0 0.0
        %1252 = vmatpush1.msra.mxu0 0.0
        %1253 = vmatprep.subr.mxu0 0.0
        %1254 = vmatpush1.msra.mxu0 0.0
        %1255 = vmatprep.subr.mxu0 0.0
        %1256 = vmatpush1.msra.mxu0 0.0
        %1257 = vmatprep.subr.mxu0 0.0
        %1258 = vmatpush1.msra.mxu0 0.0
        %1259 = vmatprep.subr.mxu0 0.0
        %1260 = vmatpush1.msra.mxu0 0.0
        %1261 = vmatprep.subr.mxu0 0.0
        %1262 = vmatpush1.msra.mxu0 0.0
        %1263 = vmatprep.subr.mxu0 0.0
        %1264 = vmatpush1.msra.mxu0 0.0
        %1265 = vmatprep.subr.mxu0 0.0
        %1266 = vmatpush1.msra.mxu0 0.0
        %1267 = vmatprep.subr.mxu0 0.0
        %1268 = vmatpush1.msra.mxu0 0.0
        %1269 = vmatprep.subr.mxu0 0.0
        %1270 = vmatpush1.msra.mxu0 0.0
        %1271 = vmatprep.subr.mxu0 0.0
        %1272 = vmatpush1.msra.mxu0 0.0
        %1273 = vmatprep.subr.mxu0 0.0
        %1274 = vmatpush1.msra.mxu0 0.0
        %1275 = vmatprep.mubr.f32.mxu0 0.0
        %v1276 = vand.u32 %v704, 4294901760
        %1277 = vmatmul.mubr.f32.gmra.mrb[0].mxu0 %v1276
        %v1278 = vpop.f32.mrb[0].mxu0
        %v1279 = vadd.f32 %v1160, %v1278
        %v1280 = vpop.f32.mrb[0].mxu0
        %1281 = vdwg.mxu0
        %1282 = vmatprep.subr.mxu0 0.0
        %v1283 = vand.u32 %v712, 4294901760
        %1284 = vmatpush1.msra.mxu0 %v1283
        %1285 = vmatprep.subr.mxu0 0.0
        %v1286 = vand.u32 %v713, 4294901760
        %1287 = vmatpush1.msra.mxu0 %v1286
        %1288 = vmatprep.subr.mxu0 0.0
        %v1289 = vand.u32 %v714, 4294901760
        %1290 = vmatpush1.msra.mxu0 %v1289
        %1291 = vmatprep.subr.mxu0 0.0
        %v1292 = vand.u32 %v715, 4294901760
        %1293 = vmatpush1.msra.mxu0 %v1292
        %1294 = vmatprep.subr.mxu0 0.0
        %v1295 = vand.u32 %v716, 4294901760
        %1296 = vmatpush1.msra.mxu0 %v1295
        %1297 = vmatprep.subr.mxu0 0.0
        %v1298 = vand.u32 %v717, 4294901760
        %1299 = vmatpush1.msra.mxu0 %v1298
        %1300 = vmatprep.subr.mxu0 0.0
        %v1301 = vand.u32 %v718, 4294901760
        %1302 = vmatpush1.msra.mxu0 %v1301
        %1303 = vmatprep.subr.mxu0 0.0
        %v1304 = vand.u32 %v719, 4294901760
        %1305 = vmatpush1.msra.mxu0 %v1304
        %1306 = vmatprep.subr.mxu0 0.0
        %v1307 = vand.u32 %v720, 4294901760
        %1308 = vmatpush1.msra.mxu0 %v1307
        %1309 = vmatprep.subr.mxu0 0.0
        %v1310 = vand.u32 %v721, 4294901760
        %1311 = vmatpush1.msra.mxu0 %v1310
        %1312 = vmatprep.subr.mxu0 0.0
        %v1313 = vand.u32 %v722, 4294901760
        %1314 = vmatpush1.msra.mxu0 %v1313
        %1315 = vmatprep.subr.mxu0 0.0
        %v1316 = vand.u32 %v723, 4294901760
        %1317 = vmatpush1.msra.mxu0 %v1316
        %1318 = vmatprep.subr.mxu0 0.0
        %v1319 = vand.u32 %v724, 4294901760
        %1320 = vmatpush1.msra.mxu0 %v1319
        %1321 = vmatprep.subr.mxu0 0.0
        %v1322 = vand.u32 %v725, 4294901760
        %1323 = vmatpush1.msra.mxu0 %v1322
        %1324 = vmatprep.subr.mxu0 0.0
        %v1325 = vand.u32 %v726, 4294901760
        %1326 = vmatpush1.msra.mxu0 %v1325
        %1327 = vmatprep.subr.mxu0 0.0
        %v1328 = vand.u32 %v727, 4294901760
        %1329 = vmatpush1.msra.mxu0 %v1328
        %1330 = vmatprep.subr.mxu0 0.0
        %1331 = vmatpush1.msra.mxu0 0.0
        %1332 = vmatprep.subr.mxu0 0.0
        %1333 = vmatpush1.msra.mxu0 0.0
        %1334 = vmatprep.subr.mxu0 0.0
        %1335 = vmatpush1.msra.mxu0 0.0
        %1336 = vmatprep.subr.mxu0 0.0
        %1337 = vmatpush1.msra.mxu0 0.0
        %1338 = vmatprep.subr.mxu0 0.0
        %1339 = vmatpush1.msra.mxu0 0.0
        %1340 = vmatprep.subr.mxu0 0.0
        %1341 = vmatpush1.msra.mxu0 0.0
        %1342 = vmatprep.subr.mxu0 0.0
        %1343 = vmatpush1.msra.mxu0 0.0
        %1344 = vmatprep.subr.mxu0 0.0
        %1345 = vmatpush1.msra.mxu0 0.0
        %1346 = vmatprep.subr.mxu0 0.0
        %1347 = vmatpush1.msra.mxu0 0.0
        %1348 = vmatprep.subr.mxu0 0.0
        %1349 = vmatpush1.msra.mxu0 0.0
        %1350 = vmatprep.subr.mxu0 0.0
        %1351 = vmatpush1.msra.mxu0 0.0
        %1352 = vmatprep.subr.mxu0 0.0
        %1353 = vmatpush1.msra.mxu0 0.0
        %1354 = vmatprep.subr.mxu0 0.0
        %1355 = vmatpush1.msra.mxu0 0.0
        %1356 = vmatprep.subr.mxu0 0.0
        %1357 = vmatpush1.msra.mxu0 0.0
        %1358 = vmatprep.subr.mxu0 0.0
        %1359 = vmatpush1.msra.mxu0 0.0
        %1360 = vmatprep.subr.mxu0 0.0
        %1361 = vmatpush1.msra.mxu0 0.0
        %1362 = vmatprep.mubr.f32.mxu0 0.0
        %v1363 = vand.u32 %v704, 4294901760
        %1364 = vmatmul.mubr.f32.gmra.mrb[0].mxu0 %v1363
        %v1365 = vpop.f32.mrb[0].mxu0
        %v1366 = vadd.f32 %v1279, %v1365
        %v1367 = vpop.f32.mrb[0].mxu0
        %1368 = vdwg.mxu0
        %v1369 = vmul.f32 %v1366, 2.0
        %v1370 = vsub.f32 %v237, %v1369
        %v1371 = vmul.f32 %v1370, 1.442695
        %v1372 = vpow.pop %v1371
        %v1373 = vld [vmem:[%s3] sm:$0xff]
        %v1374 = vld [vmem:[%s3 + $0x8] sm:$0x1]
        %v1376 = vsel %vm240, %v1372, 0
        %v1379 = vsel %vm244, %v1374, 0
        %1381 = vmatprep.subr.mxu0 0.0
        %v1382 = vand.u32 %v1373, 4294901760
        %1383 = vmatpush1.msra.mxu0 %v1382
        %1384 = vmatprep.subr.mxu0 0.0
        %v1385 = vand.u32 %v1379, 4294901760
        %1386 = vmatpush1.msra.mxu0 %v1385
        %1387 = vmatprep.subr.mxu0 0.0
        %1388 = vmatpush1.msra.mxu0 0.0
        %1389 = vmatprep.subr.mxu0 0.0
        %1390 = vmatpush1.msra.mxu0 0.0
        %1391 = vmatprep.subr.mxu0 0.0
        %1392 = vmatpush1.msra.mxu0 0.0
        %1393 = vmatprep.subr.mxu0 0.0
        %1394 = vmatpush1.msra.mxu0 0.0
        %1395 = vmatprep.subr.mxu0 0.0
        %1396 = vmatpush1.msra.mxu0 0.0
        %1397 = vmatprep.subr.mxu0 0.0
        %1398 = vmatpush1.msra.mxu0 0.0
        %1399 = vmatprep.subr.mxu0 0.0
        %1400 = vmatpush1.msra.mxu0 0.0
        %1401 = vmatprep.subr.mxu0 0.0
        %1402 = vmatpush1.msra.mxu0 0.0
        %1403 = vmatprep.subr.mxu0 0.0
        %1404 = vmatpush1.msra.mxu0 0.0
        %1405 = vmatprep.subr.mxu0 0.0
        %1406 = vmatpush1.msra.mxu0 0.0
        %1407 = vmatprep.subr.mxu0 0.0
        %1408 = vmatpush1.msra.mxu0 0.0
        %1409 = vmatprep.subr.mxu0 0.0
        %1410 = vmatpush1.msra.mxu0 0.0
        %1411 = vmatprep.subr.mxu0 0.0
        %1412 = vmatpush1.msra.mxu0 0.0
        %1413 = vmatprep.subr.mxu0 0.0
        %1414 = vmatpush1.msra.mxu0 0.0
        %1415 = vmatprep.subr.mxu0 0.0
        %1416 = vmatpush1.msra.mxu0 0.0
        %1417 = vmatprep.subr.mxu0 0.0
        %1418 = vmatpush1.msra.mxu0 0.0
        %1419 = vmatprep.subr.mxu0 0.0
        %1420 = vmatpush1.msra.mxu0 0.0
        %1421 = vmatprep.subr.mxu0 0.0
        %1422 = vmatpush1.msra.mxu0 0.0
        %1423 = vmatprep.subr.mxu0 0.0
        %1424 = vmatpush1.msra.mxu0 0.0
        %1425 = vmatprep.subr.mxu0 0.0
        %1426 = vmatpush1.msra.mxu0 0.0
        %1427 = vmatprep.subr.mxu0 0.0
        %1428 = vmatpush1.msra.mxu0 0.0
        %1429 = vmatprep.subr.mxu0 0.0
        %1430 = vmatpush1.msra.mxu0 0.0
        %1431 = vmatprep.subr.mxu0 0.0
        %1432 = vmatpush1.msra.mxu0 0.0
        %1433 = vmatprep.subr.mxu0 0.0
        %1434 = vmatpush1.msra.mxu0 0.0
        %1435 = vmatprep.subr.mxu0 0.0
        %1436 = vmatpush1.msra.mxu0 0.0
        %1437 = vmatprep.subr.mxu0 0.0
        %1438 = vmatpush1.msra.mxu0 0.0
        %1439 = vmatprep.subr.mxu0 0.0
        %1440 = vmatpush1.msra.mxu0 0.0
        %1441 = vmatprep.subr.mxu0 0.0
        %1442 = vmatpush1.msra.mxu0 0.0
        %1443 = vmatprep.subr.mxu0 0.0
        %1444 = vmatpush1.msra.mxu0 0.0
        %1445 = vmatprep.subr.mxu0 0.0
        %1446 = vmatpush1.msra.mxu0 0.0
        %1447 = vmatprep.mubr.f32.mxu0 0.0
        %v1448 = vand.u32 %v1376, 4294901760
        %v1449 = vsub.f32 %v1376, %v1448
        %v1450 = vand.u32 %v1449, 4294901760
        %v1451 = vsub.f32 %v1449, %v1450
        %v1452 = vand.u32 %v1451, 4294901760
        %1453 = vmatmul.mubr.f32.gmra.mrb[0].mxu0 %v1452
        %v1454 = vpop.f32.mrb[0].mxu0
        %v1455 = vadd.f32 0.0, %v1454
        %v1456 = vpop.f32.mrb[0].mxu0
        %1457 = vdwg.mxu0
        %1458 = vmatprep.subr.mxu0 0.0
        %v1459 = vand.u32 %v1373, 4294901760
        %v1460 = vsub.f32 %v1373, %v1459
        %v1461 = vand.u32 %v1460, 4294901760
        %v1462 = vsub.f32 %v1460, %v1461
        %v1463 = vand.u32 %v1462, 4294901760
        %1464 = vmatpush1.msra.mxu0 %v1463
        %1465 = vmatprep.subr.mxu0 0.0
        %v1466 = vand.u32 %v1379, 4294901760
        %v1467 = vsub.f32 %v1379, %v1466
        %v1468 = vand.u32 %v1467, 4294901760
        %v1469 = vsub.f32 %v1467, %v1468
        %v1470 = vand.u32 %v1469, 4294901760
        %1471 = vmatpush1.msra.mxu0 %v1470
        %1472 = vmatprep.subr.mxu0 0.0
        %1473 = vmatpush1.msra.mxu0 0.0
        %1474 = vmatprep.subr.mxu0 0.0
        %1475 = vmatpush1.msra.mxu0 0.0
        %1476 = vmatprep.subr.mxu0 0.0
        %1477 = vmatpush1.msra.mxu0 0.0
        %1478 = vmatprep.subr.mxu0 0.0
        %1479 = vmatpush1.msra.mxu0 0.0
        %1480 = vmatprep.subr.mxu0 0.0
        %1481 = vmatpush1.msra.mxu0 0.0
        %1482 = vmatprep.subr.mxu0 0.0
        %1483 = vmatpush1.msra.mxu0 0.0
        %1484 = vmatprep.subr.mxu0 0.0
        %1485 = vmatpush1.msra.mxu0 0.0
        %1486 = vmatprep.subr.mxu0 0.0
        %1487 = vmatpush1.msra.mxu0 0.0
        %1488 = vmatprep.subr.mxu0 0.0
        %1489 = vmatpush1.msra.mxu0 0.0
        %1490 = vmatprep.subr.mxu0 0.0
        %1491 = vmatpush1.msra.mxu0 0.0
        %1492 = vmatprep.subr.mxu0 0.0
        %1493 = vmatpush1.msra.mxu0 0.0
        %1494 = vmatprep.subr.mxu0 0.0
        %1495 = vmatpush1.msra.mxu0 0.0
        %1496 = vmatprep.subr.mxu0 0.0
        %1497 = vmatpush1.msra.mxu0 0.0
        %1498 = vmatprep.subr.mxu0 0.0
        %1499 = vmatpush1.msra.mxu0 0.0
        %1500 = vmatprep.subr.mxu0 0.0
        %1501 = vmatpush1.msra.mxu0 0.0
        %1502 = vmatprep.subr.mxu0 0.0
        %1503 = vmatpush1.msra.mxu0 0.0
        %1504 = vmatprep.subr.mxu0 0.0
        %1505 = vmatpush1.msra.mxu0 0.0
        %1506 = vmatprep.subr.mxu0 0.0
        %1507 = vmatpush1.msra.mxu0 0.0
        %1508 = vmatprep.subr.mxu0 0.0
        %1509 = vmatpush1.msra.mxu0 0.0
        %1510 = vmatprep.subr.mxu0 0.0
        %1511 = vmatpush1.msra.mxu0 0.0
        %1512 = vmatprep.subr.mxu0 0.0
        %1513 = vmatpush1.msra.mxu0 0.0
        %1514 = vmatprep.subr.mxu0 0.0
        %1515 = vmatpush1.msra.mxu0 0.0
        %1516 = vmatprep.subr.mxu0 0.0
        %1517 = vmatpush1.msra.mxu0 0.0
        %1518 = vmatprep.subr.mxu0 0.0
        %1519 = vmatpush1.msra.mxu0 0.0
        %1520 = vmatprep.subr.mxu0 0.0
        %1521 = vmatpush1.msra.mxu0 0.0
        %1522 = vmatprep.subr.mxu0 0.0
        %1523 = vmatpush1.msra.mxu0 0.0
        %1524 = vmatprep.subr.mxu0 0.0
        %1525 = vmatpush1.msra.mxu0 0.0
        %1526 = vmatprep.subr.mxu0 0.0
        %1527 = vmatpush1.msra.mxu0 0.0
        %1528 = vmatprep.subr.mxu0 0.0
        %1529 = vmatpush1.msra.mxu0 0.0
        %1530 = vmatprep.subr.mxu0 0.0
        %1531 = vmatpush1.msra.mxu0 0.0
        %1532 = vmatprep.mubr.f32.mxu0 0.0
        %v1533 = vand.u32 %v1376, 4294901760
        %1534 = vmatmul.mubr.f32.gmra.mrb[0].mxu0 %v1533
        %v1535 = vpop.f32.mrb[0].mxu0
        %v1536 = vadd.f32 %v1455, %v1535
        %v1537 = vpop.f32.mrb[0].mxu0
        %1538 = vdwg.mxu0
        %1539 = vmatprep.subr.mxu0 0.0
        %v1540 = vand.u32 %v1373, 4294901760
        %v1541 = vsub.f32 %v1373, %v1540
        %1542 = vmatpush1.msra.mxu0 %v1541
        %1543 = vmatprep.subr.mxu0 0.0
        %v1544 = vand.u32 %v1379, 4294901760
        %v1545 = vsub.f32 %v1379, %v1544
        %1546 = vmatpush1.msra.mxu0 %v1545
        %1547 = vmatprep.subr.mxu0 0.0
        %1548 = vmatpush1.msra.mxu0 0.0
        %1549 = vmatprep.subr.mxu0 0.0
        %1550 = vmatpush1.msra.mxu0 0.0
        %1551 = vmatprep.subr.mxu0 0.0
        %1552 = vmatpush1.msra.mxu0 0.0
        %1553 = vmatprep.subr.mxu0 0.0
        %1554 = vmatpush1.msra.mxu0 0.0
        %1555 = vmatprep.subr.mxu0 0.0
        %1556 = vmatpush1.msra.mxu0 0.0
        %1557 = vmatprep.subr.mxu0 0.0
        %1558 = vmatpush1.msra.mxu0 0.0
        %1559 = vmatprep.subr.mxu0 0.0
        %1560 = vmatpush1.msra.mxu0 0.0
        %1561 = vmatprep.subr.mxu0 0.0
        %1562 = vmatpush1.msra.mxu0 0.0
        %1563 = vmatprep.subr.mxu0 0.0
        %1564 = vmatpush1.msra.mxu0 0.0
        %1565 = vmatprep.subr.mxu0 0.0
        %1566 = vmatpush1.msra.mxu0 0.0
        %1567 = vmatprep.subr.mxu0 0.0
        %1568 = vmatpush1.msra.mxu0 0.0
        %1569 = vmatprep.subr.mxu0 0.0
        %1570 = vmatpush1.msra.mxu0 0.0
        %1571 = vmatprep.subr.mxu0 0.0
        %1572 = vmatpush1.msra.mxu0 0.0
        %1573 = vmatprep.subr.mxu0 0.0
        %1574 = vmatpush1.msra.mxu0 0.0
        %1575 = vmatprep.subr.mxu0 0.0
        %1576 = vmatpush1.msra.mxu0 0.0
        %1577 = vmatprep.subr.mxu0 0.0
        %1578 = vmatpush1.msra.mxu0 0.0
        %1579 = vmatprep.subr.mxu0 0.0
        %1580 = vmatpush1.msra.mxu0 0.0
        %1581 = vmatprep.subr.mxu0 0.0
        %1582 = vmatpush1.msra.mxu0 0.0
        %1583 = vmatprep.subr.mxu0 0.0
        %1584 = vmatpush1.msra.mxu0 0.0
        %1585 = vmatprep.subr.mxu0 0.0
        %1586 = vmatpush1.msra.mxu0 0.0
        %1587 = vmatprep.subr.mxu0 0.0
        %1588 = vmatpush1.msra.mxu0 0.0
        %1589 = vmatprep.subr.mxu0 0.0
        %1590 = vmatpush1.msra.mxu0 0.0
        %1591 = vmatprep.subr.mxu0 0.0
        %1592 = vmatpush1.msra.mxu0 0.0
        %1593 = vmatprep.subr.mxu0 0.0
        %1594 = vmatpush1.msra.mxu0 0.0
        %1595 = vmatprep.subr.mxu0 0.0
        %1596 = vmatpush1.msra.mxu0 0.0
        %1597 = vmatprep.subr.mxu0 0.0
        %1598 = vmatpush1.msra.mxu0 0.0
        %1599 = vmatprep.subr.mxu0 0.0
        %1600 = vmatpush1.msra.mxu0 0.0
        %1601 = vmatprep.subr.mxu0 0.0
        %1602 = vmatpush1.msra.mxu0 0.0
        %1603 = vmatprep.subr.mxu0 0.0
        %1604 = vmatpush1.msra.mxu0 0.0
        %1605 = vmatprep.subr.mxu0 0.0
        %1606 = vmatpush1.msra.mxu0 0.0
        %1607 = vmatprep.mubr.f32.mxu0 0.0
        %v1608 = vand.u32 %v1376, 4294901760
        %v1609 = vsub.f32 %v1376, %v1608
        %1610 = vmatmul.mubr.f32.gmra.mrb[0].mxu0 %v1609
        %v1611 = vpop.f32.mrb[0].mxu0
        %v1612 = vadd.f32 %v1536, %v1611
        %v1613 = vpop.f32.mrb[0].mxu0
        %1614 = vdwg.mxu0
        %1615 = vmatprep.subr.mxu0 0.0
        %v1616 = vand.u32 %v1373, 4294901760
        %1617 = vmatpush1.msra.mxu0 %v1616
        %1618 = vmatprep.subr.mxu0 0.0
        %v1619 = vand.u32 %v1379, 4294901760
        %1620 = vmatpush1.msra.mxu0 %v1619
        %1621 = vmatprep.subr.mxu0 0.0
        %1622 = vmatpush1.msra.mxu0 0.0
        %1623 = vmatprep.subr.mxu0 0.0
        %1624 = vmatpush1.msra.mxu0 0.0
        %1625 = vmatprep.subr.mxu0 0.0
        %1626 = vmatpush1.msra.mxu0 0.0
        %1627 = vmatprep.subr.mxu0 0.0
        %1628 = vmatpush1.msra.mxu0 0.0
        %1629 = vmatprep.subr.mxu0 0.0
        %1630 = vmatpush1.msra.mxu0 0.0
        %1631 = vmatprep.subr.mxu0 0.0
        %1632 = vmatpush1.msra.mxu0 0.0
        %1633 = vmatprep.subr.mxu0 0.0
        %1634 = vmatpush1.msra.mxu0 0.0
        %1635 = vmatprep.subr.mxu0 0.0
        %1636 = vmatpush1.msra.mxu0 0.0
        %1637 = vmatprep.subr.mxu0 0.0
        %1638 = vmatpush1.msra.mxu0 0.0
        %1639 = vmatprep.subr.mxu0 0.0
        %1640 = vmatpush1.msra.mxu0 0.0
        %1641 = vmatprep.subr.mxu0 0.0
        %1642 = vmatpush1.msra.mxu0 0.0
        %1643 = vmatprep.subr.mxu0 0.0
        %1644 = vmatpush1.msra.mxu0 0.0
        %1645 = vmatprep.subr.mxu0 0.0
        %1646 = vmatpush1.msra.mxu0 0.0
        %1647 = vmatprep.subr.mxu0 0.0
        %1648 = vmatpush1.msra.mxu0 0.0
        %1649 = vmatprep.subr.mxu0 0.0
        %1650 = vmatpush1.msra.mxu0 0.0
        %1651 = vmatprep.subr.mxu0 0.0
        %1652 = vmatpush1.msra.mxu0 0.0
        %1653 = vmatprep.subr.mxu0 0.0
        %1654 = vmatpush1.msra.mxu0 0.0
        %1655 = vmatprep.subr.mxu0 0.0
        %1656 = vmatpush1.msra.mxu0 0.0
        %1657 = vmatprep.subr.mxu0 0.0
        %1658 = vmatpush1.msra.mxu0 0.0
        %1659 = vmatprep.subr.mxu0 0.0
        %1660 = vmatpush1.msra.mxu0 0.0
        %1661 = vmatprep.subr.mxu0 0.0
        %1662 = vmatpush1.msra.mxu0 0.0
        %1663 = vmatprep.subr.mxu0 0.0
        %1664 = vmatpush1.msra.mxu0 0.0
        %1665 = vmatprep.subr.mxu0 0.0
        %1666 = vmatpush1.msra.mxu0 0.0
        %1667 = vmatprep.subr.mxu0 0.0
        %1668 = vmatpush1.msra.mxu0 0.0
        %1669 = vmatprep.subr.mxu0 0.0
        %1670 = vmatpush1.msra.mxu0 0.0
        %1671 = vmatprep.subr.mxu0 0.0
        %1672 = vmatpush1.msra.mxu0 0.0
        %1673 = vmatprep.subr.mxu0 0.0
        %1674 = vmatpush1.msra.mxu0 0.0
        %1675 = vmatprep.subr.mxu0 0.0
        %1676 = vmatpush1.msra.mxu0 0.0
        %1677 = vmatprep.subr.mxu0 0.0
        %1678 = vmatpush1.msra.mxu0 0.0
        %1679 = vmatprep.subr.mxu0 0.0
        %1680 = vmatpush1.msra.mxu0 0.0
        %1681 = vmatprep.mubr.f32.mxu0 0.0
        %v1682 = vand.u32 %v1376, 4294901760
        %v1683 = vsub.f32 %v1376, %v1682
        %v1684 = vand.u32 %v1683, 4294901760
        %1685 = vmatmul.mubr.f32.gmra.mrb[0].mxu0 %v1684
        %v1686 = vpop.f32.mrb[0].mxu0
        %v1687 = vadd.f32 %v1612, %v1686
        %v1688 = vpop.f32.mrb[0].mxu0
        %1689 = vdwg.mxu0
        %1690 = vmatprep.subr.mxu0 0.0
        %v1691 = vand.u32 %v1373, 4294901760
        %v1692 = vsub.f32 %v1373, %v1691
        %v1693 = vand.u32 %v1692, 4294901760
        %1694 = vmatpush1.msra.mxu0 %v1693
        %1695 = vmatprep.subr.mxu0 0.0
        %v1696 = vand.u32 %v1379, 4294901760
        %v1697 = vsub.f32 %v1379, %v1696
        %v1698 = vand.u32 %v1697, 4294901760
        %1699 = vmatpush1.msra.mxu0 %v1698
        %1700 = vmatprep.subr.mxu0 0.0
        %1701 = vmatpush1.msra.mxu0 0.0
        %1702 = vmatprep.subr.mxu0 0.0
        %1703 = vmatpush1.msra.mxu0 0.0
        %1704 = vmatprep.subr.mxu0 0.0
        %1705 = vmatpush1.msra.mxu0 0.0
        %1706 = vmatprep.subr.mxu0 0.0
        %1707 = vmatpush1.msra.mxu0 0.0
        %1708 = vmatprep.subr.mxu0 0.0
        %1709 = vmatpush1.msra.mxu0 0.0
        %1710 = vmatprep.subr.mxu0 0.0
        %1711 = vmatpush1.msra.mxu0 0.0
        %1712 = vmatprep.subr.mxu0 0.0
        %1713 = vmatpush1.msra.mxu0 0.0
        %1714 = vmatprep.subr.mxu0 0.0
        %1715 = vmatpush1.msra.mxu0 0.0
        %1716 = vmatprep.subr.mxu0 0.0
        %1717 = vmatpush1.msra.mxu0 0.0
        %1718 = vmatprep.subr.mxu0 0.0
        %1719 = vmatpush1.msra.mxu0 0.0
        %1720 = vmatprep.subr.mxu0 0.0
        %1721 = vmatpush1.msra.mxu0 0.0
        %1722 = vmatprep.subr.mxu0 0.0
        %1723 = vmatpush1.msra.mxu0 0.0
        %1724 = vmatprep.subr.mxu0 0.0
        %1725 = vmatpush1.msra.mxu0 0.0
        %1726 = vmatprep.subr.mxu0 0.0
        %1727 = vmatpush1.msra.mxu0 0.0
        %1728 = vmatprep.subr.mxu0 0.0
        %1729 = vmatpush1.msra.mxu0 0.0
        %1730 = vmatprep.subr.mxu0 0.0
        %1731 = vmatpush1.msra.mxu0 0.0
        %1732 = vmatprep.subr.mxu0 0.0
        %1733 = vmatpush1.msra.mxu0 0.0
        %1734 = vmatprep.subr.mxu0 0.0
        %1735 = vmatpush1.msra.mxu0 0.0
        %1736 = vmatprep.subr.mxu0 0.0
        %1737 = vmatpush1.msra.mxu0 0.0
        %1738 = vmatprep.subr.mxu0 0.0
        %1739 = vmatpush1.msra.mxu0 0.0
        %1740 = vmatprep.subr.mxu0 0.0
        %1741 = vmatpush1.msra.mxu0 0.0
        %1742 = vmatprep.subr.mxu0 0.0
        %1743 = vmatpush1.msra.mxu0 0.0
        %1744 = vmatprep.subr.mxu0 0.0
        %1745 = vmatpush1.msra.mxu0 0.0
        %1746 = vmatprep.subr.mxu0 0.0
        %1747 = vmatpush1.msra.mxu0 0.0
        %1748 = vmatprep.subr.mxu0 0.0
        %1749 = vmatpush1.msra.mxu0 0.0
        %1750 = vmatprep.subr.mxu0 0.0
        %1751 = vmatpush1.msra.mxu0 0.0
        %1752 = vmatprep.subr.mxu0 0.0
        %1753 = vmatpush1.msra.mxu0 0.0
        %1754 = vmatprep.subr.mxu0 0.0
        %1755 = vmatpush1.msra.mxu0 0.0
        %1756 = vmatprep.subr.mxu0 0.0
        %1757 = vmatpush1.msra.mxu0 0.0
        %1758 = vmatprep.subr.mxu0 0.0
        %1759 = vmatpush1.msra.mxu0 0.0
        %1760 = vmatprep.mubr.f32.mxu0 0.0
        %v1761 = vand.u32 %v1376, 4294901760
        %1762 = vmatmul.mubr.f32.gmra.mrb[0].mxu0 %v1761
        %v1763 = vpop.f32.mrb[0].mxu0
        %v1764 = vadd.f32 %v1687, %v1763
        %v1765 = vpop.f32.mrb[0].mxu0
        %1766 = vdwg.mxu0
        %1767 = vmatprep.subr.mxu0 0.0
        %v1768 = vand.u32 %v1373, 4294901760
        %1769 = vmatpush1.msra.mxu0 %v1768
        %1770 = vmatprep.subr.mxu0 0.0
        %v1771 = vand.u32 %v1379, 4294901760
        %1772 = vmatpush1.msra.mxu0 %v1771
        %1773 = vmatprep.subr.mxu0 0.0
        %1774 = vmatpush1.msra.mxu0 0.0
        %1775 = vmatprep.subr.mxu0 0.0
        %1776 = vmatpush1.msra.mxu0 0.0
        %1777 = vmatprep.subr.mxu0 0.0
        %1778 = vmatpush1.msra.mxu0 0.0
        %1779 = vmatprep.subr.mxu0 0.0
        %1780 = vmatpush1.msra.mxu0 0.0
        %1781 = vmatprep.subr.mxu0 0.0
        %1782 = vmatpush1.msra.mxu0 0.0
        %1783 = vmatprep.subr.mxu0 0.0
        %1784 = vmatpush1.msra.mxu0 0.0
        %1785 = vmatprep.subr.mxu0 0.0
        %1786 = vmatpush1.msra.mxu0 0.0
        %1787 = vmatprep.subr.mxu0 0.0
        %1788 = vmatpush1.msra.mxu0 0.0
        %1789 = vmatprep.subr.mxu0 0.0
        %1790 = vmatpush1.msra.mxu0 0.0
        %1791 = vmatprep.subr.mxu0 0.0
        %1792 = vmatpush1.msra.mxu0 0.0
        %1793 = vmatprep.subr.mxu0 0.0
        %1794 = vmatpush1.msra.mxu0 0.0
        %1795 = vmatprep.subr.mxu0 0.0
        %1796 = vmatpush1.msra.mxu0 0.0
        %1797 = vmatprep.subr.mxu0 0.0
        %1798 = vmatpush1.msra.mxu0 0.0
        %1799 = vmatprep.subr.mxu0 0.0
        %1800 = vmatpush1.msra.mxu0 0.0
        %1801 = vmatprep.subr.mxu0 0.0
        %1802 = vmatpush1.msra.mxu0 0.0
        %1803 = vmatprep.subr.mxu0 0.0
        %1804 = vmatpush1.msra.mxu0 0.0
        %1805 = vmatprep.subr.mxu0 0.0
        %1806 = vmatpush1.msra.mxu0 0.0
        %1807 = vmatprep.subr.mxu0 0.0
        %1808 = vmatpush1.msra.mxu0 0.0
        %1809 = vmatprep.subr.mxu0 0.0
        %1810 = vmatpush1.msra.mxu0 0.0
        %1811 = vmatprep.subr.mxu0 0.0
        %1812 = vmatpush1.msra.mxu0 0.0
        %1813 = vmatprep.subr.mxu0 0.0
        %1814 = vmatpush1.msra.mxu0 0.0
        %1815 = vmatprep.subr.mxu0 0.0
        %1816 = vmatpush1.msra.mxu0 0.0
        %1817 = vmatprep.subr.mxu0 0.0
        %1818 = vmatpush1.msra.mxu0 0.0
        %1819 = vmatprep.subr.mxu0 0.0
        %1820 = vmatpush1.msra.mxu0 0.0
        %1821 = vmatprep.subr.mxu0 0.0
        %1822 = vmatpush1.msra.mxu0 0.0
        %1823 = vmatprep.subr.mxu0 0.0
        %1824 = vmatpush1.msra.mxu0 0.0
        %1825 = vmatprep.subr.mxu0 0.0
        %1826 = vmatpush1.msra.mxu0 0.0
        %1827 = vmatprep.subr.mxu0 0.0
        %1828 = vmatpush1.msra.mxu0 0.0
        %1829 = vmatprep.subr.mxu0 0.0
        %1830 = vmatpush1.msra.mxu0 0.0
        %1831 = vmatprep.subr.mxu0 0.0
        %1832 = vmatpush1.msra.mxu0 0.0
        %1833 = vmatprep.mubr.f32.mxu0 0.0
        %v1834 = vand.u32 %v1376, 4294901760
        %1835 = vmatmul.mubr.f32.gmra.mrb[0].mxu0 %v1834
        %v1836 = vpop.f32.mrb[0].mxu0
        %v1837 = vadd.f32 %v1764, %v1836
        %v1838 = vpop.f32.mrb[0].mxu0
        %1839 = vdwg.mxu0
        %v1840 = vld [vmem:[#allocation2] sm:$0xff]
        %v1841 = vld [vmem:[#allocation2 + $0x8] sm:$0xff]
        %v1842 = vld [vmem:[#allocation2 + $0x10] sm:$0xff]
        %v1843 = vld [vmem:[#allocation2 + $0x18] sm:$0xff]
        %v1844 = vld [vmem:[#allocation2 + $0x20] sm:$0xff]
        %v1845 = vld [vmem:[#allocation2 + $0x28] sm:$0xff]
        %v1846 = vld [vmem:[#allocation2 + $0x30] sm:$0xff]
        %v1847 = vld [vmem:[#allocation2 + $0x38] sm:$0xff]
        %v1848 = vld [vmem:[#allocation2 + $0x40] sm:$0xff]
        %v1849 = vld [vmem:[#allocation2 + $0x48] sm:$0xff]
        %v1850 = vld [vmem:[#allocation2 + $0x50] sm:$0xff]
        %v1851 = vld [vmem:[#allocation2 + $0x58] sm:$0xff]
        %v1852 = vld [vmem:[#allocation2 + $0x60] sm:$0xff]
        %v1853 = vld [vmem:[#allocation2 + $0x68] sm:$0xff]
        %v1854 = vld [vmem:[#allocation2 + $0x70] sm:$0xff]
        %v1855 = vld [vmem:[#allocation2 + $0x78] sm:$0xff]
        %1856 = vmatprep.subr.mxu0 0.0
        %v1857 = vand.u32 %v1840, 4294901760
        %1858 = vmatpush1.msra.mxu0 %v1857
        %1859 = vmatprep.subr.mxu0 0.0
        %v1860 = vand.u32 %v1841, 4294901760
        %1861 = vmatpush1.msra.mxu0 %v1860
        %1862 = vmatprep.subr.mxu0 0.0
        %v1863 = vand.u32 %v1842, 4294901760
        %1864 = vmatpush1.msra.mxu0 %v1863
        %1865 = vmatprep.subr.mxu0 0.0
        %v1866 = vand.u32 %v1843, 4294901760
        %1867 = vmatpush1.msra.mxu0 %v1866
        %1868 = vmatprep.subr.mxu0 0.0
        %v1869 = vand.u32 %v1844, 4294901760
        %1870 = vmatpush1.msra.mxu0 %v1869
        %1871 = vmatprep.subr.mxu0 0.0
        %v1872 = vand.u32 %v1845, 4294901760
        %1873 = vmatpush1.msra.mxu0 %v1872
        %1874 = vmatprep.subr.mxu0 0.0
        %v1875 = vand.u32 %v1846, 4294901760
        %1876 = vmatpush1.msra.mxu0 %v1875
        %1877 = vmatprep.subr.mxu0 0.0
        %v1878 = vand.u32 %v1847, 4294901760
        %1879 = vmatpush1.msra.mxu0 %v1878
        %1880 = vmatprep.subr.mxu0 0.0
        %v1881 = vand.u32 %v1848, 4294901760
        %1882 = vmatpush1.msra.mxu0 %v1881
        %1883 = vmatprep.subr.mxu0 0.0
        %v1884 = vand.u32 %v1849, 4294901760
        %1885 = vmatpush1.msra.mxu0 %v1884
        %1886 = vmatprep.subr.mxu0 0.0
        %v1887 = vand.u32 %v1850, 4294901760
        %1888 = vmatpush1.msra.mxu0 %v1887
        %1889 = vmatprep.subr.mxu0 0.0
        %v1890 = vand.u32 %v1851, 4294901760
        %1891 = vmatpush1.msra.mxu0 %v1890
        %1892 = vmatprep.subr.mxu0 0.0
        %v1893 = vand.u32 %v1852, 4294901760
        %1894 = vmatpush1.msra.mxu0 %v1893
        %1895 = vmatprep.subr.mxu0 0.0
        %v1896 = vand.u32 %v1853, 4294901760
        %1897 = vmatpush1.msra.mxu0 %v1896
        %1898 = vmatprep.subr.mxu0 0.0
        %v1899 = vand.u32 %v1854, 4294901760
        %1900 = vmatpush1.msra.mxu0 %v1899
        %1901 = vmatprep.subr.mxu0 0.0
        %v1902 = vand.u32 %v1855, 4294901760
        %1903 = vmatpush1.msra.mxu0 %v1902
        %1904 = vmatprep.subr.mxu0 0.0
        %1905 = vmatpush1.msra.mxu0 0.0
        %1906 = vmatprep.subr.mxu0 0.0
        %1907 = vmatpush1.msra.mxu0 0.0
        %1908 = vmatprep.subr.mxu0 0.0
        %1909 = vmatpush1.msra.mxu0 0.0
        %1910 = vmatprep.subr.mxu0 0.0
        %1911 = vmatpush1.msra.mxu0 0.0
        %1912 = vmatprep.subr.mxu0 0.0
        %1913 = vmatpush1.msra.mxu0 0.0
        %1914 = vmatprep.subr.mxu0 0.0
        %1915 = vmatpush1.msra.mxu0 0.0
        %1916 = vmatprep.subr.mxu0 0.0
        %1917 = vmatpush1.msra.mxu0 0.0
        %1918 = vmatprep.subr.mxu0 0.0
        %1919 = vmatpush1.msra.mxu0 0.0
        %1920 = vmatprep.subr.mxu0 0.0
        %1921 = vmatpush1.msra.mxu0 0.0
        %1922 = vmatprep.subr.mxu0 0.0
        %1923 = vmatpush1.msra.mxu0 0.0
        %1924 = vmatprep.subr.mxu0 0.0
        %1925 = vmatpush1.msra.mxu0 0.0
        %1926 = vmatprep.subr.mxu0 0.0
        %1927 = vmatpush1.msra.mxu0 0.0
        %1928 = vmatprep.subr.mxu0 0.0
        %1929 = vmatpush1.msra.mxu0 0.0
        %1930 = vmatprep.subr.mxu0 0.0
        %1931 = vmatpush1.msra.mxu0 0.0
        %1932 = vmatprep.subr.mxu0 0.0
        %1933 = vmatpush1.msra.mxu0 0.0
        %1934 = vmatprep.subr.mxu0 0.0
        %1935 = vmatpush1.msra.mxu0 0.0
        %1936 = vmatprep.mubr.f32.mxu0 0.0
        %v1937 = vand.u32 %v1837, 4294901760
        %v1938 = vsub.f32 %v1837, %v1937
        %v1939 = vand.u32 %v1938, 4294901760
        %v1940 = vsub.f32 %v1938, %v1939
        %v1941 = vand.u32 %v1940, 4294901760
        %1942 = vmatmul.mubr.f32.gmra.mrb[0].mxu0 %v1941
        %v1943 = vpop.f32.mrb[0].mxu0
        %v1944 = vadd.f32 0.0, %v1943
        %v1945 = vpop.f32.mrb[0].mxu0
        %1946 = vdwg.mxu0
        %1947 = vmatprep.subr.mxu0 0.0
        %v1948 = vand.u32 %v1840, 4294901760
        %v1949 = vsub.f32 %v1840, %v1948
        %v1950 = vand.u32 %v1949, 4294901760
        %v1951 = vsub.f32 %v1949, %v1950
        %v1952 = vand.u32 %v1951, 4294901760
        %1953 = vmatpush1.msra.mxu0 %v1952
        %1954 = vmatprep.subr.mxu0 0.0
        %v1955 = vand.u32 %v1841, 4294901760
        %v1956 = vsub.f32 %v1841, %v1955
        %v1957 = vand.u32 %v1956, 4294901760
        %v1958 = vsub.f32 %v1956, %v1957
        %v1959 = vand.u32 %v1958, 4294901760
        %1960 = vmatpush1.msra.mxu0 %v1959
        %1961 = vmatprep.subr.mxu0 0.0
        %v1962 = vand.u32 %v1842, 4294901760
        %v1963 = vsub.f32 %v1842, %v1962
        %v1964 = vand.u32 %v1963, 4294901760
        %v1965 = vsub.f32 %v1963, %v1964
        %v1966 = vand.u32 %v1965, 4294901760
        %1967 = vmatpush1.msra.mxu0 %v1966
        %1968 = vmatprep.subr.mxu0 0.0
        %v1969 = vand.u32 %v1843, 4294901760
        %v1970 = vsub.f32 %v1843, %v1969
        %v1971 = vand.u32 %v1970, 4294901760
        %v1972 = vsub.f32 %v1970, %v1971
        %v1973 = vand.u32 %v1972, 4294901760
        %1974 = vmatpush1.msra.mxu0 %v1973
        %1975 = vmatprep.subr.mxu0 0.0
        %v1976 = vand.u32 %v1844, 4294901760
        %v1977 = vsub.f32 %v1844, %v1976
        %v1978 = vand.u32 %v1977, 4294901760
        %v1979 = vsub.f32 %v1977, %v1978
        %v1980 = vand.u32 %v1979, 4294901760
        %1981 = vmatpush1.msra.mxu0 %v1980
        %1982 = vmatprep.subr.mxu0 0.0
        %v1983 = vand.u32 %v1845, 4294901760
        %v1984 = vsub.f32 %v1845, %v1983
        %v1985 = vand.u32 %v1984, 4294901760
        %v1986 = vsub.f32 %v1984, %v1985
        %v1987 = vand.u32 %v1986, 4294901760
        %1988 = vmatpush1.msra.mxu0 %v1987
        %1989 = vmatprep.subr.mxu0 0.0
        %v1990 = vand.u32 %v1846, 4294901760
        %v1991 = vsub.f32 %v1846, %v1990
        %v1992 = vand.u32 %v1991, 4294901760
        %v1993 = vsub.f32 %v1991, %v1992
        %v1994 = vand.u32 %v1993, 4294901760
        %1995 = vmatpush1.msra.mxu0 %v1994
        %1996 = vmatprep.subr.mxu0 0.0
        %v1997 = vand.u32 %v1847, 4294901760
        %v1998 = vsub.f32 %v1847, %v1997
        %v1999 = vand.u32 %v1998, 4294901760
        %v2000 = vsub.f32 %v1998, %v1999
        %v2001 = vand.u32 %v2000, 4294901760
        %2002 = vmatpush1.msra.mxu0 %v2001
        %2003 = vmatprep.subr.mxu0 0.0
        %v2004 = vand.u32 %v1848, 4294901760
        %v2005 = vsub.f32 %v1848, %v2004
        %v2006 = vand.u32 %v2005, 4294901760
        %v2007 = vsub.f32 %v2005, %v2006
        %v2008 = vand.u32 %v2007, 4294901760
        %2009 = vmatpush1.msra.mxu0 %v2008
        %2010 = vmatprep.subr.mxu0 0.0
        %v2011 = vand.u32 %v1849, 4294901760
        %v2012 = vsub.f32 %v1849, %v2011
        %v2013 = vand.u32 %v2012, 4294901760
        %v2014 = vsub.f32 %v2012, %v2013
        %v2015 = vand.u32 %v2014, 4294901760
        %2016 = vmatpush1.msra.mxu0 %v2015
        %2017 = vmatprep.subr.mxu0 0.0
        %v2018 = vand.u32 %v1850, 4294901760
        %v2019 = vsub.f32 %v1850, %v2018
        %v2020 = vand.u32 %v2019, 4294901760
        %v2021 = vsub.f32 %v2019, %v2020
        %v2022 = vand.u32 %v2021, 4294901760
        %2023 = vmatpush1.msra.mxu0 %v2022
        %2024 = vmatprep.subr.mxu0 0.0
        %v2025 = vand.u32 %v1851, 4294901760
        %v2026 = vsub.f32 %v1851, %v2025
        %v2027 = vand.u32 %v2026, 4294901760
        %v2028 = vsub.f32 %v2026, %v2027
        %v2029 = vand.u32 %v2028, 4294901760
        %2030 = vmatpush1.msra.mxu0 %v2029
        %2031 = vmatprep.subr.mxu0 0.0
        %v2032 = vand.u32 %v1852, 4294901760
        %v2033 = vsub.f32 %v1852, %v2032
        %v2034 = vand.u32 %v2033, 4294901760
        %v2035 = vsub.f32 %v2033, %v2034
        %v2036 = vand.u32 %v2035, 4294901760
        %2037 = vmatpush1.msra.mxu0 %v2036
        %2038 = vmatprep.subr.mxu0 0.0
        %v2039 = vand.u32 %v1853, 4294901760
        %v2040 = vsub.f32 %v1853, %v2039
        %v2041 = vand.u32 %v2040, 4294901760
        %v2042 = vsub.f32 %v2040, %v2041
        %v2043 = vand.u32 %v2042, 4294901760
        %2044 = vmatpush1.msra.mxu0 %v2043
        %2045 = vmatprep.subr.mxu0 0.0
        %v2046 = vand.u32 %v1854, 4294901760
        %v2047 = vsub.f32 %v1854, %v2046
        %v2048 = vand.u32 %v2047, 4294901760
        %v2049 = vsub.f32 %v2047, %v2048
        %v2050 = vand.u32 %v2049, 4294901760
        %2051 = vmatpush1.msra.mxu0 %v2050
        %2052 = vmatprep.subr.mxu0 0.0
        %v2053 = vand.u32 %v1855, 4294901760
        %v2054 = vsub.f32 %v1855, %v2053
        %v2055 = vand.u32 %v2054, 4294901760
        %v2056 = vsub.f32 %v2054, %v2055
        %v2057 = vand.u32 %v2056, 4294901760
        %2058 = vmatpush1.msra.mxu0 %v2057
        %2059 = vmatprep.subr.mxu0 0.0
        %2060 = vmatpush1.msra.mxu0 0.0
        %2061 = vmatprep.subr.mxu0 0.0
        %2062 = vmatpush1.msra.mxu0 0.0
        %2063 = vmatprep.subr.mxu0 0.0
        %2064 = vmatpush1.msra.mxu0 0.0
        %2065 = vmatprep.subr.mxu0 0.0
        %2066 = vmatpush1.msra.mxu0 0.0
        %2067 = vmatprep.subr.mxu0 0.0
        %2068 = vmatpush1.msra.mxu0 0.0
        %2069 = vmatprep.subr.mxu0 0.0
        %2070 = vmatpush1.msra.mxu0 0.0
        %2071 = vmatprep.subr.mxu0 0.0
        %2072 = vmatpush1.msra.mxu0 0.0
        %2073 = vmatprep.subr.mxu0 0.0
        %2074 = vmatpush1.msra.mxu0 0.0
        %2075 = vmatprep.subr.mxu0 0.0
        %2076 = vmatpush1.msra.mxu0 0.0
        %2077 = vmatprep.subr.mxu0 0.0
        %2078 = vmatpush1.msra.mxu0 0.0
        %2079 = vmatprep.subr.mxu0 0.0
        %2080 = vmatpush1.msra.mxu0 0.0
        %2081 = vmatprep.subr.mxu0 0.0
        %2082 = vmatpush1.msra.mxu0 0.0
        %2083 = vmatprep.subr.mxu0 0.0
        %2084 = vmatpush1.msra.mxu0 0.0
        %2085 = vmatprep.subr.mxu0 0.0
        %2086 = vmatpush1.msra.mxu0 0.0
        %2087 = vmatprep.subr.mxu0 0.0
        %2088 = vmatpush1.msra.mxu0 0.0
        %2089 = vmatprep.subr.mxu0 0.0
        %2090 = vmatpush1.msra.mxu0 0.0
        %2091 = vmatprep.mubr.f32.mxu0 0.0
        %v2092 = vand.u32 %v1837, 4294901760
        %2093 = vmatmul.mubr.f32.gmra.mrb[0].mxu0 %v2092
        %v2094 = vpop.f32.mrb[0].mxu0
        %v2095 = vadd.f32 %v1944, %v2094
        %v2096 = vpop.f32.mrb[0].mxu0
        %2097 = vdwg.mxu0
        %2098 = vmatprep.subr.mxu0 0.0
        %v2099 = vand.u32 %v1840, 4294901760
        %v2100 = vsub.f32 %v1840, %v2099
        %2101 = vmatpush1.msra.mxu0 %v2100
        %2102 = vmatprep.subr.mxu0 0.0
        %v2103 = vand.u32 %v1841, 4294901760
        %v2104 = vsub.f32 %v1841, %v2103
        %2105 = vmatpush1.msra.mxu0 %v2104
        %2106 = vmatprep.subr.mxu0 0.0
        %v2107 = vand.u32 %v1842, 4294901760
        %v2108 = vsub.f32 %v1842, %v2107
        %2109 = vmatpush1.msra.mxu0 %v2108
        %2110 = vmatprep.subr.mxu0 0.0
        %v2111 = vand.u32 %v1843, 4294901760
        %v2112 = vsub.f32 %v1843, %v2111
        %2113 = vmatpush1.msra.mxu0 %v2112
        %2114 = vmatprep.subr.mxu0 0.0
        %v2115 = vand.u32 %v1844, 4294901760
        %v2116 = vsub.f32 %v1844, %v2115
        %2117 = vmatpush1.msra.mxu0 %v2116
        %2118 = vmatprep.subr.mxu0 0.0
        %v2119 = vand.u32 %v1845, 4294901760
        %v2120 = vsub.f32 %v1845, %v2119
        %2121 = vmatpush1.msra.mxu0 %v2120
        %2122 = vmatprep.subr.mxu0 0.0
        %v2123 = vand.u32 %v1846, 4294901760
        %v2124 = vsub.f32 %v1846, %v2123
        %2125 = vmatpush1.msra.mxu0 %v2124
        %2126 = vmatprep.subr.mxu0 0.0
        %v2127 = vand.u32 %v1847, 4294901760
        %v2128 = vsub.f32 %v1847, %v2127
        %2129 = vmatpush1.msra.mxu0 %v2128
        %2130 = vmatprep.subr.mxu0 0.0
        %v2131 = vand.u32 %v1848, 4294901760
        %v2132 = vsub.f32 %v1848, %v2131
        %2133 = vmatpush1.msra.mxu0 %v2132
        %2134 = vmatprep.subr.mxu0 0.0
        %v2135 = vand.u32 %v1849, 4294901760
        %v2136 = vsub.f32 %v1849, %v2135
        %2137 = vmatpush1.msra.mxu0 %v2136
        %2138 = vmatprep.subr.mxu0 0.0
        %v2139 = vand.u32 %v1850, 4294901760
        %v2140 = vsub.f32 %v1850, %v2139
        %2141 = vmatpush1.msra.mxu0 %v2140
        %2142 = vmatprep.subr.mxu0 0.0
        %v2143 = vand.u32 %v1851, 4294901760
        %v2144 = vsub.f32 %v1851, %v2143
        %2145 = vmatpush1.msra.mxu0 %v2144
        %2146 = vmatprep.subr.mxu0 0.0
        %v2147 = vand.u32 %v1852, 4294901760
        %v2148 = vsub.f32 %v1852, %v2147
        %2149 = vmatpush1.msra.mxu0 %v2148
        %2150 = vmatprep.subr.mxu0 0.0
        %v2151 = vand.u32 %v1853, 4294901760
        %v2152 = vsub.f32 %v1853, %v2151
        %2153 = vmatpush1.msra.mxu0 %v2152
        %2154 = vmatprep.subr.mxu0 0.0
        %v2155 = vand.u32 %v1854, 4294901760
        %v2156 = vsub.f32 %v1854, %v2155
        %2157 = vmatpush1.msra.mxu0 %v2156
        %2158 = vmatprep.subr.mxu0 0.0
        %v2159 = vand.u32 %v1855, 4294901760
        %v2160 = vsub.f32 %v1855, %v2159
        %2161 = vmatpush1.msra.mxu0 %v2160
        %2162 = vmatprep.subr.mxu0 0.0
        %2163 = vmatpush1.msra.mxu0 0.0
        %2164 = vmatprep.subr.mxu0 0.0
        %2165 = vmatpush1.msra.mxu0 0.0
        %2166 = vmatprep.subr.mxu0 0.0
        %2167 = vmatpush1.msra.mxu0 0.0
        %2168 = vmatprep.subr.mxu0 0.0
        %2169 = vmatpush1.msra.mxu0 0.0
        %2170 = vmatprep.subr.mxu0 0.0
        %2171 = vmatpush1.msra.mxu0 0.0
        %2172 = vmatprep.subr.mxu0 0.0
        %2173 = vmatpush1.msra.mxu0 0.0
        %2174 = vmatprep.subr.mxu0 0.0
        %2175 = vmatpush1.msra.mxu0 0.0
        %2176 = vmatprep.subr.mxu0 0.0
        %2177 = vmatpush1.msra.mxu0 0.0
        %2178 = vmatprep.subr.mxu0 0.0
        %2179 = vmatpush1.msra.mxu0 0.0
        %2180 = vmatprep.subr.mxu0 0.0
        %2181 = vmatpush1.msra.mxu0 0.0
        %2182 = vmatprep.subr.mxu0 0.0
        %2183 = vmatpush1.msra.mxu0 0.0
        %2184 = vmatprep.subr.mxu0 0.0
        %2185 = vmatpush1.msra.mxu0 0.0
        %2186 = vmatprep.subr.mxu0 0.0
        %2187 = vmatpush1.msra.mxu0 0.0
        %2188 = vmatprep.subr.mxu0 0.0
        %2189 = vmatpush1.msra.mxu0 0.0
        %2190 = vmatprep.subr.mxu0 0.0
        %2191 = vmatpush1.msra.mxu0 0.0
        %2192 = vmatprep.subr.mxu0 0.0
        %2193 = vmatpush1.msra.mxu0 0.0
        %2194 = vmatprep.mubr.f32.mxu0 0.0
        %v2195 = vand.u32 %v1837, 4294901760
        %v2196 = vsub.f32 %v1837, %v2195
        %2197 = vmatmul.mubr.f32.gmra.mrb[0].mxu0 %v2196
        %v2198 = vpop.f32.mrb[0].mxu0
        %v2199 = vadd.f32 %v2095, %v2198
        %v2200 = vpop.f32.mrb[0].mxu0
        %2201 = vdwg.mxu0
        %2202 = vmatprep.subr.mxu0 0.0
        %v2203 = vand.u32 %v1840, 4294901760
        %2204 = vmatpush1.msra.mxu0 %v2203
        %2205 = vmatprep.subr.mxu0 0.0
        %v2206 = vand.u32 %v1841, 4294901760
        %2207 = vmatpush1.msra.mxu0 %v2206
        %2208 = vmatprep.subr.mxu0 0.0
        %v2209 = vand.u32 %v1842, 4294901760
        %2210 = vmatpush1.msra.mxu0 %v2209
        %2211 = vmatprep.subr.mxu0 0.0
        %v2212 = vand.u32 %v1843, 4294901760
        %2213 = vmatpush1.msra.mxu0 %v2212
        %2214 = vmatprep.subr.mxu0 0.0
        %v2215 = vand.u32 %v1844, 4294901760
        %2216 = vmatpush1.msra.mxu0 %v2215
        %2217 = vmatprep.subr.mxu0 0.0
        %v2218 = vand.u32 %v1845, 4294901760
        %2219 = vmatpush1.msra.mxu0 %v2218
        %2220 = vmatprep.subr.mxu0 0.0
        %v2221 = vand.u32 %v1846, 4294901760
        %2222 = vmatpush1.msra.mxu0 %v2221
        %2223 = vmatprep.subr.mxu0 0.0
        %v2224 = vand.u32 %v1847, 4294901760
        %2225 = vmatpush1.msra.mxu0 %v2224
        %2226 = vmatprep.subr.mxu0 0.0
        %v2227 = vand.u32 %v1848, 4294901760
        %2228 = vmatpush1.msra.mxu0 %v2227
        %2229 = vmatprep.subr.mxu0 0.0
        %v2230 = vand.u32 %v1849, 4294901760
        %2231 = vmatpush1.msra.mxu0 %v2230
        %2232 = vmatprep.subr.mxu0 0.0
        %v2233 = vand.u32 %v1850, 4294901760
        %2234 = vmatpush1.msra.mxu0 %v2233
        %2235 = vmatprep.subr.mxu0 0.0
        %v2236 = vand.u32 %v1851, 4294901760
        %2237 = vmatpush1.msra.mxu0 %v2236
        %2238 = vmatprep.subr.mxu0 0.0
        %v2239 = vand.u32 %v1852, 4294901760
        %2240 = vmatpush1.msra.mxu0 %v2239
        %2241 = vmatprep.subr.mxu0 0.0
        %v2242 = vand.u32 %v1853, 4294901760
        %2243 = vmatpush1.msra.mxu0 %v2242
        %2244 = vmatprep.subr.mxu0 0.0
        %v2245 = vand.u32 %v1854, 4294901760
        %2246 = vmatpush1.msra.mxu0 %v2245
        %2247 = vmatprep.subr.mxu0 0.0
        %v2248 = vand.u32 %v1855, 4294901760
        %2249 = vmatpush1.msra.mxu0 %v2248
        %2250 = vmatprep.subr.mxu0 0.0
        %2251 = vmatpush1.msra.mxu0 0.0
        %2252 = vmatprep.subr.mxu0 0.0
        %2253 = vmatpush1.msra.mxu0 0.0
        %2254 = vmatprep.subr.mxu0 0.0
        %2255 = vmatpush1.msra.mxu0 0.0
        %2256 = vmatprep.subr.mxu0 0.0
        %2257 = vmatpush1.msra.mxu0 0.0
        %2258 = vmatprep.subr.mxu0 0.0
        %2259 = vmatpush1.msra.mxu0 0.0
        %2260 = vmatprep.subr.mxu0 0.0
        %2261 = vmatpush1.msra.mxu0 0.0
        %2262 = vmatprep.subr.mxu0 0.0
        %2263 = vmatpush1.msra.mxu0 0.0
        %2264 = vmatprep.subr.mxu0 0.0
        %2265 = vmatpush1.msra.mxu0 0.0
        %2266 = vmatprep.subr.mxu0 0.0
        %2267 = vmatpush1.msra.mxu0 0.0
        %2268 = vmatprep.subr.mxu0 0.0
        %2269 = vmatpush1.msra.mxu0 0.0
        %2270 = vmatprep.subr.mxu0 0.0
        %2271 = vmatpush1.msra.mxu0 0.0
        %2272 = vmatprep.subr.mxu0 0.0
        %2273 = vmatpush1.msra.mxu0 0.0
        %2274 = vmatprep.subr.mxu0 0.0
        %2275 = vmatpush1.msra.mxu0 0.0
        %2276 = vmatprep.subr.mxu0 0.0
        %2277 = vmatpush1.msra.mxu0 0.0
        %2278 = vmatprep.subr.mxu0 0.0
        %2279 = vmatpush1.msra.mxu0 0.0
        %2280 = vmatprep.subr.mxu0 0.0
        %2281 = vmatpush1.msra.mxu0 0.0
        %2282 = vmatprep.mubr.f32.mxu0 0.0
        %v2283 = vand.u32 %v1837, 4294901760
        %v2284 = vsub.f32 %v1837, %v2283
        %v2285 = vand.u32 %v2284, 4294901760
        %2286 = vmatmul.mubr.f32.gmra.mrb[0].mxu0 %v2285
        %v2287 = vpop.f32.mrb[0].mxu0
        %v2288 = vadd.f32 %v2199, %v2287
        %v2289 = vpop.f32.mrb[0].mxu0
        %2290 = vdwg.mxu0
        %2291 = vmatprep.subr.mxu0 0.0
        %v2292 = vand.u32 %v1840, 4294901760
        %v2293 = vsub.f32 %v1840, %v2292
        %v2294 = vand.u32 %v2293, 4294901760
        %2295 = vmatpush1.msra.mxu0 %v2294
        %2296 = vmatprep.subr.mxu0 0.0
        %v2297 = vand.u32 %v1841, 4294901760
        %v2298 = vsub.f32 %v1841, %v2297
        %v2299 = vand.u32 %v2298, 4294901760
        %2300 = vmatpush1.msra.mxu0 %v2299
        %2301 = vmatprep.subr.mxu0 0.0
        %v2302 = vand.u32 %v1842, 4294901760
        %v2303 = vsub.f32 %v1842, %v2302
        %v2304 = vand.u32 %v2303, 4294901760
        %2305 = vmatpush1.msra.mxu0 %v2304
        %2306 = vmatprep.subr.mxu0 0.0
        %v2307 = vand.u32 %v1843, 4294901760
        %v2308 = vsub.f32 %v1843, %v2307
        %v2309 = vand.u32 %v2308, 4294901760
        %2310 = vmatpush1.msra.mxu0 %v2309
        %2311 = vmatprep.subr.mxu0 0.0
        %v2312 = vand.u32 %v1844, 4294901760
        %v2313 = vsub.f32 %v1844, %v2312
        %v2314 = vand.u32 %v2313, 4294901760
        %2315 = vmatpush1.msra.mxu0 %v2314
        %2316 = vmatprep.subr.mxu0 0.0
        %v2317 = vand.u32 %v1845, 4294901760
        %v2318 = vsub.f32 %v1845, %v2317
        %v2319 = vand.u32 %v2318, 4294901760
        %2320 = vmatpush1.msra.mxu0 %v2319
        %2321 = vmatprep.subr.mxu0 0.0
        %v2322 = vand.u32 %v1846, 4294901760
        %v2323 = vsub.f32 %v1846, %v2322
        %v2324 = vand.u32 %v2323, 4294901760
        %2325 = vmatpush1.msra.mxu0 %v2324
        %2326 = vmatprep.subr.mxu0 0.0
        %v2327 = vand.u32 %v1847, 4294901760
        %v2328 = vsub.f32 %v1847, %v2327
        %v2329 = vand.u32 %v2328, 4294901760
        %2330 = vmatpush1.msra.mxu0 %v2329
        %2331 = vmatprep.subr.mxu0 0.0
        %v2332 = vand.u32 %v1848, 4294901760
        %v2333 = vsub.f32 %v1848, %v2332
        %v2334 = vand.u32 %v2333, 4294901760
        %2335 = vmatpush1.msra.mxu0 %v2334
        %2336 = vmatprep.subr.mxu0 0.0
        %v2337 = vand.u32 %v1849, 4294901760
        %v2338 = vsub.f32 %v1849, %v2337
        %v2339 = vand.u32 %v2338, 4294901760
        %2340 = vmatpush1.msra.mxu0 %v2339
        %2341 = vmatprep.subr.mxu0 0.0
        %v2342 = vand.u32 %v1850, 4294901760
        %v2343 = vsub.f32 %v1850, %v2342
        %v2344 = vand.u32 %v2343, 4294901760
        %2345 = vmatpush1.msra.mxu0 %v2344
        %2346 = vmatprep.subr.mxu0 0.0
        %v2347 = vand.u32 %v1851, 4294901760
        %v2348 = vsub.f32 %v1851, %v2347
        %v2349 = vand.u32 %v2348, 4294901760
        %2350 = vmatpush1.msra.mxu0 %v2349
        %2351 = vmatprep.subr.mxu0 0.0
        %v2352 = vand.u32 %v1852, 4294901760
        %v2353 = vsub.f32 %v1852, %v2352
        %v2354 = vand.u32 %v2353, 4294901760
        %2355 = vmatpush1.msra.mxu0 %v2354
        %2356 = vmatprep.subr.mxu0 0.0
        %v2357 = vand.u32 %v1853, 4294901760
        %v2358 = vsub.f32 %v1853, %v2357
        %v2359 = vand.u32 %v2358, 4294901760
        %2360 = vmatpush1.msra.mxu0 %v2359
        %2361 = vmatprep.subr.mxu0 0.0
        %v2362 = vand.u32 %v1854, 4294901760
        %v2363 = vsub.f32 %v1854, %v2362
        %v2364 = vand.u32 %v2363, 4294901760
        %2365 = vmatpush1.msra.mxu0 %v2364
        %2366 = vmatprep.subr.mxu0 0.0
        %v2367 = vand.u32 %v1855, 4294901760
        %v2368 = vsub.f32 %v1855, %v2367
        %v2369 = vand.u32 %v2368, 4294901760
        %2370 = vmatpush1.msra.mxu0 %v2369
        %2371 = vmatprep.subr.mxu0 0.0
        %2372 = vmatpush1.msra.mxu0 0.0
        %2373 = vmatprep.subr.mxu0 0.0
        %2374 = vmatpush1.msra.mxu0 0.0
        %2375 = vmatprep.subr.mxu0 0.0
        %2376 = vmatpush1.msra.mxu0 0.0
        %2377 = vmatprep.subr.mxu0 0.0
        %2378 = vmatpush1.msra.mxu0 0.0
        %2379 = vmatprep.subr.mxu0 0.0
        %2380 = vmatpush1.msra.mxu0 0.0
        %2381 = vmatprep.subr.mxu0 0.0
        %2382 = vmatpush1.msra.mxu0 0.0
        %2383 = vmatprep.subr.mxu0 0.0
        %2384 = vmatpush1.msra.mxu0 0.0
        %2385 = vmatprep.subr.mxu0 0.0
        %2386 = vmatpush1.msra.mxu0 0.0
        %2387 = vmatprep.subr.mxu0 0.0
        %2388 = vmatpush1.msra.mxu0 0.0
        %2389 = vmatprep.subr.mxu0 0.0
        %2390 = vmatpush1.msra.mxu0 0.0
        %2391 = vmatprep.subr.mxu0 0.0
        %2392 = vmatpush1.msra.mxu0 0.0
        %2393 = vmatprep.subr.mxu0 0.0
        %2394 = vmatpush1.msra.mxu0 0.0
        %2395 = vmatprep.subr.mxu0 0.0
        %2396 = vmatpush1.msra.mxu0 0.0
        %2397 = vmatprep.subr.mxu0 0.0
        %2398 = vmatpush1.msra.mxu0 0.0
        %2399 = vmatprep.subr.mxu0 0.0
        %2400 = vmatpush1.msra.mxu0 0.0
        %2401 = vmatprep.subr.mxu0 0.0
        %2402 = vmatpush1.msra.mxu0 0.0
        %2403 = vmatprep.mubr.f32.mxu0 0.0
        %v2404 = vand.u32 %v1837, 4294901760
        %2405 = vmatmul.mubr.f32.gmra.mrb[0].mxu0 %v2404
        %v2406 = vpop.f32.mrb[0].mxu0
        %v2407 = vadd.f32 %v2288, %v2406
        %v2408 = vpop.f32.mrb[0].mxu0
        %2409 = vdwg.mxu0
        %2410 = vmatprep.subr.mxu0 0.0
        %v2411 = vand.u32 %v1840, 4294901760
        %2412 = vmatpush1.msra.mxu0 %v2411
        %2413 = vmatprep.subr.mxu0 0.0
        %v2414 = vand.u32 %v1841, 4294901760
        %2415 = vmatpush1.msra.mxu0 %v2414
        %2416 = vmatprep.subr.mxu0 0.0
        %v2417 = vand.u32 %v1842, 4294901760
        %2418 = vmatpush1.msra.mxu0 %v2417
        %2419 = vmatprep.subr.mxu0 0.0
        %v2420 = vand.u32 %v1843, 4294901760
        %2421 = vmatpush1.msra.mxu0 %v2420
        %2422 = vmatprep.subr.mxu0 0.0
        %v2423 = vand.u32 %v1844, 4294901760
        %2424 = vmatpush1.msra.mxu0 %v2423
        %2425 = vmatprep.subr.mxu0 0.0
        %v2426 = vand.u32 %v1845, 4294901760
        %2427 = vmatpush1.msra.mxu0 %v2426
        %2428 = vmatprep.subr.mxu0 0.0
        %v2429 = vand.u32 %v1846, 4294901760
        %2430 = vmatpush1.msra.mxu0 %v2429
        %2431 = vmatprep.subr.mxu0 0.0
        %v2432 = vand.u32 %v1847, 4294901760
        %2433 = vmatpush1.msra.mxu0 %v2432
        %2434 = vmatprep.subr.mxu0 0.0
        %v2435 = vand.u32 %v1848, 4294901760
        %2436 = vmatpush1.msra.mxu0 %v2435
        %2437 = vmatprep.subr.mxu0 0.0
        %v2438 = vand.u32 %v1849, 4294901760
        %2439 = vmatpush1.msra.mxu0 %v2438
        %2440 = vmatprep.subr.mxu0 0.0
        %v2441 = vand.u32 %v1850, 4294901760
        %2442 = vmatpush1.msra.mxu0 %v2441
        %2443 = vmatprep.subr.mxu0 0.0
        %v2444 = vand.u32 %v1851, 4294901760
        %2445 = vmatpush1.msra.mxu0 %v2444
        %2446 = vmatprep.subr.mxu0 0.0
        %v2447 = vand.u32 %v1852, 4294901760
        %2448 = vmatpush1.msra.mxu0 %v2447
        %2449 = vmatprep.subr.mxu0 0.0
        %v2450 = vand.u32 %v1853, 4294901760
        %2451 = vmatpush1.msra.mxu0 %v2450
        %2452 = vmatprep.subr.mxu0 0.0
        %v2453 = vand.u32 %v1854, 4294901760
        %2454 = vmatpush1.msra.mxu0 %v2453
        %2455 = vmatprep.subr.mxu0 0.0
        %v2456 = vand.u32 %v1855, 4294901760
        %2457 = vmatpush1.msra.mxu0 %v2456
        %2458 = vmatprep.subr.mxu0 0.0
        %2459 = vmatpush1.msra.mxu0 0.0
        %2460 = vmatprep.subr.mxu0 0.0
        %2461 = vmatpush1.msra.mxu0 0.0
        %2462 = vmatprep.subr.mxu0 0.0
        %2463 = vmatpush1.msra.mxu0 0.0
        %2464 = vmatprep.subr.mxu0 0.0
        %2465 = vmatpush1.msra.mxu0 0.0
        %2466 = vmatprep.subr.mxu0 0.0
        %2467 = vmatpush1.msra.mxu0 0.0
        %2468 = vmatprep.subr.mxu0 0.0
        %2469 = vmatpush1.msra.mxu0 0.0
        %2470 = vmatprep.subr.mxu0 0.0
        %2471 = vmatpush1.msra.mxu0 0.0
        %2472 = vmatprep.subr.mxu0 0.0
        %2473 = vmatpush1.msra.mxu0 0.0
        %2474 = vmatprep.subr.mxu0 0.0
        %2475 = vmatpush1.msra.mxu0 0.0
        %2476 = vmatprep.subr.mxu0 0.0
        %2477 = vmatpush1.msra.mxu0 0.0
        %2478 = vmatprep.subr.mxu0 0.0
        %2479 = vmatpush1.msra.mxu0 0.0
        %2480 = vmatprep.subr.mxu0 0.0
        %2481 = vmatpush1.msra.mxu0 0.0
        %2482 = vmatprep.subr.mxu0 0.0
        %2483 = vmatpush1.msra.mxu0 0.0
        %2484 = vmatprep.subr.mxu0 0.0
        %2485 = vmatpush1.msra.mxu0 0.0
        %2486 = vmatprep.subr.mxu0 0.0
        %2487 = vmatpush1.msra.mxu0 0.0
        %2488 = vmatprep.subr.mxu0 0.0
        %2489 = vmatpush1.msra.mxu0 0.0
        %2490 = vmatprep.mubr.f32.mxu0 0.0
        %v2491 = vand.u32 %v1837, 4294901760
        %2492 = vmatmul.mubr.f32.gmra.mrb[0].mxu0 %v2491
        %v2493 = vpop.f32.mrb[0].mxu0
        %v2494 = vadd.f32 %v2407, %v2493
        %v2495 = vpop.f32.mrb[0].mxu0
        %2496 = vdwg.mxu0
        %v2497 = vsub.f32 %v2494, %v711
        %s2498 = scalar_lea.vmem [#allocation2], 128
        %v2499 = vld [vmem:[%s2498] sm:$0xff]
        %v2500 = vld [vmem:[%s2498 + $0x8] sm:$0xff]
        %v2501 = vld [vmem:[%s2498 + $0x10] sm:$0xff]
        %v2502 = vld [vmem:[%s2498 + $0x18] sm:$0xff]
        %v2503 = vld [vmem:[%s2498 + $0x20] sm:$0xff]
        %v2504 = vld [vmem:[%s2498 + $0x28] sm:$0xff]
        %v2505 = vld [vmem:[%s2498 + $0x30] sm:$0xff]
        %v2506 = vld [vmem:[%s2498 + $0x38] sm:$0xff]
        %v2507 = vld [vmem:[%s2498 + $0x40] sm:$0xff]
        %v2508 = vld [vmem:[%s2498 + $0x48] sm:$0xff]
        %v2509 = vld [vmem:[%s2498 + $0x50] sm:$0xff]
        %v2510 = vld [vmem:[%s2498 + $0x58] sm:$0xff]
        %v2511 = vld [vmem:[%s2498 + $0x60] sm:$0xff]
        %v2512 = vld [vmem:[%s2498 + $0x68] sm:$0xff]
        %v2513 = vld [vmem:[%s2498 + $0x70] sm:$0xff]
        %v2514 = vld [vmem:[%s2498 + $0x78] sm:$0xff]
        %2515 = vmatprep.subr.mxu0 0.0
        %v2516 = vand.u32 %v2499, 4294901760
        %2517 = vmatpush1.msra.mxu0 %v2516
        %2518 = vmatprep.subr.mxu0 0.0
        %v2519 = vand.u32 %v2500, 4294901760
        %2520 = vmatpush1.msra.mxu0 %v2519
        %2521 = vmatprep.subr.mxu0 0.0
        %v2522 = vand.u32 %v2501, 4294901760
        %2523 = vmatpush1.msra.mxu0 %v2522
        %2524 = vmatprep.subr.mxu0 0.0
        %v2525 = vand.u32 %v2502, 4294901760
        %2526 = vmatpush1.msra.mxu0 %v2525
        %2527 = vmatprep.subr.mxu0 0.0
        %v2528 = vand.u32 %v2503, 4294901760
        %2529 = vmatpush1.msra.mxu0 %v2528
        %2530 = vmatprep.subr.mxu0 0.0
        %v2531 = vand.u32 %v2504, 4294901760
        %2532 = vmatpush1.msra.mxu0 %v2531
        %2533 = vmatprep.subr.mxu0 0.0
        %v2534 = vand.u32 %v2505, 4294901760
        %2535 = vmatpush1.msra.mxu0 %v2534
        %2536 = vmatprep.subr.mxu0 0.0
        %v2537 = vand.u32 %v2506, 4294901760
        %2538 = vmatpush1.msra.mxu0 %v2537
        %2539 = vmatprep.subr.mxu0 0.0
        %v2540 = vand.u32 %v2507, 4294901760
        %2541 = vmatpush1.msra.mxu0 %v2540
        %2542 = vmatprep.subr.mxu0 0.0
        %v2543 = vand.u32 %v2508, 4294901760
        %2544 = vmatpush1.msra.mxu0 %v2543
        %2545 = vmatprep.subr.mxu0 0.0
        %v2546 = vand.u32 %v2509, 4294901760
        %2547 = vmatpush1.msra.mxu0 %v2546
        %2548 = vmatprep.subr.mxu0 0.0
        %v2549 = vand.u32 %v2510, 4294901760
        %2550 = vmatpush1.msra.mxu0 %v2549
        %2551 = vmatprep.subr.mxu0 0.0
        %v2552 = vand.u32 %v2511, 4294901760
        %2553 = vmatpush1.msra.mxu0 %v2552
        %2554 = vmatprep.subr.mxu0 0.0
        %v2555 = vand.u32 %v2512, 4294901760
        %2556 = vmatpush1.msra.mxu0 %v2555
        %2557 = vmatprep.subr.mxu0 0.0
        %v2558 = vand.u32 %v2513, 4294901760
        %2559 = vmatpush1.msra.mxu0 %v2558
        %2560 = vmatprep.subr.mxu0 0.0
        %v2561 = vand.u32 %v2514, 4294901760
        %2562 = vmatpush1.msra.mxu0 %v2561
        %2563 = vmatprep.subr.mxu0 0.0
        %2564 = vmatpush1.msra.mxu0 0.0
        %2565 = vmatprep.subr.mxu0 0.0
        %2566 = vmatpush1.msra.mxu0 0.0
        %2567 = vmatprep.subr.mxu0 0.0
        %2568 = vmatpush1.msra.mxu0 0.0
        %2569 = vmatprep.subr.mxu0 0.0
        %2570 = vmatpush1.msra.mxu0 0.0
        %2571 = vmatprep.subr.mxu0 0.0
        %2572 = vmatpush1.msra.mxu0 0.0
        %2573 = vmatprep.subr.mxu0 0.0
        %2574 = vmatpush1.msra.mxu0 0.0
        %2575 = vmatprep.subr.mxu0 0.0
        %2576 = vmatpush1.msra.mxu0 0.0
        %2577 = vmatprep.subr.mxu0 0.0
        %2578 = vmatpush1.msra.mxu0 0.0
        %2579 = vmatprep.subr.mxu0 0.0
        %2580 = vmatpush1.msra.mxu0 0.0
        %2581 = vmatprep.subr.mxu0 0.0
        %2582 = vmatpush1.msra.mxu0 0.0
        %2583 = vmatprep.subr.mxu0 0.0
        %2584 = vmatpush1.msra.mxu0 0.0
        %2585 = vmatprep.subr.mxu0 0.0
        %2586 = vmatpush1.msra.mxu0 0.0
        %2587 = vmatprep.subr.mxu0 0.0
        %2588 = vmatpush1.msra.mxu0 0.0
        %2589 = vmatprep.subr.mxu0 0.0
        %2590 = vmatpush1.msra.mxu0 0.0
        %2591 = vmatprep.subr.mxu0 0.0
        %2592 = vmatpush1.msra.mxu0 0.0
        %2593 = vmatprep.subr.mxu0 0.0
        %2594 = vmatpush1.msra.mxu0 0.0
        %2595 = vmatprep.mubr.f32.mxu0 0.0
        %v2596 = vand.u32 %v1837, 4294901760
        %v2597 = vsub.f32 %v1837, %v2596
        %v2598 = vand.u32 %v2597, 4294901760
        %v2599 = vsub.f32 %v2597, %v2598
        %v2600 = vand.u32 %v2599, 4294901760
        %2601 = vmatmul.mubr.f32.gmra.mrb[0].mxu0 %v2600
        %v2602 = vpop.f32.mrb[0].mxu0
        %v2603 = vadd.f32 0.0, %v2602
        %v2604 = vpop.f32.mrb[0].mxu0
        %2605 = vdwg.mxu0
        %2606 = vmatprep.subr.mxu0 0.0
        %v2607 = vand.u32 %v2499, 4294901760
        %v2608 = vsub.f32 %v2499, %v2607
        %v2609 = vand.u32 %v2608, 4294901760
        %v2610 = vsub.f32 %v2608, %v2609
        %v2611 = vand.u32 %v2610, 4294901760
        %2612 = vmatpush1.msra.mxu0 %v2611
        %2613 = vmatprep.subr.mxu0 0.0
        %v2614 = vand.u32 %v2500, 4294901760
        %v2615 = vsub.f32 %v2500, %v2614
        %v2616 = vand.u32 %v2615, 4294901760
        %v2617 = vsub.f32 %v2615, %v2616
        %v2618 = vand.u32 %v2617, 4294901760
        %2619 = vmatpush1.msra.mxu0 %v2618
        %2620 = vmatprep.subr.mxu0 0.0
        %v2621 = vand.u32 %v2501, 4294901760
        %v2622 = vsub.f32 %v2501, %v2621
        %v2623 = vand.u32 %v2622, 4294901760
        %v2624 = vsub.f32 %v2622, %v2623
        %v2625 = vand.u32 %v2624, 4294901760
        %2626 = vmatpush1.msra.mxu0 %v2625
        %2627 = vmatprep.subr.mxu0 0.0
        %v2628 = vand.u32 %v2502, 4294901760
        %v2629 = vsub.f32 %v2502, %v2628
        %v2630 = vand.u32 %v2629, 4294901760
        %v2631 = vsub.f32 %v2629, %v2630
        %v2632 = vand.u32 %v2631, 4294901760
        %2633 = vmatpush1.msra.mxu0 %v2632
        %2634 = vmatprep.subr.mxu0 0.0
        %v2635 = vand.u32 %v2503, 4294901760
        %v2636 = vsub.f32 %v2503, %v2635
        %v2637 = vand.u32 %v2636, 4294901760
        %v2638 = vsub.f32 %v2636, %v2637
        %v2639 = vand.u32 %v2638, 4294901760
        %2640 = vmatpush1.msra.mxu0 %v2639
        %2641 = vmatprep.subr.mxu0 0.0
        %v2642 = vand.u32 %v2504, 4294901760
        %v2643 = vsub.f32 %v2504, %v2642
        %v2644 = vand.u32 %v2643, 4294901760
        %v2645 = vsub.f32 %v2643, %v2644
        %v2646 = vand.u32 %v2645, 4294901760
        %2647 = vmatpush1.msra.mxu0 %v2646
        %2648 = vmatprep.subr.mxu0 0.0
        %v2649 = vand.u32 %v2505, 4294901760
        %v2650 = vsub.f32 %v2505, %v2649
        %v2651 = vand.u32 %v2650, 4294901760
        %v2652 = vsub.f32 %v2650, %v2651
        %v2653 = vand.u32 %v2652, 4294901760
        %2654 = vmatpush1.msra.mxu0 %v2653
        %2655 = vmatprep.subr.mxu0 0.0
        %v2656 = vand.u32 %v2506, 4294901760
        %v2657 = vsub.f32 %v2506, %v2656
        %v2658 = vand.u32 %v2657, 4294901760
        %v2659 = vsub.f32 %v2657, %v2658
        %v2660 = vand.u32 %v2659, 4294901760
        %2661 = vmatpush1.msra.mxu0 %v2660
        %2662 = vmatprep.subr.mxu0 0.0
        %v2663 = vand.u32 %v2507, 4294901760
        %v2664 = vsub.f32 %v2507, %v2663
        %v2665 = vand.u32 %v2664, 4294901760
        %v2666 = vsub.f32 %v2664, %v2665
        %v2667 = vand.u32 %v2666, 4294901760
        %2668 = vmatpush1.msra.mxu0 %v2667
        %2669 = vmatprep.subr.mxu0 0.0
        %v2670 = vand.u32 %v2508, 4294901760
        %v2671 = vsub.f32 %v2508, %v2670
        %v2672 = vand.u32 %v2671, 4294901760
        %v2673 = vsub.f32 %v2671, %v2672
        %v2674 = vand.u32 %v2673, 4294901760
        %2675 = vmatpush1.msra.mxu0 %v2674
        %2676 = vmatprep.subr.mxu0 0.0
        %v2677 = vand.u32 %v2509, 4294901760
        %v2678 = vsub.f32 %v2509, %v2677
        %v2679 = vand.u32 %v2678, 4294901760
        %v2680 = vsub.f32 %v2678, %v2679
        %v2681 = vand.u32 %v2680, 4294901760
        %2682 = vmatpush1.msra.mxu0 %v2681
        %2683 = vmatprep.subr.mxu0 0.0
        %v2684 = vand.u32 %v2510, 4294901760
        %v2685 = vsub.f32 %v2510, %v2684
        %v2686 = vand.u32 %v2685, 4294901760
        %v2687 = vsub.f32 %v2685, %v2686
        %v2688 = vand.u32 %v2687, 4294901760
        %2689 = vmatpush1.msra.mxu0 %v2688
        %2690 = vmatprep.subr.mxu0 0.0
        %v2691 = vand.u32 %v2511, 4294901760
        %v2692 = vsub.f32 %v2511, %v2691
        %v2693 = vand.u32 %v2692, 4294901760
        %v2694 = vsub.f32 %v2692, %v2693
        %v2695 = vand.u32 %v2694, 4294901760
        %2696 = vmatpush1.msra.mxu0 %v2695
        %2697 = vmatprep.subr.mxu0 0.0
        %v2698 = vand.u32 %v2512, 4294901760
        %v2699 = vsub.f32 %v2512, %v2698
        %v2700 = vand.u32 %v2699, 4294901760
        %v2701 = vsub.f32 %v2699, %v2700
        %v2702 = vand.u32 %v2701, 4294901760
        %2703 = vmatpush1.msra.mxu0 %v2702
        %2704 = vmatprep.subr.mxu0 0.0
        %v2705 = vand.u32 %v2513, 4294901760
        %v2706 = vsub.f32 %v2513, %v2705
        %v2707 = vand.u32 %v2706, 4294901760
        %v2708 = vsub.f32 %v2706, %v2707
        %v2709 = vand.u32 %v2708, 4294901760
        %2710 = vmatpush1.msra.mxu0 %v2709
        %2711 = vmatprep.subr.mxu0 0.0
        %v2712 = vand.u32 %v2514, 4294901760
        %v2713 = vsub.f32 %v2514, %v2712
        %v2714 = vand.u32 %v2713, 4294901760
        %v2715 = vsub.f32 %v2713, %v2714
        %v2716 = vand.u32 %v2715, 4294901760
        %2717 = vmatpush1.msra.mxu0 %v2716
        %2718 = vmatprep.subr.mxu0 0.0
        %2719 = vmatpush1.msra.mxu0 0.0
        %2720 = vmatprep.subr.mxu0 0.0
        %2721 = vmatpush1.msra.mxu0 0.0
        %2722 = vmatprep.subr.mxu0 0.0
        %2723 = vmatpush1.msra.mxu0 0.0
        %2724 = vmatprep.subr.mxu0 0.0
        %2725 = vmatpush1.msra.mxu0 0.0
        %2726 = vmatprep.subr.mxu0 0.0
        %2727 = vmatpush1.msra.mxu0 0.0
        %2728 = vmatprep.subr.mxu0 0.0
        %2729 = vmatpush1.msra.mxu0 0.0
        %2730 = vmatprep.subr.mxu0 0.0
        %2731 = vmatpush1.msra.mxu0 0.0
        %2732 = vmatprep.subr.mxu0 0.0
        %2733 = vmatpush1.msra.mxu0 0.0
        %2734 = vmatprep.subr.mxu0 0.0
        %2735 = vmatpush1.msra.mxu0 0.0
        %2736 = vmatprep.subr.mxu0 0.0
        %2737 = vmatpush1.msra.mxu0 0.0
        %2738 = vmatprep.subr.mxu0 0.0
        %2739 = vmatpush1.msra.mxu0 0.0
        %2740 = vmatprep.subr.mxu0 0.0
        %2741 = vmatpush1.msra.mxu0 0.0
        %2742 = vmatprep.subr.mxu0 0.0
        %2743 = vmatpush1.msra.mxu0 0.0
        %2744 = vmatprep.subr.mxu0 0.0
        %2745 = vmatpush1.msra.mxu0 0.0
        %2746 = vmatprep.subr.mxu0 0.0
        %2747 = vmatpush1.msra.mxu0 0.0
        %2748 = vmatprep.subr.mxu0 0.0
        %2749 = vmatpush1.msra.mxu0 0.0
        %2750 = vmatprep.mubr.f32.mxu0 0.0
        %v2751 = vand.u32 %v1837, 4294901760
        %2752 = vmatmul.mubr.f32.gmra.mrb[0].mxu0 %v2751
        %v2753 = vpop.f32.mrb[0].mxu0
        %v2754 = vadd.f32 %v2603, %v2753
        %v2755 = vpop.f32.mrb[0].mxu0
        %2756 = vdwg.mxu0
        %2757 = vmatprep.subr.mxu0 0.0
        %v2758 = vand.u32 %v2499, 4294901760
        %v2759 = vsub.f32 %v2499, %v2758
        %2760 = vmatpush1.msra.mxu0 %v2759
        %2761 = vmatprep.subr.mxu0 0.0
        %v2762 = vand.u32 %v2500, 4294901760
        %v2763 = vsub.f32 %v2500, %v2762
        %2764 = vmatpush1.msra.mxu0 %v2763
        %2765 = vmatprep.subr.mxu0 0.0
        %v2766 = vand.u32 %v2501, 4294901760
        %v2767 = vsub.f32 %v2501, %v2766
        %2768 = vmatpush1.msra.mxu0 %v2767
        %2769 = vmatprep.subr.mxu0 0.0
        %v2770 = vand.u32 %v2502, 4294901760
        %v2771 = vsub.f32 %v2502, %v2770
        %2772 = vmatpush1.msra.mxu0 %v2771
        %2773 = vmatprep.subr.mxu0 0.0
        %v2774 = vand.u32 %v2503, 4294901760
        %v2775 = vsub.f32 %v2503, %v2774
        %2776 = vmatpush1.msra.mxu0 %v2775
        %2777 = vmatprep.subr.mxu0 0.0
        %v2778 = vand.u32 %v2504, 4294901760
        %v2779 = vsub.f32 %v2504, %v2778
        %2780 = vmatpush1.msra.mxu0 %v2779
        %2781 = vmatprep.subr.mxu0 0.0
        %v2782 = vand.u32 %v2505, 4294901760
        %v2783 = vsub.f32 %v2505, %v2782
        %2784 = vmatpush1.msra.mxu0 %v2783
        %2785 = vmatprep.subr.mxu0 0.0
        %v2786 = vand.u32 %v2506, 4294901760
        %v2787 = vsub.f32 %v2506, %v2786
        %2788 = vmatpush1.msra.mxu0 %v2787
        %2789 = vmatprep.subr.mxu0 0.0
        %v2790 = vand.u32 %v2507, 4294901760
        %v2791 = vsub.f32 %v2507, %v2790
        %2792 = vmatpush1.msra.mxu0 %v2791
        %2793 = vmatprep.subr.mxu0 0.0
        %v2794 = vand.u32 %v2508, 4294901760
        %v2795 = vsub.f32 %v2508, %v2794
        %2796 = vmatpush1.msra.mxu0 %v2795
        %2797 = vmatprep.subr.mxu0 0.0
        %v2798 = vand.u32 %v2509, 4294901760
        %v2799 = vsub.f32 %v2509, %v2798
        %2800 = vmatpush1.msra.mxu0 %v2799
        %2801 = vmatprep.subr.mxu0 0.0
        %v2802 = vand.u32 %v2510, 4294901760
        %v2803 = vsub.f32 %v2510, %v2802
        %2804 = vmatpush1.msra.mxu0 %v2803
        %2805 = vmatprep.subr.mxu0 0.0
        %v2806 = vand.u32 %v2511, 4294901760
        %v2807 = vsub.f32 %v2511, %v2806
        %2808 = vmatpush1.msra.mxu0 %v2807
        %2809 = vmatprep.subr.mxu0 0.0
        %v2810 = vand.u32 %v2512, 4294901760
        %v2811 = vsub.f32 %v2512, %v2810
        %2812 = vmatpush1.msra.mxu0 %v2811
        %2813 = vmatprep.subr.mxu0 0.0
        %v2814 = vand.u32 %v2513, 4294901760
        %v2815 = vsub.f32 %v2513, %v2814
        %2816 = vmatpush1.msra.mxu0 %v2815
        %2817 = vmatprep.subr.mxu0 0.0
        %v2818 = vand.u32 %v2514, 4294901760
        %v2819 = vsub.f32 %v2514, %v2818
        %2820 = vmatpush1.msra.mxu0 %v2819
        %2821 = vmatprep.subr.mxu0 0.0
        %2822 = vmatpush1.msra.mxu0 0.0
        %2823 = vmatprep.subr.mxu0 0.0
        %2824 = vmatpush1.msra.mxu0 0.0
        %2825 = vmatprep.subr.mxu0 0.0
        %2826 = vmatpush1.msra.mxu0 0.0
        %2827 = vmatprep.subr.mxu0 0.0
        %2828 = vmatpush1.msra.mxu0 0.0
        %2829 = vmatprep.subr.mxu0 0.0
        %2830 = vmatpush1.msra.mxu0 0.0
        %2831 = vmatprep.subr.mxu0 0.0
        %2832 = vmatpush1.msra.mxu0 0.0
        %2833 = vmatprep.subr.mxu0 0.0
        %2834 = vmatpush1.msra.mxu0 0.0
        %2835 = vmatprep.subr.mxu0 0.0
        %2836 = vmatpush1.msra.mxu0 0.0
        %2837 = vmatprep.subr.mxu0 0.0
        %2838 = vmatpush1.msra.mxu0 0.0
        %2839 = vmatprep.subr.mxu0 0.0
        %2840 = vmatpush1.msra.mxu0 0.0
        %2841 = vmatprep.subr.mxu0 0.0
        %2842 = vmatpush1.msra.mxu0 0.0
        %2843 = vmatprep.subr.mxu0 0.0
        %2844 = vmatpush1.msra.mxu0 0.0
        %2845 = vmatprep.subr.mxu0 0.0
        %2846 = vmatpush1.msra.mxu0 0.0
        %2847 = vmatprep.subr.mxu0 0.0
        %2848 = vmatpush1.msra.mxu0 0.0
        %2849 = vmatprep.subr.mxu0 0.0
        %2850 = vmatpush1.msra.mxu0 0.0
        %2851 = vmatprep.subr.mxu0 0.0
        %2852 = vmatpush1.msra.mxu0 0.0
        %2853 = vmatprep.mubr.f32.mxu0 0.0
        %v2854 = vand.u32 %v1837, 4294901760
        %v2855 = vsub.f32 %v1837, %v2854
        %2856 = vmatmul.mubr.f32.gmra.mrb[0].mxu0 %v2855
        %v2857 = vpop.f32.mrb[0].mxu0
        %v2858 = vadd.f32 %v2754, %v2857
        %v2859 = vpop.f32.mrb[0].mxu0
        %2860 = vdwg.mxu0
        %2861 = vmatprep.subr.mxu0 0.0
        %v2862 = vand.u32 %v2499, 4294901760
        %2863 = vmatpush1.msra.mxu0 %v2862
        %2864 = vmatprep.subr.mxu0 0.0
        %v2865 = vand.u32 %v2500, 4294901760
        %2866 = vmatpush1.msra.mxu0 %v2865
        %2867 = vmatprep.subr.mxu0 0.0
        %v2868 = vand.u32 %v2501, 4294901760
        %2869 = vmatpush1.msra.mxu0 %v2868
        %2870 = vmatprep.subr.mxu0 0.0
        %v2871 = vand.u32 %v2502, 4294901760
        %2872 = vmatpush1.msra.mxu0 %v2871
        %2873 = vmatprep.subr.mxu0 0.0
        %v2874 = vand.u32 %v2503, 4294901760
        %2875 = vmatpush1.msra.mxu0 %v2874
        %2876 = vmatprep.subr.mxu0 0.0
        %v2877 = vand.u32 %v2504, 4294901760
        %2878 = vmatpush1.msra.mxu0 %v2877
        %2879 = vmatprep.subr.mxu0 0.0
        %v2880 = vand.u32 %v2505, 4294901760
        %2881 = vmatpush1.msra.mxu0 %v2880
        %2882 = vmatprep.subr.mxu0 0.0
        %v2883 = vand.u32 %v2506, 4294901760
        %2884 = vmatpush1.msra.mxu0 %v2883
        %2885 = vmatprep.subr.mxu0 0.0
        %v2886 = vand.u32 %v2507, 4294901760
        %2887 = vmatpush1.msra.mxu0 %v2886
        %2888 = vmatprep.subr.mxu0 0.0
        %v2889 = vand.u32 %v2508, 4294901760
        %2890 = vmatpush1.msra.mxu0 %v2889
        %2891 = vmatprep.subr.mxu0 0.0
        %v2892 = vand.u32 %v2509, 4294901760
        %2893 = vmatpush1.msra.mxu0 %v2892
        %2894 = vmatprep.subr.mxu0 0.0
        %v2895 = vand.u32 %v2510, 4294901760
        %2896 = vmatpush1.msra.mxu0 %v2895
        %2897 = vmatprep.subr.mxu0 0.0
        %v2898 = vand.u32 %v2511, 4294901760
        %2899 = vmatpush1.msra.mxu0 %v2898
        %2900 = vmatprep.subr.mxu0 0.0
        %v2901 = vand.u32 %v2512, 4294901760
        %2902 = vmatpush1.msra.mxu0 %v2901
        %2903 = vmatprep.subr.mxu0 0.0
        %v2904 = vand.u32 %v2513, 4294901760
        %2905 = vmatpush1.msra.mxu0 %v2904
        %2906 = vmatprep.subr.mxu0 0.0
        %v2907 = vand.u32 %v2514, 4294901760
        %2908 = vmatpush1.msra.mxu0 %v2907
        %2909 = vmatprep.subr.mxu0 0.0
        %2910 = vmatpush1.msra.mxu0 0.0
        %2911 = vmatprep.subr.mxu0 0.0
        %2912 = vmatpush1.msra.mxu0 0.0
        %2913 = vmatprep.subr.mxu0 0.0
        %2914 = vmatpush1.msra.mxu0 0.0
        %2915 = vmatprep.subr.mxu0 0.0
        %2916 = vmatpush1.msra.mxu0 0.0
        %2917 = vmatprep.subr.mxu0 0.0
        %2918 = vmatpush1.msra.mxu0 0.0
        %2919 = vmatprep.subr.mxu0 0.0
        %2920 = vmatpush1.msra.mxu0 0.0
        %2921 = vmatprep.subr.mxu0 0.0
        %2922 = vmatpush1.msra.mxu0 0.0
        %2923 = vmatprep.subr.mxu0 0.0
        %2924 = vmatpush1.msra.mxu0 0.0
        %2925 = vmatprep.subr.mxu0 0.0
        %2926 = vmatpush1.msra.mxu0 0.0
        %2927 = vmatprep.subr.mxu0 0.0
        %2928 = vmatpush1.msra.mxu0 0.0
        %2929 = vmatprep.subr.mxu0 0.0
        %2930 = vmatpush1.msra.mxu0 0.0
        %2931 = vmatprep.subr.mxu0 0.0
        %2932 = vmatpush1.msra.mxu0 0.0
        %2933 = vmatprep.subr.mxu0 0.0
        %2934 = vmatpush1.msra.mxu0 0.0
        %2935 = vmatprep.subr.mxu0 0.0
        %2936 = vmatpush1.msra.mxu0 0.0
        %2937 = vmatprep.subr.mxu0 0.0
        %2938 = vmatpush1.msra.mxu0 0.0
        %2939 = vmatprep.subr.mxu0 0.0
        %2940 = vmatpush1.msra.mxu0 0.0
        %2941 = vmatprep.mubr.f32.mxu0 0.0
        %v2942 = vand.u32 %v1837, 4294901760
        %v2943 = vsub.f32 %v1837, %v2942
        %v2944 = vand.u32 %v2943, 4294901760
        %2945 = vmatmul.mubr.f32.gmra.mrb[0].mxu0 %v2944
        %v2946 = vpop.f32.mrb[0].mxu0
        %v2947 = vadd.f32 %v2858, %v2946
        %v2948 = vpop.f32.mrb[0].mxu0
        %2949 = vdwg.mxu0
        %2950 = vmatprep.subr.mxu0 0.0
        %v2951 = vand.u32 %v2499, 4294901760
        %v2952 = vsub.f32 %v2499, %v2951
        %v2953 = vand.u32 %v2952, 4294901760
        %2954 = vmatpush1.msra.mxu0 %v2953
        %2955 = vmatprep.subr.mxu0 0.0
        %v2956 = vand.u32 %v2500, 4294901760
        %v2957 = vsub.f32 %v2500, %v2956
        %v2958 = vand.u32 %v2957, 4294901760
        %2959 = vmatpush1.msra.mxu0 %v2958
        %2960 = vmatprep.subr.mxu0 0.0
        %v2961 = vand.u32 %v2501, 4294901760
        %v2962 = vsub.f32 %v2501, %v2961
        %v2963 = vand.u32 %v2962, 4294901760
        %2964 = vmatpush1.msra.mxu0 %v2963
        %2965 = vmatprep.subr.mxu0 0.0
        %v2966 = vand.u32 %v2502, 4294901760
        %v2967 = vsub.f32 %v2502, %v2966
        %v2968 = vand.u32 %v2967, 4294901760
        %2969 = vmatpush1.msra.mxu0 %v2968
        %2970 = vmatprep.subr.mxu0 0.0
        %v2971 = vand.u32 %v2503, 4294901760
        %v2972 = vsub.f32 %v2503, %v2971
        %v2973 = vand.u32 %v2972, 4294901760
        %2974 = vmatpush1.msra.mxu0 %v2973
        %2975 = vmatprep.subr.mxu0 0.0
        %v2976 = vand.u32 %v2504, 4294901760
        %v2977 = vsub.f32 %v2504, %v2976
        %v2978 = vand.u32 %v2977, 4294901760
        %2979 = vmatpush1.msra.mxu0 %v2978
        %2980 = vmatprep.subr.mxu0 0.0
        %v2981 = vand.u32 %v2505, 4294901760
        %v2982 = vsub.f32 %v2505, %v2981
        %v2983 = vand.u32 %v2982, 4294901760
        %2984 = vmatpush1.msra.mxu0 %v2983
        %2985 = vmatprep.subr.mxu0 0.0
        %v2986 = vand.u32 %v2506, 4294901760
        %v2987 = vsub.f32 %v2506, %v2986
        %v2988 = vand.u32 %v2987, 4294901760
        %2989 = vmatpush1.msra.mxu0 %v2988
        %2990 = vmatprep.subr.mxu0 0.0
        %v2991 = vand.u32 %v2507, 4294901760
        %v2992 = vsub.f32 %v2507, %v2991
        %v2993 = vand.u32 %v2992, 4294901760
        %2994 = vmatpush1.msra.mxu0 %v2993
        %2995 = vmatprep.subr.mxu0 0.0
        %v2996 = vand.u32 %v2508, 4294901760
        %v2997 = vsub.f32 %v2508, %v2996
        %v2998 = vand.u32 %v2997, 4294901760
        %2999 = vmatpush1.msra.mxu0 %v2998
        %3000 = vmatprep.subr.mxu0 0.0
        %v3001 = vand.u32 %v2509, 4294901760
        %v3002 = vsub.f32 %v2509, %v3001
        %v3003 = vand.u32 %v3002, 4294901760
        %3004 = vmatpush1.msra.mxu0 %v3003
        %3005 = vmatprep.subr.mxu0 0.0
        %v3006 = vand.u32 %v2510, 4294901760
        %v3007 = vsub.f32 %v2510, %v3006
        %v3008 = vand.u32 %v3007, 4294901760
        %3009 = vmatpush1.msra.mxu0 %v3008
        %3010 = vmatprep.subr.mxu0 0.0
        %v3011 = vand.u32 %v2511, 4294901760
        %v3012 = vsub.f32 %v2511, %v3011
        %v3013 = vand.u32 %v3012, 4294901760
        %3014 = vmatpush1.msra.mxu0 %v3013
        %3015 = vmatprep.subr.mxu0 0.0
        %v3016 = vand.u32 %v2512, 4294901760
        %v3017 = vsub.f32 %v2512, %v3016
        %v3018 = vand.u32 %v3017, 4294901760
        %3019 = vmatpush1.msra.mxu0 %v3018
        %3020 = vmatprep.subr.mxu0 0.0
        %v3021 = vand.u32 %v2513, 4294901760
        %v3022 = vsub.f32 %v2513, %v3021
        %v3023 = vand.u32 %v3022, 4294901760
        %3024 = vmatpush1.msra.mxu0 %v3023
        %3025 = vmatprep.subr.mxu0 0.0
        %v3026 = vand.u32 %v2514, 4294901760
        %v3027 = vsub.f32 %v2514, %v3026
        %v3028 = vand.u32 %v3027, 4294901760
        %3029 = vmatpush1.msra.mxu0 %v3028
        %3030 = vmatprep.subr.mxu0 0.0
        %3031 = vmatpush1.msra.mxu0 0.0
        %3032 = vmatprep.subr.mxu0 0.0
        %3033 = vmatpush1.msra.mxu0 0.0
        %3034 = vmatprep.subr.mxu0 0.0
        %3035 = vmatpush1.msra.mxu0 0.0
        %3036 = vmatprep.subr.mxu0 0.0
        %3037 = vmatpush1.msra.mxu0 0.0
        %3038 = vmatprep.subr.mxu0 0.0
        %3039 = vmatpush1.msra.mxu0 0.0
        %3040 = vmatprep.subr.mxu0 0.0
        %3041 = vmatpush1.msra.mxu0 0.0
        %3042 = vmatprep.subr.mxu0 0.0
        %3043 = vmatpush1.msra.mxu0 0.0
        %3044 = vmatprep.subr.mxu0 0.0
        %3045 = vmatpush1.msra.mxu0 0.0
        %3046 = vmatprep.subr.mxu0 0.0
        %3047 = vmatpush1.msra.mxu0 0.0
        %3048 = vmatprep.subr.mxu0 0.0
        %3049 = vmatpush1.msra.mxu0 0.0
        %3050 = vmatprep.subr.mxu0 0.0
        %3051 = vmatpush1.msra.mxu0 0.0
        %3052 = vmatprep.subr.mxu0 0.0
        %3053 = vmatpush1.msra.mxu0 0.0
        %3054 = vmatprep.subr.mxu0 0.0
        %3055 = vmatpush1.msra.mxu0 0.0
        %3056 = vmatprep.subr.mxu0 0.0
        %3057 = vmatpush1.msra.mxu0 0.0
        %3058 = vmatprep.subr.mxu0 0.0
        %3059 = vmatpush1.msra.mxu0 0.0
        %3060 = vmatprep.subr.mxu0 0.0
        %3061 = vmatpush1.msra.mxu0 0.0
        %3062 = vmatprep.mubr.f32.mxu0 0.0
        %v3063 = vand.u32 %v1837, 4294901760
        %3064 = vmatmul.mubr.f32.gmra.mrb[0].mxu0 %v3063
        %v3065 = vpop.f32.mrb[0].mxu0
        %v3066 = vadd.f32 %v2947, %v3065
        %v3067 = vpop.f32.mrb[0].mxu0
        %3068 = vdwg.mxu0
        %3069 = vmatprep.subr.mxu0 0.0
        %v3070 = vand.u32 %v2499, 4294901760
        %3071 = vmatpush1.msra.mxu0 %v3070
        %3072 = vmatprep.subr.mxu0 0.0
        %v3073 = vand.u32 %v2500, 4294901760
        %3074 = vmatpush1.msra.mxu0 %v3073
        %3075 = vmatprep.subr.mxu0 0.0
        %v3076 = vand.u32 %v2501, 4294901760
        %3077 = vmatpush1.msra.mxu0 %v3076
        %3078 = vmatprep.subr.mxu0 0.0
        %v3079 = vand.u32 %v2502, 4294901760
        %3080 = vmatpush1.msra.mxu0 %v3079
        %3081 = vmatprep.subr.mxu0 0.0
        %v3082 = vand.u32 %v2503, 4294901760
        %3083 = vmatpush1.msra.mxu0 %v3082
        %3084 = vmatprep.subr.mxu0 0.0
        %v3085 = vand.u32 %v2504, 4294901760
        %3086 = vmatpush1.msra.mxu0 %v3085
        %3087 = vmatprep.subr.mxu0 0.0
        %v3088 = vand.u32 %v2505, 4294901760
        %3089 = vmatpush1.msra.mxu0 %v3088
        %3090 = vmatprep.subr.mxu0 0.0
        %v3091 = vand.u32 %v2506, 4294901760
        %3092 = vmatpush1.msra.mxu0 %v3091
        %3093 = vmatprep.subr.mxu0 0.0
        %v3094 = vand.u32 %v2507, 4294901760
        %3095 = vmatpush1.msra.mxu0 %v3094
        %3096 = vmatprep.subr.mxu0 0.0
        %v3097 = vand.u32 %v2508, 4294901760
        %3098 = vmatpush1.msra.mxu0 %v3097
        %3099 = vmatprep.subr.mxu0 0.0
        %v3100 = vand.u32 %v2509, 4294901760
        %3101 = vmatpush1.msra.mxu0 %v3100
        %3102 = vmatprep.subr.mxu0 0.0
        %v3103 = vand.u32 %v2510, 4294901760
        %3104 = vmatpush1.msra.mxu0 %v3103
        %3105 = vmatprep.subr.mxu0 0.0
        %v3106 = vand.u32 %v2511, 4294901760
        %3107 = vmatpush1.msra.mxu0 %v3106
        %3108 = vmatprep.subr.mxu0 0.0
        %v3109 = vand.u32 %v2512, 4294901760
        %3110 = vmatpush1.msra.mxu0 %v3109
        %3111 = vmatprep.subr.mxu0 0.0
        %v3112 = vand.u32 %v2513, 4294901760
        %3113 = vmatpush1.msra.mxu0 %v3112
        %3114 = vmatprep.subr.mxu0 0.0
        %v3115 = vand.u32 %v2514, 4294901760
        %3116 = vmatpush1.msra.mxu0 %v3115
        %3117 = vmatprep.subr.mxu0 0.0
        %3118 = vmatpush1.msra.mxu0 0.0
        %3119 = vmatprep.subr.mxu0 0.0
        %3120 = vmatpush1.msra.mxu0 0.0
        %3121 = vmatprep.subr.mxu0 0.0
        %3122 = vmatpush1.msra.mxu0 0.0
        %3123 = vmatprep.subr.mxu0 0.0
        %3124 = vmatpush1.msra.mxu0 0.0
        %3125 = vmatprep.subr.mxu0 0.0
        %3126 = vmatpush1.msra.mxu0 0.0
        %3127 = vmatprep.subr.mxu0 0.0
        %3128 = vmatpush1.msra.mxu0 0.0
        %3129 = vmatprep.subr.mxu0 0.0
        %3130 = vmatpush1.msra.mxu0 0.0
        %3131 = vmatprep.subr.mxu0 0.0
        %3132 = vmatpush1.msra.mxu0 0.0
        %3133 = vmatprep.subr.mxu0 0.0
        %3134 = vmatpush1.msra.mxu0 0.0
        %3135 = vmatprep.subr.mxu0 0.0
        %3136 = vmatpush1.msra.mxu0 0.0
        %3137 = vmatprep.subr.mxu0 0.0
        %3138 = vmatpush1.msra.mxu0 0.0
        %3139 = vmatprep.subr.mxu0 0.0
        %3140 = vmatpush1.msra.mxu0 0.0
        %3141 = vmatprep.subr.mxu0 0.0
        %3142 = vmatpush1.msra.mxu0 0.0
        %3143 = vmatprep.subr.mxu0 0.0
        %3144 = vmatpush1.msra.mxu0 0.0
        %3145 = vmatprep.subr.mxu0 0.0
        %3146 = vmatpush1.msra.mxu0 0.0
        %3147 = vmatprep.subr.mxu0 0.0
        %3148 = vmatpush1.msra.mxu0 0.0
        %3149 = vmatprep.mubr.f32.mxu0 0.0
        %v3150 = vand.u32 %v1837, 4294901760
        %3151 = vmatmul.mubr.f32.gmra.mrb[0].mxu0 %v3150
        %v3152 = vpop.f32.mrb[0].mxu0
        %v3153 = vadd.f32 %v3066, %v3152
        %v3154 = vpop.f32.mrb[0].mxu0
        %3155 = vdwg.mxu0
        %v3156 = vmul.f32 %v711, -0.058586136
        %v3157 = vsub.f32 %v3153, %v3156
        %s3158 = scalar_lea.vmem [#allocation2], 256
        %v3159 = vld [vmem:[%s3158] sm:$0xff]
        %v3160 = vld [vmem:[%s3158 + $0x8] sm:$0xff]
        %v3161 = vld [vmem:[%s3158 + $0x10] sm:$0xff]
        %v3162 = vld [vmem:[%s3158 + $0x18] sm:$0xff]
        %v3163 = vld [vmem:[%s3158 + $0x20] sm:$0xff]
        %v3164 = vld [vmem:[%s3158 + $0x28] sm:$0xff]
        %v3165 = vld [vmem:[%s3158 + $0x30] sm:$0xff]
        %v3166 = vld [vmem:[%s3158 + $0x38] sm:$0xff]
        %v3167 = vld [vmem:[%s3158 + $0x40] sm:$0xff]
        %v3168 = vld [vmem:[%s3158 + $0x48] sm:$0xff]
        %v3169 = vld [vmem:[%s3158 + $0x50] sm:$0xff]
        %v3170 = vld [vmem:[%s3158 + $0x58] sm:$0xff]
        %v3171 = vld [vmem:[%s3158 + $0x60] sm:$0xff]
        %v3172 = vld [vmem:[%s3158 + $0x68] sm:$0xff]
        %v3173 = vld [vmem:[%s3158 + $0x70] sm:$0xff]
        %v3174 = vld [vmem:[%s3158 + $0x78] sm:$0xff]
        %3175 = vmatprep.subr.mxu0 0.0
        %v3176 = vand.u32 %v3159, 4294901760
        %3177 = vmatpush1.msra.mxu0 %v3176
        %3178 = vmatprep.subr.mxu0 0.0
        %v3179 = vand.u32 %v3160, 4294901760
        %3180 = vmatpush1.msra.mxu0 %v3179
        %3181 = vmatprep.subr.mxu0 0.0
        %v3182 = vand.u32 %v3161, 4294901760
        %3183 = vmatpush1.msra.mxu0 %v3182
        %3184 = vmatprep.subr.mxu0 0.0
        %v3185 = vand.u32 %v3162, 4294901760
        %3186 = vmatpush1.msra.mxu0 %v3185
        %3187 = vmatprep.subr.mxu0 0.0
        %v3188 = vand.u32 %v3163, 4294901760
        %3189 = vmatpush1.msra.mxu0 %v3188
        %3190 = vmatprep.subr.mxu0 0.0
        %v3191 = vand.u32 %v3164, 4294901760
        %3192 = vmatpush1.msra.mxu0 %v3191
        %3193 = vmatprep.subr.mxu0 0.0
        %v3194 = vand.u32 %v3165, 4294901760
        %3195 = vmatpush1.msra.mxu0 %v3194
        %3196 = vmatprep.subr.mxu0 0.0
        %v3197 = vand.u32 %v3166, 4294901760
        %3198 = vmatpush1.msra.mxu0 %v3197
        %3199 = vmatprep.subr.mxu0 0.0
        %v3200 = vand.u32 %v3167, 4294901760
        %3201 = vmatpush1.msra.mxu0 %v3200
        %3202 = vmatprep.subr.mxu0 0.0
        %v3203 = vand.u32 %v3168, 4294901760
        %3204 = vmatpush1.msra.mxu0 %v3203
        %3205 = vmatprep.subr.mxu0 0.0
        %v3206 = vand.u32 %v3169, 4294901760
        %3207 = vmatpush1.msra.mxu0 %v3206
        %3208 = vmatprep.subr.mxu0 0.0
        %v3209 = vand.u32 %v3170, 4294901760
        %3210 = vmatpush1.msra.mxu0 %v3209
        %3211 = vmatprep.subr.mxu0 0.0
        %v3212 = vand.u32 %v3171, 4294901760
        %3213 = vmatpush1.msra.mxu0 %v3212
        %3214 = vmatprep.subr.mxu0 0.0
        %v3215 = vand.u32 %v3172, 4294901760
        %3216 = vmatpush1.msra.mxu0 %v3215
        %3217 = vmatprep.subr.mxu0 0.0
        %v3218 = vand.u32 %v3173, 4294901760
        %3219 = vmatpush1.msra.mxu0 %v3218
        %3220 = vmatprep.subr.mxu0 0.0
        %v3221 = vand.u32 %v3174, 4294901760
        %3222 = vmatpush1.msra.mxu0 %v3221
        %3223 = vmatprep.subr.mxu0 0.0
        %3224 = vmatpush1.msra.mxu0 0.0
        %3225 = vmatprep.subr.mxu0 0.0
        %3226 = vmatpush1.msra.mxu0 0.0
        %3227 = vmatprep.subr.mxu0 0.0
        %3228 = vmatpush1.msra.mxu0 0.0
        %3229 = vmatprep.subr.mxu0 0.0
        %3230 = vmatpush1.msra.mxu0 0.0
        %3231 = vmatprep.subr.mxu0 0.0
        %3232 = vmatpush1.msra.mxu0 0.0
        %3233 = vmatprep.subr.mxu0 0.0
        %3234 = vmatpush1.msra.mxu0 0.0
        %3235 = vmatprep.subr.mxu0 0.0
        %3236 = vmatpush1.msra.mxu0 0.0
        %3237 = vmatprep.subr.mxu0 0.0
        %3238 = vmatpush1.msra.mxu0 0.0
        %3239 = vmatprep.subr.mxu0 0.0
        %3240 = vmatpush1.msra.mxu0 0.0
        %3241 = vmatprep.subr.mxu0 0.0
        %3242 = vmatpush1.msra.mxu0 0.0
        %3243 = vmatprep.subr.mxu0 0.0
        %3244 = vmatpush1.msra.mxu0 0.0
        %3245 = vmatprep.subr.mxu0 0.0
        %3246 = vmatpush1.msra.mxu0 0.0
        %3247 = vmatprep.subr.mxu0 0.0
        %3248 = vmatpush1.msra.mxu0 0.0
        %3249 = vmatprep.subr.mxu0 0.0
        %3250 = vmatpush1.msra.mxu0 0.0
        %3251 = vmatprep.subr.mxu0 0.0
        %3252 = vmatpush1.msra.mxu0 0.0
        %3253 = vmatprep.subr.mxu0 0.0
        %3254 = vmatpush1.msra.mxu0 0.0
        %3255 = vmatprep.mubr.f32.mxu0 0.0
        %v3256 = vand.u32 %v1837, 4294901760
        %v3257 = vsub.f32 %v1837, %v3256
        %v3258 = vand.u32 %v3257, 4294901760
        %v3259 = vsub.f32 %v3257, %v3258
        %v3260 = vand.u32 %v3259, 4294901760
        %3261 = vmatmul.mubr.f32.gmra.mrb[0].mxu0 %v3260
        %v3262 = vpop.f32.mrb[0].mxu0
        %v3263 = vadd.f32 0.0, %v3262
        %v3264 = vpop.f32.mrb[0].mxu0
        %3265 = vdwg.mxu0
        %3266 = vmatprep.subr.mxu0 0.0
        %v3267 = vand.u32 %v3159, 4294901760
        %v3268 = vsub.f32 %v3159, %v3267
        %v3269 = vand.u32 %v3268, 4294901760
        %v3270 = vsub.f32 %v3268, %v3269
        %v3271 = vand.u32 %v3270, 4294901760
        %3272 = vmatpush1.msra.mxu0 %v3271
        %3273 = vmatprep.subr.mxu0 0.0
        %v3274 = vand.u32 %v3160, 4294901760
        %v3275 = vsub.f32 %v3160, %v3274
        %v3276 = vand.u32 %v3275, 4294901760
        %v3277 = vsub.f32 %v3275, %v3276
        %v3278 = vand.u32 %v3277, 4294901760
        %3279 = vmatpush1.msra.mxu0 %v3278
        %3280 = vmatprep.subr.mxu0 0.0
        %v3281 = vand.u32 %v3161, 4294901760
        %v3282 = vsub.f32 %v3161, %v3281
        %v3283 = vand.u32 %v3282, 4294901760
        %v3284 = vsub.f32 %v3282, %v3283
        %v3285 = vand.u32 %v3284, 4294901760
        %3286 = vmatpush1.msra.mxu0 %v3285
        %3287 = vmatprep.subr.mxu0 0.0
        %v3288 = vand.u32 %v3162, 4294901760
        %v3289 = vsub.f32 %v3162, %v3288
        %v3290 = vand.u32 %v3289, 4294901760
        %v3291 = vsub.f32 %v3289, %v3290
        %v3292 = vand.u32 %v3291, 4294901760
        %3293 = vmatpush1.msra.mxu0 %v3292
        %3294 = vmatprep.subr.mxu0 0.0
        %v3295 = vand.u32 %v3163, 4294901760
        %v3296 = vsub.f32 %v3163, %v3295
        %v3297 = vand.u32 %v3296, 4294901760
        %v3298 = vsub.f32 %v3296, %v3297
        %v3299 = vand.u32 %v3298, 4294901760
        %3300 = vmatpush1.msra.mxu0 %v3299
        %3301 = vmatprep.subr.mxu0 0.0
        %v3302 = vand.u32 %v3164, 4294901760
        %v3303 = vsub.f32 %v3164, %v3302
        %v3304 = vand.u32 %v3303, 4294901760
        %v3305 = vsub.f32 %v3303, %v3304
        %v3306 = vand.u32 %v3305, 4294901760
        %3307 = vmatpush1.msra.mxu0 %v3306
        %3308 = vmatprep.subr.mxu0 0.0
        %v3309 = vand.u32 %v3165, 4294901760
        %v3310 = vsub.f32 %v3165, %v3309
        %v3311 = vand.u32 %v3310, 4294901760
        %v3312 = vsub.f32 %v3310, %v3311
        %v3313 = vand.u32 %v3312, 4294901760
        %3314 = vmatpush1.msra.mxu0 %v3313
        %3315 = vmatprep.subr.mxu0 0.0
        %v3316 = vand.u32 %v3166, 4294901760
        %v3317 = vsub.f32 %v3166, %v3316
        %v3318 = vand.u32 %v3317, 4294901760
        %v3319 = vsub.f32 %v3317, %v3318
        %v3320 = vand.u32 %v3319, 4294901760
        %3321 = vmatpush1.msra.mxu0 %v3320
        %3322 = vmatprep.subr.mxu0 0.0
        %v3323 = vand.u32 %v3167, 4294901760
        %v3324 = vsub.f32 %v3167, %v3323
        %v3325 = vand.u32 %v3324, 4294901760
        %v3326 = vsub.f32 %v3324, %v3325
        %v3327 = vand.u32 %v3326, 4294901760
        %3328 = vmatpush1.msra.mxu0 %v3327
        %3329 = vmatprep.subr.mxu0 0.0
        %v3330 = vand.u32 %v3168, 4294901760
        %v3331 = vsub.f32 %v3168, %v3330
        %v3332 = vand.u32 %v3331, 4294901760
        %v3333 = vsub.f32 %v3331, %v3332
        %v3334 = vand.u32 %v3333, 4294901760
        %3335 = vmatpush1.msra.mxu0 %v3334
        %3336 = vmatprep.subr.mxu0 0.0
        %v3337 = vand.u32 %v3169, 4294901760
        %v3338 = vsub.f32 %v3169, %v3337
        %v3339 = vand.u32 %v3338, 4294901760
        %v3340 = vsub.f32 %v3338, %v3339
        %v3341 = vand.u32 %v3340, 4294901760
        %3342 = vmatpush1.msra.mxu0 %v3341
        %3343 = vmatprep.subr.mxu0 0.0
        %v3344 = vand.u32 %v3170, 4294901760
        %v3345 = vsub.f32 %v3170, %v3344
        %v3346 = vand.u32 %v3345, 4294901760
        %v3347 = vsub.f32 %v3345, %v3346
        %v3348 = vand.u32 %v3347, 4294901760
        %3349 = vmatpush1.msra.mxu0 %v3348
        %3350 = vmatprep.subr.mxu0 0.0
        %v3351 = vand.u32 %v3171, 4294901760
        %v3352 = vsub.f32 %v3171, %v3351
        %v3353 = vand.u32 %v3352, 4294901760
        %v3354 = vsub.f32 %v3352, %v3353
        %v3355 = vand.u32 %v3354, 4294901760
        %3356 = vmatpush1.msra.mxu0 %v3355
        %3357 = vmatprep.subr.mxu0 0.0
        %v3358 = vand.u32 %v3172, 4294901760
        %v3359 = vsub.f32 %v3172, %v3358
        %v3360 = vand.u32 %v3359, 4294901760
        %v3361 = vsub.f32 %v3359, %v3360
        %v3362 = vand.u32 %v3361, 4294901760
        %3363 = vmatpush1.msra.mxu0 %v3362
        %3364 = vmatprep.subr.mxu0 0.0
        %v3365 = vand.u32 %v3173, 4294901760
        %v3366 = vsub.f32 %v3173, %v3365
        %v3367 = vand.u32 %v3366, 4294901760
        %v3368 = vsub.f32 %v3366, %v3367
        %v3369 = vand.u32 %v3368, 4294901760
        %3370 = vmatpush1.msra.mxu0 %v3369
        %3371 = vmatprep.subr.mxu0 0.0
        %v3372 = vand.u32 %v3174, 4294901760
        %v3373 = vsub.f32 %v3174, %v3372
        %v3374 = vand.u32 %v3373, 4294901760
        %v3375 = vsub.f32 %v3373, %v3374
        %v3376 = vand.u32 %v3375, 4294901760
        %3377 = vmatpush1.msra.mxu0 %v3376
        %3378 = vmatprep.subr.mxu0 0.0
        %3379 = vmatpush1.msra.mxu0 0.0
        %3380 = vmatprep.subr.mxu0 0.0
        %3381 = vmatpush1.msra.mxu0 0.0
        %3382 = vmatprep.subr.mxu0 0.0
        %3383 = vmatpush1.msra.mxu0 0.0
        %3384 = vmatprep.subr.mxu0 0.0
        %3385 = vmatpush1.msra.mxu0 0.0
        %3386 = vmatprep.subr.mxu0 0.0
        %3387 = vmatpush1.msra.mxu0 0.0
        %3388 = vmatprep.subr.mxu0 0.0
        %3389 = vmatpush1.msra.mxu0 0.0
        %3390 = vmatprep.subr.mxu0 0.0
        %3391 = vmatpush1.msra.mxu0 0.0
        %3392 = vmatprep.subr.mxu0 0.0
        %3393 = vmatpush1.msra.mxu0 0.0
        %3394 = vmatprep.subr.mxu0 0.0
        %3395 = vmatpush1.msra.mxu0 0.0
        %3396 = vmatprep.subr.mxu0 0.0
        %3397 = vmatpush1.msra.mxu0 0.0
        %3398 = vmatprep.subr.mxu0 0.0
        %3399 = vmatpush1.msra.mxu0 0.0
        %3400 = vmatprep.subr.mxu0 0.0
        %3401 = vmatpush1.msra.mxu0 0.0
        %3402 = vmatprep.subr.mxu0 0.0
        %3403 = vmatpush1.msra.mxu0 0.0
        %3404 = vmatprep.subr.mxu0 0.0
        %3405 = vmatpush1.msra.mxu0 0.0
        %3406 = vmatprep.subr.mxu0 0.0
        %3407 = vmatpush1.msra.mxu0 0.0
        %3408 = vmatprep.subr.mxu0 0.0
        %3409 = vmatpush1.msra.mxu0 0.0
        %3410 = vmatprep.mubr.f32.mxu0 0.0
        %v3411 = vand.u32 %v1837, 4294901760
        %3412 = vmatmul.mubr.f32.gmra.mrb[0].mxu0 %v3411
        %v3413 = vpop.f32.mrb[0].mxu0
        %v3414 = vadd.f32 %v3263, %v3413
        %v3415 = vpop.f32.mrb[0].mxu0
        %3416 = vdwg.mxu0
        %3417 = vmatprep.subr.mxu0 0.0
        %v3418 = vand.u32 %v3159, 4294901760
        %v3419 = vsub.f32 %v3159, %v3418
        %3420 = vmatpush1.msra.mxu0 %v3419
        %3421 = vmatprep.subr.mxu0 0.0
        %v3422 = vand.u32 %v3160, 4294901760
        %v3423 = vsub.f32 %v3160, %v3422
        %3424 = vmatpush1.msra.mxu0 %v3423
        %3425 = vmatprep.subr.mxu0 0.0
        %v3426 = vand.u32 %v3161, 4294901760
        %v3427 = vsub.f32 %v3161, %v3426
        %3428 = vmatpush1.msra.mxu0 %v3427
        %3429 = vmatprep.subr.mxu0 0.0
        %v3430 = vand.u32 %v3162, 4294901760
        %v3431 = vsub.f32 %v3162, %v3430
        %3432 = vmatpush1.msra.mxu0 %v3431
        %3433 = vmatprep.subr.mxu0 0.0
        %v3434 = vand.u32 %v3163, 4294901760
        %v3435 = vsub.f32 %v3163, %v3434
        %3436 = vmatpush1.msra.mxu0 %v3435
        %3437 = vmatprep.subr.mxu0 0.0
        %v3438 = vand.u32 %v3164, 4294901760
        %v3439 = vsub.f32 %v3164, %v3438
        %3440 = vmatpush1.msra.mxu0 %v3439
        %3441 = vmatprep.subr.mxu0 0.0
        %v3442 = vand.u32 %v3165, 4294901760
        %v3443 = vsub.f32 %v3165, %v3442
        %3444 = vmatpush1.msra.mxu0 %v3443
        %3445 = vmatprep.subr.mxu0 0.0
        %v3446 = vand.u32 %v3166, 4294901760
        %v3447 = vsub.f32 %v3166, %v3446
        %3448 = vmatpush1.msra.mxu0 %v3447
        %3449 = vmatprep.subr.mxu0 0.0
        %v3450 = vand.u32 %v3167, 4294901760
        %v3451 = vsub.f32 %v3167, %v3450
        %3452 = vmatpush1.msra.mxu0 %v3451
        %3453 = vmatprep.subr.mxu0 0.0
        %v3454 = vand.u32 %v3168, 4294901760
        %v3455 = vsub.f32 %v3168, %v3454
        %3456 = vmatpush1.msra.mxu0 %v3455
        %3457 = vmatprep.subr.mxu0 0.0
        %v3458 = vand.u32 %v3169, 4294901760
        %v3459 = vsub.f32 %v3169, %v3458
        %3460 = vmatpush1.msra.mxu0 %v3459
        %3461 = vmatprep.subr.mxu0 0.0
        %v3462 = vand.u32 %v3170, 4294901760
        %v3463 = vsub.f32 %v3170, %v3462
        %3464 = vmatpush1.msra.mxu0 %v3463
        %3465 = vmatprep.subr.mxu0 0.0
        %v3466 = vand.u32 %v3171, 4294901760
        %v3467 = vsub.f32 %v3171, %v3466
        %3468 = vmatpush1.msra.mxu0 %v3467
        %3469 = vmatprep.subr.mxu0 0.0
        %v3470 = vand.u32 %v3172, 4294901760
        %v3471 = vsub.f32 %v3172, %v3470
        %3472 = vmatpush1.msra.mxu0 %v3471
        %3473 = vmatprep.subr.mxu0 0.0
        %v3474 = vand.u32 %v3173, 4294901760
        %v3475 = vsub.f32 %v3173, %v3474
        %3476 = vmatpush1.msra.mxu0 %v3475
        %3477 = vmatprep.subr.mxu0 0.0
        %v3478 = vand.u32 %v3174, 4294901760
        %v3479 = vsub.f32 %v3174, %v3478
        %3480 = vmatpush1.msra.mxu0 %v3479
        %3481 = vmatprep.subr.mxu0 0.0
        %3482 = vmatpush1.msra.mxu0 0.0
        %3483 = vmatprep.subr.mxu0 0.0
        %3484 = vmatpush1.msra.mxu0 0.0
        %3485 = vmatprep.subr.mxu0 0.0
        %3486 = vmatpush1.msra.mxu0 0.0
        %3487 = vmatprep.subr.mxu0 0.0
        %3488 = vmatpush1.msra.mxu0 0.0
        %3489 = vmatprep.subr.mxu0 0.0
        %3490 = vmatpush1.msra.mxu0 0.0
        %3491 = vmatprep.subr.mxu0 0.0
        %3492 = vmatpush1.msra.mxu0 0.0
        %3493 = vmatprep.subr.mxu0 0.0
        %3494 = vmatpush1.msra.mxu0 0.0
        %3495 = vmatprep.subr.mxu0 0.0
        %3496 = vmatpush1.msra.mxu0 0.0
        %3497 = vmatprep.subr.mxu0 0.0
        %3498 = vmatpush1.msra.mxu0 0.0
        %3499 = vmatprep.subr.mxu0 0.0
        %3500 = vmatpush1.msra.mxu0 0.0
        %3501 = vmatprep.subr.mxu0 0.0
        %3502 = vmatpush1.msra.mxu0 0.0
        %3503 = vmatprep.subr.mxu0 0.0
        %3504 = vmatpush1.msra.mxu0 0.0
        %3505 = vmatprep.subr.mxu0 0.0
        %3506 = vmatpush1.msra.mxu0 0.0
        %3507 = vmatprep.subr.mxu0 0.0
        %3508 = vmatpush1.msra.mxu0 0.0
        %3509 = vmatprep.subr.mxu0 0.0
        %3510 = vmatpush1.msra.mxu0 0.0
        %3511 = vmatprep.subr.mxu0 0.0
        %3512 = vmatpush1.msra.mxu0 0.0
        %3513 = vmatprep.mubr.f32.mxu0 0.0
        %v3514 = vand.u32 %v1837, 4294901760
        %v3515 = vsub.f32 %v1837, %v3514
        %3516 = vmatmul.mubr.f32.gmra.mrb[0].mxu0 %v3515
        %v3517 = vpop.f32.mrb[0].mxu0
        %v3518 = vadd.f32 %v3414, %v3517
        %v3519 = vpop.f32.mrb[0].mxu0
        %3520 = vdwg.mxu0
        %3521 = vmatprep.subr.mxu0 0.0
        %v3522 = vand.u32 %v3159, 4294901760
        %3523 = vmatpush1.msra.mxu0 %v3522
        %3524 = vmatprep.subr.mxu0 0.0
        %v3525 = vand.u32 %v3160, 4294901760
        %3526 = vmatpush1.msra.mxu0 %v3525
        %3527 = vmatprep.subr.mxu0 0.0
        %v3528 = vand.u32 %v3161, 4294901760
        %3529 = vmatpush1.msra.mxu0 %v3528
        %3530 = vmatprep.subr.mxu0 0.0
        %v3531 = vand.u32 %v3162, 4294901760
        %3532 = vmatpush1.msra.mxu0 %v3531
        %3533 = vmatprep.subr.mxu0 0.0
        %v3534 = vand.u32 %v3163, 4294901760
        %3535 = vmatpush1.msra.mxu0 %v3534
        %3536 = vmatprep.subr.mxu0 0.0
        %v3537 = vand.u32 %v3164, 4294901760
        %3538 = vmatpush1.msra.mxu0 %v3537
        %3539 = vmatprep.subr.mxu0 0.0
        %v3540 = vand.u32 %v3165, 4294901760
        %3541 = vmatpush1.msra.mxu0 %v3540
        %3542 = vmatprep.subr.mxu0 0.0
        %v3543 = vand.u32 %v3166, 4294901760
        %3544 = vmatpush1.msra.mxu0 %v3543
        %3545 = vmatprep.subr.mxu0 0.0
        %v3546 = vand.u32 %v3167, 4294901760
        %3547 = vmatpush1.msra.mxu0 %v3546
        %3548 = vmatprep.subr.mxu0 0.0
        %v3549 = vand.u32 %v3168, 4294901760
        %3550 = vmatpush1.msra.mxu0 %v3549
        %3551 = vmatprep.subr.mxu0 0.0
        %v3552 = vand.u32 %v3169, 4294901760
        %3553 = vmatpush1.msra.mxu0 %v3552
        %3554 = vmatprep.subr.mxu0 0.0
        %v3555 = vand.u32 %v3170, 4294901760
        %3556 = vmatpush1.msra.mxu0 %v3555
        %3557 = vmatprep.subr.mxu0 0.0
        %v3558 = vand.u32 %v3171, 4294901760
        %3559 = vmatpush1.msra.mxu0 %v3558
        %3560 = vmatprep.subr.mxu0 0.0
        %v3561 = vand.u32 %v3172, 4294901760
        %3562 = vmatpush1.msra.mxu0 %v3561
        %3563 = vmatprep.subr.mxu0 0.0
        %v3564 = vand.u32 %v3173, 4294901760
        %3565 = vmatpush1.msra.mxu0 %v3564
        %3566 = vmatprep.subr.mxu0 0.0
        %v3567 = vand.u32 %v3174, 4294901760
        %3568 = vmatpush1.msra.mxu0 %v3567
        %3569 = vmatprep.subr.mxu0 0.0
        %3570 = vmatpush1.msra.mxu0 0.0
        %3571 = vmatprep.subr.mxu0 0.0
        %3572 = vmatpush1.msra.mxu0 0.0
        %3573 = vmatprep.subr.mxu0 0.0
        %3574 = vmatpush1.msra.mxu0 0.0
        %3575 = vmatprep.subr.mxu0 0.0
        %3576 = vmatpush1.msra.mxu0 0.0
        %3577 = vmatprep.subr.mxu0 0.0
        %3578 = vmatpush1.msra.mxu0 0.0
        %3579 = vmatprep.subr.mxu0 0.0
        %3580 = vmatpush1.msra.mxu0 0.0
        %3581 = vmatprep.subr.mxu0 0.0
        %3582 = vmatpush1.msra.mxu0 0.0
        %3583 = vmatprep.subr.mxu0 0.0
        %3584 = vmatpush1.msra.mxu0 0.0
        %3585 = vmatprep.subr.mxu0 0.0
        %3586 = vmatpush1.msra.mxu0 0.0
        %3587 = vmatprep.subr.mxu0 0.0
        %3588 = vmatpush1.msra.mxu0 0.0
        %3589 = vmatprep.subr.mxu0 0.0
        %3590 = vmatpush1.msra.mxu0 0.0
        %3591 = vmatprep.subr.mxu0 0.0
        %3592 = vmatpush1.msra.mxu0 0.0
        %3593 = vmatprep.subr.mxu0 0.0
        %3594 = vmatpush1.msra.mxu0 0.0
        %3595 = vmatprep.subr.mxu0 0.0
        %3596 = vmatpush1.msra.mxu0 0.0
        %3597 = vmatprep.subr.mxu0 0.0
        %3598 = vmatpush1.msra.mxu0 0.0
        %3599 = vmatprep.subr.mxu0 0.0
        %3600 = vmatpush1.msra.mxu0 0.0
        %3601 = vmatprep.mubr.f32.mxu0 0.0
        %v3602 = vand.u32 %v1837, 4294901760
        %v3603 = vsub.f32 %v1837, %v3602
        %v3604 = vand.u32 %v3603, 4294901760
        %3605 = vmatmul.mubr.f32.gmra.mrb[0].mxu0 %v3604
        %v3606 = vpop.f32.mrb[0].mxu0
        %v3607 = vadd.f32 %v3518, %v3606
        %v3608 = vpop.f32.mrb[0].mxu0
        %3609 = vdwg.mxu0
        %3610 = vmatprep.subr.mxu0 0.0
        %v3611 = vand.u32 %v3159, 4294901760
        %v3612 = vsub.f32 %v3159, %v3611
        %v3613 = vand.u32 %v3612, 4294901760
        %3614 = vmatpush1.msra.mxu0 %v3613
        %3615 = vmatprep.subr.mxu0 0.0
        %v3616 = vand.u32 %v3160, 4294901760
        %v3617 = vsub.f32 %v3160, %v3616
        %v3618 = vand.u32 %v3617, 4294901760
        %3619 = vmatpush1.msra.mxu0 %v3618
        %3620 = vmatprep.subr.mxu0 0.0
        %v3621 = vand.u32 %v3161, 4294901760
        %v3622 = vsub.f32 %v3161, %v3621
        %v3623 = vand.u32 %v3622, 4294901760
        %3624 = vmatpush1.msra.mxu0 %v3623
        %3625 = vmatprep.subr.mxu0 0.0
        %v3626 = vand.u32 %v3162, 4294901760
        %v3627 = vsub.f32 %v3162, %v3626
        %v3628 = vand.u32 %v3627, 4294901760
        %3629 = vmatpush1.msra.mxu0 %v3628
        %3630 = vmatprep.subr.mxu0 0.0
        %v3631 = vand.u32 %v3163, 4294901760
        %v3632 = vsub.f32 %v3163, %v3631
        %v3633 = vand.u32 %v3632, 4294901760
        %3634 = vmatpush1.msra.mxu0 %v3633
        %3635 = vmatprep.subr.mxu0 0.0
        %v3636 = vand.u32 %v3164, 4294901760
        %v3637 = vsub.f32 %v3164, %v3636
        %v3638 = vand.u32 %v3637, 4294901760
        %3639 = vmatpush1.msra.mxu0 %v3638
        %3640 = vmatprep.subr.mxu0 0.0
        %v3641 = vand.u32 %v3165, 4294901760
        %v3642 = vsub.f32 %v3165, %v3641
        %v3643 = vand.u32 %v3642, 4294901760
        %3644 = vmatpush1.msra.mxu0 %v3643
        %3645 = vmatprep.subr.mxu0 0.0
        %v3646 = vand.u32 %v3166, 4294901760
        %v3647 = vsub.f32 %v3166, %v3646
        %v3648 = vand.u32 %v3647, 4294901760
        %3649 = vmatpush1.msra.mxu0 %v3648
        %3650 = vmatprep.subr.mxu0 0.0
        %v3651 = vand.u32 %v3167, 4294901760
        %v3652 = vsub.f32 %v3167, %v3651
        %v3653 = vand.u32 %v3652, 4294901760
        %3654 = vmatpush1.msra.mxu0 %v3653
        %3655 = vmatprep.subr.mxu0 0.0
        %v3656 = vand.u32 %v3168, 4294901760
        %v3657 = vsub.f32 %v3168, %v3656
        %v3658 = vand.u32 %v3657, 4294901760
        %3659 = vmatpush1.msra.mxu0 %v3658
        %3660 = vmatprep.subr.mxu0 0.0
        %v3661 = vand.u32 %v3169, 4294901760
        %v3662 = vsub.f32 %v3169, %v3661
        %v3663 = vand.u32 %v3662, 4294901760
        %3664 = vmatpush1.msra.mxu0 %v3663
        %3665 = vmatprep.subr.mxu0 0.0
        %v3666 = vand.u32 %v3170, 4294901760
        %v3667 = vsub.f32 %v3170, %v3666
        %v3668 = vand.u32 %v3667, 4294901760
        %3669 = vmatpush1.msra.mxu0 %v3668
        %3670 = vmatprep.subr.mxu0 0.0
        %v3671 = vand.u32 %v3171, 4294901760
        %v3672 = vsub.f32 %v3171, %v3671
        %v3673 = vand.u32 %v3672, 4294901760
        %3674 = vmatpush1.msra.mxu0 %v3673
        %3675 = vmatprep.subr.mxu0 0.0
        %v3676 = vand.u32 %v3172, 4294901760
        %v3677 = vsub.f32 %v3172, %v3676
        %v3678 = vand.u32 %v3677, 4294901760
        %3679 = vmatpush1.msra.mxu0 %v3678
        %3680 = vmatprep.subr.mxu0 0.0
        %v3681 = vand.u32 %v3173, 4294901760
        %v3682 = vsub.f32 %v3173, %v3681
        %v3683 = vand.u32 %v3682, 4294901760
        %3684 = vmatpush1.msra.mxu0 %v3683
        %3685 = vmatprep.subr.mxu0 0.0
        %v3686 = vand.u32 %v3174, 4294901760
        %v3687 = vsub.f32 %v3174, %v3686
        %v3688 = vand.u32 %v3687, 4294901760
        %3689 = vmatpush1.msra.mxu0 %v3688
        %3690 = vmatprep.subr.mxu0 0.0
        %3691 = vmatpush1.msra.mxu0 0.0
        %3692 = vmatprep.subr.mxu0 0.0
        %3693 = vmatpush1.msra.mxu0 0.0
        %3694 = vmatprep.subr.mxu0 0.0
        %3695 = vmatpush1.msra.mxu0 0.0
        %3696 = vmatprep.subr.mxu0 0.0
        %3697 = vmatpush1.msra.mxu0 0.0
        %3698 = vmatprep.subr.mxu0 0.0
        %3699 = vmatpush1.msra.mxu0 0.0
        %3700 = vmatprep.subr.mxu0 0.0
        %3701 = vmatpush1.msra.mxu0 0.0
        %3702 = vmatprep.subr.mxu0 0.0
        %3703 = vmatpush1.msra.mxu0 0.0
        %3704 = vmatprep.subr.mxu0 0.0
        %3705 = vmatpush1.msra.mxu0 0.0
        %3706 = vmatprep.subr.mxu0 0.0
        %3707 = vmatpush1.msra.mxu0 0.0
        %3708 = vmatprep.subr.mxu0 0.0
        %3709 = vmatpush1.msra.mxu0 0.0
        %3710 = vmatprep.subr.mxu0 0.0
        %3711 = vmatpush1.msra.mxu0 0.0
        %3712 = vmatprep.subr.mxu0 0.0
        %3713 = vmatpush1.msra.mxu0 0.0
        %3714 = vmatprep.subr.mxu0 0.0
        %3715 = vmatpush1.msra.mxu0 0.0
        %3716 = vmatprep.subr.mxu0 0.0
        %3717 = vmatpush1.msra.mxu0 0.0
        %3718 = vmatprep.subr.mxu0 0.0
        %3719 = vmatpush1.msra.mxu0 0.0
        %3720 = vmatprep.subr.mxu0 0.0
        %3721 = vmatpush1.msra.mxu0 0.0
        %3722 = vmatprep.mubr.f32.mxu0 0.0
        %v3723 = vand.u32 %v1837, 4294901760
        %3724 = vmatmul.mubr.f32.gmra.mrb[0].mxu0 %v3723
        %v3725 = vpop.f32.mrb[0].mxu0
        %v3726 = vadd.f32 %v3607, %v3725
        %v3727 = vpop.f32.mrb[0].mxu0
        %3728 = vdwg.mxu0
        %3729 = vmatprep.subr.mxu0 0.0
        %v3730 = vand.u32 %v3159, 4294901760
        %3731 = vmatpush1.msra.mxu0 %v3730
        %3732 = vmatprep.subr.mxu0 0.0
        %v3733 = vand.u32 %v3160, 4294901760
        %3734 = vmatpush1.msra.mxu0 %v3733
        %3735 = vmatprep.subr.mxu0 0.0
        %v3736 = vand.u32 %v3161, 4294901760
        %3737 = vmatpush1.msra.mxu0 %v3736
        %3738 = vmatprep.subr.mxu0 0.0
        %v3739 = vand.u32 %v3162, 4294901760
        %3740 = vmatpush1.msra.mxu0 %v3739
        %3741 = vmatprep.subr.mxu0 0.0
        %v3742 = vand.u32 %v3163, 4294901760
        %3743 = vmatpush1.msra.mxu0 %v3742
        %3744 = vmatprep.subr.mxu0 0.0
        %v3745 = vand.u32 %v3164, 4294901760
        %3746 = vmatpush1.msra.mxu0 %v3745
        %3747 = vmatprep.subr.mxu0 0.0
        %v3748 = vand.u32 %v3165, 4294901760
        %3749 = vmatpush1.msra.mxu0 %v3748
        %3750 = vmatprep.subr.mxu0 0.0
        %v3751 = vand.u32 %v3166, 4294901760
        %3752 = vmatpush1.msra.mxu0 %v3751
        %3753 = vmatprep.subr.mxu0 0.0
        %v3754 = vand.u32 %v3167, 4294901760
        %3755 = vmatpush1.msra.mxu0 %v3754
        %3756 = vmatprep.subr.mxu0 0.0
        %v3757 = vand.u32 %v3168, 4294901760
        %3758 = vmatpush1.msra.mxu0 %v3757
        %3759 = vmatprep.subr.mxu0 0.0
        %v3760 = vand.u32 %v3169, 4294901760
        %3761 = vmatpush1.msra.mxu0 %v3760
        %3762 = vmatprep.subr.mxu0 0.0
        %v3763 = vand.u32 %v3170, 4294901760
        %3764 = vmatpush1.msra.mxu0 %v3763
        %3765 = vmatprep.subr.mxu0 0.0
        %v3766 = vand.u32 %v3171, 4294901760
        %3767 = vmatpush1.msra.mxu0 %v3766
        %3768 = vmatprep.subr.mxu0 0.0
        %v3769 = vand.u32 %v3172, 4294901760
        %3770 = vmatpush1.msra.mxu0 %v3769
        %3771 = vmatprep.subr.mxu0 0.0
        %v3772 = vand.u32 %v3173, 4294901760
        %3773 = vmatpush1.msra.mxu0 %v3772
        %3774 = vmatprep.subr.mxu0 0.0
        %v3775 = vand.u32 %v3174, 4294901760
        %3776 = vmatpush1.msra.mxu0 %v3775
        %3777 = vmatprep.subr.mxu0 0.0
        %3778 = vmatpush1.msra.mxu0 0.0
        %3779 = vmatprep.subr.mxu0 0.0
        %3780 = vmatpush1.msra.mxu0 0.0
        %3781 = vmatprep.subr.mxu0 0.0
        %3782 = vmatpush1.msra.mxu0 0.0
        %3783 = vmatprep.subr.mxu0 0.0
        %3784 = vmatpush1.msra.mxu0 0.0
        %3785 = vmatprep.subr.mxu0 0.0
        %3786 = vmatpush1.msra.mxu0 0.0
        %3787 = vmatprep.subr.mxu0 0.0
        %3788 = vmatpush1.msra.mxu0 0.0
        %3789 = vmatprep.subr.mxu0 0.0
        %3790 = vmatpush1.msra.mxu0 0.0
        %3791 = vmatprep.subr.mxu0 0.0
        %3792 = vmatpush1.msra.mxu0 0.0
        %3793 = vmatprep.subr.mxu0 0.0
        %3794 = vmatpush1.msra.mxu0 0.0
        %3795 = vmatprep.subr.mxu0 0.0
        %3796 = vmatpush1.msra.mxu0 0.0
        %3797 = vmatprep.subr.mxu0 0.0
        %3798 = vmatpush1.msra.mxu0 0.0
        %3799 = vmatprep.subr.mxu0 0.0
        %3800 = vmatpush1.msra.mxu0 0.0
        %3801 = vmatprep.subr.mxu0 0.0
        %3802 = vmatpush1.msra.mxu0 0.0
        %3803 = vmatprep.subr.mxu0 0.0
        %3804 = vmatpush1.msra.mxu0 0.0
        %3805 = vmatprep.subr.mxu0 0.0
        %3806 = vmatpush1.msra.mxu0 0.0
        %3807 = vmatprep.subr.mxu0 0.0
        %3808 = vmatpush1.msra.mxu0 0.0
        %3809 = vmatprep.mubr.f32.mxu0 0.0
        %v3810 = vand.u32 %v1837, 4294901760
        %3811 = vmatmul.mubr.f32.gmra.mrb[0].mxu0 %v3810
        %v3812 = vpop.f32.mrb[0].mxu0
        %v3813 = vadd.f32 %v3726, %v3812
        %v3814 = vpop.f32.mrb[0].mxu0
        %3815 = vdwg.mxu0
        %v3816 = vmul.f32 %v711, 0.01
        %v3817 = vsub.f32 %v3813, %v3816
        %s3818 = scalar_lea.vmem [#allocation2], 384
        %v3819 = vld [vmem:[%s3818] sm:$0xff]
        %v3820 = vld [vmem:[%s3818 + $0x8] sm:$0xff]
        %v3821 = vld [vmem:[%s3818 + $0x10] sm:$0xff]
        %v3822 = vld [vmem:[%s3818 + $0x18] sm:$0xff]
        %v3823 = vld [vmem:[%s3818 + $0x20] sm:$0xff]
        %v3824 = vld [vmem:[%s3818 + $0x28] sm:$0xff]
        %v3825 = vld [vmem:[%s3818 + $0x30] sm:$0xff]
        %v3826 = vld [vmem:[%s3818 + $0x38] sm:$0xff]
        %v3827 = vld [vmem:[%s3818 + $0x40] sm:$0xff]
        %v3828 = vld [vmem:[%s3818 + $0x48] sm:$0xff]
        %v3829 = vld [vmem:[%s3818 + $0x50] sm:$0xff]
        %v3830 = vld [vmem:[%s3818 + $0x58] sm:$0xff]
        %v3831 = vld [vmem:[%s3818 + $0x60] sm:$0xff]
        %v3832 = vld [vmem:[%s3818 + $0x68] sm:$0xff]
        %v3833 = vld [vmem:[%s3818 + $0x70] sm:$0xff]
        %v3834 = vld [vmem:[%s3818 + $0x78] sm:$0xff]
        %3835 = vmatprep.subr.mxu0 0.0
        %v3836 = vand.u32 %v3819, 4294901760
        %3837 = vmatpush1.msra.mxu0 %v3836
        %3838 = vmatprep.subr.mxu0 0.0
        %v3839 = vand.u32 %v3820, 4294901760
        %3840 = vmatpush1.msra.mxu0 %v3839
        %3841 = vmatprep.subr.mxu0 0.0
        %v3842 = vand.u32 %v3821, 4294901760
        %3843 = vmatpush1.msra.mxu0 %v3842
        %3844 = vmatprep.subr.mxu0 0.0
        %v3845 = vand.u32 %v3822, 4294901760
        %3846 = vmatpush1.msra.mxu0 %v3845
        %3847 = vmatprep.subr.mxu0 0.0
        %v3848 = vand.u32 %v3823, 4294901760
        %3849 = vmatpush1.msra.mxu0 %v3848
        %3850 = vmatprep.subr.mxu0 0.0
        %v3851 = vand.u32 %v3824, 4294901760
        %3852 = vmatpush1.msra.mxu0 %v3851
        %3853 = vmatprep.subr.mxu0 0.0
        %v3854 = vand.u32 %v3825, 4294901760
        %3855 = vmatpush1.msra.mxu0 %v3854
        %3856 = vmatprep.subr.mxu0 0.0
        %v3857 = vand.u32 %v3826, 4294901760
        %3858 = vmatpush1.msra.mxu0 %v3857
        %3859 = vmatprep.subr.mxu0 0.0
        %v3860 = vand.u32 %v3827, 4294901760
        %3861 = vmatpush1.msra.mxu0 %v3860
        %3862 = vmatprep.subr.mxu0 0.0
        %v3863 = vand.u32 %v3828, 4294901760
        %3864 = vmatpush1.msra.mxu0 %v3863
        %3865 = vmatprep.subr.mxu0 0.0
        %v3866 = vand.u32 %v3829, 4294901760
        %3867 = vmatpush1.msra.mxu0 %v3866
        %3868 = vmatprep.subr.mxu0 0.0
        %v3869 = vand.u32 %v3830, 4294901760
        %3870 = vmatpush1.msra.mxu0 %v3869
        %3871 = vmatprep.subr.mxu0 0.0
        %v3872 = vand.u32 %v3831, 4294901760
        %3873 = vmatpush1.msra.mxu0 %v3872
        %3874 = vmatprep.subr.mxu0 0.0
        %v3875 = vand.u32 %v3832, 4294901760
        %3876 = vmatpush1.msra.mxu0 %v3875
        %3877 = vmatprep.subr.mxu0 0.0
        %v3878 = vand.u32 %v3833, 4294901760
        %3879 = vmatpush1.msra.mxu0 %v3878
        %3880 = vmatprep.subr.mxu0 0.0
        %v3881 = vand.u32 %v3834, 4294901760
        %3882 = vmatpush1.msra.mxu0 %v3881
        %3883 = vmatprep.subr.mxu0 0.0
        %3884 = vmatpush1.msra.mxu0 0.0
        %3885 = vmatprep.subr.mxu0 0.0
        %3886 = vmatpush1.msra.mxu0 0.0
        %3887 = vmatprep.subr.mxu0 0.0
        %3888 = vmatpush1.msra.mxu0 0.0
        %3889 = vmatprep.subr.mxu0 0.0
        %3890 = vmatpush1.msra.mxu0 0.0
        %3891 = vmatprep.subr.mxu0 0.0
        %3892 = vmatpush1.msra.mxu0 0.0
        %3893 = vmatprep.subr.mxu0 0.0
        %3894 = vmatpush1.msra.mxu0 0.0
        %3895 = vmatprep.subr.mxu0 0.0
        %3896 = vmatpush1.msra.mxu0 0.0
        %3897 = vmatprep.subr.mxu0 0.0
        %3898 = vmatpush1.msra.mxu0 0.0
        %3899 = vmatprep.subr.mxu0 0.0
        %3900 = vmatpush1.msra.mxu0 0.0
        %3901 = vmatprep.subr.mxu0 0.0
        %3902 = vmatpush1.msra.mxu0 0.0
        %3903 = vmatprep.subr.mxu0 0.0
        %3904 = vmatpush1.msra.mxu0 0.0
        %3905 = vmatprep.subr.mxu0 0.0
        %3906 = vmatpush1.msra.mxu0 0.0
        %3907 = vmatprep.subr.mxu0 0.0
        %3908 = vmatpush1.msra.mxu0 0.0
        %3909 = vmatprep.subr.mxu0 0.0
        %3910 = vmatpush1.msra.mxu0 0.0
        %3911 = vmatprep.subr.mxu0 0.0
        %3912 = vmatpush1.msra.mxu0 0.0
        %3913 = vmatprep.subr.mxu0 0.0
        %3914 = vmatpush1.msra.mxu0 0.0
        %3915 = vmatprep.mubr.f32.mxu0 0.0
        %v3916 = vand.u32 %v1837, 4294901760
        %v3917 = vsub.f32 %v1837, %v3916
        %v3918 = vand.u32 %v3917, 4294901760
        %v3919 = vsub.f32 %v3917, %v3918
        %v3920 = vand.u32 %v3919, 4294901760
        %3921 = vmatmul.mubr.f32.gmra.mrb[0].mxu0 %v3920
        %v3922 = vpop.f32.mrb[0].mxu0
        %v3923 = vadd.f32 0.0, %v3922
        %v3924 = vpop.f32.mrb[0].mxu0
        %3925 = vdwg.mxu0
        %3926 = vmatprep.subr.mxu0 0.0
        %v3927 = vand.u32 %v3819, 4294901760
        %v3928 = vsub.f32 %v3819, %v3927
        %v3929 = vand.u32 %v3928, 4294901760
        %v3930 = vsub.f32 %v3928, %v3929
        %v3931 = vand.u32 %v3930, 4294901760
        %3932 = vmatpush1.msra.mxu0 %v3931
        %3933 = vmatprep.subr.mxu0 0.0
        %v3934 = vand.u32 %v3820, 4294901760
        %v3935 = vsub.f32 %v3820, %v3934
        %v3936 = vand.u32 %v3935, 4294901760
        %v3937 = vsub.f32 %v3935, %v3936
        %v3938 = vand.u32 %v3937, 4294901760
        %3939 = vmatpush1.msra.mxu0 %v3938
        %3940 = vmatprep.subr.mxu0 0.0
        %v3941 = vand.u32 %v3821, 4294901760
        %v3942 = vsub.f32 %v3821, %v3941
        %v3943 = vand.u32 %v3942, 4294901760
        %v3944 = vsub.f32 %v3942, %v3943
        %v3945 = vand.u32 %v3944, 4294901760
        %3946 = vmatpush1.msra.mxu0 %v3945
        %3947 = vmatprep.subr.mxu0 0.0
        %v3948 = vand.u32 %v3822, 4294901760
        %v3949 = vsub.f32 %v3822, %v3948
        %v3950 = vand.u32 %v3949, 4294901760
        %v3951 = vsub.f32 %v3949, %v3950
        %v3952 = vand.u32 %v3951, 4294901760
        %3953 = vmatpush1.msra.mxu0 %v3952
        %3954 = vmatprep.subr.mxu0 0.0
        %v3955 = vand.u32 %v3823, 4294901760
        %v3956 = vsub.f32 %v3823, %v3955
        %v3957 = vand.u32 %v3956, 4294901760
        %v3958 = vsub.f32 %v3956, %v3957
        %v3959 = vand.u32 %v3958, 4294901760
        %3960 = vmatpush1.msra.mxu0 %v3959
        %3961 = vmatprep.subr.mxu0 0.0
        %v3962 = vand.u32 %v3824, 4294901760
        %v3963 = vsub.f32 %v3824, %v3962
        %v3964 = vand.u32 %v3963, 4294901760
        %v3965 = vsub.f32 %v3963, %v3964
        %v3966 = vand.u32 %v3965, 4294901760
        %3967 = vmatpush1.msra.mxu0 %v3966
        %3968 = vmatprep.subr.mxu0 0.0
        %v3969 = vand.u32 %v3825, 4294901760
        %v3970 = vsub.f32 %v3825, %v3969
        %v3971 = vand.u32 %v3970, 4294901760
        %v3972 = vsub.f32 %v3970, %v3971
        %v3973 = vand.u32 %v3972, 4294901760
        %3974 = vmatpush1.msra.mxu0 %v3973
        %3975 = vmatprep.subr.mxu0 0.0
        %v3976 = vand.u32 %v3826, 4294901760
        %v3977 = vsub.f32 %v3826, %v3976
        %v3978 = vand.u32 %v3977, 4294901760
        %v3979 = vsub.f32 %v3977, %v3978
        %v3980 = vand.u32 %v3979, 4294901760
        %3981 = vmatpush1.msra.mxu0 %v3980
        %3982 = vmatprep.subr.mxu0 0.0
        %v3983 = vand.u32 %v3827, 4294901760
        %v3984 = vsub.f32 %v3827, %v3983
        %v3985 = vand.u32 %v3984, 4294901760
        %v3986 = vsub.f32 %v3984, %v3985
        %v3987 = vand.u32 %v3986, 4294901760
        %3988 = vmatpush1.msra.mxu0 %v3987
        %3989 = vmatprep.subr.mxu0 0.0
        %v3990 = vand.u32 %v3828, 4294901760
        %v3991 = vsub.f32 %v3828, %v3990
        %v3992 = vand.u32 %v3991, 4294901760
        %v3993 = vsub.f32 %v3991, %v3992
        %v3994 = vand.u32 %v3993, 4294901760
        %3995 = vmatpush1.msra.mxu0 %v3994
        %3996 = vmatprep.subr.mxu0 0.0
        %v3997 = vand.u32 %v3829, 4294901760
        %v3998 = vsub.f32 %v3829, %v3997
        %v3999 = vand.u32 %v3998, 4294901760
        %v4000 = vsub.f32 %v3998, %v3999
        %v4001 = vand.u32 %v4000, 4294901760
        %4002 = vmatpush1.msra.mxu0 %v4001
        %4003 = vmatprep.subr.mxu0 0.0
        %v4004 = vand.u32 %v3830, 4294901760
        %v4005 = vsub.f32 %v3830, %v4004
        %v4006 = vand.u32 %v4005, 4294901760
        %v4007 = vsub.f32 %v4005, %v4006
        %v4008 = vand.u32 %v4007, 4294901760
        %4009 = vmatpush1.msra.mxu0 %v4008
        %4010 = vmatprep.subr.mxu0 0.0
        %v4011 = vand.u32 %v3831, 4294901760
        %v4012 = vsub.f32 %v3831, %v4011
        %v4013 = vand.u32 %v4012, 4294901760
        %v4014 = vsub.f32 %v4012, %v4013
        %v4015 = vand.u32 %v4014, 4294901760
        %4016 = vmatpush1.msra.mxu0 %v4015
        %4017 = vmatprep.subr.mxu0 0.0
        %v4018 = vand.u32 %v3832, 4294901760
        %v4019 = vsub.f32 %v3832, %v4018
        %v4020 = vand.u32 %v4019, 4294901760
        %v4021 = vsub.f32 %v4019, %v4020
        %v4022 = vand.u32 %v4021, 4294901760
        %4023 = vmatpush1.msra.mxu0 %v4022
        %4024 = vmatprep.subr.mxu0 0.0
        %v4025 = vand.u32 %v3833, 4294901760
        %v4026 = vsub.f32 %v3833, %v4025
        %v4027 = vand.u32 %v4026, 4294901760
        %v4028 = vsub.f32 %v4026, %v4027
        %v4029 = vand.u32 %v4028, 4294901760
        %4030 = vmatpush1.msra.mxu0 %v4029
        %4031 = vmatprep.subr.mxu0 0.0
        %v4032 = vand.u32 %v3834, 4294901760
        %v4033 = vsub.f32 %v3834, %v4032
        %v4034 = vand.u32 %v4033, 4294901760
        %v4035 = vsub.f32 %v4033, %v4034
        %v4036 = vand.u32 %v4035, 4294901760
        %4037 = vmatpush1.msra.mxu0 %v4036
        %4038 = vmatprep.subr.mxu0 0.0
        %4039 = vmatpush1.msra.mxu0 0.0
        %4040 = vmatprep.subr.mxu0 0.0
        %4041 = vmatpush1.msra.mxu0 0.0
        %4042 = vmatprep.subr.mxu0 0.0
        %4043 = vmatpush1.msra.mxu0 0.0
        %4044 = vmatprep.subr.mxu0 0.0
        %4045 = vmatpush1.msra.mxu0 0.0
        %4046 = vmatprep.subr.mxu0 0.0
        %4047 = vmatpush1.msra.mxu0 0.0
        %4048 = vmatprep.subr.mxu0 0.0
        %4049 = vmatpush1.msra.mxu0 0.0
        %4050 = vmatprep.subr.mxu0 0.0
        %4051 = vmatpush1.msra.mxu0 0.0
        %4052 = vmatprep.subr.mxu0 0.0
        %4053 = vmatpush1.msra.mxu0 0.0
        %4054 = vmatprep.subr.mxu0 0.0
        %4055 = vmatpush1.msra.mxu0 0.0
        %4056 = vmatprep.subr.mxu0 0.0
        %4057 = vmatpush1.msra.mxu0 0.0
        %4058 = vmatprep.subr.mxu0 0.0
        %4059 = vmatpush1.msra.mxu0 0.0
        %4060 = vmatprep.subr.mxu0 0.0
        %4061 = vmatpush1.msra.mxu0 0.0
        %4062 = vmatprep.subr.mxu0 0.0
        %4063 = vmatpush1.msra.mxu0 0.0
        %4064 = vmatprep.subr.mxu0 0.0
        %4065 = vmatpush1.msra.mxu0 0.0
        %4066 = vmatprep.subr.mxu0 0.0
        %4067 = vmatpush1.msra.mxu0 0.0
        %4068 = vmatprep.subr.mxu0 0.0
        %4069 = vmatpush1.msra.mxu0 0.0
        %4070 = vmatprep.mubr.f32.mxu0 0.0
        %v4071 = vand.u32 %v1837, 4294901760
        %4072 = vmatmul.mubr.f32.gmra.mrb[0].mxu0 %v4071
        %v4073 = vpop.f32.mrb[0].mxu0
        %v4074 = vadd.f32 %v3923, %v4073
        %v4075 = vpop.f32.mrb[0].mxu0
        %4076 = vdwg.mxu0
        %4077 = vmatprep.subr.mxu0 0.0
        %v4078 = vand.u32 %v3819, 4294901760
        %v4079 = vsub.f32 %v3819, %v4078
        %4080 = vmatpush1.msra.mxu0 %v4079
        %4081 = vmatprep.subr.mxu0 0.0
        %v4082 = vand.u32 %v3820, 4294901760
        %v4083 = vsub.f32 %v3820, %v4082
        %4084 = vmatpush1.msra.mxu0 %v4083
        %4085 = vmatprep.subr.mxu0 0.0
        %v4086 = vand.u32 %v3821, 4294901760
        %v4087 = vsub.f32 %v3821, %v4086
        %4088 = vmatpush1.msra.mxu0 %v4087
        %4089 = vmatprep.subr.mxu0 0.0
        %v4090 = vand.u32 %v3822, 4294901760
        %v4091 = vsub.f32 %v3822, %v4090
        %4092 = vmatpush1.msra.mxu0 %v4091
        %4093 = vmatprep.subr.mxu0 0.0
        %v4094 = vand.u32 %v3823, 4294901760
        %v4095 = vsub.f32 %v3823, %v4094
        %4096 = vmatpush1.msra.mxu0 %v4095
        %4097 = vmatprep.subr.mxu0 0.0
        %v4098 = vand.u32 %v3824, 4294901760
        %v4099 = vsub.f32 %v3824, %v4098
        %4100 = vmatpush1.msra.mxu0 %v4099
        %4101 = vmatprep.subr.mxu0 0.0
        %v4102 = vand.u32 %v3825, 4294901760
        %v4103 = vsub.f32 %v3825, %v4102
        %4104 = vmatpush1.msra.mxu0 %v4103
        %4105 = vmatprep.subr.mxu0 0.0
        %v4106 = vand.u32 %v3826, 4294901760
        %v4107 = vsub.f32 %v3826, %v4106
        %4108 = vmatpush1.msra.mxu0 %v4107
        %4109 = vmatprep.subr.mxu0 0.0
        %v4110 = vand.u32 %v3827, 4294901760
        %v4111 = vsub.f32 %v3827, %v4110
        %4112 = vmatpush1.msra.mxu0 %v4111
        %4113 = vmatprep.subr.mxu0 0.0
        %v4114 = vand.u32 %v3828, 4294901760
        %v4115 = vsub.f32 %v3828, %v4114
        %4116 = vmatpush1.msra.mxu0 %v4115
        %4117 = vmatprep.subr.mxu0 0.0
        %v4118 = vand.u32 %v3829, 4294901760
        %v4119 = vsub.f32 %v3829, %v4118
        %4120 = vmatpush1.msra.mxu0 %v4119
        %4121 = vmatprep.subr.mxu0 0.0
        %v4122 = vand.u32 %v3830, 4294901760
        %v4123 = vsub.f32 %v3830, %v4122
        %4124 = vmatpush1.msra.mxu0 %v4123
        %4125 = vmatprep.subr.mxu0 0.0
        %v4126 = vand.u32 %v3831, 4294901760
        %v4127 = vsub.f32 %v3831, %v4126
        %4128 = vmatpush1.msra.mxu0 %v4127
        %4129 = vmatprep.subr.mxu0 0.0
        %v4130 = vand.u32 %v3832, 4294901760
        %v4131 = vsub.f32 %v3832, %v4130
        %4132 = vmatpush1.msra.mxu0 %v4131
        %4133 = vmatprep.subr.mxu0 0.0
        %v4134 = vand.u32 %v3833, 4294901760
        %v4135 = vsub.f32 %v3833, %v4134
        %4136 = vmatpush1.msra.mxu0 %v4135
        %4137 = vmatprep.subr.mxu0 0.0
        %v4138 = vand.u32 %v3834, 4294901760
        %v4139 = vsub.f32 %v3834, %v4138
        %4140 = vmatpush1.msra.mxu0 %v4139
        %4141 = vmatprep.subr.mxu0 0.0
        %4142 = vmatpush1.msra.mxu0 0.0
        %4143 = vmatprep.subr.mxu0 0.0
        %4144 = vmatpush1.msra.mxu0 0.0
        %4145 = vmatprep.subr.mxu0 0.0
        %4146 = vmatpush1.msra.mxu0 0.0
        %4147 = vmatprep.subr.mxu0 0.0
        %4148 = vmatpush1.msra.mxu0 0.0
        %4149 = vmatprep.subr.mxu0 0.0
        %4150 = vmatpush1.msra.mxu0 0.0
        %4151 = vmatprep.subr.mxu0 0.0
        %4152 = vmatpush1.msra.mxu0 0.0
        %4153 = vmatprep.subr.mxu0 0.0
        %4154 = vmatpush1.msra.mxu0 0.0
        %4155 = vmatprep.subr.mxu0 0.0
        %4156 = vmatpush1.msra.mxu0 0.0
        %4157 = vmatprep.subr.mxu0 0.0
        %4158 = vmatpush1.msra.mxu0 0.0
        %4159 = vmatprep.subr.mxu0 0.0
        %4160 = vmatpush1.msra.mxu0 0.0
        %4161 = vmatprep.subr.mxu0 0.0
        %4162 = vmatpush1.msra.mxu0 0.0
        %4163 = vmatprep.subr.mxu0 0.0
        %4164 = vmatpush1.msra.mxu0 0.0
        %4165 = vmatprep.subr.mxu0 0.0
        %4166 = vmatpush1.msra.mxu0 0.0
        %4167 = vmatprep.subr.mxu0 0.0
        %4168 = vmatpush1.msra.mxu0 0.0
        %4169 = vmatprep.subr.mxu0 0.0
        %4170 = vmatpush1.msra.mxu0 0.0
        %4171 = vmatprep.subr.mxu0 0.0
        %4172 = vmatpush1.msra.mxu0 0.0
        %4173 = vmatprep.mubr.f32.mxu0 0.0
        %v4174 = vand.u32 %v1837, 4294901760
        %v4175 = vsub.f32 %v1837, %v4174
        %4176 = vmatmul.mubr.f32.gmra.mrb[0].mxu0 %v4175
        %v4177 = vpop.f32.mrb[0].mxu0
        %v4178 = vadd.f32 %v4074, %v4177
        %v4179 = vpop.f32.mrb[0].mxu0
        %4180 = vdwg.mxu0
        %4181 = vmatprep.subr.mxu0 0.0
        %v4182 = vand.u32 %v3819, 4294901760
        %4183 = vmatpush1.msra.mxu0 %v4182
        %4184 = vmatprep.subr.mxu0 0.0
        %v4185 = vand.u32 %v3820, 4294901760
        %4186 = vmatpush1.msra.mxu0 %v4185
        %4187 = vmatprep.subr.mxu0 0.0
        %v4188 = vand.u32 %v3821, 4294901760
        %4189 = vmatpush1.msra.mxu0 %v4188
        %4190 = vmatprep.subr.mxu0 0.0
        %v4191 = vand.u32 %v3822, 4294901760
        %4192 = vmatpush1.msra.mxu0 %v4191
        %4193 = vmatprep.subr.mxu0 0.0
        %v4194 = vand.u32 %v3823, 4294901760
        %4195 = vmatpush1.msra.mxu0 %v4194
        %4196 = vmatprep.subr.mxu0 0.0
        %v4197 = vand.u32 %v3824, 4294901760
        %4198 = vmatpush1.msra.mxu0 %v4197
        %4199 = vmatprep.subr.mxu0 0.0
        %v4200 = vand.u32 %v3825, 4294901760
        %4201 = vmatpush1.msra.mxu0 %v4200
        %4202 = vmatprep.subr.mxu0 0.0
        %v4203 = vand.u32 %v3826, 4294901760
        %4204 = vmatpush1.msra.mxu0 %v4203
        %4205 = vmatprep.subr.mxu0 0.0
        %v4206 = vand.u32 %v3827, 4294901760
        %4207 = vmatpush1.msra.mxu0 %v4206
        %4208 = vmatprep.subr.mxu0 0.0
        %v4209 = vand.u32 %v3828, 4294901760
        %4210 = vmatpush1.msra.mxu0 %v4209
        %4211 = vmatprep.subr.mxu0 0.0
        %v4212 = vand.u32 %v3829, 4294901760
        %4213 = vmatpush1.msra.mxu0 %v4212
        %4214 = vmatprep.subr.mxu0 0.0
        %v4215 = vand.u32 %v3830, 4294901760
        %4216 = vmatpush1.msra.mxu0 %v4215
        %4217 = vmatprep.subr.mxu0 0.0
        %v4218 = vand.u32 %v3831, 4294901760
        %4219 = vmatpush1.msra.mxu0 %v4218
        %4220 = vmatprep.subr.mxu0 0.0
        %v4221 = vand.u32 %v3832, 4294901760
        %4222 = vmatpush1.msra.mxu0 %v4221
        %4223 = vmatprep.subr.mxu0 0.0
        %v4224 = vand.u32 %v3833, 4294901760
        %4225 = vmatpush1.msra.mxu0 %v4224
        %4226 = vmatprep.subr.mxu0 0.0
        %v4227 = vand.u32 %v3834, 4294901760
        %4228 = vmatpush1.msra.mxu0 %v4227
        %4229 = vmatprep.subr.mxu0 0.0
        %4230 = vmatpush1.msra.mxu0 0.0
        %4231 = vmatprep.subr.mxu0 0.0
        %4232 = vmatpush1.msra.mxu0 0.0
        %4233 = vmatprep.subr.mxu0 0.0
        %4234 = vmatpush1.msra.mxu0 0.0
        %4235 = vmatprep.subr.mxu0 0.0
        %4236 = vmatpush1.msra.mxu0 0.0
        %4237 = vmatprep.subr.mxu0 0.0
        %4238 = vmatpush1.msra.mxu0 0.0
        %4239 = vmatprep.subr.mxu0 0.0
        %4240 = vmatpush1.msra.mxu0 0.0
        %4241 = vmatprep.subr.mxu0 0.0
        %4242 = vmatpush1.msra.mxu0 0.0
        %4243 = vmatprep.subr.mxu0 0.0
        %4244 = vmatpush1.msra.mxu0 0.0
        %4245 = vmatprep.subr.mxu0 0.0
        %4246 = vmatpush1.msra.mxu0 0.0
        %4247 = vmatprep.subr.mxu0 0.0
        %4248 = vmatpush1.msra.mxu0 0.0
        %4249 = vmatprep.subr.mxu0 0.0
        %4250 = vmatpush1.msra.mxu0 0.0
        %4251 = vmatprep.subr.mxu0 0.0
        %4252 = vmatpush1.msra.mxu0 0.0
        %4253 = vmatprep.subr.mxu0 0.0
        %4254 = vmatpush1.msra.mxu0 0.0
        %4255 = vmatprep.subr.mxu0 0.0
        %4256 = vmatpush1.msra.mxu0 0.0
        %4257 = vmatprep.subr.mxu0 0.0
        %4258 = vmatpush1.msra.mxu0 0.0
        %4259 = vmatprep.subr.mxu0 0.0
        %4260 = vmatpush1.msra.mxu0 0.0
        %4261 = vmatprep.mubr.f32.mxu0 0.0
        %v4262 = vand.u32 %v1837, 4294901760
        %v4263 = vsub.f32 %v1837, %v4262
        %v4264 = vand.u32 %v4263, 4294901760
        %4265 = vmatmul.mubr.f32.gmra.mrb[0].mxu0 %v4264
        %v4266 = vpop.f32.mrb[0].mxu0
        %v4267 = vadd.f32 %v4178, %v4266
        %v4268 = vpop.f32.mrb[0].mxu0
        %4269 = vdwg.mxu0
        %4270 = vmatprep.subr.mxu0 0.0
        %v4271 = vand.u32 %v3819, 4294901760
        %v4272 = vsub.f32 %v3819, %v4271
        %v4273 = vand.u32 %v4272, 4294901760
        %4274 = vmatpush1.msra.mxu0 %v4273
        %4275 = vmatprep.subr.mxu0 0.0
        %v4276 = vand.u32 %v3820, 4294901760
        %v4277 = vsub.f32 %v3820, %v4276
        %v4278 = vand.u32 %v4277, 4294901760
        %4279 = vmatpush1.msra.mxu0 %v4278
        %4280 = vmatprep.subr.mxu0 0.0
        %v4281 = vand.u32 %v3821, 4294901760
        %v4282 = vsub.f32 %v3821, %v4281
        %v4283 = vand.u32 %v4282, 4294901760
        %4284 = vmatpush1.msra.mxu0 %v4283
        %4285 = vmatprep.subr.mxu0 0.0
        %v4286 = vand.u32 %v3822, 4294901760
        %v4287 = vsub.f32 %v3822, %v4286
        %v4288 = vand.u32 %v4287, 4294901760
        %4289 = vmatpush1.msra.mxu0 %v4288
        %4290 = vmatprep.subr.mxu0 0.0
        %v4291 = vand.u32 %v3823, 4294901760
        %v4292 = vsub.f32 %v3823, %v4291
        %v4293 = vand.u32 %v4292, 4294901760
        %4294 = vmatpush1.msra.mxu0 %v4293
        %4295 = vmatprep.subr.mxu0 0.0
        %v4296 = vand.u32 %v3824, 4294901760
        %v4297 = vsub.f32 %v3824, %v4296
        %v4298 = vand.u32 %v4297, 4294901760
        %4299 = vmatpush1.msra.mxu0 %v4298
        %4300 = vmatprep.subr.mxu0 0.0
        %v4301 = vand.u32 %v3825, 4294901760
        %v4302 = vsub.f32 %v3825, %v4301
        %v4303 = vand.u32 %v4302, 4294901760
        %4304 = vmatpush1.msra.mxu0 %v4303
        %4305 = vmatprep.subr.mxu0 0.0
        %v4306 = vand.u32 %v3826, 4294901760
        %v4307 = vsub.f32 %v3826, %v4306
        %v4308 = vand.u32 %v4307, 4294901760
        %4309 = vmatpush1.msra.mxu0 %v4308
        %4310 = vmatprep.subr.mxu0 0.0
        %v4311 = vand.u32 %v3827, 4294901760
        %v4312 = vsub.f32 %v3827, %v4311
        %v4313 = vand.u32 %v4312, 4294901760
        %4314 = vmatpush1.msra.mxu0 %v4313
        %4315 = vmatprep.subr.mxu0 0.0
        %v4316 = vand.u32 %v3828, 4294901760
        %v4317 = vsub.f32 %v3828, %v4316
        %v4318 = vand.u32 %v4317, 4294901760
        %4319 = vmatpush1.msra.mxu0 %v4318
        %4320 = vmatprep.subr.mxu0 0.0
        %v4321 = vand.u32 %v3829, 4294901760
        %v4322 = vsub.f32 %v3829, %v4321
        %v4323 = vand.u32 %v4322, 4294901760
        %4324 = vmatpush1.msra.mxu0 %v4323
        %4325 = vmatprep.subr.mxu0 0.0
        %v4326 = vand.u32 %v3830, 4294901760
        %v4327 = vsub.f32 %v3830, %v4326
        %v4328 = vand.u32 %v4327, 4294901760
        %4329 = vmatpush1.msra.mxu0 %v4328
        %4330 = vmatprep.subr.mxu0 0.0
        %v4331 = vand.u32 %v3831, 4294901760
        %v4332 = vsub.f32 %v3831, %v4331
        %v4333 = vand.u32 %v4332, 4294901760
        %4334 = vmatpush1.msra.mxu0 %v4333
        %4335 = vmatprep.subr.mxu0 0.0
        %v4336 = vand.u32 %v3832, 4294901760
        %v4337 = vsub.f32 %v3832, %v4336
        %v4338 = vand.u32 %v4337, 4294901760
        %4339 = vmatpush1.msra.mxu0 %v4338
        %4340 = vmatprep.subr.mxu0 0.0
        %v4341 = vand.u32 %v3833, 4294901760
        %v4342 = vsub.f32 %v3833, %v4341
        %v4343 = vand.u32 %v4342, 4294901760
        %4344 = vmatpush1.msra.mxu0 %v4343
        %4345 = vmatprep.subr.mxu0 0.0
        %v4346 = vand.u32 %v3834, 4294901760
        %v4347 = vsub.f32 %v3834, %v4346
        %v4348 = vand.u32 %v4347, 4294901760
        %4349 = vmatpush1.msra.mxu0 %v4348
        %4350 = vmatprep.subr.mxu0 0.0
        %4351 = vmatpush1.msra.mxu0 0.0
        %4352 = vmatprep.subr.mxu0 0.0
        %4353 = vmatpush1.msra.mxu0 0.0
        %4354 = vmatprep.subr.mxu0 0.0
        %4355 = vmatpush1.msra.mxu0 0.0
        %4356 = vmatprep.subr.mxu0 0.0
        %4357 = vmatpush1.msra.mxu0 0.0
        %4358 = vmatprep.subr.mxu0 0.0
        %4359 = vmatpush1.msra.mxu0 0.0
        %4360 = vmatprep.subr.mxu0 0.0
        %4361 = vmatpush1.msra.mxu0 0.0
        %4362 = vmatprep.subr.mxu0 0.0
        %4363 = vmatpush1.msra.mxu0 0.0
        %4364 = vmatprep.subr.mxu0 0.0
        %4365 = vmatpush1.msra.mxu0 0.0
        %4366 = vmatprep.subr.mxu0 0.0
        %4367 = vmatpush1.msra.mxu0 0.0
        %4368 = vmatprep.subr.mxu0 0.0
        %4369 = vmatpush1.msra.mxu0 0.0
        %4370 = vmatprep.subr.mxu0 0.0
        %4371 = vmatpush1.msra.mxu0 0.0
        %4372 = vmatprep.subr.mxu0 0.0
        %4373 = vmatpush1.msra.mxu0 0.0
        %4374 = vmatprep.subr.mxu0 0.0
        %4375 = vmatpush1.msra.mxu0 0.0
        %4376 = vmatprep.subr.mxu0 0.0
        %4377 = vmatpush1.msra.mxu0 0.0
        %4378 = vmatprep.subr.mxu0 0.0
        %4379 = vmatpush1.msra.mxu0 0.0
        %4380 = vmatprep.subr.mxu0 0.0
        %4381 = vmatpush1.msra.mxu0 0.0
        %4382 = vmatprep.mubr.f32.mxu0 0.0
        %v4383 = vand.u32 %v1837, 4294901760
        %4384 = vmatmul.mubr.f32.gmra.mrb[0].mxu0 %v4383
        %v4385 = vpop.f32.mrb[0].mxu0
        %v4386 = vadd.f32 %v4267, %v4385
        %v4387 = vpop.f32.mrb[0].mxu0
        %4388 = vdwg.mxu0
        %4389 = vmatprep.subr.mxu0 0.0
        %v4390 = vand.u32 %v3819, 4294901760
        %4391 = vmatpush1.msra.mxu0 %v4390
        %4392 = vmatprep.subr.mxu0 0.0
        %v4393 = vand.u32 %v3820, 4294901760
        %4394 = vmatpush1.msra.mxu0 %v4393
        %4395 = vmatprep.subr.mxu0 0.0
        %v4396 = vand.u32 %v3821, 4294901760
        %4397 = vmatpush1.msra.mxu0 %v4396
        %4398 = vmatprep.subr.mxu0 0.0
        %v4399 = vand.u32 %v3822, 4294901760
        %4400 = vmatpush1.msra.mxu0 %v4399
        %4401 = vmatprep.subr.mxu0 0.0
        %v4402 = vand.u32 %v3823, 4294901760
        %4403 = vmatpush1.msra.mxu0 %v4402
        %4404 = vmatprep.subr.mxu0 0.0
        %v4405 = vand.u32 %v3824, 4294901760
        %4406 = vmatpush1.msra.mxu0 %v4405
        %4407 = vmatprep.subr.mxu0 0.0
        %v4408 = vand.u32 %v3825, 4294901760
        %4409 = vmatpush1.msra.mxu0 %v4408
        %4410 = vmatprep.subr.mxu0 0.0
        %v4411 = vand.u32 %v3826, 4294901760
        %4412 = vmatpush1.msra.mxu0 %v4411
        %4413 = vmatprep.subr.mxu0 0.0
        %v4414 = vand.u32 %v3827, 4294901760
        %4415 = vmatpush1.msra.mxu0 %v4414
        %4416 = vmatprep.subr.mxu0 0.0
        %v4417 = vand.u32 %v3828, 4294901760
        %4418 = vmatpush1.msra.mxu0 %v4417
        %4419 = vmatprep.subr.mxu0 0.0
        %v4420 = vand.u32 %v3829, 4294901760
        %4421 = vmatpush1.msra.mxu0 %v4420
        %4422 = vmatprep.subr.mxu0 0.0
        %v4423 = vand.u32 %v3830, 4294901760
        %4424 = vmatpush1.msra.mxu0 %v4423
        %4425 = vmatprep.subr.mxu0 0.0
        %v4426 = vand.u32 %v3831, 4294901760
        %4427 = vmatpush1.msra.mxu0 %v4426
        %4428 = vmatprep.subr.mxu0 0.0
        %v4429 = vand.u32 %v3832, 4294901760
        %4430 = vmatpush1.msra.mxu0 %v4429
        %4431 = vmatprep.subr.mxu0 0.0
        %v4432 = vand.u32 %v3833, 4294901760
        %4433 = vmatpush1.msra.mxu0 %v4432
        %4434 = vmatprep.subr.mxu0 0.0
        %v4435 = vand.u32 %v3834, 4294901760
        %4436 = vmatpush1.msra.mxu0 %v4435
        %4437 = vmatprep.subr.mxu0 0.0
        %4438 = vmatpush1.msra.mxu0 0.0
        %4439 = vmatprep.subr.mxu0 0.0
        %4440 = vmatpush1.msra.mxu0 0.0
        %4441 = vmatprep.subr.mxu0 0.0
        %4442 = vmatpush1.msra.mxu0 0.0
        %4443 = vmatprep.subr.mxu0 0.0
        %4444 = vmatpush1.msra.mxu0 0.0
        %4445 = vmatprep.subr.mxu0 0.0
        %4446 = vmatpush1.msra.mxu0 0.0
        %4447 = vmatprep.subr.mxu0 0.0
        %4448 = vmatpush1.msra.mxu0 0.0
        %4449 = vmatprep.subr.mxu0 0.0
        %4450 = vmatpush1.msra.mxu0 0.0
        %4451 = vmatprep.subr.mxu0 0.0
        %4452 = vmatpush1.msra.mxu0 0.0
        %4453 = vmatprep.subr.mxu0 0.0
        %4454 = vmatpush1.msra.mxu0 0.0
        %4455 = vmatprep.subr.mxu0 0.0
        %4456 = vmatpush1.msra.mxu0 0.0
        %4457 = vmatprep.subr.mxu0 0.0
        %4458 = vmatpush1.msra.mxu0 0.0
        %4459 = vmatprep.subr.mxu0 0.0
        %4460 = vmatpush1.msra.mxu0 0.0
        %4461 = vmatprep.subr.mxu0 0.0
        %4462 = vmatpush1.msra.mxu0 0.0
        %4463 = vmatprep.subr.mxu0 0.0
        %4464 = vmatpush1.msra.mxu0 0.0
        %4465 = vmatprep.subr.mxu0 0.0
        %4466 = vmatpush1.msra.mxu0 0.0
        %4467 = vmatprep.subr.mxu0 0.0
        %4468 = vmatpush1.msra.mxu0 0.0
        %4469 = vmatprep.mubr.f32.mxu0 0.0
        %v4470 = vand.u32 %v1837, 4294901760
        %4471 = vmatmul.mubr.f32.gmra.mrb[0].mxu0 %v4470
        %v4472 = vpop.f32.mrb[0].mxu0
        %v4473 = vadd.f32 %v4386, %v4472
        %v4474 = vpop.f32.mrb[0].mxu0
        %4475 = vdwg.mxu0
        %v4476 = vmul.f32 %v711, -0.0007772975
        %v4477 = vsub.f32 %v4473, %v4476
        %v4478 = vrcp.pop %v2497
        %v4479 = vmul.f32 1.0, %v4478
        %4481 = vset.pattern.permute.xlu0 0
        %4482 = vperm.xlu0 %4481, %v4479
        %v4483 = vpop.permute.xlu0 %4482
        %v4485 = vmul.f32 %v2497, %v4483
        %4487 = vset.pattern.permute.xlu0 0
        %4488 = vperm.xlu0 %4487, %v3157
        %v4489 = vpop.permute.xlu0 %4488
        %v4491 = vmul.f32 %v4489, %v4485
        %v4492 = vsub.f32 %v3157, %v4491
        %4494 = vset.pattern.permute.xlu0 0
        %4495 = vperm.xlu0 %4494, %v3817
        %v4496 = vpop.permute.xlu0 %4495
        %v4498 = vmul.f32 %v4496, %v4485
        %v4499 = vsub.f32 %v3817, %v4498
        %4501 = vset.pattern.permute.xlu0 0
        %4502 = vperm.xlu0 %4501, %v4477
        %v4503 = vpop.permute.xlu0 %4502
        %v4505 = vmul.f32 %v4503, %v4485
        %v4506 = vsub.f32 %v4477, %v4505
        %v4507 = vrcp.pop %v4492
        %v4508 = vmul.f32 1.0, %v4507
        %4510 = vset.pattern.permute.xlu0 1
        %4511 = vperm.xlu0 %4510, %v4508
        %v4512 = vpop.permute.xlu0 %4511
        %v4514 = vmul.f32 %v4492, %v4512
        %4516 = vset.pattern.permute.xlu0 1
        %4517 = vperm.xlu0 %4516, %v4485
        %v4518 = vpop.permute.xlu0 %4517
        %v4520 = vmul.f32 %v4518, %v4514
        %v4521 = vsub.f32 %v4485, %v4520
        %4523 = vset.pattern.permute.xlu0 1
        %4524 = vperm.xlu0 %4523, %v4499
        %v4525 = vpop.permute.xlu0 %4524
        %v4527 = vmul.f32 %v4525, %v4514
        %v4528 = vsub.f32 %v4499, %v4527
        %4530 = vset.pattern.permute.xlu0 1
        %4531 = vperm.xlu0 %4530, %v4506
        %v4532 = vpop.permute.xlu0 %4531
        %v4534 = vmul.f32 %v4532, %v4514
        %v4535 = vsub.f32 %v4506, %v4534
        %v4536 = vrcp.pop %v4528
        %v4537 = vmul.f32 1.0, %v4536
        %4539 = vset.pattern.permute.xlu0 2
        %4540 = vperm.xlu0 %4539, %v4537
        %v4541 = vpop.permute.xlu0 %4540
        %v4543 = vmul.f32 %v4528, %v4541
        %4545 = vset.pattern.permute.xlu0 2
        %4546 = vperm.xlu0 %4545, %v4521
        %v4547 = vpop.permute.xlu0 %4546
        %v4549 = vmul.f32 %v4547, %v4543
        %v4550 = vsub.f32 %v4521, %v4549
        %4552 = vset.pattern.permute.xlu0 2
        %4553 = vperm.xlu0 %4552, %v4514
        %v4554 = vpop.permute.xlu0 %4553
        %v4556 = vmul.f32 %v4554, %v4543
        %v4557 = vsub.f32 %v4514, %v4556
        %4559 = vset.pattern.permute.xlu0 2
        %4560 = vperm.xlu0 %4559, %v4535
        %v4561 = vpop.permute.xlu0 %4560
        %v4563 = vmul.f32 %v4561, %v4543
        %v4564 = vsub.f32 %v4535, %v4563
        %v4565 = vrcp.pop %v4564
        %v4566 = vmul.f32 1.0, %v4565
        %4568 = vset.pattern.permute.xlu0 3
        %4569 = vperm.xlu0 %4568, %v4566
        %v4570 = vpop.permute.xlu0 %4569
        %v4572 = vmul.f32 %v4564, %v4570
        %4574 = vset.pattern.permute.xlu0 3
        %4575 = vperm.xlu0 %4574, %v4550
        %v4576 = vpop.permute.xlu0 %4575
        %v4578 = vmul.f32 %v4576, %v4572
        %v4579 = vsub.f32 %v4550, %v4578
        %4581 = vset.pattern.permute.xlu0 3
        %4582 = vperm.xlu0 %4581, %v4557
        %v4583 = vpop.permute.xlu0 %4582
        %v4585 = vmul.f32 %v4583, %v4572
        %v4586 = vsub.f32 %v4557, %v4585
        %4588 = vset.pattern.permute.xlu0 3
        %4589 = vperm.xlu0 %4588, %v4543
        %v4590 = vpop.permute.xlu0 %4589
        %v4592 = vmul.f32 %v4590, %v4572
        %v4593 = vsub.f32 %v4543, %v4592
        %vm4594 = vcmp.eq.s32.totalorder %v708, 0
        %v4595 = vsel %vm4594, 1, 0
        %v4596 = vcvt.s32.f32 %v4595
        %4598 = vset.pattern.permute.xlu0 4
        %4599 = vperm.xlu0 %4598, %v4579
        %v4600 = vpop.permute.xlu0 %4599
        %v4602 = vmul.f32 %v4600, %v4596
        %v4603 = vadd.f32 %v4602, 0.0
        %vm4604 = vcmp.eq.s32.totalorder %v708, 1
        %v4605 = vsel %vm4604, 1, 0
        %v4606 = vcvt.s32.f32 %v4605
        %4608 = vset.pattern.permute.xlu0 4
        %4609 = vperm.xlu0 %4608, %v4586
        %v4610 = vpop.permute.xlu0 %4609
        %v4612 = vmul.f32 %v4610, %v4606
        %v4613 = vadd.f32 %v4603, %v4612
        %vm4614 = vcmp.eq.s32.totalorder %v708, 2
        %v4615 = vsel %vm4614, 1, 0
        %v4616 = vcvt.s32.f32 %v4615
        %4618 = vset.pattern.permute.xlu0 4
        %4619 = vperm.xlu0 %4618, %v4593
        %v4620 = vpop.permute.xlu0 %4619
        %v4622 = vmul.f32 %v4620, %v4616
        %v4623 = vadd.f32 %v4613, %v4622
        %vm4624 = vcmp.eq.s32.totalorder %v708, 3
        %v4625 = vsel %vm4624, 1, 0
        %v4626 = vcvt.s32.f32 %v4625
        %4628 = vset.pattern.permute.xlu0 4
        %4629 = vperm.xlu0 %4628, %v4572
        %v4630 = vpop.permute.xlu0 %4629
        %v4632 = vmul.f32 %v4630, %v4626
        %v4633 = vadd.f32 %v4623, %v4632
        %v4634 = vadd.f32 %v704, %v4633
        %4635 = vmatprep.subr.mxu0 0.0
        %v4636 = vand.u32 %v712, 4294901760
        %4637 = vmatpush1.msra.mxu0 %v4636
        %4638 = vmatprep.subr.mxu0 0.0
        %v4639 = vand.u32 %v713, 4294901760
        %4640 = vmatpush1.msra.mxu0 %v4639
        %4641 = vmatprep.subr.mxu0 0.0
        %v4642 = vand.u32 %v714, 4294901760
        %4643 = vmatpush1.msra.mxu0 %v4642
        %4644 = vmatprep.subr.mxu0 0.0
        %v4645 = vand.u32 %v715, 4294901760
        %4646 = vmatpush1.msra.mxu0 %v4645
        %4647 = vmatprep.subr.mxu0 0.0
        %v4648 = vand.u32 %v716, 4294901760
        %4649 = vmatpush1.msra.mxu0 %v4648
        %4650 = vmatprep.subr.mxu0 0.0
        %v4651 = vand.u32 %v717, 4294901760
        %4652 = vmatpush1.msra.mxu0 %v4651
        %4653 = vmatprep.subr.mxu0 0.0
        %v4654 = vand.u32 %v718, 4294901760
        %4655 = vmatpush1.msra.mxu0 %v4654
        %4656 = vmatprep.subr.mxu0 0.0
        %v4657 = vand.u32 %v719, 4294901760
        %4658 = vmatpush1.msra.mxu0 %v4657
        %4659 = vmatprep.subr.mxu0 0.0
        %v4660 = vand.u32 %v720, 4294901760
        %4661 = vmatpush1.msra.mxu0 %v4660
        %4662 = vmatprep.subr.mxu0 0.0
        %v4663 = vand.u32 %v721, 4294901760
        %4664 = vmatpush1.msra.mxu0 %v4663
        %4665 = vmatprep.subr.mxu0 0.0
        %v4666 = vand.u32 %v722, 4294901760
        %4667 = vmatpush1.msra.mxu0 %v4666
        %4668 = vmatprep.subr.mxu0 0.0
        %v4669 = vand.u32 %v723, 4294901760
        %4670 = vmatpush1.msra.mxu0 %v4669
        %4671 = vmatprep.subr.mxu0 0.0
        %v4672 = vand.u32 %v724, 4294901760
        %4673 = vmatpush1.msra.mxu0 %v4672
        %4674 = vmatprep.subr.mxu0 0.0
        %v4675 = vand.u32 %v725, 4294901760
        %4676 = vmatpush1.msra.mxu0 %v4675
        %4677 = vmatprep.subr.mxu0 0.0
        %v4678 = vand.u32 %v726, 4294901760
        %4679 = vmatpush1.msra.mxu0 %v4678
        %4680 = vmatprep.subr.mxu0 0.0
        %v4681 = vand.u32 %v727, 4294901760
        %4682 = vmatpush1.msra.mxu0 %v4681
        %4683 = vmatprep.subr.mxu0 0.0
        %4684 = vmatpush1.msra.mxu0 0.0
        %4685 = vmatprep.subr.mxu0 0.0
        %4686 = vmatpush1.msra.mxu0 0.0
        %4687 = vmatprep.subr.mxu0 0.0
        %4688 = vmatpush1.msra.mxu0 0.0
        %4689 = vmatprep.subr.mxu0 0.0
        %4690 = vmatpush1.msra.mxu0 0.0
        %4691 = vmatprep.subr.mxu0 0.0
        %4692 = vmatpush1.msra.mxu0 0.0
        %4693 = vmatprep.subr.mxu0 0.0
        %4694 = vmatpush1.msra.mxu0 0.0
        %4695 = vmatprep.subr.mxu0 0.0
        %4696 = vmatpush1.msra.mxu0 0.0
        %4697 = vmatprep.subr.mxu0 0.0
        %4698 = vmatpush1.msra.mxu0 0.0
        %4699 = vmatprep.subr.mxu0 0.0
        %4700 = vmatpush1.msra.mxu0 0.0
        %4701 = vmatprep.subr.mxu0 0.0
        %4702 = vmatpush1.msra.mxu0 0.0
        %4703 = vmatprep.subr.mxu0 0.0
        %4704 = vmatpush1.msra.mxu0 0.0
        %4705 = vmatprep.subr.mxu0 0.0
        %4706 = vmatpush1.msra.mxu0 0.0
        %4707 = vmatprep.subr.mxu0 0.0
        %4708 = vmatpush1.msra.mxu0 0.0
        %4709 = vmatprep.subr.mxu0 0.0
        %4710 = vmatpush1.msra.mxu0 0.0
        %4711 = vmatprep.subr.mxu0 0.0
        %4712 = vmatpush1.msra.mxu0 0.0
        %4713 = vmatprep.subr.mxu0 0.0
        %4714 = vmatpush1.msra.mxu0 0.0
        %4715 = vmatprep.mubr.f32.mxu0 0.0
        %v4716 = vand.u32 %v4634, 4294901760
        %v4717 = vsub.f32 %v4634, %v4716
        %v4718 = vand.u32 %v4717, 4294901760
        %v4719 = vsub.f32 %v4717, %v4718
        %v4720 = vand.u32 %v4719, 4294901760
        %4721 = vmatmul.mubr.f32.gmra.mrb[0].mxu0 %v4720
        %v4722 = vpop.f32.mrb[0].mxu0
        %v4723 = vadd.f32 0.0, %v4722
        %v4724 = vpop.f32.mrb[0].mxu0
        %4725 = vdwg.mxu0
        %4726 = vmatprep.subr.mxu0 0.0
        %v4727 = vand.u32 %v712, 4294901760
        %v4728 = vsub.f32 %v712, %v4727
        %v4729 = vand.u32 %v4728, 4294901760
        %v4730 = vsub.f32 %v4728, %v4729
        %v4731 = vand.u32 %v4730, 4294901760
        %4732 = vmatpush1.msra.mxu0 %v4731
        %4733 = vmatprep.subr.mxu0 0.0
        %v4734 = vand.u32 %v713, 4294901760
        %v4735 = vsub.f32 %v713, %v4734
        %v4736 = vand.u32 %v4735, 4294901760
        %v4737 = vsub.f32 %v4735, %v4736
        %v4738 = vand.u32 %v4737, 4294901760
        %4739 = vmatpush1.msra.mxu0 %v4738
        %4740 = vmatprep.subr.mxu0 0.0
        %v4741 = vand.u32 %v714, 4294901760
        %v4742 = vsub.f32 %v714, %v4741
        %v4743 = vand.u32 %v4742, 4294901760
        %v4744 = vsub.f32 %v4742, %v4743
        %v4745 = vand.u32 %v4744, 4294901760
        %4746 = vmatpush1.msra.mxu0 %v4745
        %4747 = vmatprep.subr.mxu0 0.0
        %v4748 = vand.u32 %v715, 4294901760
        %v4749 = vsub.f32 %v715, %v4748
        %v4750 = vand.u32 %v4749, 4294901760
        %v4751 = vsub.f32 %v4749, %v4750
        %v4752 = vand.u32 %v4751, 4294901760
        %4753 = vmatpush1.msra.mxu0 %v4752
        %4754 = vmatprep.subr.mxu0 0.0
        %v4755 = vand.u32 %v716, 4294901760
        %v4756 = vsub.f32 %v716, %v4755
        %v4757 = vand.u32 %v4756, 4294901760
        %v4758 = vsub.f32 %v4756, %v4757
        %v4759 = vand.u32 %v4758, 4294901760
        %4760 = vmatpush1.msra.mxu0 %v4759
        %4761 = vmatprep.subr.mxu0 0.0
        %v4762 = vand.u32 %v717, 4294901760
        %v4763 = vsub.f32 %v717, %v4762
        %v4764 = vand.u32 %v4763, 4294901760
        %v4765 = vsub.f32 %v4763, %v4764
        %v4766 = vand.u32 %v4765, 4294901760
        %4767 = vmatpush1.msra.mxu0 %v4766
        %4768 = vmatprep.subr.mxu0 0.0
        %v4769 = vand.u32 %v718, 4294901760
        %v4770 = vsub.f32 %v718, %v4769
        %v4771 = vand.u32 %v4770, 4294901760
        %v4772 = vsub.f32 %v4770, %v4771
        %v4773 = vand.u32 %v4772, 4294901760
        %4774 = vmatpush1.msra.mxu0 %v4773
        %4775 = vmatprep.subr.mxu0 0.0
        %v4776 = vand.u32 %v719, 4294901760
        %v4777 = vsub.f32 %v719, %v4776
        %v4778 = vand.u32 %v4777, 4294901760
        %v4779 = vsub.f32 %v4777, %v4778
        %v4780 = vand.u32 %v4779, 4294901760
        %4781 = vmatpush1.msra.mxu0 %v4780
        %4782 = vmatprep.subr.mxu0 0.0
        %v4783 = vand.u32 %v720, 4294901760
        %v4784 = vsub.f32 %v720, %v4783
        %v4785 = vand.u32 %v4784, 4294901760
        %v4786 = vsub.f32 %v4784, %v4785
        %v4787 = vand.u32 %v4786, 4294901760
        %4788 = vmatpush1.msra.mxu0 %v4787
        %4789 = vmatprep.subr.mxu0 0.0
        %v4790 = vand.u32 %v721, 4294901760
        %v4791 = vsub.f32 %v721, %v4790
        %v4792 = vand.u32 %v4791, 4294901760
        %v4793 = vsub.f32 %v4791, %v4792
        %v4794 = vand.u32 %v4793, 4294901760
        %4795 = vmatpush1.msra.mxu0 %v4794
        %4796 = vmatprep.subr.mxu0 0.0
        %v4797 = vand.u32 %v722, 4294901760
        %v4798 = vsub.f32 %v722, %v4797
        %v4799 = vand.u32 %v4798, 4294901760
        %v4800 = vsub.f32 %v4798, %v4799
        %v4801 = vand.u32 %v4800, 4294901760
        %4802 = vmatpush1.msra.mxu0 %v4801
        %4803 = vmatprep.subr.mxu0 0.0
        %v4804 = vand.u32 %v723, 4294901760
        %v4805 = vsub.f32 %v723, %v4804
        %v4806 = vand.u32 %v4805, 4294901760
        %v4807 = vsub.f32 %v4805, %v4806
        %v4808 = vand.u32 %v4807, 4294901760
        %4809 = vmatpush1.msra.mxu0 %v4808
        %4810 = vmatprep.subr.mxu0 0.0
        %v4811 = vand.u32 %v724, 4294901760
        %v4812 = vsub.f32 %v724, %v4811
        %v4813 = vand.u32 %v4812, 4294901760
        %v4814 = vsub.f32 %v4812, %v4813
        %v4815 = vand.u32 %v4814, 4294901760
        %4816 = vmatpush1.msra.mxu0 %v4815
        %4817 = vmatprep.subr.mxu0 0.0
        %v4818 = vand.u32 %v725, 4294901760
        %v4819 = vsub.f32 %v725, %v4818
        %v4820 = vand.u32 %v4819, 4294901760
        %v4821 = vsub.f32 %v4819, %v4820
        %v4822 = vand.u32 %v4821, 4294901760
        %4823 = vmatpush1.msra.mxu0 %v4822
        %4824 = vmatprep.subr.mxu0 0.0
        %v4825 = vand.u32 %v726, 4294901760
        %v4826 = vsub.f32 %v726, %v4825
        %v4827 = vand.u32 %v4826, 4294901760
        %v4828 = vsub.f32 %v4826, %v4827
        %v4829 = vand.u32 %v4828, 4294901760
        %4830 = vmatpush1.msra.mxu0 %v4829
        %4831 = vmatprep.subr.mxu0 0.0
        %v4832 = vand.u32 %v727, 4294901760
        %v4833 = vsub.f32 %v727, %v4832
        %v4834 = vand.u32 %v4833, 4294901760
        %v4835 = vsub.f32 %v4833, %v4834
        %v4836 = vand.u32 %v4835, 4294901760
        %4837 = vmatpush1.msra.mxu0 %v4836
        %4838 = vmatprep.subr.mxu0 0.0
        %4839 = vmatpush1.msra.mxu0 0.0
        %4840 = vmatprep.subr.mxu0 0.0
        %4841 = vmatpush1.msra.mxu0 0.0
        %4842 = vmatprep.subr.mxu0 0.0
        %4843 = vmatpush1.msra.mxu0 0.0
        %4844 = vmatprep.subr.mxu0 0.0
        %4845 = vmatpush1.msra.mxu0 0.0
        %4846 = vmatprep.subr.mxu0 0.0
        %4847 = vmatpush1.msra.mxu0 0.0
        %4848 = vmatprep.subr.mxu0 0.0
        %4849 = vmatpush1.msra.mxu0 0.0
        %4850 = vmatprep.subr.mxu0 0.0
        %4851 = vmatpush1.msra.mxu0 0.0
        %4852 = vmatprep.subr.mxu0 0.0
        %4853 = vmatpush1.msra.mxu0 0.0
        %4854 = vmatprep.subr.mxu0 0.0
        %4855 = vmatpush1.msra.mxu0 0.0
        %4856 = vmatprep.subr.mxu0 0.0
        %4857 = vmatpush1.msra.mxu0 0.0
        %4858 = vmatprep.subr.mxu0 0.0
        %4859 = vmatpush1.msra.mxu0 0.0
        %4860 = vmatprep.subr.mxu0 0.0
        %4861 = vmatpush1.msra.mxu0 0.0
        %4862 = vmatprep.subr.mxu0 0.0
        %4863 = vmatpush1.msra.mxu0 0.0
        %4864 = vmatprep.subr.mxu0 0.0
        %4865 = vmatpush1.msra.mxu0 0.0
        %4866 = vmatprep.subr.mxu0 0.0
        %4867 = vmatpush1.msra.mxu0 0.0
        %4868 = vmatprep.subr.mxu0 0.0
        %4869 = vmatpush1.msra.mxu0 0.0
        %4870 = vmatprep.mubr.f32.mxu0 0.0
        %v4871 = vand.u32 %v4634, 4294901760
        %4872 = vmatmul.mubr.f32.gmra.mrb[0].mxu0 %v4871
        %v4873 = vpop.f32.mrb[0].mxu0
        %v4874 = vadd.f32 %v4723, %v4873
        %v4875 = vpop.f32.mrb[0].mxu0
        %4876 = vdwg.mxu0
        %4877 = vmatprep.subr.mxu0 0.0
        %v4878 = vand.u32 %v712, 4294901760
        %v4879 = vsub.f32 %v712, %v4878
        %4880 = vmatpush1.msra.mxu0 %v4879
        %4881 = vmatprep.subr.mxu0 0.0
        %v4882 = vand.u32 %v713, 4294901760
        %v4883 = vsub.f32 %v713, %v4882
        %4884 = vmatpush1.msra.mxu0 %v4883
        %4885 = vmatprep.subr.mxu0 0.0
        %v4886 = vand.u32 %v714, 4294901760
        %v4887 = vsub.f32 %v714, %v4886
        %4888 = vmatpush1.msra.mxu0 %v4887
        %4889 = vmatprep.subr.mxu0 0.0
        %v4890 = vand.u32 %v715, 4294901760
        %v4891 = vsub.f32 %v715, %v4890
        %4892 = vmatpush1.msra.mxu0 %v4891
        %4893 = vmatprep.subr.mxu0 0.0
        %v4894 = vand.u32 %v716, 4294901760
        %v4895 = vsub.f32 %v716, %v4894
        %4896 = vmatpush1.msra.mxu0 %v4895
        %4897 = vmatprep.subr.mxu0 0.0
        %v4898 = vand.u32 %v717, 4294901760
        %v4899 = vsub.f32 %v717, %v4898
        %4900 = vmatpush1.msra.mxu0 %v4899
        %4901 = vmatprep.subr.mxu0 0.0
        %v4902 = vand.u32 %v718, 4294901760
        %v4903 = vsub.f32 %v718, %v4902
        %4904 = vmatpush1.msra.mxu0 %v4903
        %4905 = vmatprep.subr.mxu0 0.0
        %v4906 = vand.u32 %v719, 4294901760
        %v4907 = vsub.f32 %v719, %v4906
        %4908 = vmatpush1.msra.mxu0 %v4907
        %4909 = vmatprep.subr.mxu0 0.0
        %v4910 = vand.u32 %v720, 4294901760
        %v4911 = vsub.f32 %v720, %v4910
        %4912 = vmatpush1.msra.mxu0 %v4911
        %4913 = vmatprep.subr.mxu0 0.0
        %v4914 = vand.u32 %v721, 4294901760
        %v4915 = vsub.f32 %v721, %v4914
        %4916 = vmatpush1.msra.mxu0 %v4915
        %4917 = vmatprep.subr.mxu0 0.0
        %v4918 = vand.u32 %v722, 4294901760
        %v4919 = vsub.f32 %v722, %v4918
        %4920 = vmatpush1.msra.mxu0 %v4919
        %4921 = vmatprep.subr.mxu0 0.0
        %v4922 = vand.u32 %v723, 4294901760
        %v4923 = vsub.f32 %v723, %v4922
        %4924 = vmatpush1.msra.mxu0 %v4923
        %4925 = vmatprep.subr.mxu0 0.0
        %v4926 = vand.u32 %v724, 4294901760
        %v4927 = vsub.f32 %v724, %v4926
        %4928 = vmatpush1.msra.mxu0 %v4927
        %4929 = vmatprep.subr.mxu0 0.0
        %v4930 = vand.u32 %v725, 4294901760
        %v4931 = vsub.f32 %v725, %v4930
        %4932 = vmatpush1.msra.mxu0 %v4931
        %4933 = vmatprep.subr.mxu0 0.0
        %v4934 = vand.u32 %v726, 4294901760
        %v4935 = vsub.f32 %v726, %v4934
        %4936 = vmatpush1.msra.mxu0 %v4935
        %4937 = vmatprep.subr.mxu0 0.0
        %v4938 = vand.u32 %v727, 4294901760
        %v4939 = vsub.f32 %v727, %v4938
        %4940 = vmatpush1.msra.mxu0 %v4939
        %4941 = vmatprep.subr.mxu0 0.0
        %4942 = vmatpush1.msra.mxu0 0.0
        %4943 = vmatprep.subr.mxu0 0.0
        %4944 = vmatpush1.msra.mxu0 0.0
        %4945 = vmatprep.subr.mxu0 0.0
        %4946 = vmatpush1.msra.mxu0 0.0
        %4947 = vmatprep.subr.mxu0 0.0
        %4948 = vmatpush1.msra.mxu0 0.0
        %4949 = vmatprep.subr.mxu0 0.0
        %4950 = vmatpush1.msra.mxu0 0.0
        %4951 = vmatprep.subr.mxu0 0.0
        %4952 = vmatpush1.msra.mxu0 0.0
        %4953 = vmatprep.subr.mxu0 0.0
        %4954 = vmatpush1.msra.mxu0 0.0
        %4955 = vmatprep.subr.mxu0 0.0
        %4956 = vmatpush1.msra.mxu0 0.0
        %4957 = vmatprep.subr.mxu0 0.0
        %4958 = vmatpush1.msra.mxu0 0.0
        %4959 = vmatprep.subr.mxu0 0.0
        %4960 = vmatpush1.msra.mxu0 0.0
        %4961 = vmatprep.subr.mxu0 0.0
        %4962 = vmatpush1.msra.mxu0 0.0
        %4963 = vmatprep.subr.mxu0 0.0
        %4964 = vmatpush1.msra.mxu0 0.0
        %4965 = vmatprep.subr.mxu0 0.0
        %4966 = vmatpush1.msra.mxu0 0.0
        %4967 = vmatprep.subr.mxu0 0.0
        %4968 = vmatpush1.msra.mxu0 0.0
        %4969 = vmatprep.subr.mxu0 0.0
        %4970 = vmatpush1.msra.mxu0 0.0
        %4971 = vmatprep.subr.mxu0 0.0
        %4972 = vmatpush1.msra.mxu0 0.0
        %4973 = vmatprep.mubr.f32.mxu0 0.0
        %v4974 = vand.u32 %v4634, 4294901760
        %v4975 = vsub.f32 %v4634, %v4974
        %4976 = vmatmul.mubr.f32.gmra.mrb[0].mxu0 %v4975
        %v4977 = vpop.f32.mrb[0].mxu0
        %v4978 = vadd.f32 %v4874, %v4977
        %v4979 = vpop.f32.mrb[0].mxu0
        %4980 = vdwg.mxu0
        %4981 = vmatprep.subr.mxu0 0.0
        %v4982 = vand.u32 %v712, 4294901760
        %4983 = vmatpush1.msra.mxu0 %v4982
        %4984 = vmatprep.subr.mxu0 0.0
        %v4985 = vand.u32 %v713, 4294901760
        %4986 = vmatpush1.msra.mxu0 %v4985
        %4987 = vmatprep.subr.mxu0 0.0
        %v4988 = vand.u32 %v714, 4294901760
        %4989 = vmatpush1.msra.mxu0 %v4988
        %4990 = vmatprep.subr.mxu0 0.0
        %v4991 = vand.u32 %v715, 4294901760
        %4992 = vmatpush1.msra.mxu0 %v4991
        %4993 = vmatprep.subr.mxu0 0.0
        %v4994 = vand.u32 %v716, 4294901760
        %4995 = vmatpush1.msra.mxu0 %v4994
        %4996 = vmatprep.subr.mxu0 0.0
        %v4997 = vand.u32 %v717, 4294901760
        %4998 = vmatpush1.msra.mxu0 %v4997
        %4999 = vmatprep.subr.mxu0 0.0
        %v5000 = vand.u32 %v718, 4294901760
        %5001 = vmatpush1.msra.mxu0 %v5000
        %5002 = vmatprep.subr.mxu0 0.0
        %v5003 = vand.u32 %v719, 4294901760
        %5004 = vmatpush1.msra.mxu0 %v5003
        %5005 = vmatprep.subr.mxu0 0.0
        %v5006 = vand.u32 %v720, 4294901760
        %5007 = vmatpush1.msra.mxu0 %v5006
        %5008 = vmatprep.subr.mxu0 0.0
        %v5009 = vand.u32 %v721, 4294901760
        %5010 = vmatpush1.msra.mxu0 %v5009
        %5011 = vmatprep.subr.mxu0 0.0
        %v5012 = vand.u32 %v722, 4294901760
        %5013 = vmatpush1.msra.mxu0 %v5012
        %5014 = vmatprep.subr.mxu0 0.0
        %v5015 = vand.u32 %v723, 4294901760
        %5016 = vmatpush1.msra.mxu0 %v5015
        %5017 = vmatprep.subr.mxu0 0.0
        %v5018 = vand.u32 %v724, 4294901760
        %5019 = vmatpush1.msra.mxu0 %v5018
        %5020 = vmatprep.subr.mxu0 0.0
        %v5021 = vand.u32 %v725, 4294901760
        %5022 = vmatpush1.msra.mxu0 %v5021
        %5023 = vmatprep.subr.mxu0 0.0
        %v5024 = vand.u32 %v726, 4294901760
        %5025 = vmatpush1.msra.mxu0 %v5024
        %5026 = vmatprep.subr.mxu0 0.0
        %v5027 = vand.u32 %v727, 4294901760
        %5028 = vmatpush1.msra.mxu0 %v5027
        %5029 = vmatprep.subr.mxu0 0.0
        %5030 = vmatpush1.msra.mxu0 0.0
        %5031 = vmatprep.subr.mxu0 0.0
        %5032 = vmatpush1.msra.mxu0 0.0
        %5033 = vmatprep.subr.mxu0 0.0
        %5034 = vmatpush1.msra.mxu0 0.0
        %5035 = vmatprep.subr.mxu0 0.0
        %5036 = vmatpush1.msra.mxu0 0.0
        %5037 = vmatprep.subr.mxu0 0.0
        %5038 = vmatpush1.msra.mxu0 0.0
        %5039 = vmatprep.subr.mxu0 0.0
        %5040 = vmatpush1.msra.mxu0 0.0
        %5041 = vmatprep.subr.mxu0 0.0
        %5042 = vmatpush1.msra.mxu0 0.0
        %5043 = vmatprep.subr.mxu0 0.0
        %5044 = vmatpush1.msra.mxu0 0.0
        %5045 = vmatprep.subr.mxu0 0.0
        %5046 = vmatpush1.msra.mxu0 0.0
        %5047 = vmatprep.subr.mxu0 0.0
        %5048 = vmatpush1.msra.mxu0 0.0
        %5049 = vmatprep.subr.mxu0 0.0
        %5050 = vmatpush1.msra.mxu0 0.0
        %5051 = vmatprep.subr.mxu0 0.0
        %5052 = vmatpush1.msra.mxu0 0.0
        %5053 = vmatprep.subr.mxu0 0.0
        %5054 = vmatpush1.msra.mxu0 0.0
        %5055 = vmatprep.subr.mxu0 0.0
        %5056 = vmatpush1.msra.mxu0 0.0
        %5057 = vmatprep.subr.mxu0 0.0
        %5058 = vmatpush1.msra.mxu0 0.0
        %5059 = vmatprep.subr.mxu0 0.0
        %5060 = vmatpush1.msra.mxu0 0.0
        %5061 = vmatprep.mubr.f32.mxu0 0.0
        %v5062 = vand.u32 %v4634, 4294901760
        %v5063 = vsub.f32 %v4634, %v5062
        %v5064 = vand.u32 %v5063, 4294901760
        %5065 = vmatmul.mubr.f32.gmra.mrb[0].mxu0 %v5064
        %v5066 = vpop.f32.mrb[0].mxu0
        %v5067 = vadd.f32 %v4978, %v5066
        %v5068 = vpop.f32.mrb[0].mxu0
        %5069 = vdwg.mxu0
        %5070 = vmatprep.subr.mxu0 0.0
        %v5071 = vand.u32 %v712, 4294901760
        %v5072 = vsub.f32 %v712, %v5071
        %v5073 = vand.u32 %v5072, 4294901760
        %5074 = vmatpush1.msra.mxu0 %v5073
        %5075 = vmatprep.subr.mxu0 0.0
        %v5076 = vand.u32 %v713, 4294901760
        %v5077 = vsub.f32 %v713, %v5076
        %v5078 = vand.u32 %v5077, 4294901760
        %5079 = vmatpush1.msra.mxu0 %v5078
        %5080 = vmatprep.subr.mxu0 0.0
        %v5081 = vand.u32 %v714, 4294901760
        %v5082 = vsub.f32 %v714, %v5081
        %v5083 = vand.u32 %v5082, 4294901760
        %5084 = vmatpush1.msra.mxu0 %v5083
        %5085 = vmatprep.subr.mxu0 0.0
        %v5086 = vand.u32 %v715, 4294901760
        %v5087 = vsub.f32 %v715, %v5086
        %v5088 = vand.u32 %v5087, 4294901760
        %5089 = vmatpush1.msra.mxu0 %v5088
        %5090 = vmatprep.subr.mxu0 0.0
        %v5091 = vand.u32 %v716, 4294901760
        %v5092 = vsub.f32 %v716, %v5091
        %v5093 = vand.u32 %v5092, 4294901760
        %5094 = vmatpush1.msra.mxu0 %v5093
        %5095 = vmatprep.subr.mxu0 0.0
        %v5096 = vand.u32 %v717, 4294901760
        %v5097 = vsub.f32 %v717, %v5096
        %v5098 = vand.u32 %v5097, 4294901760
        %5099 = vmatpush1.msra.mxu0 %v5098
        %5100 = vmatprep.subr.mxu0 0.0
        %v5101 = vand.u32 %v718, 4294901760
        %v5102 = vsub.f32 %v718, %v5101
        %v5103 = vand.u32 %v5102, 4294901760
        %5104 = vmatpush1.msra.mxu0 %v5103
        %5105 = vmatprep.subr.mxu0 0.0
        %v5106 = vand.u32 %v719, 4294901760
        %v5107 = vsub.f32 %v719, %v5106
        %v5108 = vand.u32 %v5107, 4294901760
        %5109 = vmatpush1.msra.mxu0 %v5108
        %5110 = vmatprep.subr.mxu0 0.0
        %v5111 = vand.u32 %v720, 4294901760
        %v5112 = vsub.f32 %v720, %v5111
        %v5113 = vand.u32 %v5112, 4294901760
        %5114 = vmatpush1.msra.mxu0 %v5113
        %5115 = vmatprep.subr.mxu0 0.0
        %v5116 = vand.u32 %v721, 4294901760
        %v5117 = vsub.f32 %v721, %v5116
        %v5118 = vand.u32 %v5117, 4294901760
        %5119 = vmatpush1.msra.mxu0 %v5118
        %5120 = vmatprep.subr.mxu0 0.0
        %v5121 = vand.u32 %v722, 4294901760
        %v5122 = vsub.f32 %v722, %v5121
        %v5123 = vand.u32 %v5122, 4294901760
        %5124 = vmatpush1.msra.mxu0 %v5123
        %5125 = vmatprep.subr.mxu0 0.0
        %v5126 = vand.u32 %v723, 4294901760
        %v5127 = vsub.f32 %v723, %v5126
        %v5128 = vand.u32 %v5127, 4294901760
        %5129 = vmatpush1.msra.mxu0 %v5128
        %5130 = vmatprep.subr.mxu0 0.0
        %v5131 = vand.u32 %v724, 4294901760
        %v5132 = vsub.f32 %v724, %v5131
        %v5133 = vand.u32 %v5132, 4294901760
        %5134 = vmatpush1.msra.mxu0 %v5133
        %5135 = vmatprep.subr.mxu0 0.0
        %v5136 = vand.u32 %v725, 4294901760
        %v5137 = vsub.f32 %v725, %v5136
        %v5138 = vand.u32 %v5137, 4294901760
        %5139 = vmatpush1.msra.mxu0 %v5138
        %5140 = vmatprep.subr.mxu0 0.0
        %v5141 = vand.u32 %v726, 4294901760
        %v5142 = vsub.f32 %v726, %v5141
        %v5143 = vand.u32 %v5142, 4294901760
        %5144 = vmatpush1.msra.mxu0 %v5143
        %5145 = vmatprep.subr.mxu0 0.0
        %v5146 = vand.u32 %v727, 4294901760
        %v5147 = vsub.f32 %v727, %v5146
        %v5148 = vand.u32 %v5147, 4294901760
        %5149 = vmatpush1.msra.mxu0 %v5148
        %5150 = vmatprep.subr.mxu0 0.0
        %5151 = vmatpush1.msra.mxu0 0.0
        %5152 = vmatprep.subr.mxu0 0.0
        %5153 = vmatpush1.msra.mxu0 0.0
        %5154 = vmatprep.subr.mxu0 0.0
        %5155 = vmatpush1.msra.mxu0 0.0
        %5156 = vmatprep.subr.mxu0 0.0
        %5157 = vmatpush1.msra.mxu0 0.0
        %5158 = vmatprep.subr.mxu0 0.0
        %5159 = vmatpush1.msra.mxu0 0.0
        %5160 = vmatprep.subr.mxu0 0.0
        %5161 = vmatpush1.msra.mxu0 0.0
        %5162 = vmatprep.subr.mxu0 0.0
        %5163 = vmatpush1.msra.mxu0 0.0
        %5164 = vmatprep.subr.mxu0 0.0
        %5165 = vmatpush1.msra.mxu0 0.0
        %5166 = vmatprep.subr.mxu0 0.0
        %5167 = vmatpush1.msra.mxu0 0.0
        %5168 = vmatprep.subr.mxu0 0.0
        %5169 = vmatpush1.msra.mxu0 0.0
        %5170 = vmatprep.subr.mxu0 0.0
        %5171 = vmatpush1.msra.mxu0 0.0
        %5172 = vmatprep.subr.mxu0 0.0
        %5173 = vmatpush1.msra.mxu0 0.0
        %5174 = vmatprep.subr.mxu0 0.0
        %5175 = vmatpush1.msra.mxu0 0.0
        %5176 = vmatprep.subr.mxu0 0.0
        %5177 = vmatpush1.msra.mxu0 0.0
        %5178 = vmatprep.subr.mxu0 0.0
        %5179 = vmatpush1.msra.mxu0 0.0
        %5180 = vmatprep.subr.mxu0 0.0
        %5181 = vmatpush1.msra.mxu0 0.0
        %5182 = vmatprep.mubr.f32.mxu0 0.0
        %v5183 = vand.u32 %v4634, 4294901760
        %5184 = vmatmul.mubr.f32.gmra.mrb[0].mxu0 %v5183
        %v5185 = vpop.f32.mrb[0].mxu0
        %v5186 = vadd.f32 %v5067, %v5185
        %v5187 = vpop.f32.mrb[0].mxu0
        %5188 = vdwg.mxu0
        %5189 = vmatprep.subr.mxu0 0.0
        %v5190 = vand.u32 %v712, 4294901760
        %5191 = vmatpush1.msra.mxu0 %v5190
        %5192 = vmatprep.subr.mxu0 0.0
        %v5193 = vand.u32 %v713, 4294901760
        %5194 = vmatpush1.msra.mxu0 %v5193
        %5195 = vmatprep.subr.mxu0 0.0
        %v5196 = vand.u32 %v714, 4294901760
        %5197 = vmatpush1.msra.mxu0 %v5196
        %5198 = vmatprep.subr.mxu0 0.0
        %v5199 = vand.u32 %v715, 4294901760
        %5200 = vmatpush1.msra.mxu0 %v5199
        %5201 = vmatprep.subr.mxu0 0.0
        %v5202 = vand.u32 %v716, 4294901760
        %5203 = vmatpush1.msra.mxu0 %v5202
        %5204 = vmatprep.subr.mxu0 0.0
        %v5205 = vand.u32 %v717, 4294901760
        %5206 = vmatpush1.msra.mxu0 %v5205
        %5207 = vmatprep.subr.mxu0 0.0
        %v5208 = vand.u32 %v718, 4294901760
        %5209 = vmatpush1.msra.mxu0 %v5208
        %5210 = vmatprep.subr.mxu0 0.0
        %v5211 = vand.u32 %v719, 4294901760
        %5212 = vmatpush1.msra.mxu0 %v5211
        %5213 = vmatprep.subr.mxu0 0.0
        %v5214 = vand.u32 %v720, 4294901760
        %5215 = vmatpush1.msra.mxu0 %v5214
        %5216 = vmatprep.subr.mxu0 0.0
        %v5217 = vand.u32 %v721, 4294901760
        %5218 = vmatpush1.msra.mxu0 %v5217
        %5219 = vmatprep.subr.mxu0 0.0
        %v5220 = vand.u32 %v722, 4294901760
        %5221 = vmatpush1.msra.mxu0 %v5220
        %5222 = vmatprep.subr.mxu0 0.0
        %v5223 = vand.u32 %v723, 4294901760
        %5224 = vmatpush1.msra.mxu0 %v5223
        %5225 = vmatprep.subr.mxu0 0.0
        %v5226 = vand.u32 %v724, 4294901760
        %5227 = vmatpush1.msra.mxu0 %v5226
        %5228 = vmatprep.subr.mxu0 0.0
        %v5229 = vand.u32 %v725, 4294901760
        %5230 = vmatpush1.msra.mxu0 %v5229
        %5231 = vmatprep.subr.mxu0 0.0
        %v5232 = vand.u32 %v726, 4294901760
        %5233 = vmatpush1.msra.mxu0 %v5232
        %5234 = vmatprep.subr.mxu0 0.0
        %v5235 = vand.u32 %v727, 4294901760
        %5236 = vmatpush1.msra.mxu0 %v5235
        %5237 = vmatprep.subr.mxu0 0.0
        %5238 = vmatpush1.msra.mxu0 0.0
        %5239 = vmatprep.subr.mxu0 0.0
        %5240 = vmatpush1.msra.mxu0 0.0
        %5241 = vmatprep.subr.mxu0 0.0
        %5242 = vmatpush1.msra.mxu0 0.0
        %5243 = vmatprep.subr.mxu0 0.0
        %5244 = vmatpush1.msra.mxu0 0.0
        %5245 = vmatprep.subr.mxu0 0.0
        %5246 = vmatpush1.msra.mxu0 0.0
        %5247 = vmatprep.subr.mxu0 0.0
        %5248 = vmatpush1.msra.mxu0 0.0
        %5249 = vmatprep.subr.mxu0 0.0
        %5250 = vmatpush1.msra.mxu0 0.0
        %5251 = vmatprep.subr.mxu0 0.0
        %5252 = vmatpush1.msra.mxu0 0.0
        %5253 = vmatprep.subr.mxu0 0.0
        %5254 = vmatpush1.msra.mxu0 0.0
        %5255 = vmatprep.subr.mxu0 0.0
        %5256 = vmatpush1.msra.mxu0 0.0
        %5257 = vmatprep.subr.mxu0 0.0
        %5258 = vmatpush1.msra.mxu0 0.0
        %5259 = vmatprep.subr.mxu0 0.0
        %5260 = vmatpush1.msra.mxu0 0.0
        %5261 = vmatprep.subr.mxu0 0.0
        %5262 = vmatpush1.msra.mxu0 0.0
        %5263 = vmatprep.subr.mxu0 0.0
        %5264 = vmatpush1.msra.mxu0 0.0
        %5265 = vmatprep.subr.mxu0 0.0
        %5266 = vmatpush1.msra.mxu0 0.0
        %5267 = vmatprep.subr.mxu0 0.0
        %5268 = vmatpush1.msra.mxu0 0.0
        %5269 = vmatprep.mubr.f32.mxu0 0.0
        %v5270 = vand.u32 %v4634, 4294901760
        %5271 = vmatmul.mubr.f32.gmra.mrb[0].mxu0 %v5270
        %v5272 = vpop.f32.mrb[0].mxu0
        %v5273 = vadd.f32 %v5186, %v5272
        %v5274 = vpop.f32.mrb[0].mxu0
        %5275 = vdwg.mxu0
        %v5276 = vmul.f32 %v5273, 2.0
        %v5277 = vsub.f32 %v237, %v5276
        %v5278 = vmul.f32 %v5277, 1.442695
        %v5279 = vpow.pop %v5278
        %v5281 = vsel %vm240, %v5279, 0
        %5283 = vmatprep.subr.mxu0 0.0
        %v5284 = vand.u32 %v1373, 4294901760
        %5285 = vmatpush1.msra.mxu0 %v5284
        %5286 = vmatprep.subr.mxu0 0.0
        %v5287 = vand.u32 %v1379, 4294901760
        %5288 = vmatpush1.msra.mxu0 %v5287
        %5289 = vmatprep.subr.mxu0 0.0
        %5290 = vmatpush1.msra.mxu0 0.0
        %5291 = vmatprep.subr.mxu0 0.0
        %5292 = vmatpush1.msra.mxu0 0.0
        %5293 = vmatprep.subr.mxu0 0.0
        %5294 = vmatpush1.msra.mxu0 0.0
        %5295 = vmatprep.subr.mxu0 0.0
        %5296 = vmatpush1.msra.mxu0 0.0
        %5297 = vmatprep.subr.mxu0 0.0
        %5298 = vmatpush1.msra.mxu0 0.0
        %5299 = vmatprep.subr.mxu0 0.0
        %5300 = vmatpush1.msra.mxu0 0.0
        %5301 = vmatprep.subr.mxu0 0.0
        %5302 = vmatpush1.msra.mxu0 0.0
        %5303 = vmatprep.subr.mxu0 0.0
        %5304 = vmatpush1.msra.mxu0 0.0
        %5305 = vmatprep.subr.mxu0 0.0
        %5306 = vmatpush1.msra.mxu0 0.0
        %5307 = vmatprep.subr.mxu0 0.0
        %5308 = vmatpush1.msra.mxu0 0.0
        %5309 = vmatprep.subr.mxu0 0.0
        %5310 = vmatpush1.msra.mxu0 0.0
        %5311 = vmatprep.subr.mxu0 0.0
        %5312 = vmatpush1.msra.mxu0 0.0
        %5313 = vmatprep.subr.mxu0 0.0
        %5314 = vmatpush1.msra.mxu0 0.0
        %5315 = vmatprep.subr.mxu0 0.0
        %5316 = vmatpush1.msra.mxu0 0.0
        %5317 = vmatprep.subr.mxu0 0.0
        %5318 = vmatpush1.msra.mxu0 0.0
        %5319 = vmatprep.subr.mxu0 0.0
        %5320 = vmatpush1.msra.mxu0 0.0
        %5321 = vmatprep.subr.mxu0 0.0
        %5322 = vmatpush1.msra.mxu0 0.0
        %5323 = vmatprep.subr.mxu0 0.0
        %5324 = vmatpush1.msra.mxu0 0.0
        %5325 = vmatprep.subr.mxu0 0.0
        %5326 = vmatpush1.msra.mxu0 0.0
        %5327 = vmatprep.subr.mxu0 0.0
        %5328 = vmatpush1.msra.mxu0 0.0
        %5329 = vmatprep.subr.mxu0 0.0
        %5330 = vmatpush1.msra.mxu0 0.0
        %5331 = vmatprep.subr.mxu0 0.0
        %5332 = vmatpush1.msra.mxu0 0.0
        %5333 = vmatprep.subr.mxu0 0.0
        %5334 = vmatpush1.msra.mxu0 0.0
        %5335 = vmatprep.subr.mxu0 0.0
        %5336 = vmatpush1.msra.mxu0 0.0
        %5337 = vmatprep.subr.mxu0 0.0
        %5338 = vmatpush1.msra.mxu0 0.0
        %5339 = vmatprep.subr.mxu0 0.0
        %5340 = vmatpush1.msra.mxu0 0.0
        %5341 = vmatprep.subr.mxu0 0.0
        %5342 = vmatpush1.msra.mxu0 0.0
        %5343 = vmatprep.subr.mxu0 0.0
        %5344 = vmatpush1.msra.mxu0 0.0
        %5345 = vmatprep.subr.mxu0 0.0
        %5346 = vmatpush1.msra.mxu0 0.0
        %5347 = vmatprep.subr.mxu0 0.0
        %5348 = vmatpush1.msra.mxu0 0.0
        %5349 = vmatprep.mubr.f32.mxu0 0.0
        %v5350 = vand.u32 %v5281, 4294901760
        %v5351 = vsub.f32 %v5281, %v5350
        %v5352 = vand.u32 %v5351, 4294901760
        %v5353 = vsub.f32 %v5351, %v5352
        %v5354 = vand.u32 %v5353, 4294901760
        %5355 = vmatmul.mubr.f32.gmra.mrb[0].mxu0 %v5354
        %v5356 = vpop.f32.mrb[0].mxu0
        %v5357 = vadd.f32 0.0, %v5356
        %v5358 = vpop.f32.mrb[0].mxu0
        %5359 = vdwg.mxu0
        %5360 = vmatprep.subr.mxu0 0.0
        %v5361 = vand.u32 %v1373, 4294901760
        %v5362 = vsub.f32 %v1373, %v5361
        %v5363 = vand.u32 %v5362, 4294901760
        %v5364 = vsub.f32 %v5362, %v5363
        %v5365 = vand.u32 %v5364, 4294901760
        %5366 = vmatpush1.msra.mxu0 %v5365
        %5367 = vmatprep.subr.mxu0 0.0
        %v5368 = vand.u32 %v1379, 4294901760
        %v5369 = vsub.f32 %v1379, %v5368
        %v5370 = vand.u32 %v5369, 4294901760
        %v5371 = vsub.f32 %v5369, %v5370
        %v5372 = vand.u32 %v5371, 4294901760
        %5373 = vmatpush1.msra.mxu0 %v5372
        %5374 = vmatprep.subr.mxu0 0.0
        %5375 = vmatpush1.msra.mxu0 0.0
        %5376 = vmatprep.subr.mxu0 0.0
        %5377 = vmatpush1.msra.mxu0 0.0
        %5378 = vmatprep.subr.mxu0 0.0
        %5379 = vmatpush1.msra.mxu0 0.0
        %5380 = vmatprep.subr.mxu0 0.0
        %5381 = vmatpush1.msra.mxu0 0.0
        %5382 = vmatprep.subr.mxu0 0.0
        %5383 = vmatpush1.msra.mxu0 0.0
        %5384 = vmatprep.subr.mxu0 0.0
        %5385 = vmatpush1.msra.mxu0 0.0
        %5386 = vmatprep.subr.mxu0 0.0
        %5387 = vmatpush1.msra.mxu0 0.0
        %5388 = vmatprep.subr.mxu0 0.0
        %5389 = vmatpush1.msra.mxu0 0.0
        %5390 = vmatprep.subr.mxu0 0.0
        %5391 = vmatpush1.msra.mxu0 0.0
        %5392 = vmatprep.subr.mxu0 0.0
        %5393 = vmatpush1.msra.mxu0 0.0
        %5394 = vmatprep.subr.mxu0 0.0
        %5395 = vmatpush1.msra.mxu0 0.0
        %5396 = vmatprep.subr.mxu0 0.0
        %5397 = vmatpush1.msra.mxu0 0.0
        %5398 = vmatprep.subr.mxu0 0.0
        %5399 = vmatpush1.msra.mxu0 0.0
        %5400 = vmatprep.subr.mxu0 0.0
        %5401 = vmatpush1.msra.mxu0 0.0
        %5402 = vmatprep.subr.mxu0 0.0
        %5403 = vmatpush1.msra.mxu0 0.0
        %5404 = vmatprep.subr.mxu0 0.0
        %5405 = vmatpush1.msra.mxu0 0.0
        %5406 = vmatprep.subr.mxu0 0.0
        %5407 = vmatpush1.msra.mxu0 0.0
        %5408 = vmatprep.subr.mxu0 0.0
        %5409 = vmatpush1.msra.mxu0 0.0
        %5410 = vmatprep.subr.mxu0 0.0
        %5411 = vmatpush1.msra.mxu0 0.0
        %5412 = vmatprep.subr.mxu0 0.0
        %5413 = vmatpush1.msra.mxu0 0.0
        %5414 = vmatprep.subr.mxu0 0.0
        %5415 = vmatpush1.msra.mxu0 0.0
        %5416 = vmatprep.subr.mxu0 0.0
        %5417 = vmatpush1.msra.mxu0 0.0
        %5418 = vmatprep.subr.mxu0 0.0
        %5419 = vmatpush1.msra.mxu0 0.0
        %5420 = vmatprep.subr.mxu0 0.0
        %5421 = vmatpush1.msra.mxu0 0.0
        %5422 = vmatprep.subr.mxu0 0.0
        %5423 = vmatpush1.msra.mxu0 0.0
        %5424 = vmatprep.subr.mxu0 0.0
        %5425 = vmatpush1.msra.mxu0 0.0
        %5426 = vmatprep.subr.mxu0 0.0
        %5427 = vmatpush1.msra.mxu0 0.0
        %5428 = vmatprep.subr.mxu0 0.0
        %5429 = vmatpush1.msra.mxu0 0.0
        %5430 = vmatprep.subr.mxu0 0.0
        %5431 = vmatpush1.msra.mxu0 0.0
        %5432 = vmatprep.subr.mxu0 0.0
        %5433 = vmatpush1.msra.mxu0 0.0
        %5434 = vmatprep.mubr.f32.mxu0 0.0
        %v5435 = vand.u32 %v5281, 4294901760
        %5436 = vmatmul.mubr.f32.gmra.mrb[0].mxu0 %v5435
        %v5437 = vpop.f32.mrb[0].mxu0
        %v5438 = vadd.f32 %v5357, %v5437
        %v5439 = vpop.f32.mrb[0].mxu0
        %5440 = vdwg.mxu0
        %5441 = vmatprep.subr.mxu0 0.0
        %v5442 = vand.u32 %v1373, 4294901760
        %v5443 = vsub.f32 %v1373, %v5442
        %5444 = vmatpush1.msra.mxu0 %v5443
        %5445 = vmatprep.subr.mxu0 0.0
        %v5446 = vand.u32 %v1379, 4294901760
        %v5447 = vsub.f32 %v1379, %v5446
        %5448 = vmatpush1.msra.mxu0 %v5447
        %5449 = vmatprep.subr.mxu0 0.0
        %5450 = vmatpush1.msra.mxu0 0.0
        %5451 = vmatprep.subr.mxu0 0.0
        %5452 = vmatpush1.msra.mxu0 0.0
        %5453 = vmatprep.subr.mxu0 0.0
        %5454 = vmatpush1.msra.mxu0 0.0
        %5455 = vmatprep.subr.mxu0 0.0
        %5456 = vmatpush1.msra.mxu0 0.0
        %5457 = vmatprep.subr.mxu0 0.0
        %5458 = vmatpush1.msra.mxu0 0.0
        %5459 = vmatprep.subr.mxu0 0.0
        %5460 = vmatpush1.msra.mxu0 0.0
        %5461 = vmatprep.subr.mxu0 0.0
        %5462 = vmatpush1.msra.mxu0 0.0
        %5463 = vmatprep.subr.mxu0 0.0
        %5464 = vmatpush1.msra.mxu0 0.0
        %5465 = vmatprep.subr.mxu0 0.0
        %5466 = vmatpush1.msra.mxu0 0.0
        %5467 = vmatprep.subr.mxu0 0.0
        %5468 = vmatpush1.msra.mxu0 0.0
        %5469 = vmatprep.subr.mxu0 0.0
        %5470 = vmatpush1.msra.mxu0 0.0
        %5471 = vmatprep.subr.mxu0 0.0
        %5472 = vmatpush1.msra.mxu0 0.0
        %5473 = vmatprep.subr.mxu0 0.0
        %5474 = vmatpush1.msra.mxu0 0.0
        %5475 = vmatprep.subr.mxu0 0.0
        %5476 = vmatpush1.msra.mxu0 0.0
        %5477 = vmatprep.subr.mxu0 0.0
        %5478 = vmatpush1.msra.mxu0 0.0
        %5479 = vmatprep.subr.mxu0 0.0
        %5480 = vmatpush1.msra.mxu0 0.0
        %5481 = vmatprep.subr.mxu0 0.0
        %5482 = vmatpush1.msra.mxu0 0.0
        %5483 = vmatprep.subr.mxu0 0.0
        %5484 = vmatpush1.msra.mxu0 0.0
        %5485 = vmatprep.subr.mxu0 0.0
        %5486 = vmatpush1.msra.mxu0 0.0
        %5487 = vmatprep.subr.mxu0 0.0
        %5488 = vmatpush1.msra.mxu0 0.0
        %5489 = vmatprep.subr.mxu0 0.0
        %5490 = vmatpush1.msra.mxu0 0.0
        %5491 = vmatprep.subr.mxu0 0.0
        %5492 = vmatpush1.msra.mxu0 0.0
        %5493 = vmatprep.subr.mxu0 0.0
        %5494 = vmatpush1.msra.mxu0 0.0
        %5495 = vmatprep.subr.mxu0 0.0
        %5496 = vmatpush1.msra.mxu0 0.0
        %5497 = vmatprep.subr.mxu0 0.0
        %5498 = vmatpush1.msra.mxu0 0.0
        %5499 = vmatprep.subr.mxu0 0.0
        %5500 = vmatpush1.msra.mxu0 0.0
        %5501 = vmatprep.subr.mxu0 0.0
        %5502 = vmatpush1.msra.mxu0 0.0
        %5503 = vmatprep.subr.mxu0 0.0
        %5504 = vmatpush1.msra.mxu0 0.0
        %5505 = vmatprep.subr.mxu0 0.0
        %5506 = vmatpush1.msra.mxu0 0.0
        %5507 = vmatprep.subr.mxu0 0.0
        %5508 = vmatpush1.msra.mxu0 0.0
        %5509 = vmatprep.mubr.f32.mxu0 0.0
        %v5510 = vand.u32 %v5281, 4294901760
        %v5511 = vsub.f32 %v5281, %v5510
        %5512 = vmatmul.mubr.f32.gmra.mrb[0].mxu0 %v5511
        %v5513 = vpop.f32.mrb[0].mxu0
        %v5514 = vadd.f32 %v5438, %v5513
        %v5515 = vpop.f32.mrb[0].mxu0
        %5516 = vdwg.mxu0
        %5517 = vmatprep.subr.mxu0 0.0
        %v5518 = vand.u32 %v1373, 4294901760
        %5519 = vmatpush1.msra.mxu0 %v5518
        %5520 = vmatprep.subr.mxu0 0.0
        %v5521 = vand.u32 %v1379, 4294901760
        %5522 = vmatpush1.msra.mxu0 %v5521
        %5523 = vmatprep.subr.mxu0 0.0
        %5524 = vmatpush1.msra.mxu0 0.0
        %5525 = vmatprep.subr.mxu0 0.0
        %5526 = vmatpush1.msra.mxu0 0.0
        %5527 = vmatprep.subr.mxu0 0.0
        %5528 = vmatpush1.msra.mxu0 0.0
        %5529 = vmatprep.subr.mxu0 0.0
        %5530 = vmatpush1.msra.mxu0 0.0
        %5531 = vmatprep.subr.mxu0 0.0
        %5532 = vmatpush1.msra.mxu0 0.0
        %5533 = vmatprep.subr.mxu0 0.0
        %5534 = vmatpush1.msra.mxu0 0.0
        %5535 = vmatprep.subr.mxu0 0.0
        %5536 = vmatpush1.msra.mxu0 0.0
        %5537 = vmatprep.subr.mxu0 0.0
        %5538 = vmatpush1.msra.mxu0 0.0
        %5539 = vmatprep.subr.mxu0 0.0
        %5540 = vmatpush1.msra.mxu0 0.0
        %5541 = vmatprep.subr.mxu0 0.0
        %5542 = vmatpush1.msra.mxu0 0.0
        %5543 = vmatprep.subr.mxu0 0.0
        %5544 = vmatpush1.msra.mxu0 0.0
        %5545 = vmatprep.subr.mxu0 0.0
        %5546 = vmatpush1.msra.mxu0 0.0
        %5547 = vmatprep.subr.mxu0 0.0
        %5548 = vmatpush1.msra.mxu0 0.0
        %5549 = vmatprep.subr.mxu0 0.0
        %5550 = vmatpush1.msra.mxu0 0.0
        %5551 = vmatprep.subr.mxu0 0.0
        %5552 = vmatpush1.msra.mxu0 0.0
        %5553 = vmatprep.subr.mxu0 0.0
        %5554 = vmatpush1.msra.mxu0 0.0
        %5555 = vmatprep.subr.mxu0 0.0
        %5556 = vmatpush1.msra.mxu0 0.0
        %5557 = vmatprep.subr.mxu0 0.0
        %5558 = vmatpush1.msra.mxu0 0.0
        %5559 = vmatprep.subr.mxu0 0.0
        %5560 = vmatpush1.msra.mxu0 0.0
        %5561 = vmatprep.subr.mxu0 0.0
        %5562 = vmatpush1.msra.mxu0 0.0
        %5563 = vmatprep.subr.mxu0 0.0
        %5564 = vmatpush1.msra.mxu0 0.0
        %5565 = vmatprep.subr.mxu0 0.0
        %5566 = vmatpush1.msra.mxu0 0.0
        %5567 = vmatprep.subr.mxu0 0.0
        %5568 = vmatpush1.msra.mxu0 0.0
        %5569 = vmatprep.subr.mxu0 0.0
        %5570 = vmatpush1.msra.mxu0 0.0
        %5571 = vmatprep.subr.mxu0 0.0
        %5572 = vmatpush1.msra.mxu0 0.0
        %5573 = vmatprep.subr.mxu0 0.0
        %5574 = vmatpush1.msra.mxu0 0.0
        %5575 = vmatprep.subr.mxu0 0.0
        %5576 = vmatpush1.msra.mxu0 0.0
        %5577 = vmatprep.subr.mxu0 0.0
        %5578 = vmatpush1.msra.mxu0 0.0
        %5579 = vmatprep.subr.mxu0 0.0
        %5580 = vmatpush1.msra.mxu0 0.0
        %5581 = vmatprep.subr.mxu0 0.0
        %5582 = vmatpush1.msra.mxu0 0.0
        %5583 = vmatprep.mubr.f32.mxu0 0.0
        %v5584 = vand.u32 %v5281, 4294901760
        %v5585 = vsub.f32 %v5281, %v5584
        %v5586 = vand.u32 %v5585, 4294901760
        %5587 = vmatmul.mubr.f32.gmra.mrb[0].mxu0 %v5586
        %v5588 = vpop.f32.mrb[0].mxu0
        %v5589 = vadd.f32 %v5514, %v5588
        %v5590 = vpop.f32.mrb[0].mxu0
        %5591 = vdwg.mxu0
        %5592 = vmatprep.subr.mxu0 0.0
        %v5593 = vand.u32 %v1373, 4294901760
        %v5594 = vsub.f32 %v1373, %v5593
        %v5595 = vand.u32 %v5594, 4294901760
        %5596 = vmatpush1.msra.mxu0 %v5595
        %5597 = vmatprep.subr.mxu0 0.0
        %v5598 = vand.u32 %v1379, 4294901760
        %v5599 = vsub.f32 %v1379, %v5598
        %v5600 = vand.u32 %v5599, 4294901760
        %5601 = vmatpush1.msra.mxu0 %v5600
        %5602 = vmatprep.subr.mxu0 0.0
        %5603 = vmatpush1.msra.mxu0 0.0
        %5604 = vmatprep.subr.mxu0 0.0
        %5605 = vmatpush1.msra.mxu0 0.0
        %5606 = vmatprep.subr.mxu0 0.0
        %5607 = vmatpush1.msra.mxu0 0.0
        %5608 = vmatprep.subr.mxu0 0.0
        %5609 = vmatpush1.msra.mxu0 0.0
        %5610 = vmatprep.subr.mxu0 0.0
        %5611 = vmatpush1.msra.mxu0 0.0
        %5612 = vmatprep.subr.mxu0 0.0
        %5613 = vmatpush1.msra.mxu0 0.0
        %5614 = vmatprep.subr.mxu0 0.0
        %5615 = vmatpush1.msra.mxu0 0.0
        %5616 = vmatprep.subr.mxu0 0.0
        %5617 = vmatpush1.msra.mxu0 0.0
        %5618 = vmatprep.subr.mxu0 0.0
        %5619 = vmatpush1.msra.mxu0 0.0
        %5620 = vmatprep.subr.mxu0 0.0
        %5621 = vmatpush1.msra.mxu0 0.0
        %5622 = vmatprep.subr.mxu0 0.0
        %5623 = vmatpush1.msra.mxu0 0.0
        %5624 = vmatprep.subr.mxu0 0.0
        %5625 = vmatpush1.msra.mxu0 0.0
        %5626 = vmatprep.subr.mxu0 0.0
        %5627 = vmatpush1.msra.mxu0 0.0
        %5628 = vmatprep.subr.mxu0 0.0
        %5629 = vmatpush1.msra.mxu0 0.0
        %5630 = vmatprep.subr.mxu0 0.0
        %5631 = vmatpush1.msra.mxu0 0.0
        %5632 = vmatprep.subr.mxu0 0.0
        %5633 = vmatpush1.msra.mxu0 0.0
        %5634 = vmatprep.subr.mxu0 0.0
        %5635 = vmatpush1.msra.mxu0 0.0
        %5636 = vmatprep.subr.mxu0 0.0
        %5637 = vmatpush1.msra.mxu0 0.0
        %5638 = vmatprep.subr.mxu0 0.0
        %5639 = vmatpush1.msra.mxu0 0.0
        %5640 = vmatprep.subr.mxu0 0.0
        %5641 = vmatpush1.msra.mxu0 0.0
        %5642 = vmatprep.subr.mxu0 0.0
        %5643 = vmatpush1.msra.mxu0 0.0
        %5644 = vmatprep.subr.mxu0 0.0
        %5645 = vmatpush1.msra.mxu0 0.0
        %5646 = vmatprep.subr.mxu0 0.0
        %5647 = vmatpush1.msra.mxu0 0.0
        %5648 = vmatprep.subr.mxu0 0.0
        %5649 = vmatpush1.msra.mxu0 0.0
        %5650 = vmatprep.subr.mxu0 0.0
        %5651 = vmatpush1.msra.mxu0 0.0
        %5652 = vmatprep.subr.mxu0 0.0
        %5653 = vmatpush1.msra.mxu0 0.0
        %5654 = vmatprep.subr.mxu0 0.0
        %5655 = vmatpush1.msra.mxu0 0.0
        %5656 = vmatprep.subr.mxu0 0.0
        %5657 = vmatpush1.msra.mxu0 0.0
        %5658 = vmatprep.subr.mxu0 0.0
        %5659 = vmatpush1.msra.mxu0 0.0
        %5660 = vmatprep.subr.mxu0 0.0
        %5661 = vmatpush1.msra.mxu0 0.0
        %5662 = vmatprep.mubr.f32.mxu0 0.0
        %v5663 = vand.u32 %v5281, 4294901760
        %5664 = vmatmul.mubr.f32.gmra.mrb[0].mxu0 %v5663
        %v5665 = vpop.f32.mrb[0].mxu0
        %v5666 = vadd.f32 %v5589, %v5665
        %v5667 = vpop.f32.mrb[0].mxu0
        %5668 = vdwg.mxu0
        %5669 = vmatprep.subr.mxu0 0.0
        %v5670 = vand.u32 %v1373, 4294901760
        %5671 = vmatpush1.msra.mxu0 %v5670
        %5672 = vmatprep.subr.mxu0 0.0
        %v5673 = vand.u32 %v1379, 4294901760
        %5674 = vmatpush1.msra.mxu0 %v5673
        %5675 = vmatprep.subr.mxu0 0.0
        %5676 = vmatpush1.msra.mxu0 0.0
        %5677 = vmatprep.subr.mxu0 0.0
        %5678 = vmatpush1.msra.mxu0 0.0
        %5679 = vmatprep.subr.mxu0 0.0
        %5680 = vmatpush1.msra.mxu0 0.0
        %5681 = vmatprep.subr.mxu0 0.0
        %5682 = vmatpush1.msra.mxu0 0.0
        %5683 = vmatprep.subr.mxu0 0.0
        %5684 = vmatpush1.msra.mxu0 0.0
        %5685 = vmatprep.subr.mxu0 0.0
        %5686 = vmatpush1.msra.mxu0 0.0
        %5687 = vmatprep.subr.mxu0 0.0
        %5688 = vmatpush1.msra.mxu0 0.0
        %5689 = vmatprep.subr.mxu0 0.0
        %5690 = vmatpush1.msra.mxu0 0.0
        %5691 = vmatprep.subr.mxu0 0.0
        %5692 = vmatpush1.msra.mxu0 0.0
        %5693 = vmatprep.subr.mxu0 0.0
        %5694 = vmatpush1.msra.mxu0 0.0
        %5695 = vmatprep.subr.mxu0 0.0
        %5696 = vmatpush1.msra.mxu0 0.0
        %5697 = vmatprep.subr.mxu0 0.0
        %5698 = vmatpush1.msra.mxu0 0.0
        %5699 = vmatprep.subr.mxu0 0.0
        %5700 = vmatpush1.msra.mxu0 0.0
        %5701 = vmatprep.subr.mxu0 0.0
        %5702 = vmatpush1.msra.mxu0 0.0
        %5703 = vmatprep.subr.mxu0 0.0
        %5704 = vmatpush1.msra.mxu0 0.0
        %5705 = vmatprep.subr.mxu0 0.0
        %5706 = vmatpush1.msra.mxu0 0.0
        %5707 = vmatprep.subr.mxu0 0.0
        %5708 = vmatpush1.msra.mxu0 0.0
        %5709 = vmatprep.subr.mxu0 0.0
        %5710 = vmatpush1.msra.mxu0 0.0
        %5711 = vmatprep.subr.mxu0 0.0
        %5712 = vmatpush1.msra.mxu0 0.0
        %5713 = vmatprep.subr.mxu0 0.0
        %5714 = vmatpush1.msra.mxu0 0.0
        %5715 = vmatprep.subr.mxu0 0.0
        %5716 = vmatpush1.msra.mxu0 0.0
        %5717 = vmatprep.subr.mxu0 0.0
        %5718 = vmatpush1.msra.mxu0 0.0
        %5719 = vmatprep.subr.mxu0 0.0
        %5720 = vmatpush1.msra.mxu0 0.0
        %5721 = vmatprep.subr.mxu0 0.0
        %5722 = vmatpush1.msra.mxu0 0.0
        %5723 = vmatprep.subr.mxu0 0.0
        %5724 = vmatpush1.msra.mxu0 0.0
        %5725 = vmatprep.subr.mxu0 0.0
        %5726 = vmatpush1.msra.mxu0 0.0
        %5727 = vmatprep.subr.mxu0 0.0
        %5728 = vmatpush1.msra.mxu0 0.0
        %5729 = vmatprep.subr.mxu0 0.0
        %5730 = vmatpush1.msra.mxu0 0.0
        %5731 = vmatprep.subr.mxu0 0.0
        %5732 = vmatpush1.msra.mxu0 0.0
        %5733 = vmatprep.subr.mxu0 0.0
        %5734 = vmatpush1.msra.mxu0 0.0
        %5735 = vmatprep.mubr.f32.mxu0 0.0
        %v5736 = vand.u32 %v5281, 4294901760
        %5737 = vmatmul.mubr.f32.gmra.mrb[0].mxu0 %v5736
        %v5738 = vpop.f32.mrb[0].mxu0
        %v5739 = vadd.f32 %v5666, %v5738
        %v5740 = vpop.f32.mrb[0].mxu0
        %5741 = vdwg.mxu0
        %5742 = vmatprep.subr.mxu0 0.0
        %v5743 = vand.u32 %v1840, 4294901760
        %5744 = vmatpush1.msra.mxu0 %v5743
        %5745 = vmatprep.subr.mxu0 0.0
        %v5746 = vand.u32 %v1841, 4294901760
        %5747 = vmatpush1.msra.mxu0 %v5746
        %5748 = vmatprep.subr.mxu0 0.0
        %v5749 = vand.u32 %v1842, 4294901760
        %5750 = vmatpush1.msra.mxu0 %v5749
        %5751 = vmatprep.subr.mxu0 0.0
        %v5752 = vand.u32 %v1843, 4294901760
        %5753 = vmatpush1.msra.mxu0 %v5752
        %5754 = vmatprep.subr.mxu0 0.0
        %v5755 = vand.u32 %v1844, 4294901760
        %5756 = vmatpush1.msra.mxu0 %v5755
        %5757 = vmatprep.subr.mxu0 0.0
        %v5758 = vand.u32 %v1845, 4294901760
        %5759 = vmatpush1.msra.mxu0 %v5758
        %5760 = vmatprep.subr.mxu0 0.0
        %v5761 = vand.u32 %v1846, 4294901760
        %5762 = vmatpush1.msra.mxu0 %v5761
        %5763 = vmatprep.subr.mxu0 0.0
        %v5764 = vand.u32 %v1847, 4294901760
        %5765 = vmatpush1.msra.mxu0 %v5764
        %5766 = vmatprep.subr.mxu0 0.0
        %v5767 = vand.u32 %v1848, 4294901760
        %5768 = vmatpush1.msra.mxu0 %v5767
        %5769 = vmatprep.subr.mxu0 0.0
        %v5770 = vand.u32 %v1849, 4294901760
        %5771 = vmatpush1.msra.mxu0 %v5770
        %5772 = vmatprep.subr.mxu0 0.0
        %v5773 = vand.u32 %v1850, 4294901760
        %5774 = vmatpush1.msra.mxu0 %v5773
        %5775 = vmatprep.subr.mxu0 0.0
        %v5776 = vand.u32 %v1851, 4294901760
        %5777 = vmatpush1.msra.mxu0 %v5776
        %5778 = vmatprep.subr.mxu0 0.0
        %v5779 = vand.u32 %v1852, 4294901760
        %5780 = vmatpush1.msra.mxu0 %v5779
        %5781 = vmatprep.subr.mxu0 0.0
        %v5782 = vand.u32 %v1853, 4294901760
        %5783 = vmatpush1.msra.mxu0 %v5782
        %5784 = vmatprep.subr.mxu0 0.0
        %v5785 = vand.u32 %v1854, 4294901760
        %5786 = vmatpush1.msra.mxu0 %v5785
        %5787 = vmatprep.subr.mxu0 0.0
        %v5788 = vand.u32 %v1855, 4294901760
        %5789 = vmatpush1.msra.mxu0 %v5788
        %5790 = vmatprep.subr.mxu0 0.0
        %5791 = vmatpush1.msra.mxu0 0.0
        %5792 = vmatprep.subr.mxu0 0.0
        %5793 = vmatpush1.msra.mxu0 0.0
        %5794 = vmatprep.subr.mxu0 0.0
        %5795 = vmatpush1.msra.mxu0 0.0
        %5796 = vmatprep.subr.mxu0 0.0
        %5797 = vmatpush1.msra.mxu0 0.0
        %5798 = vmatprep.subr.mxu0 0.0
        %5799 = vmatpush1.msra.mxu0 0.0
        %5800 = vmatprep.subr.mxu0 0.0
        %5801 = vmatpush1.msra.mxu0 0.0
        %5802 = vmatprep.subr.mxu0 0.0
        %5803 = vmatpush1.msra.mxu0 0.0
        %5804 = vmatprep.subr.mxu0 0.0
        %5805 = vmatpush1.msra.mxu0 0.0
        %5806 = vmatprep.subr.mxu0 0.0
        %5807 = vmatpush1.msra.mxu0 0.0
        %5808 = vmatprep.subr.mxu0 0.0
        %5809 = vmatpush1.msra.mxu0 0.0
        %5810 = vmatprep.subr.mxu0 0.0
        %5811 = vmatpush1.msra.mxu0 0.0
        %5812 = vmatprep.subr.mxu0 0.0
        %5813 = vmatpush1.msra.mxu0 0.0
        %5814 = vmatprep.subr.mxu0 0.0
        %5815 = vmatpush1.msra.mxu0 0.0
        %5816 = vmatprep.subr.mxu0 0.0
        %5817 = vmatpush1.msra.mxu0 0.0
        %5818 = vmatprep.subr.mxu0 0.0
        %5819 = vmatpush1.msra.mxu0 0.0
        %5820 = vmatprep.subr.mxu0 0.0
        %5821 = vmatpush1.msra.mxu0 0.0
        %5822 = vmatprep.mubr.f32.mxu0 0.0
        %v5823 = vand.u32 %v5739, 4294901760
        %v5824 = vsub.f32 %v5739, %v5823
        %v5825 = vand.u32 %v5824, 4294901760
        %v5826 = vsub.f32 %v5824, %v5825
        %v5827 = vand.u32 %v5826, 4294901760
        %5828 = vmatmul.mubr.f32.gmra.mrb[0].mxu0 %v5827
        %v5829 = vpop.f32.mrb[0].mxu0
        %v5830 = vadd.f32 0.0, %v5829
        %v5831 = vpop.f32.mrb[0].mxu0
        %5832 = vdwg.mxu0
        %5833 = vmatprep.subr.mxu0 0.0
        %v5834 = vand.u32 %v1840, 4294901760
        %v5835 = vsub.f32 %v1840, %v5834
        %v5836 = vand.u32 %v5835, 4294901760
        %v5837 = vsub.f32 %v5835, %v5836
        %v5838 = vand.u32 %v5837, 4294901760
        %5839 = vmatpush1.msra.mxu0 %v5838
        %5840 = vmatprep.subr.mxu0 0.0
        %v5841 = vand.u32 %v1841, 4294901760
        %v5842 = vsub.f32 %v1841, %v5841
        %v5843 = vand.u32 %v5842, 4294901760
        %v5844 = vsub.f32 %v5842, %v5843
        %v5845 = vand.u32 %v5844, 4294901760
        %5846 = vmatpush1.msra.mxu0 %v5845
        %5847 = vmatprep.subr.mxu0 0.0
        %v5848 = vand.u32 %v1842, 4294901760
        %v5849 = vsub.f32 %v1842, %v5848
        %v5850 = vand.u32 %v5849, 4294901760
        %v5851 = vsub.f32 %v5849, %v5850
        %v5852 = vand.u32 %v5851, 4294901760
        %5853 = vmatpush1.msra.mxu0 %v5852
        %5854 = vmatprep.subr.mxu0 0.0
        %v5855 = vand.u32 %v1843, 4294901760
        %v5856 = vsub.f32 %v1843, %v5855
        %v5857 = vand.u32 %v5856, 4294901760
        %v5858 = vsub.f32 %v5856, %v5857
        %v5859 = vand.u32 %v5858, 4294901760
        %5860 = vmatpush1.msra.mxu0 %v5859
        %5861 = vmatprep.subr.mxu0 0.0
        %v5862 = vand.u32 %v1844, 4294901760
        %v5863 = vsub.f32 %v1844, %v5862
        %v5864 = vand.u32 %v5863, 4294901760
        %v5865 = vsub.f32 %v5863, %v5864
        %v5866 = vand.u32 %v5865, 4294901760
        %5867 = vmatpush1.msra.mxu0 %v5866
        %5868 = vmatprep.subr.mxu0 0.0
        %v5869 = vand.u32 %v1845, 4294901760
        %v5870 = vsub.f32 %v1845, %v5869
        %v5871 = vand.u32 %v5870, 4294901760
        %v5872 = vsub.f32 %v5870, %v5871
        %v5873 = vand.u32 %v5872, 4294901760
        %5874 = vmatpush1.msra.mxu0 %v5873
        %5875 = vmatprep.subr.mxu0 0.0
        %v5876 = vand.u32 %v1846, 4294901760
        %v5877 = vsub.f32 %v1846, %v5876
        %v5878 = vand.u32 %v5877, 4294901760
        %v5879 = vsub.f32 %v5877, %v5878
        %v5880 = vand.u32 %v5879, 4294901760
        %5881 = vmatpush1.msra.mxu0 %v5880
        %5882 = vmatprep.subr.mxu0 0.0
        %v5883 = vand.u32 %v1847, 4294901760
        %v5884 = vsub.f32 %v1847, %v5883
        %v5885 = vand.u32 %v5884, 4294901760
        %v5886 = vsub.f32 %v5884, %v5885
        %v5887 = vand.u32 %v5886, 4294901760
        %5888 = vmatpush1.msra.mxu0 %v5887
        %5889 = vmatprep.subr.mxu0 0.0
        %v5890 = vand.u32 %v1848, 4294901760
        %v5891 = vsub.f32 %v1848, %v5890
        %v5892 = vand.u32 %v5891, 4294901760
        %v5893 = vsub.f32 %v5891, %v5892
        %v5894 = vand.u32 %v5893, 4294901760
        %5895 = vmatpush1.msra.mxu0 %v5894
        %5896 = vmatprep.subr.mxu0 0.0
        %v5897 = vand.u32 %v1849, 4294901760
        %v5898 = vsub.f32 %v1849, %v5897
        %v5899 = vand.u32 %v5898, 4294901760
        %v5900 = vsub.f32 %v5898, %v5899
        %v5901 = vand.u32 %v5900, 4294901760
        %5902 = vmatpush1.msra.mxu0 %v5901
        %5903 = vmatprep.subr.mxu0 0.0
        %v5904 = vand.u32 %v1850, 4294901760
        %v5905 = vsub.f32 %v1850, %v5904
        %v5906 = vand.u32 %v5905, 4294901760
        %v5907 = vsub.f32 %v5905, %v5906
        %v5908 = vand.u32 %v5907, 4294901760
        %5909 = vmatpush1.msra.mxu0 %v5908
        %5910 = vmatprep.subr.mxu0 0.0
        %v5911 = vand.u32 %v1851, 4294901760
        %v5912 = vsub.f32 %v1851, %v5911
        %v5913 = vand.u32 %v5912, 4294901760
        %v5914 = vsub.f32 %v5912, %v5913
        %v5915 = vand.u32 %v5914, 4294901760
        %5916 = vmatpush1.msra.mxu0 %v5915
        %5917 = vmatprep.subr.mxu0 0.0
        %v5918 = vand.u32 %v1852, 4294901760
        %v5919 = vsub.f32 %v1852, %v5918
        %v5920 = vand.u32 %v5919, 4294901760
        %v5921 = vsub.f32 %v5919, %v5920
        %v5922 = vand.u32 %v5921, 4294901760
        %5923 = vmatpush1.msra.mxu0 %v5922
        %5924 = vmatprep.subr.mxu0 0.0
        %v5925 = vand.u32 %v1853, 4294901760
        %v5926 = vsub.f32 %v1853, %v5925
        %v5927 = vand.u32 %v5926, 4294901760
        %v5928 = vsub.f32 %v5926, %v5927
        %v5929 = vand.u32 %v5928, 4294901760
        %5930 = vmatpush1.msra.mxu0 %v5929
        %5931 = vmatprep.subr.mxu0 0.0
        %v5932 = vand.u32 %v1854, 4294901760
        %v5933 = vsub.f32 %v1854, %v5932
        %v5934 = vand.u32 %v5933, 4294901760
        %v5935 = vsub.f32 %v5933, %v5934
        %v5936 = vand.u32 %v5935, 4294901760
        %5937 = vmatpush1.msra.mxu0 %v5936
        %5938 = vmatprep.subr.mxu0 0.0
        %v5939 = vand.u32 %v1855, 4294901760
        %v5940 = vsub.f32 %v1855, %v5939
        %v5941 = vand.u32 %v5940, 4294901760
        %v5942 = vsub.f32 %v5940, %v5941
        %v5943 = vand.u32 %v5942, 4294901760
        %5944 = vmatpush1.msra.mxu0 %v5943
        %5945 = vmatprep.subr.mxu0 0.0
        %5946 = vmatpush1.msra.mxu0 0.0
        %5947 = vmatprep.subr.mxu0 0.0
        %5948 = vmatpush1.msra.mxu0 0.0
        %5949 = vmatprep.subr.mxu0 0.0
        %5950 = vmatpush1.msra.mxu0 0.0
        %5951 = vmatprep.subr.mxu0 0.0
        %5952 = vmatpush1.msra.mxu0 0.0
        %5953 = vmatprep.subr.mxu0 0.0
        %5954 = vmatpush1.msra.mxu0 0.0
        %5955 = vmatprep.subr.mxu0 0.0
        %5956 = vmatpush1.msra.mxu0 0.0
        %5957 = vmatprep.subr.mxu0 0.0
        %5958 = vmatpush1.msra.mxu0 0.0
        %5959 = vmatprep.subr.mxu0 0.0
        %5960 = vmatpush1.msra.mxu0 0.0
        %5961 = vmatprep.subr.mxu0 0.0
        %5962 = vmatpush1.msra.mxu0 0.0
        %5963 = vmatprep.subr.mxu0 0.0
        %5964 = vmatpush1.msra.mxu0 0.0
        %5965 = vmatprep.subr.mxu0 0.0
        %5966 = vmatpush1.msra.mxu0 0.0
        %5967 = vmatprep.subr.mxu0 0.0
        %5968 = vmatpush1.msra.mxu0 0.0
        %5969 = vmatprep.subr.mxu0 0.0
        %5970 = vmatpush1.msra.mxu0 0.0
        %5971 = vmatprep.subr.mxu0 0.0
        %5972 = vmatpush1.msra.mxu0 0.0
        %5973 = vmatprep.subr.mxu0 0.0
        %5974 = vmatpush1.msra.mxu0 0.0
        %5975 = vmatprep.subr.mxu0 0.0
        %5976 = vmatpush1.msra.mxu0 0.0
        %5977 = vmatprep.mubr.f32.mxu0 0.0
        %v5978 = vand.u32 %v5739, 4294901760
        %5979 = vmatmul.mubr.f32.gmra.mrb[0].mxu0 %v5978
        %v5980 = vpop.f32.mrb[0].mxu0
        %v5981 = vadd.f32 %v5830, %v5980
        %v5982 = vpop.f32.mrb[0].mxu0
        %5983 = vdwg.mxu0
        %5984 = vmatprep.subr.mxu0 0.0
        %v5985 = vand.u32 %v1840, 4294901760
        %v5986 = vsub.f32 %v1840, %v5985
        %5987 = vmatpush1.msra.mxu0 %v5986
        %5988 = vmatprep.subr.mxu0 0.0
        %v5989 = vand.u32 %v1841, 4294901760
        %v5990 = vsub.f32 %v1841, %v5989
        %5991 = vmatpush1.msra.mxu0 %v5990
        %5992 = vmatprep.subr.mxu0 0.0
        %v5993 = vand.u32 %v1842, 4294901760
        %v5994 = vsub.f32 %v1842, %v5993
        %5995 = vmatpush1.msra.mxu0 %v5994
        %5996 = vmatprep.subr.mxu0 0.0
        %v5997 = vand.u32 %v1843, 4294901760
        %v5998 = vsub.f32 %v1843, %v5997
        %5999 = vmatpush1.msra.mxu0 %v5998
        %6000 = vmatprep.subr.mxu0 0.0
        %v6001 = vand.u32 %v1844, 4294901760
        %v6002 = vsub.f32 %v1844, %v6001
        %6003 = vmatpush1.msra.mxu0 %v6002
        %6004 = vmatprep.subr.mxu0 0.0
        %v6005 = vand.u32 %v1845, 4294901760
        %v6006 = vsub.f32 %v1845, %v6005
        %6007 = vmatpush1.msra.mxu0 %v6006
        %6008 = vmatprep.subr.mxu0 0.0
        %v6009 = vand.u32 %v1846, 4294901760
        %v6010 = vsub.f32 %v1846, %v6009
        %6011 = vmatpush1.msra.mxu0 %v6010
        %6012 = vmatprep.subr.mxu0 0.0
        %v6013 = vand.u32 %v1847, 4294901760
        %v6014 = vsub.f32 %v1847, %v6013
        %6015 = vmatpush1.msra.mxu0 %v6014
        %6016 = vmatprep.subr.mxu0 0.0
        %v6017 = vand.u32 %v1848, 4294901760
        %v6018 = vsub.f32 %v1848, %v6017
        %6019 = vmatpush1.msra.mxu0 %v6018
        %6020 = vmatprep.subr.mxu0 0.0
        %v6021 = vand.u32 %v1849, 4294901760
        %v6022 = vsub.f32 %v1849, %v6021
        %6023 = vmatpush1.msra.mxu0 %v6022
        %6024 = vmatprep.subr.mxu0 0.0
        %v6025 = vand.u32 %v1850, 4294901760
        %v6026 = vsub.f32 %v1850, %v6025
        %6027 = vmatpush1.msra.mxu0 %v6026
        %6028 = vmatprep.subr.mxu0 0.0
        %v6029 = vand.u32 %v1851, 4294901760
        %v6030 = vsub.f32 %v1851, %v6029
        %6031 = vmatpush1.msra.mxu0 %v6030
        %6032 = vmatprep.subr.mxu0 0.0
        %v6033 = vand.u32 %v1852, 4294901760
        %v6034 = vsub.f32 %v1852, %v6033
        %6035 = vmatpush1.msra.mxu0 %v6034
        %6036 = vmatprep.subr.mxu0 0.0
        %v6037 = vand.u32 %v1853, 4294901760
        %v6038 = vsub.f32 %v1853, %v6037
        %6039 = vmatpush1.msra.mxu0 %v6038
        %6040 = vmatprep.subr.mxu0 0.0
        %v6041 = vand.u32 %v1854, 4294901760
        %v6042 = vsub.f32 %v1854, %v6041
        %6043 = vmatpush1.msra.mxu0 %v6042
        %6044 = vmatprep.subr.mxu0 0.0
        %v6045 = vand.u32 %v1855, 4294901760
        %v6046 = vsub.f32 %v1855, %v6045
        %6047 = vmatpush1.msra.mxu0 %v6046
        %6048 = vmatprep.subr.mxu0 0.0
        %6049 = vmatpush1.msra.mxu0 0.0
        %6050 = vmatprep.subr.mxu0 0.0
        %6051 = vmatpush1.msra.mxu0 0.0
        %6052 = vmatprep.subr.mxu0 0.0
        %6053 = vmatpush1.msra.mxu0 0.0
        %6054 = vmatprep.subr.mxu0 0.0
        %6055 = vmatpush1.msra.mxu0 0.0
        %6056 = vmatprep.subr.mxu0 0.0
        %6057 = vmatpush1.msra.mxu0 0.0
        %6058 = vmatprep.subr.mxu0 0.0
        %6059 = vmatpush1.msra.mxu0 0.0
        %6060 = vmatprep.subr.mxu0 0.0
        %6061 = vmatpush1.msra.mxu0 0.0
        %6062 = vmatprep.subr.mxu0 0.0
        %6063 = vmatpush1.msra.mxu0 0.0
        %6064 = vmatprep.subr.mxu0 0.0
        %6065 = vmatpush1.msra.mxu0 0.0
        %6066 = vmatprep.subr.mxu0 0.0
        %6067 = vmatpush1.msra.mxu0 0.0
        %6068 = vmatprep.subr.mxu0 0.0
        %6069 = vmatpush1.msra.mxu0 0.0
        %6070 = vmatprep.subr.mxu0 0.0
        %6071 = vmatpush1.msra.mxu0 0.0
        %6072 = vmatprep.subr.mxu0 0.0
        %6073 = vmatpush1.msra.mxu0 0.0
        %6074 = vmatprep.subr.mxu0 0.0
        %6075 = vmatpush1.msra.mxu0 0.0
        %6076 = vmatprep.subr.mxu0 0.0
        %6077 = vmatpush1.msra.mxu0 0.0
        %6078 = vmatprep.subr.mxu0 0.0
        %6079 = vmatpush1.msra.mxu0 0.0
        %6080 = vmatprep.mubr.f32.mxu0 0.0
        %v6081 = vand.u32 %v5739, 4294901760
        %v6082 = vsub.f32 %v5739, %v6081
        %6083 = vmatmul.mubr.f32.gmra.mrb[0].mxu0 %v6082
        %v6084 = vpop.f32.mrb[0].mxu0
        %v6085 = vadd.f32 %v5981, %v6084
        %v6086 = vpop.f32.mrb[0].mxu0
        %6087 = vdwg.mxu0
        %6088 = vmatprep.subr.mxu0 0.0
        %v6089 = vand.u32 %v1840, 4294901760
        %6090 = vmatpush1.msra.mxu0 %v6089
        %6091 = vmatprep.subr.mxu0 0.0
        %v6092 = vand.u32 %v1841, 4294901760
        %6093 = vmatpush1.msra.mxu0 %v6092
        %6094 = vmatprep.subr.mxu0 0.0
        %v6095 = vand.u32 %v1842, 4294901760
        %6096 = vmatpush1.msra.mxu0 %v6095
        %6097 = vmatprep.subr.mxu0 0.0
        %v6098 = vand.u32 %v1843, 4294901760
        %6099 = vmatpush1.msra.mxu0 %v6098
        %6100 = vmatprep.subr.mxu0 0.0
        %v6101 = vand.u32 %v1844, 4294901760
        %6102 = vmatpush1.msra.mxu0 %v6101
        %6103 = vmatprep.subr.mxu0 0.0
        %v6104 = vand.u32 %v1845, 4294901760
        %6105 = vmatpush1.msra.mxu0 %v6104
        %6106 = vmatprep.subr.mxu0 0.0
        %v6107 = vand.u32 %v1846, 4294901760
        %6108 = vmatpush1.msra.mxu0 %v6107
        %6109 = vmatprep.subr.mxu0 0.0
        %v6110 = vand.u32 %v1847, 4294901760
        %6111 = vmatpush1.msra.mxu0 %v6110
        %6112 = vmatprep.subr.mxu0 0.0
        %v6113 = vand.u32 %v1848, 4294901760
        %6114 = vmatpush1.msra.mxu0 %v6113
        %6115 = vmatprep.subr.mxu0 0.0
        %v6116 = vand.u32 %v1849, 4294901760
        %6117 = vmatpush1.msra.mxu0 %v6116
        %6118 = vmatprep.subr.mxu0 0.0
        %v6119 = vand.u32 %v1850, 4294901760
        %6120 = vmatpush1.msra.mxu0 %v6119
        %6121 = vmatprep.subr.mxu0 0.0
        %v6122 = vand.u32 %v1851, 4294901760
        %6123 = vmatpush1.msra.mxu0 %v6122
        %6124 = vmatprep.subr.mxu0 0.0
        %v6125 = vand.u32 %v1852, 4294901760
        %6126 = vmatpush1.msra.mxu0 %v6125
        %6127 = vmatprep.subr.mxu0 0.0
        %v6128 = vand.u32 %v1853, 4294901760
        %6129 = vmatpush1.msra.mxu0 %v6128
        %6130 = vmatprep.subr.mxu0 0.0
        %v6131 = vand.u32 %v1854, 4294901760
        %6132 = vmatpush1.msra.mxu0 %v6131
        %6133 = vmatprep.subr.mxu0 0.0
        %v6134 = vand.u32 %v1855, 4294901760
        %6135 = vmatpush1.msra.mxu0 %v6134
        %6136 = vmatprep.subr.mxu0 0.0
        %6137 = vmatpush1.msra.mxu0 0.0
        %6138 = vmatprep.subr.mxu0 0.0
        %6139 = vmatpush1.msra.mxu0 0.0
        %6140 = vmatprep.subr.mxu0 0.0
        %6141 = vmatpush1.msra.mxu0 0.0
        %6142 = vmatprep.subr.mxu0 0.0
        %6143 = vmatpush1.msra.mxu0 0.0
        %6144 = vmatprep.subr.mxu0 0.0
        %6145 = vmatpush1.msra.mxu0 0.0
        %6146 = vmatprep.subr.mxu0 0.0
        %6147 = vmatpush1.msra.mxu0 0.0
        %6148 = vmatprep.subr.mxu0 0.0
        %6149 = vmatpush1.msra.mxu0 0.0
        %6150 = vmatprep.subr.mxu0 0.0
        %6151 = vmatpush1.msra.mxu0 0.0
        %6152 = vmatprep.subr.mxu0 0.0
        %6153 = vmatpush1.msra.mxu0 0.0
        %6154 = vmatprep.subr.mxu0 0.0
        %6155 = vmatpush1.msra.mxu0 0.0
        %6156 = vmatprep.subr.mxu0 0.0
        %6157 = vmatpush1.msra.mxu0 0.0
        %6158 = vmatprep.subr.mxu0 0.0
        %6159 = vmatpush1.msra.mxu0 0.0
        %6160 = vmatprep.subr.mxu0 0.0
        %6161 = vmatpush1.msra.mxu0 0.0
        %6162 = vmatprep.subr.mxu0 0.0
        %6163 = vmatpush1.msra.mxu0 0.0
        %6164 = vmatprep.subr.mxu0 0.0
        %6165 = vmatpush1.msra.mxu0 0.0
        %6166 = vmatprep.subr.mxu0 0.0
        %6167 = vmatpush1.msra.mxu0 0.0
        %6168 = vmatprep.mubr.f32.mxu0 0.0
        %v6169 = vand.u32 %v5739, 4294901760
        %v6170 = vsub.f32 %v5739, %v6169
        %v6171 = vand.u32 %v6170, 4294901760
        %6172 = vmatmul.mubr.f32.gmra.mrb[0].mxu0 %v6171
        %v6173 = vpop.f32.mrb[0].mxu0
        %v6174 = vadd.f32 %v6085, %v6173
        %v6175 = vpop.f32.mrb[0].mxu0
        %6176 = vdwg.mxu0
        %6177 = vmatprep.subr.mxu0 0.0
        %v6178 = vand.u32 %v1840, 4294901760
        %v6179 = vsub.f32 %v1840, %v6178
        %v6180 = vand.u32 %v6179, 4294901760
        %6181 = vmatpush1.msra.mxu0 %v6180
        %6182 = vmatprep.subr.mxu0 0.0
        %v6183 = vand.u32 %v1841, 4294901760
        %v6184 = vsub.f32 %v1841, %v6183
        %v6185 = vand.u32 %v6184, 4294901760
        %6186 = vmatpush1.msra.mxu0 %v6185
        %6187 = vmatprep.subr.mxu0 0.0
        %v6188 = vand.u32 %v1842, 4294901760
        %v6189 = vsub.f32 %v1842, %v6188
        %v6190 = vand.u32 %v6189, 4294901760
        %6191 = vmatpush1.msra.mxu0 %v6190
        %6192 = vmatprep.subr.mxu0 0.0
        %v6193 = vand.u32 %v1843, 4294901760
        %v6194 = vsub.f32 %v1843, %v6193
        %v6195 = vand.u32 %v6194, 4294901760
        %6196 = vmatpush1.msra.mxu0 %v6195
        %6197 = vmatprep.subr.mxu0 0.0
        %v6198 = vand.u32 %v1844, 4294901760
        %v6199 = vsub.f32 %v1844, %v6198
        %v6200 = vand.u32 %v6199, 4294901760
        %6201 = vmatpush1.msra.mxu0 %v6200
        %6202 = vmatprep.subr.mxu0 0.0
        %v6203 = vand.u32 %v1845, 4294901760
        %v6204 = vsub.f32 %v1845, %v6203
        %v6205 = vand.u32 %v6204, 4294901760
        %6206 = vmatpush1.msra.mxu0 %v6205
        %6207 = vmatprep.subr.mxu0 0.0
        %v6208 = vand.u32 %v1846, 4294901760
        %v6209 = vsub.f32 %v1846, %v6208
        %v6210 = vand.u32 %v6209, 4294901760
        %6211 = vmatpush1.msra.mxu0 %v6210
        %6212 = vmatprep.subr.mxu0 0.0
        %v6213 = vand.u32 %v1847, 4294901760
        %v6214 = vsub.f32 %v1847, %v6213
        %v6215 = vand.u32 %v6214, 4294901760
        %6216 = vmatpush1.msra.mxu0 %v6215
        %6217 = vmatprep.subr.mxu0 0.0
        %v6218 = vand.u32 %v1848, 4294901760
        %v6219 = vsub.f32 %v1848, %v6218
        %v6220 = vand.u32 %v6219, 4294901760
        %6221 = vmatpush1.msra.mxu0 %v6220
        %6222 = vmatprep.subr.mxu0 0.0
        %v6223 = vand.u32 %v1849, 4294901760
        %v6224 = vsub.f32 %v1849, %v6223
        %v6225 = vand.u32 %v6224, 4294901760
        %6226 = vmatpush1.msra.mxu0 %v6225
        %6227 = vmatprep.subr.mxu0 0.0
        %v6228 = vand.u32 %v1850, 4294901760
        %v6229 = vsub.f32 %v1850, %v6228
        %v6230 = vand.u32 %v6229, 4294901760
        %6231 = vmatpush1.msra.mxu0 %v6230
        %6232 = vmatprep.subr.mxu0 0.0
        %v6233 = vand.u32 %v1851, 4294901760
        %v6234 = vsub.f32 %v1851, %v6233
        %v6235 = vand.u32 %v6234, 4294901760
        %6236 = vmatpush1.msra.mxu0 %v6235
        %6237 = vmatprep.subr.mxu0 0.0
        %v6238 = vand.u32 %v1852, 4294901760
        %v6239 = vsub.f32 %v1852, %v6238
        %v6240 = vand.u32 %v6239, 4294901760
        %6241 = vmatpush1.msra.mxu0 %v6240
        %6242 = vmatprep.subr.mxu0 0.0
        %v6243 = vand.u32 %v1853, 4294901760
        %v6244 = vsub.f32 %v1853, %v6243
        %v6245 = vand.u32 %v6244, 4294901760
        %6246 = vmatpush1.msra.mxu0 %v6245
        %6247 = vmatprep.subr.mxu0 0.0
        %v6248 = vand.u32 %v1854, 4294901760
        %v6249 = vsub.f32 %v1854, %v6248
        %v6250 = vand.u32 %v6249, 4294901760
        %6251 = vmatpush1.msra.mxu0 %v6250
        %6252 = vmatprep.subr.mxu0 0.0
        %v6253 = vand.u32 %v1855, 4294901760
        %v6254 = vsub.f32 %v1855, %v6253
        %v6255 = vand.u32 %v6254, 4294901760
        %6256 = vmatpush1.msra.mxu0 %v6255
        %6257 = vmatprep.subr.mxu0 0.0
        %6258 = vmatpush1.msra.mxu0 0.0
        %6259 = vmatprep.subr.mxu0 0.0
        %6260 = vmatpush1.msra.mxu0 0.0
        %6261 = vmatprep.subr.mxu0 0.0
        %6262 = vmatpush1.msra.mxu0 0.0
        %6263 = vmatprep.subr.mxu0 0.0
        %6264 = vmatpush1.msra.mxu0 0.0
        %6265 = vmatprep.subr.mxu0 0.0
        %6266 = vmatpush1.msra.mxu0 0.0
        %6267 = vmatprep.subr.mxu0 0.0
        %6268 = vmatpush1.msra.mxu0 0.0
        %6269 = vmatprep.subr.mxu0 0.0
        %6270 = vmatpush1.msra.mxu0 0.0
        %6271 = vmatprep.subr.mxu0 0.0
        %6272 = vmatpush1.msra.mxu0 0.0
        %6273 = vmatprep.subr.mxu0 0.0
        %6274 = vmatpush1.msra.mxu0 0.0
        %6275 = vmatprep.subr.mxu0 0.0
        %6276 = vmatpush1.msra.mxu0 0.0
        %6277 = vmatprep.subr.mxu0 0.0
        %6278 = vmatpush1.msra.mxu0 0.0
        %6279 = vmatprep.subr.mxu0 0.0
        %6280 = vmatpush1.msra.mxu0 0.0
        %6281 = vmatprep.subr.mxu0 0.0
        %6282 = vmatpush1.msra.mxu0 0.0
        %6283 = vmatprep.subr.mxu0 0.0
        %6284 = vmatpush1.msra.mxu0 0.0
        %6285 = vmatprep.subr.mxu0 0.0
        %6286 = vmatpush1.msra.mxu0 0.0
        %6287 = vmatprep.subr.mxu0 0.0
        %6288 = vmatpush1.msra.mxu0 0.0
        %6289 = vmatprep.mubr.f32.mxu0 0.0
        %v6290 = vand.u32 %v5739, 4294901760
        %6291 = vmatmul.mubr.f32.gmra.mrb[0].mxu0 %v6290
        %v6292 = vpop.f32.mrb[0].mxu0
        %v6293 = vadd.f32 %v6174, %v6292
        %v6294 = vpop.f32.mrb[0].mxu0
        %6295 = vdwg.mxu0
        %6296 = vmatprep.subr.mxu0 0.0
        %v6297 = vand.u32 %v1840, 4294901760
        %6298 = vmatpush1.msra.mxu0 %v6297
        %6299 = vmatprep.subr.mxu0 0.0
        %v6300 = vand.u32 %v1841, 4294901760
        %6301 = vmatpush1.msra.mxu0 %v6300
        %6302 = vmatprep.subr.mxu0 0.0
        %v6303 = vand.u32 %v1842, 4294901760
        %6304 = vmatpush1.msra.mxu0 %v6303
        %6305 = vmatprep.subr.mxu0 0.0
        %v6306 = vand.u32 %v1843, 4294901760
        %6307 = vmatpush1.msra.mxu0 %v6306
        %6308 = vmatprep.subr.mxu0 0.0
        %v6309 = vand.u32 %v1844, 4294901760
        %6310 = vmatpush1.msra.mxu0 %v6309
        %6311 = vmatprep.subr.mxu0 0.0
        %v6312 = vand.u32 %v1845, 4294901760
        %6313 = vmatpush1.msra.mxu0 %v6312
        %6314 = vmatprep.subr.mxu0 0.0
        %v6315 = vand.u32 %v1846, 4294901760
        %6316 = vmatpush1.msra.mxu0 %v6315
        %6317 = vmatprep.subr.mxu0 0.0
        %v6318 = vand.u32 %v1847, 4294901760
        %6319 = vmatpush1.msra.mxu0 %v6318
        %6320 = vmatprep.subr.mxu0 0.0
        %v6321 = vand.u32 %v1848, 4294901760
        %6322 = vmatpush1.msra.mxu0 %v6321
        %6323 = vmatprep.subr.mxu0 0.0
        %v6324 = vand.u32 %v1849, 4294901760
        %6325 = vmatpush1.msra.mxu0 %v6324
        %6326 = vmatprep.subr.mxu0 0.0
        %v6327 = vand.u32 %v1850, 4294901760
        %6328 = vmatpush1.msra.mxu0 %v6327
        %6329 = vmatprep.subr.mxu0 0.0
        %v6330 = vand.u32 %v1851, 4294901760
        %6331 = vmatpush1.msra.mxu0 %v6330
        %6332 = vmatprep.subr.mxu0 0.0
        %v6333 = vand.u32 %v1852, 4294901760
        %6334 = vmatpush1.msra.mxu0 %v6333
        %6335 = vmatprep.subr.mxu0 0.0
        %v6336 = vand.u32 %v1853, 4294901760
        %6337 = vmatpush1.msra.mxu0 %v6336
        %6338 = vmatprep.subr.mxu0 0.0
        %v6339 = vand.u32 %v1854, 4294901760
        %6340 = vmatpush1.msra.mxu0 %v6339
        %6341 = vmatprep.subr.mxu0 0.0
        %v6342 = vand.u32 %v1855, 4294901760
        %6343 = vmatpush1.msra.mxu0 %v6342
        %6344 = vmatprep.subr.mxu0 0.0
        %6345 = vmatpush1.msra.mxu0 0.0
        %6346 = vmatprep.subr.mxu0 0.0
        %6347 = vmatpush1.msra.mxu0 0.0
        %6348 = vmatprep.subr.mxu0 0.0
        %6349 = vmatpush1.msra.mxu0 0.0
        %6350 = vmatprep.subr.mxu0 0.0
        %6351 = vmatpush1.msra.mxu0 0.0
        %6352 = vmatprep.subr.mxu0 0.0
        %6353 = vmatpush1.msra.mxu0 0.0
        %6354 = vmatprep.subr.mxu0 0.0
        %6355 = vmatpush1.msra.mxu0 0.0
        %6356 = vmatprep.subr.mxu0 0.0
        %6357 = vmatpush1.msra.mxu0 0.0
        %6358 = vmatprep.subr.mxu0 0.0
        %6359 = vmatpush1.msra.mxu0 0.0
        %6360 = vmatprep.subr.mxu0 0.0
        %6361 = vmatpush1.msra.mxu0 0.0
        %6362 = vmatprep.subr.mxu0 0.0
        %6363 = vmatpush1.msra.mxu0 0.0
        %6364 = vmatprep.subr.mxu0 0.0
        %6365 = vmatpush1.msra.mxu0 0.0
        %6366 = vmatprep.subr.mxu0 0.0
        %6367 = vmatpush1.msra.mxu0 0.0
        %6368 = vmatprep.subr.mxu0 0.0
        %6369 = vmatpush1.msra.mxu0 0.0
        %6370 = vmatprep.subr.mxu0 0.0
        %6371 = vmatpush1.msra.mxu0 0.0
        %6372 = vmatprep.subr.mxu0 0.0
        %6373 = vmatpush1.msra.mxu0 0.0
        %6374 = vmatprep.subr.mxu0 0.0
        %6375 = vmatpush1.msra.mxu0 0.0
        %6376 = vmatprep.mubr.f32.mxu0 0.0
        %v6377 = vand.u32 %v5739, 4294901760
        %6378 = vmatmul.mubr.f32.gmra.mrb[0].mxu0 %v6377
        %v6379 = vpop.f32.mrb[0].mxu0
        %v6380 = vadd.f32 %v6293, %v6379
        %v6381 = vpop.f32.mrb[0].mxu0
        %6382 = vdwg.mxu0
        %v6383 = vsub.f32 %v6380, %v711
        %6384 = vmatprep.subr.mxu0 0.0
        %v6385 = vand.u32 %v2499, 4294901760
        %6386 = vmatpush1.msra.mxu0 %v6385
        %6387 = vmatprep.subr.mxu0 0.0
        %v6388 = vand.u32 %v2500, 4294901760
        %6389 = vmatpush1.msra.mxu0 %v6388
        %6390 = vmatprep.subr.mxu0 0.0
        %v6391 = vand.u32 %v2501, 4294901760
        %6392 = vmatpush1.msra.mxu0 %v6391
        %6393 = vmatprep.subr.mxu0 0.0
        %v6394 = vand.u32 %v2502, 4294901760
        %6395 = vmatpush1.msra.mxu0 %v6394
        %6396 = vmatprep.subr.mxu0 0.0
        %v6397 = vand.u32 %v2503, 4294901760
        %6398 = vmatpush1.msra.mxu0 %v6397
        %6399 = vmatprep.subr.mxu0 0.0
        %v6400 = vand.u32 %v2504, 4294901760
        %6401 = vmatpush1.msra.mxu0 %v6400
        %6402 = vmatprep.subr.mxu0 0.0
        %v6403 = vand.u32 %v2505, 4294901760
        %6404 = vmatpush1.msra.mxu0 %v6403
        %6405 = vmatprep.subr.mxu0 0.0
        %v6406 = vand.u32 %v2506, 4294901760
        %6407 = vmatpush1.msra.mxu0 %v6406
        %6408 = vmatprep.subr.mxu0 0.0
        %v6409 = vand.u32 %v2507, 4294901760
        %6410 = vmatpush1.msra.mxu0 %v6409
        %6411 = vmatprep.subr.mxu0 0.0
        %v6412 = vand.u32 %v2508, 4294901760
        %6413 = vmatpush1.msra.mxu0 %v6412
        %6414 = vmatprep.subr.mxu0 0.0
        %v6415 = vand.u32 %v2509, 4294901760
        %6416 = vmatpush1.msra.mxu0 %v6415
        %6417 = vmatprep.subr.mxu0 0.0
        %v6418 = vand.u32 %v2510, 4294901760
        %6419 = vmatpush1.msra.mxu0 %v6418
        %6420 = vmatprep.subr.mxu0 0.0
        %v6421 = vand.u32 %v2511, 4294901760
        %6422 = vmatpush1.msra.mxu0 %v6421
        %6423 = vmatprep.subr.mxu0 0.0
        %v6424 = vand.u32 %v2512, 4294901760
        %6425 = vmatpush1.msra.mxu0 %v6424
        %6426 = vmatprep.subr.mxu0 0.0
        %v6427 = vand.u32 %v2513, 4294901760
        %6428 = vmatpush1.msra.mxu0 %v6427
        %6429 = vmatprep.subr.mxu0 0.0
        %v6430 = vand.u32 %v2514, 4294901760
        %6431 = vmatpush1.msra.mxu0 %v6430
        %6432 = vmatprep.subr.mxu0 0.0
        %6433 = vmatpush1.msra.mxu0 0.0
        %6434 = vmatprep.subr.mxu0 0.0
        %6435 = vmatpush1.msra.mxu0 0.0
        %6436 = vmatprep.subr.mxu0 0.0
        %6437 = vmatpush1.msra.mxu0 0.0
        %6438 = vmatprep.subr.mxu0 0.0
        %6439 = vmatpush1.msra.mxu0 0.0
        %6440 = vmatprep.subr.mxu0 0.0
        %6441 = vmatpush1.msra.mxu0 0.0
        %6442 = vmatprep.subr.mxu0 0.0
        %6443 = vmatpush1.msra.mxu0 0.0
        %6444 = vmatprep.subr.mxu0 0.0
        %6445 = vmatpush1.msra.mxu0 0.0
        %6446 = vmatprep.subr.mxu0 0.0
        %6447 = vmatpush1.msra.mxu0 0.0
        %6448 = vmatprep.subr.mxu0 0.0
        %6449 = vmatpush1.msra.mxu0 0.0
        %6450 = vmatprep.subr.mxu0 0.0
        %6451 = vmatpush1.msra.mxu0 0.0
        %6452 = vmatprep.subr.mxu0 0.0
        %6453 = vmatpush1.msra.mxu0 0.0
        %6454 = vmatprep.subr.mxu0 0.0
        %6455 = vmatpush1.msra.mxu0 0.0
        %6456 = vmatprep.subr.mxu0 0.0
        %6457 = vmatpush1.msra.mxu0 0.0
        %6458 = vmatprep.subr.mxu0 0.0
        %6459 = vmatpush1.msra.mxu0 0.0
        %6460 = vmatprep.subr.mxu0 0.0
        %6461 = vmatpush1.msra.mxu0 0.0
        %6462 = vmatprep.subr.mxu0 0.0
        %6463 = vmatpush1.msra.mxu0 0.0
        %6464 = vmatprep.mubr.f32.mxu0 0.0
        %v6465 = vand.u32 %v5739, 4294901760
        %v6466 = vsub.f32 %v5739, %v6465
        %v6467 = vand.u32 %v6466, 4294901760
        %v6468 = vsub.f32 %v6466, %v6467
        %v6469 = vand.u32 %v6468, 4294901760
        %6470 = vmatmul.mubr.f32.gmra.mrb[0].mxu0 %v6469
        %v6471 = vpop.f32.mrb[0].mxu0
        %v6472 = vadd.f32 0.0, %v6471
        %v6473 = vpop.f32.mrb[0].mxu0
        %6474 = vdwg.mxu0
        %6475 = vmatprep.subr.mxu0 0.0
        %v6476 = vand.u32 %v2499, 4294901760
        %v6477 = vsub.f32 %v2499, %v6476
        %v6478 = vand.u32 %v6477, 4294901760
        %v6479 = vsub.f32 %v6477, %v6478
        %v6480 = vand.u32 %v6479, 4294901760
        %6481 = vmatpush1.msra.mxu0 %v6480
        %6482 = vmatprep.subr.mxu0 0.0
        %v6483 = vand.u32 %v2500, 4294901760
        %v6484 = vsub.f32 %v2500, %v6483
        %v6485 = vand.u32 %v6484, 4294901760
        %v6486 = vsub.f32 %v6484, %v6485
        %v6487 = vand.u32 %v6486, 4294901760
        %6488 = vmatpush1.msra.mxu0 %v6487
        %6489 = vmatprep.subr.mxu0 0.0
        %v6490 = vand.u32 %v2501, 4294901760
        %v6491 = vsub.f32 %v2501, %v6490
        %v6492 = vand.u32 %v6491, 4294901760
        %v6493 = vsub.f32 %v6491, %v6492
        %v6494 = vand.u32 %v6493, 4294901760
        %6495 = vmatpush1.msra.mxu0 %v6494
        %6496 = vmatprep.subr.mxu0 0.0
        %v6497 = vand.u32 %v2502, 4294901760
        %v6498 = vsub.f32 %v2502, %v6497
        %v6499 = vand.u32 %v6498, 4294901760
        %v6500 = vsub.f32 %v6498, %v6499
        %v6501 = vand.u32 %v6500, 4294901760
        %6502 = vmatpush1.msra.mxu0 %v6501
        %6503 = vmatprep.subr.mxu0 0.0
        %v6504 = vand.u32 %v2503, 4294901760
        %v6505 = vsub.f32 %v2503, %v6504
        %v6506 = vand.u32 %v6505, 4294901760
        %v6507 = vsub.f32 %v6505, %v6506
        %v6508 = vand.u32 %v6507, 4294901760
        %6509 = vmatpush1.msra.mxu0 %v6508
        %6510 = vmatprep.subr.mxu0 0.0
        %v6511 = vand.u32 %v2504, 4294901760
        %v6512 = vsub.f32 %v2504, %v6511
        %v6513 = vand.u32 %v6512, 4294901760
        %v6514 = vsub.f32 %v6512, %v6513
        %v6515 = vand.u32 %v6514, 4294901760
        %6516 = vmatpush1.msra.mxu0 %v6515
        %6517 = vmatprep.subr.mxu0 0.0
        %v6518 = vand.u32 %v2505, 4294901760
        %v6519 = vsub.f32 %v2505, %v6518
        %v6520 = vand.u32 %v6519, 4294901760
        %v6521 = vsub.f32 %v6519, %v6520
        %v6522 = vand.u32 %v6521, 4294901760
        %6523 = vmatpush1.msra.mxu0 %v6522
        %6524 = vmatprep.subr.mxu0 0.0
        %v6525 = vand.u32 %v2506, 4294901760
        %v6526 = vsub.f32 %v2506, %v6525
        %v6527 = vand.u32 %v6526, 4294901760
        %v6528 = vsub.f32 %v6526, %v6527
        %v6529 = vand.u32 %v6528, 4294901760
        %6530 = vmatpush1.msra.mxu0 %v6529
        %6531 = vmatprep.subr.mxu0 0.0
        %v6532 = vand.u32 %v2507, 4294901760
        %v6533 = vsub.f32 %v2507, %v6532
        %v6534 = vand.u32 %v6533, 4294901760
        %v6535 = vsub.f32 %v6533, %v6534
        %v6536 = vand.u32 %v6535, 4294901760
        %6537 = vmatpush1.msra.mxu0 %v6536
        %6538 = vmatprep.subr.mxu0 0.0
        %v6539 = vand.u32 %v2508, 4294901760
        %v6540 = vsub.f32 %v2508, %v6539
        %v6541 = vand.u32 %v6540, 4294901760
        %v6542 = vsub.f32 %v6540, %v6541
        %v6543 = vand.u32 %v6542, 4294901760
        %6544 = vmatpush1.msra.mxu0 %v6543
        %6545 = vmatprep.subr.mxu0 0.0
        %v6546 = vand.u32 %v2509, 4294901760
        %v6547 = vsub.f32 %v2509, %v6546
        %v6548 = vand.u32 %v6547, 4294901760
        %v6549 = vsub.f32 %v6547, %v6548
        %v6550 = vand.u32 %v6549, 4294901760
        %6551 = vmatpush1.msra.mxu0 %v6550
        %6552 = vmatprep.subr.mxu0 0.0
        %v6553 = vand.u32 %v2510, 4294901760
        %v6554 = vsub.f32 %v2510, %v6553
        %v6555 = vand.u32 %v6554, 4294901760
        %v6556 = vsub.f32 %v6554, %v6555
        %v6557 = vand.u32 %v6556, 4294901760
        %6558 = vmatpush1.msra.mxu0 %v6557
        %6559 = vmatprep.subr.mxu0 0.0
        %v6560 = vand.u32 %v2511, 4294901760
        %v6561 = vsub.f32 %v2511, %v6560
        %v6562 = vand.u32 %v6561, 4294901760
        %v6563 = vsub.f32 %v6561, %v6562
        %v6564 = vand.u32 %v6563, 4294901760
        %6565 = vmatpush1.msra.mxu0 %v6564
        %6566 = vmatprep.subr.mxu0 0.0
        %v6567 = vand.u32 %v2512, 4294901760
        %v6568 = vsub.f32 %v2512, %v6567
        %v6569 = vand.u32 %v6568, 4294901760
        %v6570 = vsub.f32 %v6568, %v6569
        %v6571 = vand.u32 %v6570, 4294901760
        %6572 = vmatpush1.msra.mxu0 %v6571
        %6573 = vmatprep.subr.mxu0 0.0
        %v6574 = vand.u32 %v2513, 4294901760
        %v6575 = vsub.f32 %v2513, %v6574
        %v6576 = vand.u32 %v6575, 4294901760
        %v6577 = vsub.f32 %v6575, %v6576
        %v6578 = vand.u32 %v6577, 4294901760
        %6579 = vmatpush1.msra.mxu0 %v6578
        %6580 = vmatprep.subr.mxu0 0.0
        %v6581 = vand.u32 %v2514, 4294901760
        %v6582 = vsub.f32 %v2514, %v6581
        %v6583 = vand.u32 %v6582, 4294901760
        %v6584 = vsub.f32 %v6582, %v6583
        %v6585 = vand.u32 %v6584, 4294901760
        %6586 = vmatpush1.msra.mxu0 %v6585
        %6587 = vmatprep.subr.mxu0 0.0
        %6588 = vmatpush1.msra.mxu0 0.0
        %6589 = vmatprep.subr.mxu0 0.0
        %6590 = vmatpush1.msra.mxu0 0.0
        %6591 = vmatprep.subr.mxu0 0.0
        %6592 = vmatpush1.msra.mxu0 0.0
        %6593 = vmatprep.subr.mxu0 0.0
        %6594 = vmatpush1.msra.mxu0 0.0
        %6595 = vmatprep.subr.mxu0 0.0
        %6596 = vmatpush1.msra.mxu0 0.0
        %6597 = vmatprep.subr.mxu0 0.0
        %6598 = vmatpush1.msra.mxu0 0.0
        %6599 = vmatprep.subr.mxu0 0.0
        %6600 = vmatpush1.msra.mxu0 0.0
        %6601 = vmatprep.subr.mxu0 0.0
        %6602 = vmatpush1.msra.mxu0 0.0
        %6603 = vmatprep.subr.mxu0 0.0
        %6604 = vmatpush1.msra.mxu0 0.0
        %6605 = vmatprep.subr.mxu0 0.0
        %6606 = vmatpush1.msra.mxu0 0.0
        %6607 = vmatprep.subr.mxu0 0.0
        %6608 = vmatpush1.msra.mxu0 0.0
        %6609 = vmatprep.subr.mxu0 0.0
        %6610 = vmatpush1.msra.mxu0 0.0
        %6611 = vmatprep.subr.mxu0 0.0
        %6612 = vmatpush1.msra.mxu0 0.0
        %6613 = vmatprep.subr.mxu0 0.0
        %6614 = vmatpush1.msra.mxu0 0.0
        %6615 = vmatprep.subr.mxu0 0.0
        %6616 = vmatpush1.msra.mxu0 0.0
        %6617 = vmatprep.subr.mxu0 0.0
        %6618 = vmatpush1.msra.mxu0 0.0
        %6619 = vmatprep.mubr.f32.mxu0 0.0
        %v6620 = vand.u32 %v5739, 4294901760
        %6621 = vmatmul.mubr.f32.gmra.mrb[0].mxu0 %v6620
        %v6622 = vpop.f32.mrb[0].mxu0
        %v6623 = vadd.f32 %v6472, %v6622
        %v6624 = vpop.f32.mrb[0].mxu0
        %6625 = vdwg.mxu0
        %6626 = vmatprep.subr.mxu0 0.0
        %v6627 = vand.u32 %v2499, 4294901760
        %v6628 = vsub.f32 %v2499, %v6627
        %6629 = vmatpush1.msra.mxu0 %v6628
        %6630 = vmatprep.subr.mxu0 0.0
        %v6631 = vand.u32 %v2500, 4294901760
        %v6632 = vsub.f32 %v2500, %v6631
        %6633 = vmatpush1.msra.mxu0 %v6632
        %6634 = vmatprep.subr.mxu0 0.0
        %v6635 = vand.u32 %v2501, 4294901760
        %v6636 = vsub.f32 %v2501, %v6635
        %6637 = vmatpush1.msra.mxu0 %v6636
        %6638 = vmatprep.subr.mxu0 0.0
        %v6639 = vand.u32 %v2502, 4294901760
        %v6640 = vsub.f32 %v2502, %v6639
        %6641 = vmatpush1.msra.mxu0 %v6640
        %6642 = vmatprep.subr.mxu0 0.0
        %v6643 = vand.u32 %v2503, 4294901760
        %v6644 = vsub.f32 %v2503, %v6643
        %6645 = vmatpush1.msra.mxu0 %v6644
        %6646 = vmatprep.subr.mxu0 0.0
        %v6647 = vand.u32 %v2504, 4294901760
        %v6648 = vsub.f32 %v2504, %v6647
        %6649 = vmatpush1.msra.mxu0 %v6648
        %6650 = vmatprep.subr.mxu0 0.0
        %v6651 = vand.u32 %v2505, 4294901760
        %v6652 = vsub.f32 %v2505, %v6651
        %6653 = vmatpush1.msra.mxu0 %v6652
        %6654 = vmatprep.subr.mxu0 0.0
        %v6655 = vand.u32 %v2506, 4294901760
        %v6656 = vsub.f32 %v2506, %v6655
        %6657 = vmatpush1.msra.mxu0 %v6656
        %6658 = vmatprep.subr.mxu0 0.0
        %v6659 = vand.u32 %v2507, 4294901760
        %v6660 = vsub.f32 %v2507, %v6659
        %6661 = vmatpush1.msra.mxu0 %v6660
        %6662 = vmatprep.subr.mxu0 0.0
        %v6663 = vand.u32 %v2508, 4294901760
        %v6664 = vsub.f32 %v2508, %v6663
        %6665 = vmatpush1.msra.mxu0 %v6664
        %6666 = vmatprep.subr.mxu0 0.0
        %v6667 = vand.u32 %v2509, 4294901760
        %v6668 = vsub.f32 %v2509, %v6667
        %6669 = vmatpush1.msra.mxu0 %v6668
        %6670 = vmatprep.subr.mxu0 0.0
        %v6671 = vand.u32 %v2510, 4294901760
        %v6672 = vsub.f32 %v2510, %v6671
        %6673 = vmatpush1.msra.mxu0 %v6672
        %6674 = vmatprep.subr.mxu0 0.0
        %v6675 = vand.u32 %v2511, 4294901760
        %v6676 = vsub.f32 %v2511, %v6675
        %6677 = vmatpush1.msra.mxu0 %v6676
        %6678 = vmatprep.subr.mxu0 0.0
        %v6679 = vand.u32 %v2512, 4294901760
        %v6680 = vsub.f32 %v2512, %v6679
        %6681 = vmatpush1.msra.mxu0 %v6680
        %6682 = vmatprep.subr.mxu0 0.0
        %v6683 = vand.u32 %v2513, 4294901760
        %v6684 = vsub.f32 %v2513, %v6683
        %6685 = vmatpush1.msra.mxu0 %v6684
        %6686 = vmatprep.subr.mxu0 0.0
        %v6687 = vand.u32 %v2514, 4294901760
        %v6688 = vsub.f32 %v2514, %v6687
        %6689 = vmatpush1.msra.mxu0 %v6688
        %6690 = vmatprep.subr.mxu0 0.0
        %6691 = vmatpush1.msra.mxu0 0.0
        %6692 = vmatprep.subr.mxu0 0.0
        %6693 = vmatpush1.msra.mxu0 0.0
        %6694 = vmatprep.subr.mxu0 0.0
        %6695 = vmatpush1.msra.mxu0 0.0
        %6696 = vmatprep.subr.mxu0 0.0
        %6697 = vmatpush1.msra.mxu0 0.0
        %6698 = vmatprep.subr.mxu0 0.0
        %6699 = vmatpush1.msra.mxu0 0.0
        %6700 = vmatprep.subr.mxu0 0.0
        %6701 = vmatpush1.msra.mxu0 0.0
        %6702 = vmatprep.subr.mxu0 0.0
        %6703 = vmatpush1.msra.mxu0 0.0
        %6704 = vmatprep.subr.mxu0 0.0
        %6705 = vmatpush1.msra.mxu0 0.0
        %6706 = vmatprep.subr.mxu0 0.0
        %6707 = vmatpush1.msra.mxu0 0.0
        %6708 = vmatprep.subr.mxu0 0.0
        %6709 = vmatpush1.msra.mxu0 0.0
        %6710 = vmatprep.subr.mxu0 0.0
        %6711 = vmatpush1.msra.mxu0 0.0
        %6712 = vmatprep.subr.mxu0 0.0
        %6713 = vmatpush1.msra.mxu0 0.0
        %6714 = vmatprep.subr.mxu0 0.0
        %6715 = vmatpush1.msra.mxu0 0.0
        %6716 = vmatprep.subr.mxu0 0.0
        %6717 = vmatpush1.msra.mxu0 0.0
        %6718 = vmatprep.subr.mxu0 0.0
        %6719 = vmatpush1.msra.mxu0 0.0
        %6720 = vmatprep.subr.mxu0 0.0
        %6721 = vmatpush1.msra.mxu0 0.0
        %6722 = vmatprep.mubr.f32.mxu0 0.0
        %v6723 = vand.u32 %v5739, 4294901760
        %v6724 = vsub.f32 %v5739, %v6723
        %6725 = vmatmul.mubr.f32.gmra.mrb[0].mxu0 %v6724
        %v6726 = vpop.f32.mrb[0].mxu0
        %v6727 = vadd.f32 %v6623, %v6726
        %v6728 = vpop.f32.mrb[0].mxu0
        %6729 = vdwg.mxu0
        %6730 = vmatprep.subr.mxu0 0.0
        %v6731 = vand.u32 %v2499, 4294901760
        %6732 = vmatpush1.msra.mxu0 %v6731
        %6733 = vmatprep.subr.mxu0 0.0
        %v6734 = vand.u32 %v2500, 4294901760
        %6735 = vmatpush1.msra.mxu0 %v6734
        %6736 = vmatprep.subr.mxu0 0.0
        %v6737 = vand.u32 %v2501, 4294901760
        %6738 = vmatpush1.msra.mxu0 %v6737
        %6739 = vmatprep.subr.mxu0 0.0
        %v6740 = vand.u32 %v2502, 4294901760
        %6741 = vmatpush1.msra.mxu0 %v6740
        %6742 = vmatprep.subr.mxu0 0.0
        %v6743 = vand.u32 %v2503, 4294901760
        %6744 = vmatpush1.msra.mxu0 %v6743
        %6745 = vmatprep.subr.mxu0 0.0
        %v6746 = vand.u32 %v2504, 4294901760
        %6747 = vmatpush1.msra.mxu0 %v6746
        %6748 = vmatprep.subr.mxu0 0.0
        %v6749 = vand.u32 %v2505, 4294901760
        %6750 = vmatpush1.msra.mxu0 %v6749
        %6751 = vmatprep.subr.mxu0 0.0
        %v6752 = vand.u32 %v2506, 4294901760
        %6753 = vmatpush1.msra.mxu0 %v6752
        %6754 = vmatprep.subr.mxu0 0.0
        %v6755 = vand.u32 %v2507, 4294901760
        %6756 = vmatpush1.msra.mxu0 %v6755
        %6757 = vmatprep.subr.mxu0 0.0
        %v6758 = vand.u32 %v2508, 4294901760
        %6759 = vmatpush1.msra.mxu0 %v6758
        %6760 = vmatprep.subr.mxu0 0.0
        %v6761 = vand.u32 %v2509, 4294901760
        %6762 = vmatpush1.msra.mxu0 %v6761
        %6763 = vmatprep.subr.mxu0 0.0
        %v6764 = vand.u32 %v2510, 4294901760
        %6765 = vmatpush1.msra.mxu0 %v6764
        %6766 = vmatprep.subr.mxu0 0.0
        %v6767 = vand.u32 %v2511, 4294901760
        %6768 = vmatpush1.msra.mxu0 %v6767
        %6769 = vmatprep.subr.mxu0 0.0
        %v6770 = vand.u32 %v2512, 4294901760
        %6771 = vmatpush1.msra.mxu0 %v6770
        %6772 = vmatprep.subr.mxu0 0.0
        %v6773 = vand.u32 %v2513, 4294901760
        %6774 = vmatpush1.msra.mxu0 %v6773
        %6775 = vmatprep.subr.mxu0 0.0
        %v6776 = vand.u32 %v2514, 4294901760
        %6777 = vmatpush1.msra.mxu0 %v6776
        %6778 = vmatprep.subr.mxu0 0.0
        %6779 = vmatpush1.msra.mxu0 0.0
        %6780 = vmatprep.subr.mxu0 0.0
        %6781 = vmatpush1.msra.mxu0 0.0
        %6782 = vmatprep.subr.mxu0 0.0
        %6783 = vmatpush1.msra.mxu0 0.0
        %6784 = vmatprep.subr.mxu0 0.0
        %6785 = vmatpush1.msra.mxu0 0.0
        %6786 = vmatprep.subr.mxu0 0.0
        %6787 = vmatpush1.msra.mxu0 0.0
        %6788 = vmatprep.subr.mxu0 0.0
        %6789 = vmatpush1.msra.mxu0 0.0
        %6790 = vmatprep.subr.mxu0 0.0
        %6791 = vmatpush1.msra.mxu0 0.0
        %6792 = vmatprep.subr.mxu0 0.0
        %6793 = vmatpush1.msra.mxu0 0.0
        %6794 = vmatprep.subr.mxu0 0.0
        %6795 = vmatpush1.msra.mxu0 0.0
        %6796 = vmatprep.subr.mxu0 0.0
        %6797 = vmatpush1.msra.mxu0 0.0
        %6798 = vmatprep.subr.mxu0 0.0
        %6799 = vmatpush1.msra.mxu0 0.0
        %6800 = vmatprep.subr.mxu0 0.0
        %6801 = vmatpush1.msra.mxu0 0.0
        %6802 = vmatprep.subr.mxu0 0.0
        %6803 = vmatpush1.msra.mxu0 0.0
        %6804 = vmatprep.subr.mxu0 0.0
        %6805 = vmatpush1.msra.mxu0 0.0
        %6806 = vmatprep.subr.mxu0 0.0
        %6807 = vmatpush1.msra.mxu0 0.0
        %6808 = vmatprep.subr.mxu0 0.0
        %6809 = vmatpush1.msra.mxu0 0.0
        %6810 = vmatprep.mubr.f32.mxu0 0.0
        %v6811 = vand.u32 %v5739, 4294901760
        %v6812 = vsub.f32 %v5739, %v6811
        %v6813 = vand.u32 %v6812, 4294901760
        %6814 = vmatmul.mubr.f32.gmra.mrb[0].mxu0 %v6813
        %v6815 = vpop.f32.mrb[0].mxu0
        %v6816 = vadd.f32 %v6727, %v6815
        %v6817 = vpop.f32.mrb[0].mxu0
        %6818 = vdwg.mxu0
        %6819 = vmatprep.subr.mxu0 0.0
        %v6820 = vand.u32 %v2499, 4294901760
        %v6821 = vsub.f32 %v2499, %v6820
        %v6822 = vand.u32 %v6821, 4294901760
        %6823 = vmatpush1.msra.mxu0 %v6822
        %6824 = vmatprep.subr.mxu0 0.0
        %v6825 = vand.u32 %v2500, 4294901760
        %v6826 = vsub.f32 %v2500, %v6825
        %v6827 = vand.u32 %v6826, 4294901760
        %6828 = vmatpush1.msra.mxu0 %v6827
        %6829 = vmatprep.subr.mxu0 0.0
        %v6830 = vand.u32 %v2501, 4294901760
        %v6831 = vsub.f32 %v2501, %v6830
        %v6832 = vand.u32 %v6831, 4294901760
        %6833 = vmatpush1.msra.mxu0 %v6832
        %6834 = vmatprep.subr.mxu0 0.0
        %v6835 = vand.u32 %v2502, 4294901760
        %v6836 = vsub.f32 %v2502, %v6835
        %v6837 = vand.u32 %v6836, 4294901760
        %6838 = vmatpush1.msra.mxu0 %v6837
        %6839 = vmatprep.subr.mxu0 0.0
        %v6840 = vand.u32 %v2503, 4294901760
        %v6841 = vsub.f32 %v2503, %v6840
        %v6842 = vand.u32 %v6841, 4294901760
        %6843 = vmatpush1.msra.mxu0 %v6842
        %6844 = vmatprep.subr.mxu0 0.0
        %v6845 = vand.u32 %v2504, 4294901760
        %v6846 = vsub.f32 %v2504, %v6845
        %v6847 = vand.u32 %v6846, 4294901760
        %6848 = vmatpush1.msra.mxu0 %v6847
        %6849 = vmatprep.subr.mxu0 0.0
        %v6850 = vand.u32 %v2505, 4294901760
        %v6851 = vsub.f32 %v2505, %v6850
        %v6852 = vand.u32 %v6851, 4294901760
        %6853 = vmatpush1.msra.mxu0 %v6852
        %6854 = vmatprep.subr.mxu0 0.0
        %v6855 = vand.u32 %v2506, 4294901760
        %v6856 = vsub.f32 %v2506, %v6855
        %v6857 = vand.u32 %v6856, 4294901760
        %6858 = vmatpush1.msra.mxu0 %v6857
        %6859 = vmatprep.subr.mxu0 0.0
        %v6860 = vand.u32 %v2507, 4294901760
        %v6861 = vsub.f32 %v2507, %v6860
        %v6862 = vand.u32 %v6861, 4294901760
        %6863 = vmatpush1.msra.mxu0 %v6862
        %6864 = vmatprep.subr.mxu0 0.0
        %v6865 = vand.u32 %v2508, 4294901760
        %v6866 = vsub.f32 %v2508, %v6865
        %v6867 = vand.u32 %v6866, 4294901760
        %6868 = vmatpush1.msra.mxu0 %v6867
        %6869 = vmatprep.subr.mxu0 0.0
        %v6870 = vand.u32 %v2509, 4294901760
        %v6871 = vsub.f32 %v2509, %v6870
        %v6872 = vand.u32 %v6871, 4294901760
        %6873 = vmatpush1.msra.mxu0 %v6872
        %6874 = vmatprep.subr.mxu0 0.0
        %v6875 = vand.u32 %v2510, 4294901760
        %v6876 = vsub.f32 %v2510, %v6875
        %v6877 = vand.u32 %v6876, 4294901760
        %6878 = vmatpush1.msra.mxu0 %v6877
        %6879 = vmatprep.subr.mxu0 0.0
        %v6880 = vand.u32 %v2511, 4294901760
        %v6881 = vsub.f32 %v2511, %v6880
        %v6882 = vand.u32 %v6881, 4294901760
        %6883 = vmatpush1.msra.mxu0 %v6882
        %6884 = vmatprep.subr.mxu0 0.0
        %v6885 = vand.u32 %v2512, 4294901760
        %v6886 = vsub.f32 %v2512, %v6885
        %v6887 = vand.u32 %v6886, 4294901760
        %6888 = vmatpush1.msra.mxu0 %v6887
        %6889 = vmatprep.subr.mxu0 0.0
        %v6890 = vand.u32 %v2513, 4294901760
        %v6891 = vsub.f32 %v2513, %v6890
        %v6892 = vand.u32 %v6891, 4294901760
        %6893 = vmatpush1.msra.mxu0 %v6892
        %6894 = vmatprep.subr.mxu0 0.0
        %v6895 = vand.u32 %v2514, 4294901760
        %v6896 = vsub.f32 %v2514, %v6895
        %v6897 = vand.u32 %v6896, 4294901760
        %6898 = vmatpush1.msra.mxu0 %v6897
        %6899 = vmatprep.subr.mxu0 0.0
        %6900 = vmatpush1.msra.mxu0 0.0
        %6901 = vmatprep.subr.mxu0 0.0
        %6902 = vmatpush1.msra.mxu0 0.0
        %6903 = vmatprep.subr.mxu0 0.0
        %6904 = vmatpush1.msra.mxu0 0.0
        %6905 = vmatprep.subr.mxu0 0.0
        %6906 = vmatpush1.msra.mxu0 0.0
        %6907 = vmatprep.subr.mxu0 0.0
        %6908 = vmatpush1.msra.mxu0 0.0
        %6909 = vmatprep.subr.mxu0 0.0
        %6910 = vmatpush1.msra.mxu0 0.0
        %6911 = vmatprep.subr.mxu0 0.0
        %6912 = vmatpush1.msra.mxu0 0.0
        %6913 = vmatprep.subr.mxu0 0.0
        %6914 = vmatpush1.msra.mxu0 0.0
        %6915 = vmatprep.subr.mxu0 0.0
        %6916 = vmatpush1.msra.mxu0 0.0
        %6917 = vmatprep.subr.mxu0 0.0
        %6918 = vmatpush1.msra.mxu0 0.0
        %6919 = vmatprep.subr.mxu0 0.0
        %6920 = vmatpush1.msra.mxu0 0.0
        %6921 = vmatprep.subr.mxu0 0.0
        %6922 = vmatpush1.msra.mxu0 0.0
        %6923 = vmatprep.subr.mxu0 0.0
        %6924 = vmatpush1.msra.mxu0 0.0
        %6925 = vmatprep.subr.mxu0 0.0
        %6926 = vmatpush1.msra.mxu0 0.0
        %6927 = vmatprep.subr.mxu0 0.0
        %6928 = vmatpush1.msra.mxu0 0.0
        %6929 = vmatprep.subr.mxu0 0.0
        %6930 = vmatpush1.msra.mxu0 0.0
        %6931 = vmatprep.mubr.f32.mxu0 0.0
        %v6932 = vand.u32 %v5739, 4294901760
        %6933 = vmatmul.mubr.f32.gmra.mrb[0].mxu0 %v6932
        %v6934 = vpop.f32.mrb[0].mxu0
        %v6935 = vadd.f32 %v6816, %v6934
        %v6936 = vpop.f32.mrb[0].mxu0
        %6937 = vdwg.mxu0
        %6938 = vmatprep.subr.mxu0 0.0
        %v6939 = vand.u32 %v2499, 4294901760
        %6940 = vmatpush1.msra.mxu0 %v6939
        %6941 = vmatprep.subr.mxu0 0.0
        %v6942 = vand.u32 %v2500, 4294901760
        %6943 = vmatpush1.msra.mxu0 %v6942
        %6944 = vmatprep.subr.mxu0 0.0
        %v6945 = vand.u32 %v2501, 4294901760
        %6946 = vmatpush1.msra.mxu0 %v6945
        %6947 = vmatprep.subr.mxu0 0.0
        %v6948 = vand.u32 %v2502, 4294901760
        %6949 = vmatpush1.msra.mxu0 %v6948
        %6950 = vmatprep.subr.mxu0 0.0
        %v6951 = vand.u32 %v2503, 4294901760
        %6952 = vmatpush1.msra.mxu0 %v6951
        %6953 = vmatprep.subr.mxu0 0.0
        %v6954 = vand.u32 %v2504, 4294901760
        %6955 = vmatpush1.msra.mxu0 %v6954
        %6956 = vmatprep.subr.mxu0 0.0
        %v6957 = vand.u32 %v2505, 4294901760
        %6958 = vmatpush1.msra.mxu0 %v6957
        %6959 = vmatprep.subr.mxu0 0.0
        %v6960 = vand.u32 %v2506, 4294901760
        %6961 = vmatpush1.msra.mxu0 %v6960
        %6962 = vmatprep.subr.mxu0 0.0
        %v6963 = vand.u32 %v2507, 4294901760
        %6964 = vmatpush1.msra.mxu0 %v6963
        %6965 = vmatprep.subr.mxu0 0.0
        %v6966 = vand.u32 %v2508, 4294901760
        %6967 = vmatpush1.msra.mxu0 %v6966
        %6968 = vmatprep.subr.mxu0 0.0
        %v6969 = vand.u32 %v2509, 4294901760
        %6970 = vmatpush1.msra.mxu0 %v6969
        %6971 = vmatprep.subr.mxu0 0.0
        %v6972 = vand.u32 %v2510, 4294901760
        %6973 = vmatpush1.msra.mxu0 %v6972
        %6974 = vmatprep.subr.mxu0 0.0
        %v6975 = vand.u32 %v2511, 4294901760
        %6976 = vmatpush1.msra.mxu0 %v6975
        %6977 = vmatprep.subr.mxu0 0.0
        %v6978 = vand.u32 %v2512, 4294901760
        %6979 = vmatpush1.msra.mxu0 %v6978
        %6980 = vmatprep.subr.mxu0 0.0
        %v6981 = vand.u32 %v2513, 4294901760
        %6982 = vmatpush1.msra.mxu0 %v6981
        %6983 = vmatprep.subr.mxu0 0.0
        %v6984 = vand.u32 %v2514, 4294901760
        %6985 = vmatpush1.msra.mxu0 %v6984
        %6986 = vmatprep.subr.mxu0 0.0
        %6987 = vmatpush1.msra.mxu0 0.0
        %6988 = vmatprep.subr.mxu0 0.0
        %6989 = vmatpush1.msra.mxu0 0.0
        %6990 = vmatprep.subr.mxu0 0.0
        %6991 = vmatpush1.msra.mxu0 0.0
        %6992 = vmatprep.subr.mxu0 0.0
        %6993 = vmatpush1.msra.mxu0 0.0
        %6994 = vmatprep.subr.mxu0 0.0
        %6995 = vmatpush1.msra.mxu0 0.0
        %6996 = vmatprep.subr.mxu0 0.0
        %6997 = vmatpush1.msra.mxu0 0.0
        %6998 = vmatprep.subr.mxu0 0.0
        %6999 = vmatpush1.msra.mxu0 0.0
        %7000 = vmatprep.subr.mxu0 0.0
        %7001 = vmatpush1.msra.mxu0 0.0
        %7002 = vmatprep.subr.mxu0 0.0
        %7003 = vmatpush1.msra.mxu0 0.0
        %7004 = vmatprep.subr.mxu0 0.0
        %7005 = vmatpush1.msra.mxu0 0.0
        %7006 = vmatprep.subr.mxu0 0.0
        %7007 = vmatpush1.msra.mxu0 0.0
        %7008 = vmatprep.subr.mxu0 0.0
        %7009 = vmatpush1.msra.mxu0 0.0
        %7010 = vmatprep.subr.mxu0 0.0
        %7011 = vmatpush1.msra.mxu0 0.0
        %7012 = vmatprep.subr.mxu0 0.0
        %7013 = vmatpush1.msra.mxu0 0.0
        %7014 = vmatprep.subr.mxu0 0.0
        %7015 = vmatpush1.msra.mxu0 0.0
        %7016 = vmatprep.subr.mxu0 0.0
        %7017 = vmatpush1.msra.mxu0 0.0
        %7018 = vmatprep.mubr.f32.mxu0 0.0
        %v7019 = vand.u32 %v5739, 4294901760
        %7020 = vmatmul.mubr.f32.gmra.mrb[0].mxu0 %v7019
        %v7021 = vpop.f32.mrb[0].mxu0
        %v7022 = vadd.f32 %v6935, %v7021
        %v7023 = vpop.f32.mrb[0].mxu0
        %7024 = vdwg.mxu0
        %v7025 = vsub.f32 %v7022, %v3156
        %7026 = vmatprep.subr.mxu0 0.0
        %v7027 = vand.u32 %v3159, 4294901760
        %7028 = vmatpush1.msra.mxu0 %v7027
        %7029 = vmatprep.subr.mxu0 0.0
        %v7030 = vand.u32 %v3160, 4294901760
        %7031 = vmatpush1.msra.mxu0 %v7030
        %7032 = vmatprep.subr.mxu0 0.0
        %v7033 = vand.u32 %v3161, 4294901760
        %7034 = vmatpush1.msra.mxu0 %v7033
        %7035 = vmatprep.subr.mxu0 0.0
        %v7036 = vand.u32 %v3162, 4294901760
        %7037 = vmatpush1.msra.mxu0 %v7036
        %7038 = vmatprep.subr.mxu0 0.0
        %v7039 = vand.u32 %v3163, 4294901760
        %7040 = vmatpush1.msra.mxu0 %v7039
        %7041 = vmatprep.subr.mxu0 0.0
        %v7042 = vand.u32 %v3164, 4294901760
        %7043 = vmatpush1.msra.mxu0 %v7042
        %7044 = vmatprep.subr.mxu0 0.0
        %v7045 = vand.u32 %v3165, 4294901760
        %7046 = vmatpush1.msra.mxu0 %v7045
        %7047 = vmatprep.subr.mxu0 0.0
        %v7048 = vand.u32 %v3166, 4294901760
        %7049 = vmatpush1.msra.mxu0 %v7048
        %7050 = vmatprep.subr.mxu0 0.0
        %v7051 = vand.u32 %v3167, 4294901760
        %7052 = vmatpush1.msra.mxu0 %v7051
        %7053 = vmatprep.subr.mxu0 0.0
        %v7054 = vand.u32 %v3168, 4294901760
        %7055 = vmatpush1.msra.mxu0 %v7054
        %7056 = vmatprep.subr.mxu0 0.0
        %v7057 = vand.u32 %v3169, 4294901760
        %7058 = vmatpush1.msra.mxu0 %v7057
        %7059 = vmatprep.subr.mxu0 0.0
        %v7060 = vand.u32 %v3170, 4294901760
        %7061 = vmatpush1.msra.mxu0 %v7060
        %7062 = vmatprep.subr.mxu0 0.0
        %v7063 = vand.u32 %v3171, 4294901760
        %7064 = vmatpush1.msra.mxu0 %v7063
        %7065 = vmatprep.subr.mxu0 0.0
        %v7066 = vand.u32 %v3172, 4294901760
        %7067 = vmatpush1.msra.mxu0 %v7066
        %7068 = vmatprep.subr.mxu0 0.0
        %v7069 = vand.u32 %v3173, 4294901760
        %7070 = vmatpush1.msra.mxu0 %v7069
        %7071 = vmatprep.subr.mxu0 0.0
        %v7072 = vand.u32 %v3174, 4294901760
        %7073 = vmatpush1.msra.mxu0 %v7072
        %7074 = vmatprep.subr.mxu0 0.0
        %7075 = vmatpush1.msra.mxu0 0.0
        %7076 = vmatprep.subr.mxu0 0.0
        %7077 = vmatpush1.msra.mxu0 0.0
        %7078 = vmatprep.subr.mxu0 0.0
        %7079 = vmatpush1.msra.mxu0 0.0
        %7080 = vmatprep.subr.mxu0 0.0
        %7081 = vmatpush1.msra.mxu0 0.0
        %7082 = vmatprep.subr.mxu0 0.0
        %7083 = vmatpush1.msra.mxu0 0.0
        %7084 = vmatprep.subr.mxu0 0.0
        %7085 = vmatpush1.msra.mxu0 0.0
        %7086 = vmatprep.subr.mxu0 0.0
        %7087 = vmatpush1.msra.mxu0 0.0
        %7088 = vmatprep.subr.mxu0 0.0
        %7089 = vmatpush1.msra.mxu0 0.0
        %7090 = vmatprep.subr.mxu0 0.0
        %7091 = vmatpush1.msra.mxu0 0.0
        %7092 = vmatprep.subr.mxu0 0.0
        %7093 = vmatpush1.msra.mxu0 0.0
        %7094 = vmatprep.subr.mxu0 0.0
        %7095 = vmatpush1.msra.mxu0 0.0
        %7096 = vmatprep.subr.mxu0 0.0
        %7097 = vmatpush1.msra.mxu0 0.0
        %7098 = vmatprep.subr.mxu0 0.0
        %7099 = vmatpush1.msra.mxu0 0.0
        %7100 = vmatprep.subr.mxu0 0.0
        %7101 = vmatpush1.msra.mxu0 0.0
        %7102 = vmatprep.subr.mxu0 0.0
        %7103 = vmatpush1.msra.mxu0 0.0
        %7104 = vmatprep.subr.mxu0 0.0
        %7105 = vmatpush1.msra.mxu0 0.0
        %7106 = vmatprep.mubr.f32.mxu0 0.0
        %v7107 = vand.u32 %v5739, 4294901760
        %v7108 = vsub.f32 %v5739, %v7107
        %v7109 = vand.u32 %v7108, 4294901760
        %v7110 = vsub.f32 %v7108, %v7109
        %v7111 = vand.u32 %v7110, 4294901760
        %7112 = vmatmul.mubr.f32.gmra.mrb[0].mxu0 %v7111
        %v7113 = vpop.f32.mrb[0].mxu0
        %v7114 = vadd.f32 0.0, %v7113
        %v7115 = vpop.f32.mrb[0].mxu0
        %7116 = vdwg.mxu0
        %7117 = vmatprep.subr.mxu0 0.0
        %v7118 = vand.u32 %v3159, 4294901760
        %v7119 = vsub.f32 %v3159, %v7118
        %v7120 = vand.u32 %v7119, 4294901760
        %v7121 = vsub.f32 %v7119, %v7120
        %v7122 = vand.u32 %v7121, 4294901760
        %7123 = vmatpush1.msra.mxu0 %v7122
        %7124 = vmatprep.subr.mxu0 0.0
        %v7125 = vand.u32 %v3160, 4294901760
        %v7126 = vsub.f32 %v3160, %v7125
        %v7127 = vand.u32 %v7126, 4294901760
        %v7128 = vsub.f32 %v7126, %v7127
        %v7129 = vand.u32 %v7128, 4294901760
        %7130 = vmatpush1.msra.mxu0 %v7129
        %7131 = vmatprep.subr.mxu0 0.0
        %v7132 = vand.u32 %v3161, 4294901760
        %v7133 = vsub.f32 %v3161, %v7132
        %v7134 = vand.u32 %v7133, 4294901760
        %v7135 = vsub.f32 %v7133, %v7134
        %v7136 = vand.u32 %v7135, 4294901760
        %7137 = vmatpush1.msra.mxu0 %v7136
        %7138 = vmatprep.subr.mxu0 0.0
        %v7139 = vand.u32 %v3162, 4294901760
        %v7140 = vsub.f32 %v3162, %v7139
        %v7141 = vand.u32 %v7140, 4294901760
        %v7142 = vsub.f32 %v7140, %v7141
        %v7143 = vand.u32 %v7142, 4294901760
        %7144 = vmatpush1.msra.mxu0 %v7143
        %7145 = vmatprep.subr.mxu0 0.0
        %v7146 = vand.u32 %v3163, 4294901760
        %v7147 = vsub.f32 %v3163, %v7146
        %v7148 = vand.u32 %v7147, 4294901760
        %v7149 = vsub.f32 %v7147, %v7148
        %v7150 = vand.u32 %v7149, 4294901760
        %7151 = vmatpush1.msra.mxu0 %v7150
        %7152 = vmatprep.subr.mxu0 0.0
        %v7153 = vand.u32 %v3164, 4294901760
        %v7154 = vsub.f32 %v3164, %v7153
        %v7155 = vand.u32 %v7154, 4294901760
        %v7156 = vsub.f32 %v7154, %v7155
        %v7157 = vand.u32 %v7156, 4294901760
        %7158 = vmatpush1.msra.mxu0 %v7157
        %7159 = vmatprep.subr.mxu0 0.0
        %v7160 = vand.u32 %v3165, 4294901760
        %v7161 = vsub.f32 %v3165, %v7160
        %v7162 = vand.u32 %v7161, 4294901760
        %v7163 = vsub.f32 %v7161, %v7162
        %v7164 = vand.u32 %v7163, 4294901760
        %7165 = vmatpush1.msra.mxu0 %v7164
        %7166 = vmatprep.subr.mxu0 0.0
        %v7167 = vand.u32 %v3166, 4294901760
        %v7168 = vsub.f32 %v3166, %v7167
        %v7169 = vand.u32 %v7168, 4294901760
        %v7170 = vsub.f32 %v7168, %v7169
        %v7171 = vand.u32 %v7170, 4294901760
        %7172 = vmatpush1.msra.mxu0 %v7171
        %7173 = vmatprep.subr.mxu0 0.0
        %v7174 = vand.u32 %v3167, 4294901760
        %v7175 = vsub.f32 %v3167, %v7174
        %v7176 = vand.u32 %v7175, 4294901760
        %v7177 = vsub.f32 %v7175, %v7176
        %v7178 = vand.u32 %v7177, 4294901760
        %7179 = vmatpush1.msra.mxu0 %v7178
        %7180 = vmatprep.subr.mxu0 0.0
        %v7181 = vand.u32 %v3168, 4294901760
        %v7182 = vsub.f32 %v3168, %v7181
        %v7183 = vand.u32 %v7182, 4294901760
        %v7184 = vsub.f32 %v7182, %v7183
        %v7185 = vand.u32 %v7184, 4294901760
        %7186 = vmatpush1.msra.mxu0 %v7185
        %7187 = vmatprep.subr.mxu0 0.0
        %v7188 = vand.u32 %v3169, 4294901760
        %v7189 = vsub.f32 %v3169, %v7188
        %v7190 = vand.u32 %v7189, 4294901760
        %v7191 = vsub.f32 %v7189, %v7190
        %v7192 = vand.u32 %v7191, 4294901760
        %7193 = vmatpush1.msra.mxu0 %v7192
        %7194 = vmatprep.subr.mxu0 0.0
        %v7195 = vand.u32 %v3170, 4294901760
        %v7196 = vsub.f32 %v3170, %v7195
        %v7197 = vand.u32 %v7196, 4294901760
        %v7198 = vsub.f32 %v7196, %v7197
        %v7199 = vand.u32 %v7198, 4294901760
        %7200 = vmatpush1.msra.mxu0 %v7199
        %7201 = vmatprep.subr.mxu0 0.0
        %v7202 = vand.u32 %v3171, 4294901760
        %v7203 = vsub.f32 %v3171, %v7202
        %v7204 = vand.u32 %v7203, 4294901760
        %v7205 = vsub.f32 %v7203, %v7204
        %v7206 = vand.u32 %v7205, 4294901760
        %7207 = vmatpush1.msra.mxu0 %v7206
        %7208 = vmatprep.subr.mxu0 0.0
        %v7209 = vand.u32 %v3172, 4294901760
        %v7210 = vsub.f32 %v3172, %v7209
        %v7211 = vand.u32 %v7210, 4294901760
        %v7212 = vsub.f32 %v7210, %v7211
        %v7213 = vand.u32 %v7212, 4294901760
        %7214 = vmatpush1.msra.mxu0 %v7213
        %7215 = vmatprep.subr.mxu0 0.0
        %v7216 = vand.u32 %v3173, 4294901760
        %v7217 = vsub.f32 %v3173, %v7216
        %v7218 = vand.u32 %v7217, 4294901760
        %v7219 = vsub.f32 %v7217, %v7218
        %v7220 = vand.u32 %v7219, 4294901760
        %7221 = vmatpush1.msra.mxu0 %v7220
        %7222 = vmatprep.subr.mxu0 0.0
        %v7223 = vand.u32 %v3174, 4294901760
        %v7224 = vsub.f32 %v3174, %v7223
        %v7225 = vand.u32 %v7224, 4294901760
        %v7226 = vsub.f32 %v7224, %v7225
        %v7227 = vand.u32 %v7226, 4294901760
        %7228 = vmatpush1.msra.mxu0 %v7227
        %7229 = vmatprep.subr.mxu0 0.0
        %7230 = vmatpush1.msra.mxu0 0.0
        %7231 = vmatprep.subr.mxu0 0.0
        %7232 = vmatpush1.msra.mxu0 0.0
        %7233 = vmatprep.subr.mxu0 0.0
        %7234 = vmatpush1.msra.mxu0 0.0
        %7235 = vmatprep.subr.mxu0 0.0
        %7236 = vmatpush1.msra.mxu0 0.0
        %7237 = vmatprep.subr.mxu0 0.0
        %7238 = vmatpush1.msra.mxu0 0.0
        %7239 = vmatprep.subr.mxu0 0.0
        %7240 = vmatpush1.msra.mxu0 0.0
        %7241 = vmatprep.subr.mxu0 0.0
        %7242 = vmatpush1.msra.mxu0 0.0
        %7243 = vmatprep.subr.mxu0 0.0
        %7244 = vmatpush1.msra.mxu0 0.0
        %7245 = vmatprep.subr.mxu0 0.0
        %7246 = vmatpush1.msra.mxu0 0.0
        %7247 = vmatprep.subr.mxu0 0.0
        %7248 = vmatpush1.msra.mxu0 0.0
        %7249 = vmatprep.subr.mxu0 0.0
        %7250 = vmatpush1.msra.mxu0 0.0
        %7251 = vmatprep.subr.mxu0 0.0
        %7252 = vmatpush1.msra.mxu0 0.0
        %7253 = vmatprep.subr.mxu0 0.0
        %7254 = vmatpush1.msra.mxu0 0.0
        %7255 = vmatprep.subr.mxu0 0.0
        %7256 = vmatpush1.msra.mxu0 0.0
        %7257 = vmatprep.subr.mxu0 0.0
        %7258 = vmatpush1.msra.mxu0 0.0
        %7259 = vmatprep.subr.mxu0 0.0
        %7260 = vmatpush1.msra.mxu0 0.0
        %7261 = vmatprep.mubr.f32.mxu0 0.0
        %v7262 = vand.u32 %v5739, 4294901760
        %7263 = vmatmul.mubr.f32.gmra.mrb[0].mxu0 %v7262
        %v7264 = vpop.f32.mrb[0].mxu0
        %v7265 = vadd.f32 %v7114, %v7264
        %v7266 = vpop.f32.mrb[0].mxu0
        %7267 = vdwg.mxu0
        %7268 = vmatprep.subr.mxu0 0.0
        %v7269 = vand.u32 %v3159, 4294901760
        %v7270 = vsub.f32 %v3159, %v7269
        %7271 = vmatpush1.msra.mxu0 %v7270
        %7272 = vmatprep.subr.mxu0 0.0
        %v7273 = vand.u32 %v3160, 4294901760
        %v7274 = vsub.f32 %v3160, %v7273
        %7275 = vmatpush1.msra.mxu0 %v7274
        %7276 = vmatprep.subr.mxu0 0.0
        %v7277 = vand.u32 %v3161, 4294901760
        %v7278 = vsub.f32 %v3161, %v7277
        %7279 = vmatpush1.msra.mxu0 %v7278
        %7280 = vmatprep.subr.mxu0 0.0
        %v7281 = vand.u32 %v3162, 4294901760
        %v7282 = vsub.f32 %v3162, %v7281
        %7283 = vmatpush1.msra.mxu0 %v7282
        %7284 = vmatprep.subr.mxu0 0.0
        %v7285 = vand.u32 %v3163, 4294901760
        %v7286 = vsub.f32 %v3163, %v7285
        %7287 = vmatpush1.msra.mxu0 %v7286
        %7288 = vmatprep.subr.mxu0 0.0
        %v7289 = vand.u32 %v3164, 4294901760
        %v7290 = vsub.f32 %v3164, %v7289
        %7291 = vmatpush1.msra.mxu0 %v7290
        %7292 = vmatprep.subr.mxu0 0.0
        %v7293 = vand.u32 %v3165, 4294901760
        %v7294 = vsub.f32 %v3165, %v7293
        %7295 = vmatpush1.msra.mxu0 %v7294
        %7296 = vmatprep.subr.mxu0 0.0
        %v7297 = vand.u32 %v3166, 4294901760
        %v7298 = vsub.f32 %v3166, %v7297
        %7299 = vmatpush1.msra.mxu0 %v7298
        %7300 = vmatprep.subr.mxu0 0.0
        %v7301 = vand.u32 %v3167, 4294901760
        %v7302 = vsub.f32 %v3167, %v7301
        %7303 = vmatpush1.msra.mxu0 %v7302
        %7304 = vmatprep.subr.mxu0 0.0
        %v7305 = vand.u32 %v3168, 4294901760
        %v7306 = vsub.f32 %v3168, %v7305
        %7307 = vmatpush1.msra.mxu0 %v7306
        %7308 = vmatprep.subr.mxu0 0.0
        %v7309 = vand.u32 %v3169, 4294901760
        %v7310 = vsub.f32 %v3169, %v7309
        %7311 = vmatpush1.msra.mxu0 %v7310
        %7312 = vmatprep.subr.mxu0 0.0
        %v7313 = vand.u32 %v3170, 4294901760
        %v7314 = vsub.f32 %v3170, %v7313
        %7315 = vmatpush1.msra.mxu0 %v7314
        %7316 = vmatprep.subr.mxu0 0.0
        %v7317 = vand.u32 %v3171, 4294901760
        %v7318 = vsub.f32 %v3171, %v7317
        %7319 = vmatpush1.msra.mxu0 %v7318
        %7320 = vmatprep.subr.mxu0 0.0
        %v7321 = vand.u32 %v3172, 4294901760
        %v7322 = vsub.f32 %v3172, %v7321
        %7323 = vmatpush1.msra.mxu0 %v7322
        %7324 = vmatprep.subr.mxu0 0.0
        %v7325 = vand.u32 %v3173, 4294901760
        %v7326 = vsub.f32 %v3173, %v7325
        %7327 = vmatpush1.msra.mxu0 %v7326
        %7328 = vmatprep.subr.mxu0 0.0
        %v7329 = vand.u32 %v3174, 4294901760
        %v7330 = vsub.f32 %v3174, %v7329
        %7331 = vmatpush1.msra.mxu0 %v7330
        %7332 = vmatprep.subr.mxu0 0.0
        %7333 = vmatpush1.msra.mxu0 0.0
        %7334 = vmatprep.subr.mxu0 0.0
        %7335 = vmatpush1.msra.mxu0 0.0
        %7336 = vmatprep.subr.mxu0 0.0
        %7337 = vmatpush1.msra.mxu0 0.0
        %7338 = vmatprep.subr.mxu0 0.0
        %7339 = vmatpush1.msra.mxu0 0.0
        %7340 = vmatprep.subr.mxu0 0.0
        %7341 = vmatpush1.msra.mxu0 0.0
        %7342 = vmatprep.subr.mxu0 0.0
        %7343 = vmatpush1.msra.mxu0 0.0
        %7344 = vmatprep.subr.mxu0 0.0
        %7345 = vmatpush1.msra.mxu0 0.0
        %7346 = vmatprep.subr.mxu0 0.0
        %7347 = vmatpush1.msra.mxu0 0.0
        %7348 = vmatprep.subr.mxu0 0.0
        %7349 = vmatpush1.msra.mxu0 0.0
        %7350 = vmatprep.subr.mxu0 0.0
        %7351 = vmatpush1.msra.mxu0 0.0
        %7352 = vmatprep.subr.mxu0 0.0
        %7353 = vmatpush1.msra.mxu0 0.0
        %7354 = vmatprep.subr.mxu0 0.0
        %7355 = vmatpush1.msra.mxu0 0.0
        %7356 = vmatprep.subr.mxu0 0.0
        %7357 = vmatpush1.msra.mxu0 0.0
        %7358 = vmatprep.subr.mxu0 0.0
        %7359 = vmatpush1.msra.mxu0 0.0
        %7360 = vmatprep.subr.mxu0 0.0
        %7361 = vmatpush1.msra.mxu0 0.0
        %7362 = vmatprep.subr.mxu0 0.0
        %7363 = vmatpush1.msra.mxu0 0.0
        %7364 = vmatprep.mubr.f32.mxu0 0.0
        %v7365 = vand.u32 %v5739, 4294901760
        %v7366 = vsub.f32 %v5739, %v7365
        %7367 = vmatmul.mubr.f32.gmra.mrb[0].mxu0 %v7366
        %v7368 = vpop.f32.mrb[0].mxu0
        %v7369 = vadd.f32 %v7265, %v7368
        %v7370 = vpop.f32.mrb[0].mxu0
        %7371 = vdwg.mxu0
        %7372 = vmatprep.subr.mxu0 0.0
        %v7373 = vand.u32 %v3159, 4294901760
        %7374 = vmatpush1.msra.mxu0 %v7373
        %7375 = vmatprep.subr.mxu0 0.0
        %v7376 = vand.u32 %v3160, 4294901760
        %7377 = vmatpush1.msra.mxu0 %v7376
        %7378 = vmatprep.subr.mxu0 0.0
        %v7379 = vand.u32 %v3161, 4294901760
        %7380 = vmatpush1.msra.mxu0 %v7379
        %7381 = vmatprep.subr.mxu0 0.0
        %v7382 = vand.u32 %v3162, 4294901760
        %7383 = vmatpush1.msra.mxu0 %v7382
        %7384 = vmatprep.subr.mxu0 0.0
        %v7385 = vand.u32 %v3163, 4294901760
        %7386 = vmatpush1.msra.mxu0 %v7385
        %7387 = vmatprep.subr.mxu0 0.0
        %v7388 = vand.u32 %v3164, 4294901760
        %7389 = vmatpush1.msra.mxu0 %v7388
        %7390 = vmatprep.subr.mxu0 0.0
        %v7391 = vand.u32 %v3165, 4294901760
        %7392 = vmatpush1.msra.mxu0 %v7391
        %7393 = vmatprep.subr.mxu0 0.0
        %v7394 = vand.u32 %v3166, 4294901760
        %7395 = vmatpush1.msra.mxu0 %v7394
        %7396 = vmatprep.subr.mxu0 0.0
        %v7397 = vand.u32 %v3167, 4294901760
        %7398 = vmatpush1.msra.mxu0 %v7397
        %7399 = vmatprep.subr.mxu0 0.0
        %v7400 = vand.u32 %v3168, 4294901760
        %7401 = vmatpush1.msra.mxu0 %v7400
        %7402 = vmatprep.subr.mxu0 0.0
        %v7403 = vand.u32 %v3169, 4294901760
        %7404 = vmatpush1.msra.mxu0 %v7403
        %7405 = vmatprep.subr.mxu0 0.0
        %v7406 = vand.u32 %v3170, 4294901760
        %7407 = vmatpush1.msra.mxu0 %v7406
        %7408 = vmatprep.subr.mxu0 0.0
        %v7409 = vand.u32 %v3171, 4294901760
        %7410 = vmatpush1.msra.mxu0 %v7409
        %7411 = vmatprep.subr.mxu0 0.0
        %v7412 = vand.u32 %v3172, 4294901760
        %7413 = vmatpush1.msra.mxu0 %v7412
        %7414 = vmatprep.subr.mxu0 0.0
        %v7415 = vand.u32 %v3173, 4294901760
        %7416 = vmatpush1.msra.mxu0 %v7415
        %7417 = vmatprep.subr.mxu0 0.0
        %v7418 = vand.u32 %v3174, 4294901760
        %7419 = vmatpush1.msra.mxu0 %v7418
        %7420 = vmatprep.subr.mxu0 0.0
        %7421 = vmatpush1.msra.mxu0 0.0
        %7422 = vmatprep.subr.mxu0 0.0
        %7423 = vmatpush1.msra.mxu0 0.0
        %7424 = vmatprep.subr.mxu0 0.0
        %7425 = vmatpush1.msra.mxu0 0.0
        %7426 = vmatprep.subr.mxu0 0.0
        %7427 = vmatpush1.msra.mxu0 0.0
        %7428 = vmatprep.subr.mxu0 0.0
        %7429 = vmatpush1.msra.mxu0 0.0
        %7430 = vmatprep.subr.mxu0 0.0
        %7431 = vmatpush1.msra.mxu0 0.0
        %7432 = vmatprep.subr.mxu0 0.0
        %7433 = vmatpush1.msra.mxu0 0.0
        %7434 = vmatprep.subr.mxu0 0.0
        %7435 = vmatpush1.msra.mxu0 0.0
        %7436 = vmatprep.subr.mxu0 0.0
        %7437 = vmatpush1.msra.mxu0 0.0
        %7438 = vmatprep.subr.mxu0 0.0
        %7439 = vmatpush1.msra.mxu0 0.0
        %7440 = vmatprep.subr.mxu0 0.0
        %7441 = vmatpush1.msra.mxu0 0.0
        %7442 = vmatprep.subr.mxu0 0.0
        %7443 = vmatpush1.msra.mxu0 0.0
        %7444 = vmatprep.subr.mxu0 0.0
        %7445 = vmatpush1.msra.mxu0 0.0
        %7446 = vmatprep.subr.mxu0 0.0
        %7447 = vmatpush1.msra.mxu0 0.0
        %7448 = vmatprep.subr.mxu0 0.0
        %7449 = vmatpush1.msra.mxu0 0.0
        %7450 = vmatprep.subr.mxu0 0.0
        %7451 = vmatpush1.msra.mxu0 0.0
        %7452 = vmatprep.mubr.f32.mxu0 0.0
        %v7453 = vand.u32 %v5739, 4294901760
        %v7454 = vsub.f32 %v5739, %v7453
        %v7455 = vand.u32 %v7454, 4294901760
        %7456 = vmatmul.mubr.f32.gmra.mrb[0].mxu0 %v7455
        %v7457 = vpop.f32.mrb[0].mxu0
        %v7458 = vadd.f32 %v7369, %v7457
        %v7459 = vpop.f32.mrb[0].mxu0
        %7460 = vdwg.mxu0
        %7461 = vmatprep.subr.mxu0 0.0
        %v7462 = vand.u32 %v3159, 4294901760
        %v7463 = vsub.f32 %v3159, %v7462
        %v7464 = vand.u32 %v7463, 4294901760
        %7465 = vmatpush1.msra.mxu0 %v7464
        %7466 = vmatprep.subr.mxu0 0.0
        %v7467 = vand.u32 %v3160, 4294901760
        %v7468 = vsub.f32 %v3160, %v7467
        %v7469 = vand.u32 %v7468, 4294901760
        %7470 = vmatpush1.msra.mxu0 %v7469
        %7471 = vmatprep.subr.mxu0 0.0
        %v7472 = vand.u32 %v3161, 4294901760
        %v7473 = vsub.f32 %v3161, %v7472
        %v7474 = vand.u32 %v7473, 4294901760
        %7475 = vmatpush1.msra.mxu0 %v7474
        %7476 = vmatprep.subr.mxu0 0.0
        %v7477 = vand.u32 %v3162, 4294901760
        %v7478 = vsub.f32 %v3162, %v7477
        %v7479 = vand.u32 %v7478, 4294901760
        %7480 = vmatpush1.msra.mxu0 %v7479
        %7481 = vmatprep.subr.mxu0 0.0
        %v7482 = vand.u32 %v3163, 4294901760
        %v7483 = vsub.f32 %v3163, %v7482
        %v7484 = vand.u32 %v7483, 4294901760
        %7485 = vmatpush1.msra.mxu0 %v7484
        %7486 = vmatprep.subr.mxu0 0.0
        %v7487 = vand.u32 %v3164, 4294901760
        %v7488 = vsub.f32 %v3164, %v7487
        %v7489 = vand.u32 %v7488, 4294901760
        %7490 = vmatpush1.msra.mxu0 %v7489
        %7491 = vmatprep.subr.mxu0 0.0
        %v7492 = vand.u32 %v3165, 4294901760
        %v7493 = vsub.f32 %v3165, %v7492
        %v7494 = vand.u32 %v7493, 4294901760
        %7495 = vmatpush1.msra.mxu0 %v7494
        %7496 = vmatprep.subr.mxu0 0.0
        %v7497 = vand.u32 %v3166, 4294901760
        %v7498 = vsub.f32 %v3166, %v7497
        %v7499 = vand.u32 %v7498, 4294901760
        %7500 = vmatpush1.msra.mxu0 %v7499
        %7501 = vmatprep.subr.mxu0 0.0
        %v7502 = vand.u32 %v3167, 4294901760
        %v7503 = vsub.f32 %v3167, %v7502
        %v7504 = vand.u32 %v7503, 4294901760
        %7505 = vmatpush1.msra.mxu0 %v7504
        %7506 = vmatprep.subr.mxu0 0.0
        %v7507 = vand.u32 %v3168, 4294901760
        %v7508 = vsub.f32 %v3168, %v7507
        %v7509 = vand.u32 %v7508, 4294901760
        %7510 = vmatpush1.msra.mxu0 %v7509
        %7511 = vmatprep.subr.mxu0 0.0
        %v7512 = vand.u32 %v3169, 4294901760
        %v7513 = vsub.f32 %v3169, %v7512
        %v7514 = vand.u32 %v7513, 4294901760
        %7515 = vmatpush1.msra.mxu0 %v7514
        %7516 = vmatprep.subr.mxu0 0.0
        %v7517 = vand.u32 %v3170, 4294901760
        %v7518 = vsub.f32 %v3170, %v7517
        %v7519 = vand.u32 %v7518, 4294901760
        %7520 = vmatpush1.msra.mxu0 %v7519
        %7521 = vmatprep.subr.mxu0 0.0
        %v7522 = vand.u32 %v3171, 4294901760
        %v7523 = vsub.f32 %v3171, %v7522
        %v7524 = vand.u32 %v7523, 4294901760
        %7525 = vmatpush1.msra.mxu0 %v7524
        %7526 = vmatprep.subr.mxu0 0.0
        %v7527 = vand.u32 %v3172, 4294901760
        %v7528 = vsub.f32 %v3172, %v7527
        %v7529 = vand.u32 %v7528, 4294901760
        %7530 = vmatpush1.msra.mxu0 %v7529
        %7531 = vmatprep.subr.mxu0 0.0
        %v7532 = vand.u32 %v3173, 4294901760
        %v7533 = vsub.f32 %v3173, %v7532
        %v7534 = vand.u32 %v7533, 4294901760
        %7535 = vmatpush1.msra.mxu0 %v7534
        %7536 = vmatprep.subr.mxu0 0.0
        %v7537 = vand.u32 %v3174, 4294901760
        %v7538 = vsub.f32 %v3174, %v7537
        %v7539 = vand.u32 %v7538, 4294901760
        %7540 = vmatpush1.msra.mxu0 %v7539
        %7541 = vmatprep.subr.mxu0 0.0
        %7542 = vmatpush1.msra.mxu0 0.0
        %7543 = vmatprep.subr.mxu0 0.0
        %7544 = vmatpush1.msra.mxu0 0.0
        %7545 = vmatprep.subr.mxu0 0.0
        %7546 = vmatpush1.msra.mxu0 0.0
        %7547 = vmatprep.subr.mxu0 0.0
        %7548 = vmatpush1.msra.mxu0 0.0
        %7549 = vmatprep.subr.mxu0 0.0
        %7550 = vmatpush1.msra.mxu0 0.0
        %7551 = vmatprep.subr.mxu0 0.0
        %7552 = vmatpush1.msra.mxu0 0.0
        %7553 = vmatprep.subr.mxu0 0.0
        %7554 = vmatpush1.msra.mxu0 0.0
        %7555 = vmatprep.subr.mxu0 0.0
        %7556 = vmatpush1.msra.mxu0 0.0
        %7557 = vmatprep.subr.mxu0 0.0
        %7558 = vmatpush1.msra.mxu0 0.0
        %7559 = vmatprep.subr.mxu0 0.0
        %7560 = vmatpush1.msra.mxu0 0.0
        %7561 = vmatprep.subr.mxu0 0.0
        %7562 = vmatpush1.msra.mxu0 0.0
        %7563 = vmatprep.subr.mxu0 0.0
        %7564 = vmatpush1.msra.mxu0 0.0
        %7565 = vmatprep.subr.mxu0 0.0
        %7566 = vmatpush1.msra.mxu0 0.0
        %7567 = vmatprep.subr.mxu0 0.0
        %7568 = vmatpush1.msra.mxu0 0.0
        %7569 = vmatprep.subr.mxu0 0.0
        %7570 = vmatpush1.msra.mxu0 0.0
        %7571 = vmatprep.subr.mxu0 0.0
        %7572 = vmatpush1.msra.mxu0 0.0
        %7573 = vmatprep.mubr.f32.mxu0 0.0
        %v7574 = vand.u32 %v5739, 4294901760
        %7575 = vmatmul.mubr.f32.gmra.mrb[0].mxu0 %v7574
        %v7576 = vpop.f32.mrb[0].mxu0
        %v7577 = vadd.f32 %v7458, %v7576
        %v7578 = vpop.f32.mrb[0].mxu0
        %7579 = vdwg.mxu0
        %7580 = vmatprep.subr.mxu0 0.0
        %v7581 = vand.u32 %v3159, 4294901760
        %7582 = vmatpush1.msra.mxu0 %v7581
        %7583 = vmatprep.subr.mxu0 0.0
        %v7584 = vand.u32 %v3160, 4294901760
        %7585 = vmatpush1.msra.mxu0 %v7584
        %7586 = vmatprep.subr.mxu0 0.0
        %v7587 = vand.u32 %v3161, 4294901760
        %7588 = vmatpush1.msra.mxu0 %v7587
        %7589 = vmatprep.subr.mxu0 0.0
        %v7590 = vand.u32 %v3162, 4294901760
        %7591 = vmatpush1.msra.mxu0 %v7590
        %7592 = vmatprep.subr.mxu0 0.0
        %v7593 = vand.u32 %v3163, 4294901760
        %7594 = vmatpush1.msra.mxu0 %v7593
        %7595 = vmatprep.subr.mxu0 0.0
        %v7596 = vand.u32 %v3164, 4294901760
        %7597 = vmatpush1.msra.mxu0 %v7596
        %7598 = vmatprep.subr.mxu0 0.0
        %v7599 = vand.u32 %v3165, 4294901760
        %7600 = vmatpush1.msra.mxu0 %v7599
        %7601 = vmatprep.subr.mxu0 0.0
        %v7602 = vand.u32 %v3166, 4294901760
        %7603 = vmatpush1.msra.mxu0 %v7602
        %7604 = vmatprep.subr.mxu0 0.0
        %v7605 = vand.u32 %v3167, 4294901760
        %7606 = vmatpush1.msra.mxu0 %v7605
        %7607 = vmatprep.subr.mxu0 0.0
        %v7608 = vand.u32 %v3168, 4294901760
        %7609 = vmatpush1.msra.mxu0 %v7608
        %7610 = vmatprep.subr.mxu0 0.0
        %v7611 = vand.u32 %v3169, 4294901760
        %7612 = vmatpush1.msra.mxu0 %v7611
        %7613 = vmatprep.subr.mxu0 0.0
        %v7614 = vand.u32 %v3170, 4294901760
        %7615 = vmatpush1.msra.mxu0 %v7614
        %7616 = vmatprep.subr.mxu0 0.0
        %v7617 = vand.u32 %v3171, 4294901760
        %7618 = vmatpush1.msra.mxu0 %v7617
        %7619 = vmatprep.subr.mxu0 0.0
        %v7620 = vand.u32 %v3172, 4294901760
        %7621 = vmatpush1.msra.mxu0 %v7620
        %7622 = vmatprep.subr.mxu0 0.0
        %v7623 = vand.u32 %v3173, 4294901760
        %7624 = vmatpush1.msra.mxu0 %v7623
        %7625 = vmatprep.subr.mxu0 0.0
        %v7626 = vand.u32 %v3174, 4294901760
        %7627 = vmatpush1.msra.mxu0 %v7626
        %7628 = vmatprep.subr.mxu0 0.0
        %7629 = vmatpush1.msra.mxu0 0.0
        %7630 = vmatprep.subr.mxu0 0.0
        %7631 = vmatpush1.msra.mxu0 0.0
        %7632 = vmatprep.subr.mxu0 0.0
        %7633 = vmatpush1.msra.mxu0 0.0
        %7634 = vmatprep.subr.mxu0 0.0
        %7635 = vmatpush1.msra.mxu0 0.0
        %7636 = vmatprep.subr.mxu0 0.0
        %7637 = vmatpush1.msra.mxu0 0.0
        %7638 = vmatprep.subr.mxu0 0.0
        %7639 = vmatpush1.msra.mxu0 0.0
        %7640 = vmatprep.subr.mxu0 0.0
        %7641 = vmatpush1.msra.mxu0 0.0
        %7642 = vmatprep.subr.mxu0 0.0
        %7643 = vmatpush1.msra.mxu0 0.0
        %7644 = vmatprep.subr.mxu0 0.0
        %7645 = vmatpush1.msra.mxu0 0.0
        %7646 = vmatprep.subr.mxu0 0.0
        %7647 = vmatpush1.msra.mxu0 0.0
        %7648 = vmatprep.subr.mxu0 0.0
        %7649 = vmatpush1.msra.mxu0 0.0
        %7650 = vmatprep.subr.mxu0 0.0
        %7651 = vmatpush1.msra.mxu0 0.0
        %7652 = vmatprep.subr.mxu0 0.0
        %7653 = vmatpush1.msra.mxu0 0.0
        %7654 = vmatprep.subr.mxu0 0.0
        %7655 = vmatpush1.msra.mxu0 0.0
        %7656 = vmatprep.subr.mxu0 0.0
        %7657 = vmatpush1.msra.mxu0 0.0
        %7658 = vmatprep.subr.mxu0 0.0
        %7659 = vmatpush1.msra.mxu0 0.0
        %7660 = vmatprep.mubr.f32.mxu0 0.0
        %v7661 = vand.u32 %v5739, 4294901760
        %7662 = vmatmul.mubr.f32.gmra.mrb[0].mxu0 %v7661
        %v7663 = vpop.f32.mrb[0].mxu0
        %v7664 = vadd.f32 %v7577, %v7663
        %v7665 = vpop.f32.mrb[0].mxu0
        %7666 = vdwg.mxu0
        %v7667 = vsub.f32 %v7664, %v3816
        %7668 = vmatprep.subr.mxu0 0.0
        %v7669 = vand.u32 %v3819, 4294901760
        %7670 = vmatpush1.msra.mxu0 %v7669
        %7671 = vmatprep.subr.mxu0 0.0
        %v7672 = vand.u32 %v3820, 4294901760
        %7673 = vmatpush1.msra.mxu0 %v7672
        %7674 = vmatprep.subr.mxu0 0.0
        %v7675 = vand.u32 %v3821, 4294901760
        %7676 = vmatpush1.msra.mxu0 %v7675
        %7677 = vmatprep.subr.mxu0 0.0
        %v7678 = vand.u32 %v3822, 4294901760
        %7679 = vmatpush1.msra.mxu0 %v7678
        %7680 = vmatprep.subr.mxu0 0.0
        %v7681 = vand.u32 %v3823, 4294901760
        %7682 = vmatpush1.msra.mxu0 %v7681
        %7683 = vmatprep.subr.mxu0 0.0
        %v7684 = vand.u32 %v3824, 4294901760
        %7685 = vmatpush1.msra.mxu0 %v7684
        %7686 = vmatprep.subr.mxu0 0.0
        %v7687 = vand.u32 %v3825, 4294901760
        %7688 = vmatpush1.msra.mxu0 %v7687
        %7689 = vmatprep.subr.mxu0 0.0
        %v7690 = vand.u32 %v3826, 4294901760
        %7691 = vmatpush1.msra.mxu0 %v7690
        %7692 = vmatprep.subr.mxu0 0.0
        %v7693 = vand.u32 %v3827, 4294901760
        %7694 = vmatpush1.msra.mxu0 %v7693
        %7695 = vmatprep.subr.mxu0 0.0
        %v7696 = vand.u32 %v3828, 4294901760
        %7697 = vmatpush1.msra.mxu0 %v7696
        %7698 = vmatprep.subr.mxu0 0.0
        %v7699 = vand.u32 %v3829, 4294901760
        %7700 = vmatpush1.msra.mxu0 %v7699
        %7701 = vmatprep.subr.mxu0 0.0
        %v7702 = vand.u32 %v3830, 4294901760
        %7703 = vmatpush1.msra.mxu0 %v7702
        %7704 = vmatprep.subr.mxu0 0.0
        %v7705 = vand.u32 %v3831, 4294901760
        %7706 = vmatpush1.msra.mxu0 %v7705
        %7707 = vmatprep.subr.mxu0 0.0
        %v7708 = vand.u32 %v3832, 4294901760
        %7709 = vmatpush1.msra.mxu0 %v7708
        %7710 = vmatprep.subr.mxu0 0.0
        %v7711 = vand.u32 %v3833, 4294901760
        %7712 = vmatpush1.msra.mxu0 %v7711
        %7713 = vmatprep.subr.mxu0 0.0
        %v7714 = vand.u32 %v3834, 4294901760
        %7715 = vmatpush1.msra.mxu0 %v7714
        %7716 = vmatprep.subr.mxu0 0.0
        %7717 = vmatpush1.msra.mxu0 0.0
        %7718 = vmatprep.subr.mxu0 0.0
        %7719 = vmatpush1.msra.mxu0 0.0
        %7720 = vmatprep.subr.mxu0 0.0
        %7721 = vmatpush1.msra.mxu0 0.0
        %7722 = vmatprep.subr.mxu0 0.0
        %7723 = vmatpush1.msra.mxu0 0.0
        %7724 = vmatprep.subr.mxu0 0.0
        %7725 = vmatpush1.msra.mxu0 0.0
        %7726 = vmatprep.subr.mxu0 0.0
        %7727 = vmatpush1.msra.mxu0 0.0
        %7728 = vmatprep.subr.mxu0 0.0
        %7729 = vmatpush1.msra.mxu0 0.0
        %7730 = vmatprep.subr.mxu0 0.0
        %7731 = vmatpush1.msra.mxu0 0.0
        %7732 = vmatprep.subr.mxu0 0.0
        %7733 = vmatpush1.msra.mxu0 0.0
        %7734 = vmatprep.subr.mxu0 0.0
        %7735 = vmatpush1.msra.mxu0 0.0
        %7736 = vmatprep.subr.mxu0 0.0
        %7737 = vmatpush1.msra.mxu0 0.0
        %7738 = vmatprep.subr.mxu0 0.0
        %7739 = vmatpush1.msra.mxu0 0.0
        %7740 = vmatprep.subr.mxu0 0.0
        %7741 = vmatpush1.msra.mxu0 0.0
        %7742 = vmatprep.subr.mxu0 0.0
        %7743 = vmatpush1.msra.mxu0 0.0
        %7744 = vmatprep.subr.mxu0 0.0
        %7745 = vmatpush1.msra.mxu0 0.0
        %7746 = vmatprep.subr.mxu0 0.0
        %7747 = vmatpush1.msra.mxu0 0.0
        %7748 = vmatprep.mubr.f32.mxu0 0.0
        %v7749 = vand.u32 %v5739, 4294901760
        %v7750 = vsub.f32 %v5739, %v7749
        %v7751 = vand.u32 %v7750, 4294901760
        %v7752 = vsub.f32 %v7750, %v7751
        %v7753 = vand.u32 %v7752, 4294901760
        %7754 = vmatmul.mubr.f32.gmra.mrb[0].mxu0 %v7753
        %v7755 = vpop.f32.mrb[0].mxu0
        %v7756 = vadd.f32 0.0, %v7755
        %v7757 = vpop.f32.mrb[0].mxu0
        %7758 = vdwg.mxu0
        %7759 = vmatprep.subr.mxu0 0.0
        %v7760 = vand.u32 %v3819, 4294901760
        %v7761 = vsub.f32 %v3819, %v7760
        %v7762 = vand.u32 %v7761, 4294901760
        %v7763 = vsub.f32 %v7761, %v7762
        %v7764 = vand.u32 %v7763, 4294901760
        %7765 = vmatpush1.msra.mxu0 %v7764
        %7766 = vmatprep.subr.mxu0 0.0
        %v7767 = vand.u32 %v3820, 4294901760
        %v7768 = vsub.f32 %v3820, %v7767
        %v7769 = vand.u32 %v7768, 4294901760
        %v7770 = vsub.f32 %v7768, %v7769
        %v7771 = vand.u32 %v7770, 4294901760
        %7772 = vmatpush1.msra.mxu0 %v7771
        %7773 = vmatprep.subr.mxu0 0.0
        %v7774 = vand.u32 %v3821, 4294901760
        %v7775 = vsub.f32 %v3821, %v7774
        %v7776 = vand.u32 %v7775, 4294901760
        %v7777 = vsub.f32 %v7775, %v7776
        %v7778 = vand.u32 %v7777, 4294901760
        %7779 = vmatpush1.msra.mxu0 %v7778
        %7780 = vmatprep.subr.mxu0 0.0
        %v7781 = vand.u32 %v3822, 4294901760
        %v7782 = vsub.f32 %v3822, %v7781
        %v7783 = vand.u32 %v7782, 4294901760
        %v7784 = vsub.f32 %v7782, %v7783
        %v7785 = vand.u32 %v7784, 4294901760
        %7786 = vmatpush1.msra.mxu0 %v7785
        %7787 = vmatprep.subr.mxu0 0.0
        %v7788 = vand.u32 %v3823, 4294901760
        %v7789 = vsub.f32 %v3823, %v7788
        %v7790 = vand.u32 %v7789, 4294901760
        %v7791 = vsub.f32 %v7789, %v7790
        %v7792 = vand.u32 %v7791, 4294901760
        %7793 = vmatpush1.msra.mxu0 %v7792
        %7794 = vmatprep.subr.mxu0 0.0
        %v7795 = vand.u32 %v3824, 4294901760
        %v7796 = vsub.f32 %v3824, %v7795
        %v7797 = vand.u32 %v7796, 4294901760
        %v7798 = vsub.f32 %v7796, %v7797
        %v7799 = vand.u32 %v7798, 4294901760
        %7800 = vmatpush1.msra.mxu0 %v7799
        %7801 = vmatprep.subr.mxu0 0.0
        %v7802 = vand.u32 %v3825, 4294901760
        %v7803 = vsub.f32 %v3825, %v7802
        %v7804 = vand.u32 %v7803, 4294901760
        %v7805 = vsub.f32 %v7803, %v7804
        %v7806 = vand.u32 %v7805, 4294901760
        %7807 = vmatpush1.msra.mxu0 %v7806
        %7808 = vmatprep.subr.mxu0 0.0
        %v7809 = vand.u32 %v3826, 4294901760
        %v7810 = vsub.f32 %v3826, %v7809
        %v7811 = vand.u32 %v7810, 4294901760
        %v7812 = vsub.f32 %v7810, %v7811
        %v7813 = vand.u32 %v7812, 4294901760
        %7814 = vmatpush1.msra.mxu0 %v7813
        %7815 = vmatprep.subr.mxu0 0.0
        %v7816 = vand.u32 %v3827, 4294901760
        %v7817 = vsub.f32 %v3827, %v7816
        %v7818 = vand.u32 %v7817, 4294901760
        %v7819 = vsub.f32 %v7817, %v7818
        %v7820 = vand.u32 %v7819, 4294901760
        %7821 = vmatpush1.msra.mxu0 %v7820
        %7822 = vmatprep.subr.mxu0 0.0
        %v7823 = vand.u32 %v3828, 4294901760
        %v7824 = vsub.f32 %v3828, %v7823
        %v7825 = vand.u32 %v7824, 4294901760
        %v7826 = vsub.f32 %v7824, %v7825
        %v7827 = vand.u32 %v7826, 4294901760
        %7828 = vmatpush1.msra.mxu0 %v7827
        %7829 = vmatprep.subr.mxu0 0.0
        %v7830 = vand.u32 %v3829, 4294901760
        %v7831 = vsub.f32 %v3829, %v7830
        %v7832 = vand.u32 %v7831, 4294901760
        %v7833 = vsub.f32 %v7831, %v7832
        %v7834 = vand.u32 %v7833, 4294901760
        %7835 = vmatpush1.msra.mxu0 %v7834
        %7836 = vmatprep.subr.mxu0 0.0
        %v7837 = vand.u32 %v3830, 4294901760
        %v7838 = vsub.f32 %v3830, %v7837
        %v7839 = vand.u32 %v7838, 4294901760
        %v7840 = vsub.f32 %v7838, %v7839
        %v7841 = vand.u32 %v7840, 4294901760
        %7842 = vmatpush1.msra.mxu0 %v7841
        %7843 = vmatprep.subr.mxu0 0.0
        %v7844 = vand.u32 %v3831, 4294901760
        %v7845 = vsub.f32 %v3831, %v7844
        %v7846 = vand.u32 %v7845, 4294901760
        %v7847 = vsub.f32 %v7845, %v7846
        %v7848 = vand.u32 %v7847, 4294901760
        %7849 = vmatpush1.msra.mxu0 %v7848
        %7850 = vmatprep.subr.mxu0 0.0
        %v7851 = vand.u32 %v3832, 4294901760
        %v7852 = vsub.f32 %v3832, %v7851
        %v7853 = vand.u32 %v7852, 4294901760
        %v7854 = vsub.f32 %v7852, %v7853
        %v7855 = vand.u32 %v7854, 4294901760
        %7856 = vmatpush1.msra.mxu0 %v7855
        %7857 = vmatprep.subr.mxu0 0.0
        %v7858 = vand.u32 %v3833, 4294901760
        %v7859 = vsub.f32 %v3833, %v7858
        %v7860 = vand.u32 %v7859, 4294901760
        %v7861 = vsub.f32 %v7859, %v7860
        %v7862 = vand.u32 %v7861, 4294901760
        %7863 = vmatpush1.msra.mxu0 %v7862
        %7864 = vmatprep.subr.mxu0 0.0
        %v7865 = vand.u32 %v3834, 4294901760
        %v7866 = vsub.f32 %v3834, %v7865
        %v7867 = vand.u32 %v7866, 4294901760
        %v7868 = vsub.f32 %v7866, %v7867
        %v7869 = vand.u32 %v7868, 4294901760
        %7870 = vmatpush1.msra.mxu0 %v7869
        %7871 = vmatprep.subr.mxu0 0.0
        %7872 = vmatpush1.msra.mxu0 0.0
        %7873 = vmatprep.subr.mxu0 0.0
        %7874 = vmatpush1.msra.mxu0 0.0
        %7875 = vmatprep.subr.mxu0 0.0
        %7876 = vmatpush1.msra.mxu0 0.0
        %7877 = vmatprep.subr.mxu0 0.0
        %7878 = vmatpush1.msra.mxu0 0.0
        %7879 = vmatprep.subr.mxu0 0.0
        %7880 = vmatpush1.msra.mxu0 0.0
        %7881 = vmatprep.subr.mxu0 0.0
        %7882 = vmatpush1.msra.mxu0 0.0
        %7883 = vmatprep.subr.mxu0 0.0
        %7884 = vmatpush1.msra.mxu0 0.0
        %7885 = vmatprep.subr.mxu0 0.0
        %7886 = vmatpush1.msra.mxu0 0.0
        %7887 = vmatprep.subr.mxu0 0.0
        %7888 = vmatpush1.msra.mxu0 0.0
        %7889 = vmatprep.subr.mxu0 0.0
        %7890 = vmatpush1.msra.mxu0 0.0
        %7891 = vmatprep.subr.mxu0 0.0
        %7892 = vmatpush1.msra.mxu0 0.0
        %7893 = vmatprep.subr.mxu0 0.0
        %7894 = vmatpush1.msra.mxu0 0.0
        %7895 = vmatprep.subr.mxu0 0.0
        %7896 = vmatpush1.msra.mxu0 0.0
        %7897 = vmatprep.subr.mxu0 0.0
        %7898 = vmatpush1.msra.mxu0 0.0
        %7899 = vmatprep.subr.mxu0 0.0
        %7900 = vmatpush1.msra.mxu0 0.0
        %7901 = vmatprep.subr.mxu0 0.0
        %7902 = vmatpush1.msra.mxu0 0.0
        %7903 = vmatprep.mubr.f32.mxu0 0.0
        %v7904 = vand.u32 %v5739, 4294901760
        %7905 = vmatmul.mubr.f32.gmra.mrb[0].mxu0 %v7904
        %v7906 = vpop.f32.mrb[0].mxu0
        %v7907 = vadd.f32 %v7756, %v7906
        %v7908 = vpop.f32.mrb[0].mxu0
        %7909 = vdwg.mxu0
        %7910 = vmatprep.subr.mxu0 0.0
        %v7911 = vand.u32 %v3819, 4294901760
        %v7912 = vsub.f32 %v3819, %v7911
        %7913 = vmatpush1.msra.mxu0 %v7912
        %7914 = vmatprep.subr.mxu0 0.0
        %v7915 = vand.u32 %v3820, 4294901760
        %v7916 = vsub.f32 %v3820, %v7915
        %7917 = vmatpush1.msra.mxu0 %v7916
        %7918 = vmatprep.subr.mxu0 0.0
        %v7919 = vand.u32 %v3821, 4294901760
        %v7920 = vsub.f32 %v3821, %v7919
        %7921 = vmatpush1.msra.mxu0 %v7920
        %7922 = vmatprep.subr.mxu0 0.0
        %v7923 = vand.u32 %v3822, 4294901760
        %v7924 = vsub.f32 %v3822, %v7923
        %7925 = vmatpush1.msra.mxu0 %v7924
        %7926 = vmatprep.subr.mxu0 0.0
        %v7927 = vand.u32 %v3823, 4294901760
        %v7928 = vsub.f32 %v3823, %v7927
        %7929 = vmatpush1.msra.mxu0 %v7928
        %7930 = vmatprep.subr.mxu0 0.0
        %v7931 = vand.u32 %v3824, 4294901760
        %v7932 = vsub.f32 %v3824, %v7931
        %7933 = vmatpush1.msra.mxu0 %v7932
        %7934 = vmatprep.subr.mxu0 0.0
        %v7935 = vand.u32 %v3825, 4294901760
        %v7936 = vsub.f32 %v3825, %v7935
        %7937 = vmatpush1.msra.mxu0 %v7936
        %7938 = vmatprep.subr.mxu0 0.0
        %v7939 = vand.u32 %v3826, 4294901760
        %v7940 = vsub.f32 %v3826, %v7939
        %7941 = vmatpush1.msra.mxu0 %v7940
        %7942 = vmatprep.subr.mxu0 0.0
        %v7943 = vand.u32 %v3827, 4294901760
        %v7944 = vsub.f32 %v3827, %v7943
        %7945 = vmatpush1.msra.mxu0 %v7944
        %7946 = vmatprep.subr.mxu0 0.0
        %v7947 = vand.u32 %v3828, 4294901760
        %v7948 = vsub.f32 %v3828, %v7947
        %7949 = vmatpush1.msra.mxu0 %v7948
        %7950 = vmatprep.subr.mxu0 0.0
        %v7951 = vand.u32 %v3829, 4294901760
        %v7952 = vsub.f32 %v3829, %v7951
        %7953 = vmatpush1.msra.mxu0 %v7952
        %7954 = vmatprep.subr.mxu0 0.0
        %v7955 = vand.u32 %v3830, 4294901760
        %v7956 = vsub.f32 %v3830, %v7955
        %7957 = vmatpush1.msra.mxu0 %v7956
        %7958 = vmatprep.subr.mxu0 0.0
        %v7959 = vand.u32 %v3831, 4294901760
        %v7960 = vsub.f32 %v3831, %v7959
        %7961 = vmatpush1.msra.mxu0 %v7960
        %7962 = vmatprep.subr.mxu0 0.0
        %v7963 = vand.u32 %v3832, 4294901760
        %v7964 = vsub.f32 %v3832, %v7963
        %7965 = vmatpush1.msra.mxu0 %v7964
        %7966 = vmatprep.subr.mxu0 0.0
        %v7967 = vand.u32 %v3833, 4294901760
        %v7968 = vsub.f32 %v3833, %v7967
        %7969 = vmatpush1.msra.mxu0 %v7968
        %7970 = vmatprep.subr.mxu0 0.0
        %v7971 = vand.u32 %v3834, 4294901760
        %v7972 = vsub.f32 %v3834, %v7971
        %7973 = vmatpush1.msra.mxu0 %v7972
        %7974 = vmatprep.subr.mxu0 0.0
        %7975 = vmatpush1.msra.mxu0 0.0
        %7976 = vmatprep.subr.mxu0 0.0
        %7977 = vmatpush1.msra.mxu0 0.0
        %7978 = vmatprep.subr.mxu0 0.0
        %7979 = vmatpush1.msra.mxu0 0.0
        %7980 = vmatprep.subr.mxu0 0.0
        %7981 = vmatpush1.msra.mxu0 0.0
        %7982 = vmatprep.subr.mxu0 0.0
        %7983 = vmatpush1.msra.mxu0 0.0
        %7984 = vmatprep.subr.mxu0 0.0
        %7985 = vmatpush1.msra.mxu0 0.0
        %7986 = vmatprep.subr.mxu0 0.0
        %7987 = vmatpush1.msra.mxu0 0.0
        %7988 = vmatprep.subr.mxu0 0.0
        %7989 = vmatpush1.msra.mxu0 0.0
        %7990 = vmatprep.subr.mxu0 0.0
        %7991 = vmatpush1.msra.mxu0 0.0
        %7992 = vmatprep.subr.mxu0 0.0
        %7993 = vmatpush1.msra.mxu0 0.0
        %7994 = vmatprep.subr.mxu0 0.0
        %7995 = vmatpush1.msra.mxu0 0.0
        %7996 = vmatprep.subr.mxu0 0.0
        %7997 = vmatpush1.msra.mxu0 0.0
        %7998 = vmatprep.subr.mxu0 0.0
        %7999 = vmatpush1.msra.mxu0 0.0
        %8000 = vmatprep.subr.mxu0 0.0
        %8001 = vmatpush1.msra.mxu0 0.0
        %8002 = vmatprep.subr.mxu0 0.0
        %8003 = vmatpush1.msra.mxu0 0.0
        %8004 = vmatprep.subr.mxu0 0.0
        %8005 = vmatpush1.msra.mxu0 0.0
        %8006 = vmatprep.mubr.f32.mxu0 0.0
        %v8007 = vand.u32 %v5739, 4294901760
        %v8008 = vsub.f32 %v5739, %v8007
        %8009 = vmatmul.mubr.f32.gmra.mrb[0].mxu0 %v8008
        %v8010 = vpop.f32.mrb[0].mxu0
        %v8011 = vadd.f32 %v7907, %v8010
        %v8012 = vpop.f32.mrb[0].mxu0
        %8013 = vdwg.mxu0
        %8014 = vmatprep.subr.mxu0 0.0
        %v8015 = vand.u32 %v3819, 4294901760
        %8016 = vmatpush1.msra.mxu0 %v8015
        %8017 = vmatprep.subr.mxu0 0.0
        %v8018 = vand.u32 %v3820, 4294901760
        %8019 = vmatpush1.msra.mxu0 %v8018
        %8020 = vmatprep.subr.mxu0 0.0
        %v8021 = vand.u32 %v3821, 4294901760
        %8022 = vmatpush1.msra.mxu0 %v8021
        %8023 = vmatprep.subr.mxu0 0.0
        %v8024 = vand.u32 %v3822, 4294901760
        %8025 = vmatpush1.msra.mxu0 %v8024
        %8026 = vmatprep.subr.mxu0 0.0
        %v8027 = vand.u32 %v3823, 4294901760
        %8028 = vmatpush1.msra.mxu0 %v8027
        %8029 = vmatprep.subr.mxu0 0.0
        %v8030 = vand.u32 %v3824, 4294901760
        %8031 = vmatpush1.msra.mxu0 %v8030
        %8032 = vmatprep.subr.mxu0 0.0
        %v8033 = vand.u32 %v3825, 4294901760
        %8034 = vmatpush1.msra.mxu0 %v8033
        %8035 = vmatprep.subr.mxu0 0.0
        %v8036 = vand.u32 %v3826, 4294901760
        %8037 = vmatpush1.msra.mxu0 %v8036
        %8038 = vmatprep.subr.mxu0 0.0
        %v8039 = vand.u32 %v3827, 4294901760
        %8040 = vmatpush1.msra.mxu0 %v8039
        %8041 = vmatprep.subr.mxu0 0.0
        %v8042 = vand.u32 %v3828, 4294901760
        %8043 = vmatpush1.msra.mxu0 %v8042
        %8044 = vmatprep.subr.mxu0 0.0
        %v8045 = vand.u32 %v3829, 4294901760
        %8046 = vmatpush1.msra.mxu0 %v8045
        %8047 = vmatprep.subr.mxu0 0.0
        %v8048 = vand.u32 %v3830, 4294901760
        %8049 = vmatpush1.msra.mxu0 %v8048
        %8050 = vmatprep.subr.mxu0 0.0
        %v8051 = vand.u32 %v3831, 4294901760
        %8052 = vmatpush1.msra.mxu0 %v8051
        %8053 = vmatprep.subr.mxu0 0.0
        %v8054 = vand.u32 %v3832, 4294901760
        %8055 = vmatpush1.msra.mxu0 %v8054
        %8056 = vmatprep.subr.mxu0 0.0
        %v8057 = vand.u32 %v3833, 4294901760
        %8058 = vmatpush1.msra.mxu0 %v8057
        %8059 = vmatprep.subr.mxu0 0.0
        %v8060 = vand.u32 %v3834, 4294901760
        %8061 = vmatpush1.msra.mxu0 %v8060
        %8062 = vmatprep.subr.mxu0 0.0
        %8063 = vmatpush1.msra.mxu0 0.0
        %8064 = vmatprep.subr.mxu0 0.0
        %8065 = vmatpush1.msra.mxu0 0.0
        %8066 = vmatprep.subr.mxu0 0.0
        %8067 = vmatpush1.msra.mxu0 0.0
        %8068 = vmatprep.subr.mxu0 0.0
        %8069 = vmatpush1.msra.mxu0 0.0
        %8070 = vmatprep.subr.mxu0 0.0
        %8071 = vmatpush1.msra.mxu0 0.0
        %8072 = vmatprep.subr.mxu0 0.0
        %8073 = vmatpush1.msra.mxu0 0.0
        %8074 = vmatprep.subr.mxu0 0.0
        %8075 = vmatpush1.msra.mxu0 0.0
        %8076 = vmatprep.subr.mxu0 0.0
        %8077 = vmatpush1.msra.mxu0 0.0
        %8078 = vmatprep.subr.mxu0 0.0
        %8079 = vmatpush1.msra.mxu0 0.0
        %8080 = vmatprep.subr.mxu0 0.0
        %8081 = vmatpush1.msra.mxu0 0.0
        %8082 = vmatprep.subr.mxu0 0.0
        %8083 = vmatpush1.msra.mxu0 0.0
        %8084 = vmatprep.subr.mxu0 0.0
        %8085 = vmatpush1.msra.mxu0 0.0
        %8086 = vmatprep.subr.mxu0 0.0
        %8087 = vmatpush1.msra.mxu0 0.0
        %8088 = vmatprep.subr.mxu0 0.0
        %8089 = vmatpush1.msra.mxu0 0.0
        %8090 = vmatprep.subr.mxu0 0.0
        %8091 = vmatpush1.msra.mxu0 0.0
        %8092 = vmatprep.subr.mxu0 0.0
        %8093 = vmatpush1.msra.mxu0 0.0
        %8094 = vmatprep.mubr.f32.mxu0 0.0
        %v8095 = vand.u32 %v5739, 4294901760
        %v8096 = vsub.f32 %v5739, %v8095
        %v8097 = vand.u32 %v8096, 4294901760
        %8098 = vmatmul.mubr.f32.gmra.mrb[0].mxu0 %v8097
        %v8099 = vpop.f32.mrb[0].mxu0
        %v8100 = vadd.f32 %v8011, %v8099
        %v8101 = vpop.f32.mrb[0].mxu0
        %8102 = vdwg.mxu0
        %8103 = vmatprep.subr.mxu0 0.0
        %v8104 = vand.u32 %v3819, 4294901760
        %v8105 = vsub.f32 %v3819, %v8104
        %v8106 = vand.u32 %v8105, 4294901760
        %8107 = vmatpush1.msra.mxu0 %v8106
        %8108 = vmatprep.subr.mxu0 0.0
        %v8109 = vand.u32 %v3820, 4294901760
        %v8110 = vsub.f32 %v3820, %v8109
        %v8111 = vand.u32 %v8110, 4294901760
        %8112 = vmatpush1.msra.mxu0 %v8111
        %8113 = vmatprep.subr.mxu0 0.0
        %v8114 = vand.u32 %v3821, 4294901760
        %v8115 = vsub.f32 %v3821, %v8114
        %v8116 = vand.u32 %v8115, 4294901760
        %8117 = vmatpush1.msra.mxu0 %v8116
        %8118 = vmatprep.subr.mxu0 0.0
        %v8119 = vand.u32 %v3822, 4294901760
        %v8120 = vsub.f32 %v3822, %v8119
        %v8121 = vand.u32 %v8120, 4294901760
        %8122 = vmatpush1.msra.mxu0 %v8121
        %8123 = vmatprep.subr.mxu0 0.0
        %v8124 = vand.u32 %v3823, 4294901760
        %v8125 = vsub.f32 %v3823, %v8124
        %v8126 = vand.u32 %v8125, 4294901760
        %8127 = vmatpush1.msra.mxu0 %v8126
        %8128 = vmatprep.subr.mxu0 0.0
        %v8129 = vand.u32 %v3824, 4294901760
        %v8130 = vsub.f32 %v3824, %v8129
        %v8131 = vand.u32 %v8130, 4294901760
        %8132 = vmatpush1.msra.mxu0 %v8131
        %8133 = vmatprep.subr.mxu0 0.0
        %v8134 = vand.u32 %v3825, 4294901760
        %v8135 = vsub.f32 %v3825, %v8134
        %v8136 = vand.u32 %v8135, 4294901760
        %8137 = vmatpush1.msra.mxu0 %v8136
        %8138 = vmatprep.subr.mxu0 0.0
        %v8139 = vand.u32 %v3826, 4294901760
        %v8140 = vsub.f32 %v3826, %v8139
        %v8141 = vand.u32 %v8140, 4294901760
        %8142 = vmatpush1.msra.mxu0 %v8141
        %8143 = vmatprep.subr.mxu0 0.0
        %v8144 = vand.u32 %v3827, 4294901760
        %v8145 = vsub.f32 %v3827, %v8144
        %v8146 = vand.u32 %v8145, 4294901760
        %8147 = vmatpush1.msra.mxu0 %v8146
        %8148 = vmatprep.subr.mxu0 0.0
        %v8149 = vand.u32 %v3828, 4294901760
        %v8150 = vsub.f32 %v3828, %v8149
        %v8151 = vand.u32 %v8150, 4294901760
        %8152 = vmatpush1.msra.mxu0 %v8151
        %8153 = vmatprep.subr.mxu0 0.0
        %v8154 = vand.u32 %v3829, 4294901760
        %v8155 = vsub.f32 %v3829, %v8154
        %v8156 = vand.u32 %v8155, 4294901760
        %8157 = vmatpush1.msra.mxu0 %v8156
        %8158 = vmatprep.subr.mxu0 0.0
        %v8159 = vand.u32 %v3830, 4294901760
        %v8160 = vsub.f32 %v3830, %v8159
        %v8161 = vand.u32 %v8160, 4294901760
        %8162 = vmatpush1.msra.mxu0 %v8161
        %8163 = vmatprep.subr.mxu0 0.0
        %v8164 = vand.u32 %v3831, 4294901760
        %v8165 = vsub.f32 %v3831, %v8164
        %v8166 = vand.u32 %v8165, 4294901760
        %8167 = vmatpush1.msra.mxu0 %v8166
        %8168 = vmatprep.subr.mxu0 0.0
        %v8169 = vand.u32 %v3832, 4294901760
        %v8170 = vsub.f32 %v3832, %v8169
        %v8171 = vand.u32 %v8170, 4294901760
        %8172 = vmatpush1.msra.mxu0 %v8171
        %8173 = vmatprep.subr.mxu0 0.0
        %v8174 = vand.u32 %v3833, 4294901760
        %v8175 = vsub.f32 %v3833, %v8174
        %v8176 = vand.u32 %v8175, 4294901760
        %8177 = vmatpush1.msra.mxu0 %v8176
        %8178 = vmatprep.subr.mxu0 0.0
        %v8179 = vand.u32 %v3834, 4294901760
        %v8180 = vsub.f32 %v3834, %v8179
        %v8181 = vand.u32 %v8180, 4294901760
        %8182 = vmatpush1.msra.mxu0 %v8181
        %8183 = vmatprep.subr.mxu0 0.0
        %8184 = vmatpush1.msra.mxu0 0.0
        %8185 = vmatprep.subr.mxu0 0.0
        %8186 = vmatpush1.msra.mxu0 0.0
        %8187 = vmatprep.subr.mxu0 0.0
        %8188 = vmatpush1.msra.mxu0 0.0
        %8189 = vmatprep.subr.mxu0 0.0
        %8190 = vmatpush1.msra.mxu0 0.0
        %8191 = vmatprep.subr.mxu0 0.0
        %8192 = vmatpush1.msra.mxu0 0.0
        %8193 = vmatprep.subr.mxu0 0.0
        %8194 = vmatpush1.msra.mxu0 0.0
        %8195 = vmatprep.subr.mxu0 0.0
        %8196 = vmatpush1.msra.mxu0 0.0
        %8197 = vmatprep.subr.mxu0 0.0
        %8198 = vmatpush1.msra.mxu0 0.0
        %8199 = vmatprep.subr.mxu0 0.0
        %8200 = vmatpush1.msra.mxu0 0.0
        %8201 = vmatprep.subr.mxu0 0.0
        %8202 = vmatpush1.msra.mxu0 0.0
        %8203 = vmatprep.subr.mxu0 0.0
        %8204 = vmatpush1.msra.mxu0 0.0
        %8205 = vmatprep.subr.mxu0 0.0
        %8206 = vmatpush1.msra.mxu0 0.0
        %8207 = vmatprep.subr.mxu0 0.0
        %8208 = vmatpush1.msra.mxu0 0.0
        %8209 = vmatprep.subr.mxu0 0.0
        %8210 = vmatpush1.msra.mxu0 0.0
        %8211 = vmatprep.subr.mxu0 0.0
        %8212 = vmatpush1.msra.mxu0 0.0
        %8213 = vmatprep.subr.mxu0 0.0
        %8214 = vmatpush1.msra.mxu0 0.0
        %8215 = vmatprep.mubr.f32.mxu0 0.0
        %v8216 = vand.u32 %v5739, 4294901760
        %8217 = vmatmul.mubr.f32.gmra.mrb[0].mxu0 %v8216
        %v8218 = vpop.f32.mrb[0].mxu0
        %v8219 = vadd.f32 %v8100, %v8218
        %v8220 = vpop.f32.mrb[0].mxu0
        %8221 = vdwg.mxu0
        %8222 = vmatprep.subr.mxu0 0.0
        %v8223 = vand.u32 %v3819, 4294901760
        %8224 = vmatpush1.msra.mxu0 %v8223
        %8225 = vmatprep.subr.mxu0 0.0
        %v8226 = vand.u32 %v3820, 4294901760
        %8227 = vmatpush1.msra.mxu0 %v8226
        %8228 = vmatprep.subr.mxu0 0.0
        %v8229 = vand.u32 %v3821, 4294901760
        %8230 = vmatpush1.msra.mxu0 %v8229
        %8231 = vmatprep.subr.mxu0 0.0
        %v8232 = vand.u32 %v3822, 4294901760
        %8233 = vmatpush1.msra.mxu0 %v8232
        %8234 = vmatprep.subr.mxu0 0.0
        %v8235 = vand.u32 %v3823, 4294901760
        %8236 = vmatpush1.msra.mxu0 %v8235
        %8237 = vmatprep.subr.mxu0 0.0
        %v8238 = vand.u32 %v3824, 4294901760
        %8239 = vmatpush1.msra.mxu0 %v8238
        %8240 = vmatprep.subr.mxu0 0.0
        %v8241 = vand.u32 %v3825, 4294901760
        %8242 = vmatpush1.msra.mxu0 %v8241
        %8243 = vmatprep.subr.mxu0 0.0
        %v8244 = vand.u32 %v3826, 4294901760
        %8245 = vmatpush1.msra.mxu0 %v8244
        %8246 = vmatprep.subr.mxu0 0.0
        %v8247 = vand.u32 %v3827, 4294901760
        %8248 = vmatpush1.msra.mxu0 %v8247
        %8249 = vmatprep.subr.mxu0 0.0
        %v8250 = vand.u32 %v3828, 4294901760
        %8251 = vmatpush1.msra.mxu0 %v8250
        %8252 = vmatprep.subr.mxu0 0.0
        %v8253 = vand.u32 %v3829, 4294901760
        %8254 = vmatpush1.msra.mxu0 %v8253
        %8255 = vmatprep.subr.mxu0 0.0
        %v8256 = vand.u32 %v3830, 4294901760
        %8257 = vmatpush1.msra.mxu0 %v8256
        %8258 = vmatprep.subr.mxu0 0.0
        %v8259 = vand.u32 %v3831, 4294901760
        %8260 = vmatpush1.msra.mxu0 %v8259
        %8261 = vmatprep.subr.mxu0 0.0
        %v8262 = vand.u32 %v3832, 4294901760
        %8263 = vmatpush1.msra.mxu0 %v8262
        %8264 = vmatprep.subr.mxu0 0.0
        %v8265 = vand.u32 %v3833, 4294901760
        %8266 = vmatpush1.msra.mxu0 %v8265
        %8267 = vmatprep.subr.mxu0 0.0
        %v8268 = vand.u32 %v3834, 4294901760
        %8269 = vmatpush1.msra.mxu0 %v8268
        %8270 = vmatprep.subr.mxu0 0.0
        %8271 = vmatpush1.msra.mxu0 0.0
        %8272 = vmatprep.subr.mxu0 0.0
        %8273 = vmatpush1.msra.mxu0 0.0
        %8274 = vmatprep.subr.mxu0 0.0
        %8275 = vmatpush1.msra.mxu0 0.0
        %8276 = vmatprep.subr.mxu0 0.0
        %8277 = vmatpush1.msra.mxu0 0.0
        %8278 = vmatprep.subr.mxu0 0.0
        %8279 = vmatpush1.msra.mxu0 0.0
        %8280 = vmatprep.subr.mxu0 0.0
        %8281 = vmatpush1.msra.mxu0 0.0
        %8282 = vmatprep.subr.mxu0 0.0
        %8283 = vmatpush1.msra.mxu0 0.0
        %8284 = vmatprep.subr.mxu0 0.0
        %8285 = vmatpush1.msra.mxu0 0.0
        %8286 = vmatprep.subr.mxu0 0.0
        %8287 = vmatpush1.msra.mxu0 0.0
        %8288 = vmatprep.subr.mxu0 0.0
        %8289 = vmatpush1.msra.mxu0 0.0
        %8290 = vmatprep.subr.mxu0 0.0
        %8291 = vmatpush1.msra.mxu0 0.0
        %8292 = vmatprep.subr.mxu0 0.0
        %8293 = vmatpush1.msra.mxu0 0.0
        %8294 = vmatprep.subr.mxu0 0.0
        %8295 = vmatpush1.msra.mxu0 0.0
        %8296 = vmatprep.subr.mxu0 0.0
        %8297 = vmatpush1.msra.mxu0 0.0
        %8298 = vmatprep.subr.mxu0 0.0
        %8299 = vmatpush1.msra.mxu0 0.0
        %8300 = vmatprep.subr.mxu0 0.0
        %8301 = vmatpush1.msra.mxu0 0.0
        %8302 = vmatprep.mubr.f32.mxu0 0.0
        %v8303 = vand.u32 %v5739, 4294901760
        %8304 = vmatmul.mubr.f32.gmra.mrb[0].mxu0 %v8303
        %v8305 = vpop.f32.mrb[0].mxu0
        %v8306 = vadd.f32 %v8219, %v8305
        %v8307 = vpop.f32.mrb[0].mxu0
        %8308 = vdwg.mxu0
        %v8309 = vsub.f32 %v8306, %v4476
        %v8310 = vrcp.pop %v6383
        %v8311 = vmul.f32 1.0, %v8310
        %8313 = vset.pattern.permute.xlu0 0
        %8314 = vperm.xlu0 %8313, %v8311
        %v8315 = vpop.permute.xlu0 %8314
        %v8317 = vmul.f32 %v6383, %v8315
        %8319 = vset.pattern.permute.xlu0 0
        %8320 = vperm.xlu0 %8319, %v7025
        %v8321 = vpop.permute.xlu0 %8320
        %v8323 = vmul.f32 %v8321, %v8317
        %v8324 = vsub.f32 %v7025, %v8323
        %8326 = vset.pattern.permute.xlu0 0
        %8327 = vperm.xlu0 %8326, %v7667
        %v8328 = vpop.permute.xlu0 %8327
        %v8330 = vmul.f32 %v8328, %v8317
        %v8331 = vsub.f32 %v7667, %v8330
        %8333 = vset.pattern.permute.xlu0 0
        %8334 = vperm.xlu0 %8333, %v8309
        %v8335 = vpop.permute.xlu0 %8334
        %v8337 = vmul.f32 %v8335, %v8317
        %v8338 = vsub.f32 %v8309, %v8337
        %v8339 = vrcp.pop %v8324
        %v8340 = vmul.f32 1.0, %v8339
        %8342 = vset.pattern.permute.xlu0 1
        %8343 = vperm.xlu0 %8342, %v8340
        %v8344 = vpop.permute.xlu0 %8343
        %v8346 = vmul.f32 %v8324, %v8344
        %8348 = vset.pattern.permute.xlu0 1
        %8349 = vperm.xlu0 %8348, %v8317
        %v8350 = vpop.permute.xlu0 %8349
        %v8352 = vmul.f32 %v8350, %v8346
        %v8353 = vsub.f32 %v8317, %v8352
        %8355 = vset.pattern.permute.xlu0 1
        %8356 = vperm.xlu0 %8355, %v8331
        %v8357 = vpop.permute.xlu0 %8356
        %v8359 = vmul.f32 %v8357, %v8346
        %v8360 = vsub.f32 %v8331, %v8359
        %8362 = vset.pattern.permute.xlu0 1
        %8363 = vperm.xlu0 %8362, %v8338
        %v8364 = vpop.permute.xlu0 %8363
        %v8366 = vmul.f32 %v8364, %v8346
        %v8367 = vsub.f32 %v8338, %v8366
        %v8368 = vrcp.pop %v8360
        %v8369 = vmul.f32 1.0, %v8368
        %8371 = vset.pattern.permute.xlu0 2
        %8372 = vperm.xlu0 %8371, %v8369
        %v8373 = vpop.permute.xlu0 %8372
        %v8375 = vmul.f32 %v8360, %v8373
        %8377 = vset.pattern.permute.xlu0 2
        %8378 = vperm.xlu0 %8377, %v8353
        %v8379 = vpop.permute.xlu0 %8378
        %v8381 = vmul.f32 %v8379, %v8375
        %v8382 = vsub.f32 %v8353, %v8381
        %8384 = vset.pattern.permute.xlu0 2
        %8385 = vperm.xlu0 %8384, %v8346
        %v8386 = vpop.permute.xlu0 %8385
        %v8388 = vmul.f32 %v8386, %v8375
        %v8389 = vsub.f32 %v8346, %v8388
        %8391 = vset.pattern.permute.xlu0 2
        %8392 = vperm.xlu0 %8391, %v8367
        %v8393 = vpop.permute.xlu0 %8392
        %v8395 = vmul.f32 %v8393, %v8375
        %v8396 = vsub.f32 %v8367, %v8395
        %v8397 = vrcp.pop %v8396
        %v8398 = vmul.f32 1.0, %v8397
        %8400 = vset.pattern.permute.xlu0 3
        %8401 = vperm.xlu0 %8400, %v8398
        %v8402 = vpop.permute.xlu0 %8401
        %v8404 = vmul.f32 %v8396, %v8402
        %8406 = vset.pattern.permute.xlu0 3
        %8407 = vperm.xlu0 %8406, %v8382
        %v8408 = vpop.permute.xlu0 %8407
        %v8410 = vmul.f32 %v8408, %v8404
        %v8411 = vsub.f32 %v8382, %v8410
        %8413 = vset.pattern.permute.xlu0 3
        %8414 = vperm.xlu0 %8413, %v8389
        %v8415 = vpop.permute.xlu0 %8414
        %v8417 = vmul.f32 %v8415, %v8404
        %v8418 = vsub.f32 %v8389, %v8417
        %8420 = vset.pattern.permute.xlu0 3
        %8421 = vperm.xlu0 %8420, %v8375
        %v8422 = vpop.permute.xlu0 %8421
        %v8424 = vmul.f32 %v8422, %v8404
        %v8425 = vsub.f32 %v8375, %v8424
        %8427 = vset.pattern.permute.xlu0 4
        %8428 = vperm.xlu0 %8427, %v8411
        %v8429 = vpop.permute.xlu0 %8428
        %v8431 = vmul.f32 %v8429, %v4596
        %v8432 = vadd.f32 %v8431, 0.0
        %8434 = vset.pattern.permute.xlu0 4
        %8435 = vperm.xlu0 %8434, %v8418
        %v8436 = vpop.permute.xlu0 %8435
        %v8438 = vmul.f32 %v8436, %v4606
        %v8439 = vadd.f32 %v8432, %v8438
        %8441 = vset.pattern.permute.xlu0 4
        %8442 = vperm.xlu0 %8441, %v8425
        %v8443 = vpop.permute.xlu0 %8442
        %v8445 = vmul.f32 %v8443, %v4616
        %v8446 = vadd.f32 %v8439, %v8445
        %8448 = vset.pattern.permute.xlu0 4
        %8449 = vperm.xlu0 %8448, %v8404
        %v8450 = vpop.permute.xlu0 %8449
        %v8452 = vmul.f32 %v8450, %v4626
        %v8453 = vadd.f32 %v8446, %v8452
        %v8454 = vadd.f32 %v4634, %v8453
        %8455 = vst [vmem:[%s230] sm:$0xff] %v8454
        %s8456 = sand.u32 %s138, 1
        %s8457 = scalar_lea.sflag [#allocation4], %s8456
        %s8458 = sand.u32 %s138, 1
        %s8459 = smul.addr %s8458, 8
        %s8460 = scalar_lea.vmem [#allocation5], %s8459
        // Predicated region
        $region45: #{tpu_custom_call.1} parent=39 // pred_check
          %p8461 = pneg %p148
        $region46: #{tpu_custom_call.1} parent=39 // pred_check_branch
          %8463 = sbr.rel (%p8461) target = $region48
        $region47: #{tpu_custom_call.1} parent=39 // pred_region
          %s8465 = ssub.s32 128, 128
          %8466 = vsyncadd %s8457, %s8465
          %s8467 = smul.addr %s20, 128
          %s8468 = scalar_lea.hbm %s5, %s8467
          %s8470 = sshll.u32 %s8460, 4
          %s8471 = int_to_ptr.vmem [resolvable:$true] %s8470
          %8473 = dma.vmem_to_hbm [thread:$0]  %s8471, 128, %s8468, %s8457
        $region48: #{tpu_custom_call.1} parent=39 // pred_fallthru
          _
      $region40: #{tpu_custom_call.1} parent=5 // pred_fallthru
        _
      %p8474 = scmp.le.s32.totalorder 2, %s15
      // Predicated region
      $region49: #{tpu_custom_call.1} parent=5 // pred_check
        %p8475 = pneg %p8474
      $region50: #{tpu_custom_call.1} parent=5 // pred_check_branch
        %8477 = sbr.rel (%p8475) target = $region52
      $region51: #{tpu_custom_call.1} parent=5 // pred_region
        %s8478 = ssub.s32 %s15, 2
        // Predicated region
        $region53: #{tpu_custom_call.1} parent=51 // pred_check
          %p8479 = pneg %p154
        $region54: #{tpu_custom_call.1} parent=51 // pred_check_branch
          %8481 = sbr.rel (%p8479) target = $region56
        $region55: #{tpu_custom_call.1} parent=51 // pred_region
          %s8482 = sand.u32 %s139, 1
          %s8483 = scalar_lea.sflag [#allocation4], %s8482
          %s8484 = sand.u32 %s139, 1
          %s8485 = smul.addr %s8484, 8
          %s8486 = scalar_lea.vmem [#allocation5], %s8485
          %8487 = dma.done %s8483, 128
        $region56: #{tpu_custom_call.1} parent=51 // pred_fallthru
          _
      $region52: #{tpu_custom_call.1} parent=5 // pred_fallthru
        _
    $region6: #{tpu_custom_call.1} parent=1 // loop_footer
      %s19 = sadd.s32 1, %s15
    $region7: #{tpu_custom_call.1} parent=1 // loop_footer_branch
      %14 = sbr.rel target = $region3
    $region8: #{tpu_custom_call.1} parent=1 // loop_exit
      _
    %8488 = vsyncpa [#allocation3], 1
    %s8489 = scalar_lea.sflag [#allocation3], 1
    %8490 = vsyncpa %s8489, 1
    %8491 = vsyncpa [#allocation4], 1
    %s8492 = scalar_lea.sflag [#allocation4], 1
    %8493 = vsyncpa %s8492, 1

</llo_original>
